<compile_context>
chip_gen: v6e
topology: v6e:2x2x1
jax: 0.10.0
libtpu: 0.0.40
codegen_flags: <defaults>
</compile_context>

<pallas_src>
import functools

import numpy as np
import jax
import jax.numpy as jnp
from jax.experimental import pallas as pl
from jax.experimental.pallas import tpu as pltpu

NUM_HEADS = 4
BN_EPS = 1e-5


# ----------------------------- Pallas kernel --------------------------------
def _attn_block(q, k, v):
    """Unmasked single-head attention on one [N, hd] q/k/v block (q pre-scaled)."""
    s = jax.lax.dot_general(q.astype(jnp.bfloat16), k.astype(jnp.bfloat16),
                            (((1,), (1,)), ((), ())),
                            preferred_element_type=jnp.float32)        # [N, N]
    s = s - jnp.max(s, axis=-1, keepdims=True)
    e = jnp.exp(s)
    p = e * pl.reciprocal(jnp.sum(e, axis=-1, keepdims=True), approx=True)
    return jnp.dot(p.astype(jnp.bfloat16), v.astype(jnp.bfloat16),
                   preferred_element_type=jnp.float32)                 # [N, hd]


def gnn_kernel(x0_ref, x1_ref,
               wqkv_ref, bqkv_ref, wm_ref, bm_ref,
               w1x_ref, w1m_ref, bns_ref, bnb_ref, w2_ref, b2_ref,
               out0_ref, out1_ref,
               *, num_heads, cross_flags, seq_len, batch_tile):
    """Whole AttentionalGNN (all layers, both streams) for one batch tile.

    x0_ref / x1_ref blocks: [Bt, N, D].  Internally both streams of all Bt
    batch elements are held as one [M, D] row slab (M = Bt*2N):
      rows [b*N        : (b+1)*N       ] = stream-0 tokens of batch b
      rows [Bt*N + b*N : Bt*N + (b+1)*N] = stream-1 tokens of batch b
    Weight refs are stacked over layers (leading L axis); the layer / batch /
    head loops are unrolled at trace time (small L here).
    """
    N, Bt, H = seq_len, batch_tile, num_heads
    x = jnp.concatenate([x0_ref[...].reshape(Bt * N, -1),
                         x1_ref[...].reshape(Bt * N, -1)], axis=0)     # [M, D] f32
    M, D = x.shape
    hd = D // H

    for l, is_cross in enumerate(cross_flags):        # static unroll over layers
        xb = x.astype(jnp.bfloat16)

        # --- fused QKV projection: one lane-dense [M, D] @ [D, 3D] matmul ---
        qkv = jnp.dot(xb, wqkv_ref[l],
                      preferred_element_type=jnp.float32) + bqkv_ref[l]

        # --- attention: two unmasked [N, N] blocks per (batch, head) ---
        rows0, rows1 = [], []
        for b in range(Bt):
            r0 = b * N                       # query rows, stream 0
            r1 = Bt * N + b * N              # query rows, stream 1
            s0, s1 = (r1, r0) if is_cross else (r0, r1)   # key/value rows
            heads0, heads1 = [], []
            for h in range(H):
                cq, ck, cv = h * hd, D + h * hd, 2 * D + h * hd
                heads0.append(_attn_block(qkv[r0:r0 + N, cq:cq + hd],
                                          qkv[s0:s0 + N, ck:ck + hd],
                                          qkv[s0:s0 + N, cv:cv + hd]))
                heads1.append(_attn_block(qkv[r1:r1 + N, cq:cq + hd],
                                          qkv[s1:s1 + N, ck:ck + hd],
                                          qkv[s1:s1 + N, cv:cv + hd]))
            rows0.append(jnp.concatenate(heads0, axis=-1))             # [N, D]
            rows1.append(jnp.concatenate(heads1, axis=-1))
        o = jnp.concatenate(rows0 + rows1, axis=0)                     # [M, D]

        # --- merge projection: one full-K [M, D] @ [D, D] matmul ---
        message = jnp.dot(o.astype(jnp.bfloat16), wm_ref[l],
                          preferred_element_type=jnp.float32) + bm_ref[l]

        # --- MLP([2D, 2D, D]); cat([x, message]) realized as split W1 ---
        h1 = (jnp.dot(xb, w1x_ref[l], preferred_element_type=jnp.float32)
              + jnp.dot(message.astype(jnp.bfloat16), w1m_ref[l],
                        preferred_element_type=jnp.float32))
        h1 = jnp.maximum(h1 * bns_ref[l] + bnb_ref[l], 0.0)   # folded BN(eval)+ReLU
        delta = jnp.dot(h1.astype(jnp.bfloat16), w2_ref[l],
                        preferred_element_type=jnp.float32) + b2_ref[l]

        x = x + delta                           # residual update, both streams

    half = Bt * N
    out0_ref[...] = x[:half].reshape(Bt, N, D).astype(out0_ref.dtype)
    out1_ref[...] = x[half:].reshape(Bt, N, D).astype(out1_ref.dtype)


@functools.partial(jax.jit, static_argnames=("layer_names", "batch_tile"))
def attentional_gnn(desc0, desc1, kernel_params, layer_names, batch_tile=1):
    """desc0, desc1: [B, D, N] (PyTorch NCW). Returns updated (desc0, desc1)."""
    B, D, N = desc0.shape
    Bt = batch_tile
    assert B % Bt == 0, "batch_tile must divide batch size"
    cross_flags = tuple(name == 'cross' for name in layer_names)
    L, H = len(cross_flags), NUM_HEADS

    # Token-major NWC layout for the kernel (lane dim = features).
    x0 = jnp.transpose(desc0, (0, 2, 1))       # [B, N, D]
    x1 = jnp.transpose(desc1, (0, 2, 1))

    desc_spec = pl.BlockSpec((Bt, N, D), lambda g: (g, 0, 0))

    def const_spec(a):                          # weights: DMA once, reused
        return pl.BlockSpec(a.shape, lambda g, _nd=a.ndim: (0,) * _nd)

    # Advisory cost estimate so XLA schedules surrounding ops sensibly.
    M = 2 * N
    per_layer_flops = (2 * M * D * 3 * D            # fused QKV
                       + 8 * N * N * D              # scores + PV, both streams
                       + 2 * M * D * D              # merge
                       + 2 * 2 * M * D * 2 * D      # W1 (x-half + message-half)
                       + 2 * M * 2 * D * D)         # W2
    weight_bytes = sum(int(np.prod(a.shape)) * a.dtype.itemsize
                       for a in kernel_params)
    desc_bytes = 2 * B * N * D * 4
    cost = pl.CostEstimate(flops=int(B * L * per_layer_flops),
                           transcendentals=int(B * L * 2 * H * N * N),
                           bytes_accessed=int(2 * desc_bytes + weight_bytes))

    # Budget VMEM explicitly (resident weights + double-buffered desc blocks).
    vmem_limit = int(min(100 * 2 ** 20,
                         max(32 * 2 ** 20, 2 * weight_bytes + (16 << 20))))

    out0, out1 = pl.pallas_call(
        functools.partial(gnn_kernel, num_heads=H, cross_flags=cross_flags,
                          seq_len=N, batch_tile=Bt),
        out_shape=(jax.ShapeDtypeStruct((B, N, D), jnp.float32),
                   jax.ShapeDtypeStruct((B, N, D), jnp.float32)),
        grid=(B // Bt,),
        in_specs=[desc_spec, desc_spec] + [const_spec(a) for a in kernel_params],
        out_specs=(desc_spec, desc_spec),
        input_output_aliases={0: 0, 1: 1},
        compiler_params=pltpu.CompilerParams(
            dimension_semantics=("parallel",),
            vmem_limit_bytes=vmem_limit),
        cost_estimate=cost,
    )(x0, x1, *kernel_params)

    return jnp.transpose(out0, (0, 2, 1)), jnp.transpose(out1, (0, 2, 1))


# --------------------------- parameter setup (glue) --------------------------
def init_layer_params(key, D):
    """Deterministic synthetic init of one AttentionalPropagation layer."""
    ks = jax.random.split(key, 15)
    w = lambda k, shape, s=0.05: jax.random.normal(k, shape, jnp.float32) * s
    return dict(
        Wq=w(ks[0], (D, D)), bq=w(ks[1], (D,)),
        Wk=w(ks[2], (D, D)), bk=w(ks[3], (D,)),
        Wv=w(ks[4], (D, D)), bv=w(ks[5], (D,)),
        Wm=w(ks[6], (D, D)), bm=w(ks[7], (D,)),
        W1=w(ks[8], (2 * D, 2 * D)), b1=w(ks[9], (2 * D,)),
        bn_gamma=1.0 + w(ks[10], (2 * D,)),
        bn_beta=w(ks[11], (2 * D,)),
        bn_mean=w(ks[12], (2 * D,)),
        bn_var=1.0 + jnp.abs(w(ks[13], (2 * D,))),
        W2=w(ks[14], (D, 2 * D)),
        b2=jnp.zeros((D,), jnp.float32),      # nn.init.constant_(mlp[-1].bias, 0.)
    )


def pack_kernel_params(params_list, D):
    """Host-side packing for the fused kernel.

    * Conv1d(k=1) weights transposed to [Cin, Cout]; matmul operands -> bf16.
    * Q/K/V fused into one [L, D, 3D] weight + [L, 1, 3D] bias; head h of
      PyTorch's interleaved view owns conv channels {d*H + h}, so packed
      column h*hd + d maps to original channel d*H + h (perm below).  The
      merge weight's INPUT rows get the same permutation.
    * 1/sqrt(head_dim) folded into Wq/bq; BN(eval) + conv bias b1 folded into
      a single scale/shift; W1 split into x-half / message-half (no concat).
    """
    H = NUM_HEADS
    hd = D // H
    inv_sqrt = 1.0 / (hd ** 0.5)
    # packed column j = h*hd + d  <->  PyTorch conv-output channel d*H + h
    perm = np.array([d * H + h for h in range(H) for d in range(hd)])

    def stack(fn):
        return jnp.stack([fn(p) for p in params_list])

    bn_scale = lambda p: p['bn_gamma'] / jnp.sqrt(p['bn_var'] + BN_EPS)

    def qkv_w(p):
        wq = p['Wq'].T[:, perm] * inv_sqrt
        wk = p['Wk'].T[:, perm]
        wv = p['Wv'].T[:, perm]
        return jnp.concatenate([wq, wk, wv], axis=1)                 # [D, 3D]

    def qkv_b(p):
        return jnp.concatenate([p['bq'][perm] * inv_sqrt,
                                p['bk'][perm],
                                p['bv'][perm]])[None, :]             # [1, 3D]

    wqkv = stack(qkv_w)
    bqkv = stack(qkv_b)
    wm = stack(lambda p: p['Wm'].T[perm, :])                         # [D, D]
    bm = stack(lambda p: p['bm'][None, :])
    w1x = stack(lambda p: p['W1'][:, :D].T)                          # [D, 2D]
    w1m = stack(lambda p: p['W1'][:, D:].T)                          # [D, 2D]
    bns = stack(lambda p: bn_scale(p)[None, :])
    bnb = stack(lambda p: (p['b1'] * bn_scale(p) + p['bn_beta']
                           - p['bn_mean'] * bn_scale(p))[None, :])
    w2 = stack(lambda p: p['W2'].T)                                  # [2D, D]
    b2 = stack(lambda p: p['b2'][None, :])

    bf = lambda a: a.astype(jnp.bfloat16)
    return [bf(wqkv), bqkv, bf(wm), bm, bf(w1x), bf(w1m), bns, bnb, bf(w2), b2]


# --------------------------- pure-JAX reference ------------------------------
def _conv1(x, W, b):  # x: [B, C, N], W: [Cout, Cin]
    return jnp.einsum('oc,bcn->bon', W, x) + b[None, :, None]


def ref_layer_delta(x, src, p, D):
    B = x.shape[0]
    hd = D // NUM_HEADS
    q = _conv1(x,   p['Wq'], p['bq']).reshape(B, hd, NUM_HEADS, -1)
    k = _conv1(src, p['Wk'], p['bk']).reshape(B, hd, NUM_HEADS, -1)
    v = _conv1(src, p['Wv'], p['bv']).reshape(B, hd, NUM_HEADS, -1)
    scores = jnp.einsum('bdhn,bdhm->bhnm', q, k) / (hd ** 0.5)
    prob = jax.nn.softmax(scores, axis=-1)
    xa = jnp.einsum('bhnm,bdhm->bdhn', prob, v).reshape(B, D, -1)
    message = _conv1(xa, p['Wm'], p['bm'])
    y = jnp.concatenate([x, message], axis=1)
    h1 = _conv1(y, p['W1'], p['b1'])
    h1 = ((h1 - p['bn_mean'][None, :, None])
          / jnp.sqrt(p['bn_var'] + BN_EPS)[None, :, None]
          * p['bn_gamma'][None, :, None] + p['bn_beta'][None, :, None])
    h1 = jnp.maximum(h1, 0.0)
    return _conv1(h1, p['W2'], p['b2'])


# ----------------------------------- main ------------------------------------
if __name__ == "__main__":
    B, D, N = 2, 64, 16                # feature_dim=64, 4 heads -> head dim 16
    layer_names = ('self', 'cross')

    key = jax.random.PRNGKey(0)
    k0, k1, kp = jax.random.split(key, 3)
    desc0 = jax.random.normal(k0, (B, D, N), jnp.float32)   # PyTorch NCW layout
    desc1 = jax.random.normal(k1, (B, D, N), jnp.float32)

    layer_keys = jax.random.split(kp, len(layer_names))
    params = [init_layer_params(k, D) for k in layer_keys]
    kernel_params = tuple(pack_kernel_params(params, D))

    # --- fused Pallas forward (single pallas_call) ---
    # batch_tile=B here: at this toy shape filling the matmul M-dim matters
    # more than feeding 2 TensorCores; on v7x with real B keep >= 2 grid steps.
    out0, out1 = attentional_gnn(desc0, desc1, kernel_params,
                                 layer_names=layer_names, batch_tile=B)
    jax.block_until_ready((out0, out1))

    # --- pure-JAX reference (PyTorch semantics, NCW layout, f32) ---
    r0, r1 = desc0, desc1
    for p, name in zip(params, layer_names):
        s0, s1 = (r1, r0) if name == 'cross' else (r0, r1)
        delta0 = ref_layer_delta(r0, s0, p, D)
        delta1 = ref_layer_delta(r1, s1, p, D)
        r0, r1 = r0 + delta0, r1 + delta1

    # Tolerance reflects bf16 MXU operands (f32 accumulation) + approx
    # reciprocal in the kernel vs. the f32 reference; typical error ~1e-3.
    assert jnp.allclose(out0, r0, atol=2e-2, rtol=2e-2), "desc0 mismatch"
    assert jnp.allclose(out1, r1, atol=2e-2, rtol=2e-2), "desc1 mismatch"
    print("KERNEL_OK")
</pallas_src>

<mosaic_0001>
module attributes {stable_mosaic.version = 11 : i64} {
  func.func @gnn_kernel(%arg0: i32, %arg1: memref<2x16x64xf32, #tpu.memory_space<vmem>>, %arg2: memref<2x16x64xf32, #tpu.memory_space<vmem>>, %arg3: memref<2x64x192xbf16, #tpu.memory_space<vmem>>, %arg4: memref<2x1x192xf32, #tpu.memory_space<vmem>>, %arg5: memref<2x64x64xbf16, #tpu.memory_space<vmem>>, %arg6: memref<2x1x64xf32, #tpu.memory_space<vmem>>, %arg7: memref<2x64x128xbf16, #tpu.memory_space<vmem>>, %arg8: memref<2x64x128xbf16, #tpu.memory_space<vmem>>, %arg9: memref<2x1x128xf32, #tpu.memory_space<vmem>>, %arg10: memref<2x1x128xf32, #tpu.memory_space<vmem>>, %arg11: memref<2x128x64xbf16, #tpu.memory_space<vmem>>, %arg12: memref<2x1x64xf32, #tpu.memory_space<vmem>>, %arg13: memref<2x16x64xf32, #tpu.memory_space<vmem>>, %arg14: memref<2x16x64xf32, #tpu.memory_space<vmem>>) attributes {dimension_semantics = [#tpu.dimension_semantics<parallel>], iteration_bounds = array<i64: 1>, scalar_prefetch = 0 : i64, scratch_operands = 0 : i64, tpu.core_type = #tpu.core_type<tc>, window_params = [{transform_indices = @transform_0, window_bounds = array<i64: 2, 16, 64>}, {transform_indices = @transform_1, window_bounds = array<i64: 2, 16, 64>}, {pipeline_mode = #tpu.pipeline_mode<synchronous>, transform_indices = @transform_2, window_bounds = array<i64: 2, 64, 192>}, {pipeline_mode = #tpu.pipeline_mode<synchronous>, transform_indices = @transform_3, window_bounds = array<i64: 2, 1, 192>}, {pipeline_mode = #tpu.pipeline_mode<synchronous>, transform_indices = @transform_4, window_bounds = array<i64: 2, 64, 64>}, {pipeline_mode = #tpu.pipeline_mode<synchronous>, transform_indices = @transform_5, window_bounds = array<i64: 2, 1, 64>}, {pipeline_mode = #tpu.pipeline_mode<synchronous>, transform_indices = @transform_6, window_bounds = array<i64: 2, 64, 128>}, {pipeline_mode = #tpu.pipeline_mode<synchronous>, transform_indices = @transform_7, window_bounds = array<i64: 2, 64, 128>}, {pipeline_mode = #tpu.pipeline_mode<synchronous>, transform_indices = @transform_8, window_bounds = array<i64: 2, 1, 128>}, {pipeline_mode = #tpu.pipeline_mode<synchronous>, transform_indices = @transform_9, window_bounds = array<i64: 2, 1, 128>}, {pipeline_mode = #tpu.pipeline_mode<synchronous>, transform_indices = @transform_10, window_bounds = array<i64: 2, 128, 64>}, {pipeline_mode = #tpu.pipeline_mode<synchronous>, transform_indices = @transform_11, window_bounds = array<i64: 2, 1, 64>}, {transform_indices = @transform_12, window_bounds = array<i64: 2, 16, 64>}, {transform_indices = @transform_13, window_bounds = array<i64: 2, 16, 64>}]} {
    %c0 = arith.constant 0 : index
    %c0_0 = arith.constant 0 : index
    %c0_1 = arith.constant 0 : index
    %0 = vector.load %arg1[%c0, %c0_0, %c0_1] : memref<2x16x64xf32, #tpu.memory_space<vmem>>, vector<2x16x64xf32>
    %1 = vector.shape_cast %0 : vector<2x16x64xf32> to vector<32x64xf32>
    %c0_2 = arith.constant 0 : index
    %c0_3 = arith.constant 0 : index
    %c0_4 = arith.constant 0 : index
    %2 = vector.load %arg2[%c0_2, %c0_3, %c0_4] : memref<2x16x64xf32, #tpu.memory_space<vmem>>, vector<2x16x64xf32>
    %3 = vector.shape_cast %2 : vector<2x16x64xf32> to vector<32x64xf32>
    %4 = tpu.concatenate %1, %3 in 0 : vector<32x64xf32>, vector<32x64xf32> -> vector<64x64xf32>
    %5 = arith.truncf %4 : vector<64x64xf32> to vector<64x64xbf16>
    %c0_5 = arith.constant 0 : index
    %c0_6 = arith.constant 0 : index
    %c0_7 = arith.constant 0 : index
    %6 = vector.load %arg3[%c0_5, %c0_6, %c0_7] : memref<2x64x192xbf16, #tpu.memory_space<vmem>>, vector<1x64x192xbf16>
    %7 = vector.shape_cast %6 : vector<1x64x192xbf16> to vector<64x192xbf16>
    %cst = arith.constant dense<0.000000e+00> : vector<64x192xf32>
    %8 = tpu.matmul %5, %7, %cst {dimension_numbers = #tpu.dot_dimension_numbers<[1], [0], [0], [1], [0, 0, 1, 1], [], []>} : vector<64x64xbf16>, vector<64x192xbf16>, vector<64x192xf32> -> vector<64x192xf32>
    %c0_8 = arith.constant 0 : index
    %c0_9 = arith.constant 0 : index
    %c0_10 = arith.constant 0 : index
    %9 = vector.load %arg4[%c0_8, %c0_9, %c0_10] : memref<2x1x192xf32, #tpu.memory_space<vmem>>, vector<1x1x192xf32>
    %10 = vector.shape_cast %9 : vector<1x1x192xf32> to vector<1x192xf32>
    %11 = vector.broadcast %10 : vector<1x192xf32> to vector<64x192xf32>
    %12 = arith.addf %8, %11 : vector<64x192xf32>
    %13 = vector.extract_strided_slice %12 {offsets = [0, 0], sizes = [16, 16], strides = [1, 1]} : vector<64x192xf32> to vector<16x16xf32>
    %14 = vector.extract_strided_slice %12 {offsets = [0, 64], sizes = [16, 16], strides = [1, 1]} : vector<64x192xf32> to vector<16x16xf32>
    %15 = vector.extract_strided_slice %12 {offsets = [0, 128], sizes = [16, 16], strides = [1, 1]} : vector<64x192xf32> to vector<16x16xf32>
    %16 = arith.truncf %13 : vector<16x16xf32> to vector<16x16xbf16>
    %17 = arith.truncf %14 : vector<16x16xf32> to vector<16x16xbf16>
    %cst_11 = arith.constant dense<0.000000e+00> : vector<16x16xf32>
    %18 = tpu.matmul %16, %17, %cst_11 {dimension_numbers = #tpu.dot_dimension_numbers<[1], [1], [0], [0], [0, 0, 1, 0], [], []>} : vector<16x16xbf16>, vector<16x16xbf16>, vector<16x16xf32> -> vector<16x16xf32>
    %cst_12 = arith.constant dense<0xFF800000> : vector<16xf32>
    %19 = vector.multi_reduction <maximumf>, %18, %cst_12 [1] : vector<16x16xf32> to vector<16xf32>
    %20 = vector.shape_cast %19 : vector<16xf32> to vector<16x1xf32>
    %21 = vector.broadcast %20 : vector<16x1xf32> to vector<16x16xf32>
    %22 = arith.subf %18, %21 : vector<16x16xf32>
    %23 = math.exp %22 : vector<16x16xf32>
    %cst_13 = arith.constant dense<0.000000e+00> : vector<16xf32>
    %24 = vector.multi_reduction <add>, %23, %cst_13 [1] : vector<16x16xf32> to vector<16xf32>
    %25 = vector.shape_cast %24 : vector<16xf32> to vector<16x1xf32>
    %26 = tpu.reciprocal %25 {approx = true} : vector<16x1xf32> -> vector<16x1xf32>
    %27 = vector.broadcast %26 : vector<16x1xf32> to vector<16x16xf32>
    %28 = arith.mulf %23, %27 : vector<16x16xf32>
    %29 = arith.truncf %28 : vector<16x16xf32> to vector<16x16xbf16>
    %30 = arith.truncf %15 : vector<16x16xf32> to vector<16x16xbf16>
    %cst_14 = arith.constant dense<0.000000e+00> : vector<16x16xf32>
    %31 = tpu.matmul %29, %30, %cst_14 {dimension_numbers = #tpu.dot_dimension_numbers<[1], [0], [0], [1], [0, 0, 1, 1], [], []>} : vector<16x16xbf16>, vector<16x16xbf16>, vector<16x16xf32> -> vector<16x16xf32>
    %32 = vector.extract_strided_slice %12 {offsets = [32, 0], sizes = [16, 16], strides = [1, 1]} : vector<64x192xf32> to vector<16x16xf32>
    %33 = vector.extract_strided_slice %12 {offsets = [32, 64], sizes = [16, 16], strides = [1, 1]} : vector<64x192xf32> to vector<16x16xf32>
    %34 = vector.extract_strided_slice %12 {offsets = [32, 128], sizes = [16, 16], strides = [1, 1]} : vector<64x192xf32> to vector<16x16xf32>
    %35 = arith.truncf %32 : vector<16x16xf32> to vector<16x16xbf16>
    %36 = arith.truncf %33 : vector<16x16xf32> to vector<16x16xbf16>
    %cst_15 = arith.constant dense<0.000000e+00> : vector<16x16xf32>
    %37 = tpu.matmul %35, %36, %cst_15 {dimension_numbers = #tpu.dot_dimension_numbers<[1], [1], [0], [0], [0, 0, 1, 0], [], []>} : vector<16x16xbf16>, vector<16x16xbf16>, vector<16x16xf32> -> vector<16x16xf32>
    %cst_16 = arith.constant dense<0xFF800000> : vector<16xf32>
    %38 = vector.multi_reduction <maximumf>, %37, %cst_16 [1] : vector<16x16xf32> to vector<16xf32>
    %39 = vector.shape_cast %38 : vector<16xf32> to vector<16x1xf32>
    %40 = vector.broadcast %39 : vector<16x1xf32> to vector<16x16xf32>
    %41 = arith.subf %37, %40 : vector<16x16xf32>
    %42 = math.exp %41 : vector<16x16xf32>
    %cst_17 = arith.constant dense<0.000000e+00> : vector<16xf32>
    %43 = vector.multi_reduction <add>, %42, %cst_17 [1] : vector<16x16xf32> to vector<16xf32>
    %44 = vector.shape_cast %43 : vector<16xf32> to vector<16x1xf32>
    %45 = tpu.reciprocal %44 {approx = true} : vector<16x1xf32> -> vector<16x1xf32>
    %46 = vector.broadcast %45 : vector<16x1xf32> to vector<16x16xf32>
    %47 = arith.mulf %42, %46 : vector<16x16xf32>
    %48 = arith.truncf %47 : vector<16x16xf32> to vector<16x16xbf16>
    %49 = arith.truncf %34 : vector<16x16xf32> to vector<16x16xbf16>
    %cst_18 = arith.constant dense<0.000000e+00> : vector<16x16xf32>
    %50 = tpu.matmul %48, %49, %cst_18 {dimension_numbers = #tpu.dot_dimension_numbers<[1], [0], [0], [1], [0, 0, 1, 1], [], []>} : vector<16x16xbf16>, vector<16x16xbf16>, vector<16x16xf32> -> vector<16x16xf32>
    %51 = vector.extract_strided_slice %12 {offsets = [0, 16], sizes = [16, 16], strides = [1, 1]} : vector<64x192xf32> to vector<16x16xf32>
    %52 = vector.extract_strided_slice %12 {offsets = [0, 80], sizes = [16, 16], strides = [1, 1]} : vector<64x192xf32> to vector<16x16xf32>
    %53 = vector.extract_strided_slice %12 {offsets = [0, 144], sizes = [16, 16], strides = [1, 1]} : vector<64x192xf32> to vector<16x16xf32>
    %54 = arith.truncf %51 : vector<16x16xf32> to vector<16x16xbf16>
    %55 = arith.truncf %52 : vector<16x16xf32> to vector<16x16xbf16>
    %cst_19 = arith.constant dense<0.000000e+00> : vector<16x16xf32>
    %56 = tpu.matmul %54, %55, %cst_19 {dimension_numbers = #tpu.dot_dimension_numbers<[1], [1], [0], [0], [0, 0, 1, 0], [], []>} : vector<16x16xbf16>, vector<16x16xbf16>, vector<16x16xf32> -> vector<16x16xf32>
    %cst_20 = arith.constant dense<0xFF800000> : vector<16xf32>
    %57 = vector.multi_reduction <maximumf>, %56, %cst_20 [1] : vector<16x16xf32> to vector<16xf32>
    %58 = vector.shape_cast %57 : vector<16xf32> to vector<16x1xf32>
    %59 = vector.broadcast %58 : vector<16x1xf32> to vector<16x16xf32>
    %60 = arith.subf %56, %59 : vector<16x16xf32>
    %61 = math.exp %60 : vector<16x16xf32>
    %cst_21 = arith.constant dense<0.000000e+00> : vector<16xf32>
    %62 = vector.multi_reduction <add>, %61, %cst_21 [1] : vector<16x16xf32> to vector<16xf32>
    %63 = vector.shape_cast %62 : vector<16xf32> to vector<16x1xf32>
    %64 = tpu.reciprocal %63 {approx = true} : vector<16x1xf32> -> vector<16x1xf32>
    %65 = vector.broadcast %64 : vector<16x1xf32> to vector<16x16xf32>
    %66 = arith.mulf %61, %65 : vector<16x16xf32>
    %67 = arith.truncf %66 : vector<16x16xf32> to vector<16x16xbf16>
    %68 = arith.truncf %53 : vector<16x16xf32> to vector<16x16xbf16>
    %cst_22 = arith.constant dense<0.000000e+00> : vector<16x16xf32>
    %69 = tpu.matmul %67, %68, %cst_22 {dimension_numbers = #tpu.dot_dimension_numbers<[1], [0], [0], [1], [0, 0, 1, 1], [], []>} : vector<16x16xbf16>, vector<16x16xbf16>, vector<16x16xf32> -> vector<16x16xf32>
    %70 = vector.extract_strided_slice %12 {offsets = [32, 16], sizes = [16, 16], strides = [1, 1]} : vector<64x192xf32> to vector<16x16xf32>
    %71 = vector.extract_strided_slice %12 {offsets = [32, 80], sizes = [16, 16], strides = [1, 1]} : vector<64x192xf32> to vector<16x16xf32>
    %72 = vector.extract_strided_slice %12 {offsets = [32, 144], sizes = [16, 16], strides = [1, 1]} : vector<64x192xf32> to vector<16x16xf32>
    %73 = arith.truncf %70 : vector<16x16xf32> to vector<16x16xbf16>
    %74 = arith.truncf %71 : vector<16x16xf32> to vector<16x16xbf16>
    %cst_23 = arith.constant dense<0.000000e+00> : vector<16x16xf32>
    %75 = tpu.matmul %73, %74, %cst_23 {dimension_numbers = #tpu.dot_dimension_numbers<[1], [1], [0], [0], [0, 0, 1, 0], [], []>} : vector<16x16xbf16>, vector<16x16xbf16>, vector<16x16xf32> -> vector<16x16xf32>
    %cst_24 = arith.constant dense<0xFF800000> : vector<16xf32>
    %76 = vector.multi_reduction <maximumf>, %75, %cst_24 [1] : vector<16x16xf32> to vector<16xf32>
    %77 = vector.shape_cast %76 : vector<16xf32> to vector<16x1xf32>
    %78 = vector.broadcast %77 : vector<16x1xf32> to vector<16x16xf32>
    %79 = arith.subf %75, %78 : vector<16x16xf32>
    %80 = math.exp %79 : vector<16x16xf32>
    %cst_25 = arith.constant dense<0.000000e+00> : vector<16xf32>
    %81 = vector.multi_reduction <add>, %80, %cst_25 [1] : vector<16x16xf32> to vector<16xf32>
    %82 = vector.shape_cast %81 : vector<16xf32> to vector<16x1xf32>
    %83 = tpu.reciprocal %82 {approx = true} : vector<16x1xf32> -> vector<16x1xf32>
    %84 = vector.broadcast %83 : vector<16x1xf32> to vector<16x16xf32>
    %85 = arith.mulf %80, %84 : vector<16x16xf32>
    %86 = arith.truncf %85 : vector<16x16xf32> to vector<16x16xbf16>
    %87 = arith.truncf %72 : vector<16x16xf32> to vector<16x16xbf16>
    %cst_26 = arith.constant dense<0.000000e+00> : vector<16x16xf32>
    %88 = tpu.matmul %86, %87, %cst_26 {dimension_numbers = #tpu.dot_dimension_numbers<[1], [0], [0], [1], [0, 0, 1, 1], [], []>} : vector<16x16xbf16>, vector<16x16xbf16>, vector<16x16xf32> -> vector<16x16xf32>
    %89 = vector.extract_strided_slice %12 {offsets = [0, 32], sizes = [16, 16], strides = [1, 1]} : vector<64x192xf32> to vector<16x16xf32>
    %90 = vector.extract_strided_slice %12 {offsets = [0, 96], sizes = [16, 16], strides = [1, 1]} : vector<64x192xf32> to vector<16x16xf32>
    %91 = vector.extract_strided_slice %12 {offsets = [0, 160], sizes = [16, 16], strides = [1, 1]} : vector<64x192xf32> to vector<16x16xf32>
    %92 = arith.truncf %89 : vector<16x16xf32> to vector<16x16xbf16>
    %93 = arith.truncf %90 : vector<16x16xf32> to vector<16x16xbf16>
    %cst_27 = arith.constant dense<0.000000e+00> : vector<16x16xf32>
    %94 = tpu.matmul %92, %93, %cst_27 {dimension_numbers = #tpu.dot_dimension_numbers<[1], [1], [0], [0], [0, 0, 1, 0], [], []>} : vector<16x16xbf16>, vector<16x16xbf16>, vector<16x16xf32> -> vector<16x16xf32>
    %cst_28 = arith.constant dense<0xFF800000> : vector<16xf32>
    %95 = vector.multi_reduction <maximumf>, %94, %cst_28 [1] : vector<16x16xf32> to vector<16xf32>
    %96 = vector.shape_cast %95 : vector<16xf32> to vector<16x1xf32>
    %97 = vector.broadcast %96 : vector<16x1xf32> to vector<16x16xf32>
    %98 = arith.subf %94, %97 : vector<16x16xf32>
    %99 = math.exp %98 : vector<16x16xf32>
    %cst_29 = arith.constant dense<0.000000e+00> : vector<16xf32>
    %100 = vector.multi_reduction <add>, %99, %cst_29 [1] : vector<16x16xf32> to vector<16xf32>
    %101 = vector.shape_cast %100 : vector<16xf32> to vector<16x1xf32>
    %102 = tpu.reciprocal %101 {approx = true} : vector<16x1xf32> -> vector<16x1xf32>
    %103 = vector.broadcast %102 : vector<16x1xf32> to vector<16x16xf32>
    %104 = arith.mulf %99, %103 : vector<16x16xf32>
    %105 = arith.truncf %104 : vector<16x16xf32> to vector<16x16xbf16>
    %106 = arith.truncf %91 : vector<16x16xf32> to vector<16x16xbf16>
    %cst_30 = arith.constant dense<0.000000e+00> : vector<16x16xf32>
    %107 = tpu.matmul %105, %106, %cst_30 {dimension_numbers = #tpu.dot_dimension_numbers<[1], [0], [0], [1], [0, 0, 1, 1], [], []>} : vector<16x16xbf16>, vector<16x16xbf16>, vector<16x16xf32> -> vector<16x16xf32>
    %108 = vector.extract_strided_slice %12 {offsets = [32, 32], sizes = [16, 16], strides = [1, 1]} : vector<64x192xf32> to vector<16x16xf32>
    %109 = vector.extract_strided_slice %12 {offsets = [32, 96], sizes = [16, 16], strides = [1, 1]} : vector<64x192xf32> to vector<16x16xf32>
    %110 = vector.extract_strided_slice %12 {offsets = [32, 160], sizes = [16, 16], strides = [1, 1]} : vector<64x192xf32> to vector<16x16xf32>
    %111 = arith.truncf %108 : vector<16x16xf32> to vector<16x16xbf16>
    %112 = arith.truncf %109 : vector<16x16xf32> to vector<16x16xbf16>
    %cst_31 = arith.constant dense<0.000000e+00> : vector<16x16xf32>
    %113 = tpu.matmul %111, %112, %cst_31 {dimension_numbers = #tpu.dot_dimension_numbers<[1], [1], [0], [0], [0, 0, 1, 0], [], []>} : vector<16x16xbf16>, vector<16x16xbf16>, vector<16x16xf32> -> vector<16x16xf32>
    %cst_32 = arith.constant dense<0xFF800000> : vector<16xf32>
    %114 = vector.multi_reduction <maximumf>, %113, %cst_32 [1] : vector<16x16xf32> to vector<16xf32>
    %115 = vector.shape_cast %114 : vector<16xf32> to vector<16x1xf32>
    %116 = vector.broadcast %115 : vector<16x1xf32> to vector<16x16xf32>
    %117 = arith.subf %113, %116 : vector<16x16xf32>
    %118 = math.exp %117 : vector<16x16xf32>
    %cst_33 = arith.constant dense<0.000000e+00> : vector<16xf32>
    %119 = vector.multi_reduction <add>, %118, %cst_33 [1] : vector<16x16xf32> to vector<16xf32>
    %120 = vector.shape_cast %119 : vector<16xf32> to vector<16x1xf32>
    %121 = tpu.reciprocal %120 {approx = true} : vector<16x1xf32> -> vector<16x1xf32>
    %122 = vector.broadcast %121 : vector<16x1xf32> to vector<16x16xf32>
    %123 = arith.mulf %118, %122 : vector<16x16xf32>
    %124 = arith.truncf %123 : vector<16x16xf32> to vector<16x16xbf16>
    %125 = arith.truncf %110 : vector<16x16xf32> to vector<16x16xbf16>
    %cst_34 = arith.constant dense<0.000000e+00> : vector<16x16xf32>
    %126 = tpu.matmul %124, %125, %cst_34 {dimension_numbers = #tpu.dot_dimension_numbers<[1], [0], [0], [1], [0, 0, 1, 1], [], []>} : vector<16x16xbf16>, vector<16x16xbf16>, vector<16x16xf32> -> vector<16x16xf32>
    %127 = vector.extract_strided_slice %12 {offsets = [0, 48], sizes = [16, 16], strides = [1, 1]} : vector<64x192xf32> to vector<16x16xf32>
    %128 = vector.extract_strided_slice %12 {offsets = [0, 112], sizes = [16, 16], strides = [1, 1]} : vector<64x192xf32> to vector<16x16xf32>
    %129 = vector.extract_strided_slice %12 {offsets = [0, 176], sizes = [16, 16], strides = [1, 1]} : vector<64x192xf32> to vector<16x16xf32>
    %130 = arith.truncf %127 : vector<16x16xf32> to vector<16x16xbf16>
    %131 = arith.truncf %128 : vector<16x16xf32> to vector<16x16xbf16>
    %cst_35 = arith.constant dense<0.000000e+00> : vector<16x16xf32>
    %132 = tpu.matmul %130, %131, %cst_35 {dimension_numbers = #tpu.dot_dimension_numbers<[1], [1], [0], [0], [0, 0, 1, 0], [], []>} : vector<16x16xbf16>, vector<16x16xbf16>, vector<16x16xf32> -> vector<16x16xf32>
    %cst_36 = arith.constant dense<0xFF800000> : vector<16xf32>
    %133 = vector.multi_reduction <maximumf>, %132, %cst_36 [1] : vector<16x16xf32> to vector<16xf32>
    %134 = vector.shape_cast %133 : vector<16xf32> to vector<16x1xf32>
    %135 = vector.broadcast %134 : vector<16x1xf32> to vector<16x16xf32>
    %136 = arith.subf %132, %135 : vector<16x16xf32>
    %137 = math.exp %136 : vector<16x16xf32>
    %cst_37 = arith.constant dense<0.000000e+00> : vector<16xf32>
    %138 = vector.multi_reduction <add>, %137, %cst_37 [1] : vector<16x16xf32> to vector<16xf32>
    %139 = vector.shape_cast %138 : vector<16xf32> to vector<16x1xf32>
    %140 = tpu.reciprocal %139 {approx = true} : vector<16x1xf32> -> vector<16x1xf32>
    %141 = vector.broadcast %140 : vector<16x1xf32> to vector<16x16xf32>
    %142 = arith.mulf %137, %141 : vector<16x16xf32>
    %143 = arith.truncf %142 : vector<16x16xf32> to vector<16x16xbf16>
    %144 = arith.truncf %129 : vector<16x16xf32> to vector<16x16xbf16>
    %cst_38 = arith.constant dense<0.000000e+00> : vector<16x16xf32>
    %145 = tpu.matmul %143, %144, %cst_38 {dimension_numbers = #tpu.dot_dimension_numbers<[1], [0], [0], [1], [0, 0, 1, 1], [], []>} : vector<16x16xbf16>, vector<16x16xbf16>, vector<16x16xf32> -> vector<16x16xf32>
    %146 = vector.extract_strided_slice %12 {offsets = [32, 48], sizes = [16, 16], strides = [1, 1]} : vector<64x192xf32> to vector<16x16xf32>
    %147 = vector.extract_strided_slice %12 {offsets = [32, 112], sizes = [16, 16], strides = [1, 1]} : vector<64x192xf32> to vector<16x16xf32>
    %148 = vector.extract_strided_slice %12 {offsets = [32, 176], sizes = [16, 16], strides = [1, 1]} : vector<64x192xf32> to vector<16x16xf32>
    %149 = arith.truncf %146 : vector<16x16xf32> to vector<16x16xbf16>
    %150 = arith.truncf %147 : vector<16x16xf32> to vector<16x16xbf16>
    %cst_39 = arith.constant dense<0.000000e+00> : vector<16x16xf32>
    %151 = tpu.matmul %149, %150, %cst_39 {dimension_numbers = #tpu.dot_dimension_numbers<[1], [1], [0], [0], [0, 0, 1, 0], [], []>} : vector<16x16xbf16>, vector<16x16xbf16>, vector<16x16xf32> -> vector<16x16xf32>
    %cst_40 = arith.constant dense<0xFF800000> : vector<16xf32>
    %152 = vector.multi_reduction <maximumf>, %151, %cst_40 [1] : vector<16x16xf32> to vector<16xf32>
    %153 = vector.shape_cast %152 : vector<16xf32> to vector<16x1xf32>
    %154 = vector.broadcast %153 : vector<16x1xf32> to vector<16x16xf32>
    %155 = arith.subf %151, %154 : vector<16x16xf32>
    %156 = math.exp %155 : vector<16x16xf32>
    %cst_41 = arith.constant dense<0.000000e+00> : vector<16xf32>
    %157 = vector.multi_reduction <add>, %156, %cst_41 [1] : vector<16x16xf32> to vector<16xf32>
    %158 = vector.shape_cast %157 : vector<16xf32> to vector<16x1xf32>
    %159 = tpu.reciprocal %158 {approx = true} : vector<16x1xf32> -> vector<16x1xf32>
    %160 = vector.broadcast %159 : vector<16x1xf32> to vector<16x16xf32>
    %161 = arith.mulf %156, %160 : vector<16x16xf32>
    %162 = arith.truncf %161 : vector<16x16xf32> to vector<16x16xbf16>
    %163 = arith.truncf %148 : vector<16x16xf32> to vector<16x16xbf16>
    %cst_42 = arith.constant dense<0.000000e+00> : vector<16x16xf32>
    %164 = tpu.matmul %162, %163, %cst_42 {dimension_numbers = #tpu.dot_dimension_numbers<[1], [0], [0], [1], [0, 0, 1, 1], [], []>} : vector<16x16xbf16>, vector<16x16xbf16>, vector<16x16xf32> -> vector<16x16xf32>
    %165 = tpu.concatenate %31, %69, %107, %145 in 1 : vector<16x16xf32>, vector<16x16xf32>, vector<16x16xf32>, vector<16x16xf32> -> vector<16x64xf32>
    %166 = tpu.concatenate %50, %88, %126, %164 in 1 : vector<16x16xf32>, vector<16x16xf32>, vector<16x16xf32>, vector<16x16xf32> -> vector<16x64xf32>
    %167 = vector.extract_strided_slice %12 {offsets = [16, 0], sizes = [16, 16], strides = [1, 1]} : vector<64x192xf32> to vector<16x16xf32>
    %168 = vector.extract_strided_slice %12 {offsets = [16, 64], sizes = [16, 16], strides = [1, 1]} : vector<64x192xf32> to vector<16x16xf32>
    %169 = vector.extract_strided_slice %12 {offsets = [16, 128], sizes = [16, 16], strides = [1, 1]} : vector<64x192xf32> to vector<16x16xf32>
    %170 = arith.truncf %167 : vector<16x16xf32> to vector<16x16xbf16>
    %171 = arith.truncf %168 : vector<16x16xf32> to vector<16x16xbf16>
    %cst_43 = arith.constant dense<0.000000e+00> : vector<16x16xf32>
    %172 = tpu.matmul %170, %171, %cst_43 {dimension_numbers = #tpu.dot_dimension_numbers<[1], [1], [0], [0], [0, 0, 1, 0], [], []>} : vector<16x16xbf16>, vector<16x16xbf16>, vector<16x16xf32> -> vector<16x16xf32>
    %cst_44 = arith.constant dense<0xFF800000> : vector<16xf32>
    %173 = vector.multi_reduction <maximumf>, %172, %cst_44 [1] : vector<16x16xf32> to vector<16xf32>
    %174 = vector.shape_cast %173 : vector<16xf32> to vector<16x1xf32>
    %175 = vector.broadcast %174 : vector<16x1xf32> to vector<16x16xf32>
    %176 = arith.subf %172, %175 : vector<16x16xf32>
    %177 = math.exp %176 : vector<16x16xf32>
    %cst_45 = arith.constant dense<0.000000e+00> : vector<16xf32>
    %178 = vector.multi_reduction <add>, %177, %cst_45 [1] : vector<16x16xf32> to vector<16xf32>
    %179 = vector.shape_cast %178 : vector<16xf32> to vector<16x1xf32>
    %180 = tpu.reciprocal %179 {approx = true} : vector<16x1xf32> -> vector<16x1xf32>
    %181 = vector.broadcast %180 : vector<16x1xf32> to vector<16x16xf32>
    %182 = arith.mulf %177, %181 : vector<16x16xf32>
    %183 = arith.truncf %182 : vector<16x16xf32> to vector<16x16xbf16>
    %184 = arith.truncf %169 : vector<16x16xf32> to vector<16x16xbf16>
    %cst_46 = arith.constant dense<0.000000e+00> : vector<16x16xf32>
    %185 = tpu.matmul %183, %184, %cst_46 {dimension_numbers = #tpu.dot_dimension_numbers<[1], [0], [0], [1], [0, 0, 1, 1], [], []>} : vector<16x16xbf16>, vector<16x16xbf16>, vector<16x16xf32> -> vector<16x16xf32>
    %186 = vector.extract_strided_slice %12 {offsets = [48, 0], sizes = [16, 16], strides = [1, 1]} : vector<64x192xf32> to vector<16x16xf32>
    %187 = vector.extract_strided_slice %12 {offsets = [48, 64], sizes = [16, 16], strides = [1, 1]} : vector<64x192xf32> to vector<16x16xf32>
    %188 = vector.extract_strided_slice %12 {offsets = [48, 128], sizes = [16, 16], strides = [1, 1]} : vector<64x192xf32> to vector<16x16xf32>
    %189 = arith.truncf %186 : vector<16x16xf32> to vector<16x16xbf16>
    %190 = arith.truncf %187 : vector<16x16xf32> to vector<16x16xbf16>
    %cst_47 = arith.constant dense<0.000000e+00> : vector<16x16xf32>
    %191 = tpu.matmul %189, %190, %cst_47 {dimension_numbers = #tpu.dot_dimension_numbers<[1], [1], [0], [0], [0, 0, 1, 0], [], []>} : vector<16x16xbf16>, vector<16x16xbf16>, vector<16x16xf32> -> vector<16x16xf32>
    %cst_48 = arith.constant dense<0xFF800000> : vector<16xf32>
    %192 = vector.multi_reduction <maximumf>, %191, %cst_48 [1] : vector<16x16xf32> to vector<16xf32>
    %193 = vector.shape_cast %192 : vector<16xf32> to vector<16x1xf32>
    %194 = vector.broadcast %193 : vector<16x1xf32> to vector<16x16xf32>
    %195 = arith.subf %191, %194 : vector<16x16xf32>
    %196 = math.exp %195 : vector<16x16xf32>
    %cst_49 = arith.constant dense<0.000000e+00> : vector<16xf32>
    %197 = vector.multi_reduction <add>, %196, %cst_49 [1] : vector<16x16xf32> to vector<16xf32>
    %198 = vector.shape_cast %197 : vector<16xf32> to vector<16x1xf32>
    %199 = tpu.reciprocal %198 {approx = true} : vector<16x1xf32> -> vector<16x1xf32>
    %200 = vector.broadcast %199 : vector<16x1xf32> to vector<16x16xf32>
    %201 = arith.mulf %196, %200 : vector<16x16xf32>
    %202 = arith.truncf %201 : vector<16x16xf32> to vector<16x16xbf16>
    %203 = arith.truncf %188 : vector<16x16xf32> to vector<16x16xbf16>
    %cst_50 = arith.constant dense<0.000000e+00> : vector<16x16xf32>
    %204 = tpu.matmul %202, %203, %cst_50 {dimension_numbers = #tpu.dot_dimension_numbers<[1], [0], [0], [1], [0, 0, 1, 1], [], []>} : vector<16x16xbf16>, vector<16x16xbf16>, vector<16x16xf32> -> vector<16x16xf32>
    %205 = vector.extract_strided_slice %12 {offsets = [16, 16], sizes = [16, 16], strides = [1, 1]} : vector<64x192xf32> to vector<16x16xf32>
    %206 = vector.extract_strided_slice %12 {offsets = [16, 80], sizes = [16, 16], strides = [1, 1]} : vector<64x192xf32> to vector<16x16xf32>
    %207 = vector.extract_strided_slice %12 {offsets = [16, 144], sizes = [16, 16], strides = [1, 1]} : vector<64x192xf32> to vector<16x16xf32>
    %208 = arith.truncf %205 : vector<16x16xf32> to vector<16x16xbf16>
    %209 = arith.truncf %206 : vector<16x16xf32> to vector<16x16xbf16>
    %cst_51 = arith.constant dense<0.000000e+00> : vector<16x16xf32>
    %210 = tpu.matmul %208, %209, %cst_51 {dimension_numbers = #tpu.dot_dimension_numbers<[1], [1], [0], [0], [0, 0, 1, 0], [], []>} : vector<16x16xbf16>, vector<16x16xbf16>, vector<16x16xf32> -> vector<16x16xf32>
    %cst_52 = arith.constant dense<0xFF800000> : vector<16xf32>
    %211 = vector.multi_reduction <maximumf>, %210, %cst_52 [1] : vector<16x16xf32> to vector<16xf32>
    %212 = vector.shape_cast %211 : vector<16xf32> to vector<16x1xf32>
    %213 = vector.broadcast %212 : vector<16x1xf32> to vector<16x16xf32>
    %214 = arith.subf %210, %213 : vector<16x16xf32>
    %215 = math.exp %214 : vector<16x16xf32>
    %cst_53 = arith.constant dense<0.000000e+00> : vector<16xf32>
    %216 = vector.multi_reduction <add>, %215, %cst_53 [1] : vector<16x16xf32> to vector<16xf32>
    %217 = vector.shape_cast %216 : vector<16xf32> to vector<16x1xf32>
    %218 = tpu.reciprocal %217 {approx = true} : vector<16x1xf32> -> vector<16x1xf32>
    %219 = vector.broadcast %218 : vector<16x1xf32> to vector<16x16xf32>
    %220 = arith.mulf %215, %219 : vector<16x16xf32>
    %221 = arith.truncf %220 : vector<16x16xf32> to vector<16x16xbf16>
    %222 = arith.truncf %207 : vector<16x16xf32> to vector<16x16xbf16>
    %cst_54 = arith.constant dense<0.000000e+00> : vector<16x16xf32>
    %223 = tpu.matmul %221, %222, %cst_54 {dimension_numbers = #tpu.dot_dimension_numbers<[1], [0], [0], [1], [0, 0, 1, 1], [], []>} : vector<16x16xbf16>, vector<16x16xbf16>, vector<16x16xf32> -> vector<16x16xf32>
    %224 = vector.extract_strided_slice %12 {offsets = [48, 16], sizes = [16, 16], strides = [1, 1]} : vector<64x192xf32> to vector<16x16xf32>
    %225 = vector.extract_strided_slice %12 {offsets = [48, 80], sizes = [16, 16], strides = [1, 1]} : vector<64x192xf32> to vector<16x16xf32>
    %226 = vector.extract_strided_slice %12 {offsets = [48, 144], sizes = [16, 16], strides = [1, 1]} : vector<64x192xf32> to vector<16x16xf32>
    %227 = arith.truncf %224 : vector<16x16xf32> to vector<16x16xbf16>
    %228 = arith.truncf %225 : vector<16x16xf32> to vector<16x16xbf16>
    %cst_55 = arith.constant dense<0.000000e+00> : vector<16x16xf32>
    %229 = tpu.matmul %227, %228, %cst_55 {dimension_numbers = #tpu.dot_dimension_numbers<[1], [1], [0], [0], [0, 0, 1, 0], [], []>} : vector<16x16xbf16>, vector<16x16xbf16>, vector<16x16xf32> -> vector<16x16xf32>
    %cst_56 = arith.constant dense<0xFF800000> : vector<16xf32>
    %230 = vector.multi_reduction <maximumf>, %229, %cst_56 [1] : vector<16x16xf32> to vector<16xf32>
    %231 = vector.shape_cast %230 : vector<16xf32> to vector<16x1xf32>
    %232 = vector.broadcast %231 : vector<16x1xf32> to vector<16x16xf32>
    %233 = arith.subf %229, %232 : vector<16x16xf32>
    %234 = math.exp %233 : vector<16x16xf32>
    %cst_57 = arith.constant dense<0.000000e+00> : vector<16xf32>
    %235 = vector.multi_reduction <add>, %234, %cst_57 [1] : vector<16x16xf32> to vector<16xf32>
    %236 = vector.shape_cast %235 : vector<16xf32> to vector<16x1xf32>
    %237 = tpu.reciprocal %236 {approx = true} : vector<16x1xf32> -> vector<16x1xf32>
    %238 = vector.broadcast %237 : vector<16x1xf32> to vector<16x16xf32>
    %239 = arith.mulf %234, %238 : vector<16x16xf32>
    %240 = arith.truncf %239 : vector<16x16xf32> to vector<16x16xbf16>
    %241 = arith.truncf %226 : vector<16x16xf32> to vector<16x16xbf16>
    %cst_58 = arith.constant dense<0.000000e+00> : vector<16x16xf32>
    %242 = tpu.matmul %240, %241, %cst_58 {dimension_numbers = #tpu.dot_dimension_numbers<[1], [0], [0], [1], [0, 0, 1, 1], [], []>} : vector<16x16xbf16>, vector<16x16xbf16>, vector<16x16xf32> -> vector<16x16xf32>
    %243 = vector.extract_strided_slice %12 {offsets = [16, 32], sizes = [16, 16], strides = [1, 1]} : vector<64x192xf32> to vector<16x16xf32>
    %244 = vector.extract_strided_slice %12 {offsets = [16, 96], sizes = [16, 16], strides = [1, 1]} : vector<64x192xf32> to vector<16x16xf32>
    %245 = vector.extract_strided_slice %12 {offsets = [16, 160], sizes = [16, 16], strides = [1, 1]} : vector<64x192xf32> to vector<16x16xf32>
    %246 = arith.truncf %243 : vector<16x16xf32> to vector<16x16xbf16>
    %247 = arith.truncf %244 : vector<16x16xf32> to vector<16x16xbf16>
    %cst_59 = arith.constant dense<0.000000e+00> : vector<16x16xf32>
    %248 = tpu.matmul %246, %247, %cst_59 {dimension_numbers = #tpu.dot_dimension_numbers<[1], [1], [0], [0], [0, 0, 1, 0], [], []>} : vector<16x16xbf16>, vector<16x16xbf16>, vector<16x16xf32> -> vector<16x16xf32>
    %cst_60 = arith.constant dense<0xFF800000> : vector<16xf32>
    %249 = vector.multi_reduction <maximumf>, %248, %cst_60 [1] : vector<16x16xf32> to vector<16xf32>
    %250 = vector.shape_cast %249 : vector<16xf32> to vector<16x1xf32>
    %251 = vector.broadcast %250 : vector<16x1xf32> to vector<16x16xf32>
    %252 = arith.subf %248, %251 : vector<16x16xf32>
    %253 = math.exp %252 : vector<16x16xf32>
    %cst_61 = arith.constant dense<0.000000e+00> : vector<16xf32>
    %254 = vector.multi_reduction <add>, %253, %cst_61 [1] : vector<16x16xf32> to vector<16xf32>
    %255 = vector.shape_cast %254 : vector<16xf32> to vector<16x1xf32>
    %256 = tpu.reciprocal %255 {approx = true} : vector<16x1xf32> -> vector<16x1xf32>
    %257 = vector.broadcast %256 : vector<16x1xf32> to vector<16x16xf32>
    %258 = arith.mulf %253, %257 : vector<16x16xf32>
    %259 = arith.truncf %258 : vector<16x16xf32> to vector<16x16xbf16>
    %260 = arith.truncf %245 : vector<16x16xf32> to vector<16x16xbf16>
    %cst_62 = arith.constant dense<0.000000e+00> : vector<16x16xf32>
    %261 = tpu.matmul %259, %260, %cst_62 {dimension_numbers = #tpu.dot_dimension_numbers<[1], [0], [0], [1], [0, 0, 1, 1], [], []>} : vector<16x16xbf16>, vector<16x16xbf16>, vector<16x16xf32> -> vector<16x16xf32>
    %262 = vector.extract_strided_slice %12 {offsets = [48, 32], sizes = [16, 16], strides = [1, 1]} : vector<64x192xf32> to vector<16x16xf32>
    %263 = vector.extract_strided_slice %12 {offsets = [48, 96], sizes = [16, 16], strides = [1, 1]} : vector<64x192xf32> to vector<16x16xf32>
    %264 = vector.extract_strided_slice %12 {offsets = [48, 160], sizes = [16, 16], strides = [1, 1]} : vector<64x192xf32> to vector<16x16xf32>
    %265 = arith.truncf %262 : vector<16x16xf32> to vector<16x16xbf16>
    %266 = arith.truncf %263 : vector<16x16xf32> to vector<16x16xbf16>
    %cst_63 = arith.constant dense<0.000000e+00> : vector<16x16xf32>
    %267 = tpu.matmul %265, %266, %cst_63 {dimension_numbers = #tpu.dot_dimension_numbers<[1], [1], [0], [0], [0, 0, 1, 0], [], []>} : vector<16x16xbf16>, vector<16x16xbf16>, vector<16x16xf32> -> vector<16x16xf32>
    %cst_64 = arith.constant dense<0xFF800000> : vector<16xf32>
    %268 = vector.multi_reduction <maximumf>, %267, %cst_64 [1] : vector<16x16xf32> to vector<16xf32>
    %269 = vector.shape_cast %268 : vector<16xf32> to vector<16x1xf32>
    %270 = vector.broadcast %269 : vector<16x1xf32> to vector<16x16xf32>
    %271 = arith.subf %267, %270 : vector<16x16xf32>
    %272 = math.exp %271 : vector<16x16xf32>
    %cst_65 = arith.constant dense<0.000000e+00> : vector<16xf32>
    %273 = vector.multi_reduction <add>, %272, %cst_65 [1] : vector<16x16xf32> to vector<16xf32>
    %274 = vector.shape_cast %273 : vector<16xf32> to vector<16x1xf32>
    %275 = tpu.reciprocal %274 {approx = true} : vector<16x1xf32> -> vector<16x1xf32>
    %276 = vector.broadcast %275 : vector<16x1xf32> to vector<16x16xf32>
    %277 = arith.mulf %272, %276 : vector<16x16xf32>
    %278 = arith.truncf %277 : vector<16x16xf32> to vector<16x16xbf16>
    %279 = arith.truncf %264 : vector<16x16xf32> to vector<16x16xbf16>
    %cst_66 = arith.constant dense<0.000000e+00> : vector<16x16xf32>
    %280 = tpu.matmul %278, %279, %cst_66 {dimension_numbers = #tpu.dot_dimension_numbers<[1], [0], [0], [1], [0, 0, 1, 1], [], []>} : vector<16x16xbf16>, vector<16x16xbf16>, vector<16x16xf32> -> vector<16x16xf32>
    %281 = vector.extract_strided_slice %12 {offsets = [16, 48], sizes = [16, 16], strides = [1, 1]} : vector<64x192xf32> to vector<16x16xf32>
    %282 = vector.extract_strided_slice %12 {offsets = [16, 112], sizes = [16, 16], strides = [1, 1]} : vector<64x192xf32> to vector<16x16xf32>
    %283 = vector.extract_strided_slice %12 {offsets = [16, 176], sizes = [16, 16], strides = [1, 1]} : vector<64x192xf32> to vector<16x16xf32>
    %284 = arith.truncf %281 : vector<16x16xf32> to vector<16x16xbf16>
    %285 = arith.truncf %282 : vector<16x16xf32> to vector<16x16xbf16>
    %cst_67 = arith.constant dense<0.000000e+00> : vector<16x16xf32>
    %286 = tpu.matmul %284, %285, %cst_67 {dimension_numbers = #tpu.dot_dimension_numbers<[1], [1], [0], [0], [0, 0, 1, 0], [], []>} : vector<16x16xbf16>, vector<16x16xbf16>, vector<16x16xf32> -> vector<16x16xf32>
    %cst_68 = arith.constant dense<0xFF800000> : vector<16xf32>
    %287 = vector.multi_reduction <maximumf>, %286, %cst_68 [1] : vector<16x16xf32> to vector<16xf32>
    %288 = vector.shape_cast %287 : vector<16xf32> to vector<16x1xf32>
    %289 = vector.broadcast %288 : vector<16x1xf32> to vector<16x16xf32>
    %290 = arith.subf %286, %289 : vector<16x16xf32>
    %291 = math.exp %290 : vector<16x16xf32>
    %cst_69 = arith.constant dense<0.000000e+00> : vector<16xf32>
    %292 = vector.multi_reduction <add>, %291, %cst_69 [1] : vector<16x16xf32> to vector<16xf32>
    %293 = vector.shape_cast %292 : vector<16xf32> to vector<16x1xf32>
    %294 = tpu.reciprocal %293 {approx = true} : vector<16x1xf32> -> vector<16x1xf32>
    %295 = vector.broadcast %294 : vector<16x1xf32> to vector<16x16xf32>
    %296 = arith.mulf %291, %295 : vector<16x16xf32>
    %297 = arith.truncf %296 : vector<16x16xf32> to vector<16x16xbf16>
    %298 = arith.truncf %283 : vector<16x16xf32> to vector<16x16xbf16>
    %cst_70 = arith.constant dense<0.000000e+00> : vector<16x16xf32>
    %299 = tpu.matmul %297, %298, %cst_70 {dimension_numbers = #tpu.dot_dimension_numbers<[1], [0], [0], [1], [0, 0, 1, 1], [], []>} : vector<16x16xbf16>, vector<16x16xbf16>, vector<16x16xf32> -> vector<16x16xf32>
    %300 = vector.extract_strided_slice %12 {offsets = [48, 48], sizes = [16, 16], strides = [1, 1]} : vector<64x192xf32> to vector<16x16xf32>
    %301 = vector.extract_strided_slice %12 {offsets = [48, 112], sizes = [16, 16], strides = [1, 1]} : vector<64x192xf32> to vector<16x16xf32>
    %302 = vector.extract_strided_slice %12 {offsets = [48, 176], sizes = [16, 16], strides = [1, 1]} : vector<64x192xf32> to vector<16x16xf32>
    %303 = arith.truncf %300 : vector<16x16xf32> to vector<16x16xbf16>
    %304 = arith.truncf %301 : vector<16x16xf32> to vector<16x16xbf16>
    %cst_71 = arith.constant dense<0.000000e+00> : vector<16x16xf32>
    %305 = tpu.matmul %303, %304, %cst_71 {dimension_numbers = #tpu.dot_dimension_numbers<[1], [1], [0], [0], [0, 0, 1, 0], [], []>} : vector<16x16xbf16>, vector<16x16xbf16>, vector<16x16xf32> -> vector<16x16xf32>
    %cst_72 = arith.constant dense<0xFF800000> : vector<16xf32>
    %306 = vector.multi_reduction <maximumf>, %305, %cst_72 [1] : vector<16x16xf32> to vector<16xf32>
    %307 = vector.shape_cast %306 : vector<16xf32> to vector<16x1xf32>
    %308 = vector.broadcast %307 : vector<16x1xf32> to vector<16x16xf32>
    %309 = arith.subf %305, %308 : vector<16x16xf32>
    %310 = math.exp %309 : vector<16x16xf32>
    %cst_73 = arith.constant dense<0.000000e+00> : vector<16xf32>
    %311 = vector.multi_reduction <add>, %310, %cst_73 [1] : vector<16x16xf32> to vector<16xf32>
    %312 = vector.shape_cast %311 : vector<16xf32> to vector<16x1xf32>
    %313 = tpu.reciprocal %312 {approx = true} : vector<16x1xf32> -> vector<16x1xf32>
    %314 = vector.broadcast %313 : vector<16x1xf32> to vector<16x16xf32>
    %315 = arith.mulf %310, %314 : vector<16x16xf32>
    %316 = arith.truncf %315 : vector<16x16xf32> to vector<16x16xbf16>
    %317 = arith.truncf %302 : vector<16x16xf32> to vector<16x16xbf16>
    %cst_74 = arith.constant dense<0.000000e+00> : vector<16x16xf32>
    %318 = tpu.matmul %316, %317, %cst_74 {dimension_numbers = #tpu.dot_dimension_numbers<[1], [0], [0], [1], [0, 0, 1, 1], [], []>} : vector<16x16xbf16>, vector<16x16xbf16>, vector<16x16xf32> -> vector<16x16xf32>
    %319 = tpu.concatenate %185, %223, %261, %299 in 1 : vector<16x16xf32>, vector<16x16xf32>, vector<16x16xf32>, vector<16x16xf32> -> vector<16x64xf32>
    %320 = tpu.concatenate %204, %242, %280, %318 in 1 : vector<16x16xf32>, vector<16x16xf32>, vector<16x16xf32>, vector<16x16xf32> -> vector<16x64xf32>
    %321 = tpu.concatenate %165, %319, %166, %320 in 0 : vector<16x64xf32>, vector<16x64xf32>, vector<16x64xf32>, vector<16x64xf32> -> vector<64x64xf32>
    %322 = arith.truncf %321 : vector<64x64xf32> to vector<64x64xbf16>
    %c0_75 = arith.constant 0 : index
    %c0_76 = arith.constant 0 : index
    %c0_77 = arith.constant 0 : index
    %323 = vector.load %arg5[%c0_75, %c0_76, %c0_77] : memref<2x64x64xbf16, #tpu.memory_space<vmem>>, vector<1x64x64xbf16>
    %324 = vector.shape_cast %323 : vector<1x64x64xbf16> to vector<64x64xbf16>
    %cst_78 = arith.constant dense<0.000000e+00> : vector<64x64xf32>
    %325 = tpu.matmul %322, %324, %cst_78 {dimension_numbers = #tpu.dot_dimension_numbers<[1], [0], [0], [1], [0, 0, 1, 1], [], []>} : vector<64x64xbf16>, vector<64x64xbf16>, vector<64x64xf32> -> vector<64x64xf32>
    %c0_79 = arith.constant 0 : index
    %c0_80 = arith.constant 0 : index
    %c0_81 = arith.constant 0 : index
    %326 = vector.load %arg6[%c0_79, %c0_80, %c0_81] : memref<2x1x64xf32, #tpu.memory_space<vmem>>, vector<1x1x64xf32>
    %327 = vector.shape_cast %326 : vector<1x1x64xf32> to vector<1x64xf32>
    %328 = vector.broadcast %327 : vector<1x64xf32> to vector<64x64xf32>
    %329 = arith.addf %325, %328 : vector<64x64xf32>
    %c0_82 = arith.constant 0 : index
    %c0_83 = arith.constant 0 : index
    %c0_84 = arith.constant 0 : index
    %330 = vector.load %arg7[%c0_82, %c0_83, %c0_84] : memref<2x64x128xbf16, #tpu.memory_space<vmem>>, vector<1x64x128xbf16>
    %331 = vector.shape_cast %330 : vector<1x64x128xbf16> to vector<64x128xbf16>
    %cst_85 = arith.constant dense<0.000000e+00> : vector<64x128xf32>
    %332 = tpu.matmul %5, %331, %cst_85 {dimension_numbers = #tpu.dot_dimension_numbers<[1], [0], [0], [1], [0, 0, 1, 1], [], []>} : vector<64x64xbf16>, vector<64x128xbf16>, vector<64x128xf32> -> vector<64x128xf32>
    %333 = arith.truncf %329 : vector<64x64xf32> to vector<64x64xbf16>
    %c0_86 = arith.constant 0 : index
    %c0_87 = arith.constant 0 : index
    %c0_88 = arith.constant 0 : index
    %334 = vector.load %arg8[%c0_86, %c0_87, %c0_88] : memref<2x64x128xbf16, #tpu.memory_space<vmem>>, vector<1x64x128xbf16>
    %335 = vector.shape_cast %334 : vector<1x64x128xbf16> to vector<64x128xbf16>
    %cst_89 = arith.constant dense<0.000000e+00> : vector<64x128xf32>
    %336 = tpu.matmul %333, %335, %cst_89 {dimension_numbers = #tpu.dot_dimension_numbers<[1], [0], [0], [1], [0, 0, 1, 1], [], []>} : vector<64x64xbf16>, vector<64x128xbf16>, vector<64x128xf32> -> vector<64x128xf32>
    %337 = arith.addf %332, %336 : vector<64x128xf32>
    %c0_90 = arith.constant 0 : index
    %c0_91 = arith.constant 0 : index
    %c0_92 = arith.constant 0 : index
    %338 = vector.load %arg9[%c0_90, %c0_91, %c0_92] : memref<2x1x128xf32, #tpu.memory_space<vmem>>, vector<1x1x128xf32>
    %339 = vector.shape_cast %338 : vector<1x1x128xf32> to vector<1x128xf32>
    %340 = vector.broadcast %339 : vector<1x128xf32> to vector<64x128xf32>
    %341 = arith.mulf %337, %340 : vector<64x128xf32>
    %c0_93 = arith.constant 0 : index
    %c0_94 = arith.constant 0 : index
    %c0_95 = arith.constant 0 : index
    %342 = vector.load %arg10[%c0_93, %c0_94, %c0_95] : memref<2x1x128xf32, #tpu.memory_space<vmem>>, vector<1x1x128xf32>
    %343 = vector.shape_cast %342 : vector<1x1x128xf32> to vector<1x128xf32>
    %344 = vector.broadcast %343 : vector<1x128xf32> to vector<64x128xf32>
    %345 = arith.addf %341, %344 : vector<64x128xf32>
    %cst_96 = arith.constant 0.000000e+00 : f32
    %346 = vector.broadcast %cst_96 : f32 to vector<64x128xf32>
    %347 = arith.maximumf %345, %346 : vector<64x128xf32>
    %348 = arith.truncf %347 : vector<64x128xf32> to vector<64x128xbf16>
    %c0_97 = arith.constant 0 : index
    %c0_98 = arith.constant 0 : index
    %c0_99 = arith.constant 0 : index
    %349 = vector.load %arg11[%c0_97, %c0_98, %c0_99] : memref<2x128x64xbf16, #tpu.memory_space<vmem>>, vector<1x128x64xbf16>
    %350 = vector.shape_cast %349 : vector<1x128x64xbf16> to vector<128x64xbf16>
    %cst_100 = arith.constant dense<0.000000e+00> : vector<64x64xf32>
    %351 = tpu.matmul %348, %350, %cst_100 {dimension_numbers = #tpu.dot_dimension_numbers<[1], [0], [0], [1], [0, 0, 1, 1], [], []>} : vector<64x128xbf16>, vector<128x64xbf16>, vector<64x64xf32> -> vector<64x64xf32>
    %c0_101 = arith.constant 0 : index
    %c0_102 = arith.constant 0 : index
    %c0_103 = arith.constant 0 : index
    %352 = vector.load %arg12[%c0_101, %c0_102, %c0_103] : memref<2x1x64xf32, #tpu.memory_space<vmem>>, vector<1x1x64xf32>
    %353 = vector.shape_cast %352 : vector<1x1x64xf32> to vector<1x64xf32>
    %354 = vector.broadcast %353 : vector<1x64xf32> to vector<64x64xf32>
    %355 = arith.addf %351, %354 : vector<64x64xf32>
    %356 = arith.addf %4, %355 : vector<64x64xf32>
    %357 = arith.truncf %356 : vector<64x64xf32> to vector<64x64xbf16>
    %c1 = arith.constant 1 : index
    %c0_104 = arith.constant 0 : index
    %c0_105 = arith.constant 0 : index
    %358 = vector.load %arg3[%c1, %c0_104, %c0_105] : memref<2x64x192xbf16, #tpu.memory_space<vmem>>, vector<1x64x192xbf16>
    %359 = vector.shape_cast %358 : vector<1x64x192xbf16> to vector<64x192xbf16>
    %cst_106 = arith.constant dense<0.000000e+00> : vector<64x192xf32>
    %360 = tpu.matmul %357, %359, %cst_106 {dimension_numbers = #tpu.dot_dimension_numbers<[1], [0], [0], [1], [0, 0, 1, 1], [], []>} : vector<64x64xbf16>, vector<64x192xbf16>, vector<64x192xf32> -> vector<64x192xf32>
    %c1_107 = arith.constant 1 : index
    %c0_108 = arith.constant 0 : index
    %c0_109 = arith.constant 0 : index
    %361 = vector.load %arg4[%c1_107, %c0_108, %c0_109] : memref<2x1x192xf32, #tpu.memory_space<vmem>>, vector<1x1x192xf32>
    %362 = vector.shape_cast %361 : vector<1x1x192xf32> to vector<1x192xf32>
    %363 = vector.broadcast %362 : vector<1x192xf32> to vector<64x192xf32>
    %364 = arith.addf %360, %363 : vector<64x192xf32>
    %365 = vector.extract_strided_slice %364 {offsets = [0, 0], sizes = [16, 16], strides = [1, 1]} : vector<64x192xf32> to vector<16x16xf32>
    %366 = vector.extract_strided_slice %364 {offsets = [32, 64], sizes = [16, 16], strides = [1, 1]} : vector<64x192xf32> to vector<16x16xf32>
    %367 = vector.extract_strided_slice %364 {offsets = [32, 128], sizes = [16, 16], strides = [1, 1]} : vector<64x192xf32> to vector<16x16xf32>
    %368 = arith.truncf %365 : vector<16x16xf32> to vector<16x16xbf16>
    %369 = arith.truncf %366 : vector<16x16xf32> to vector<16x16xbf16>
    %cst_110 = arith.constant dense<0.000000e+00> : vector<16x16xf32>
    %370 = tpu.matmul %368, %369, %cst_110 {dimension_numbers = #tpu.dot_dimension_numbers<[1], [1], [0], [0], [0, 0, 1, 0], [], []>} : vector<16x16xbf16>, vector<16x16xbf16>, vector<16x16xf32> -> vector<16x16xf32>
    %cst_111 = arith.constant dense<0xFF800000> : vector<16xf32>
    %371 = vector.multi_reduction <maximumf>, %370, %cst_111 [1] : vector<16x16xf32> to vector<16xf32>
    %372 = vector.shape_cast %371 : vector<16xf32> to vector<16x1xf32>
    %373 = vector.broadcast %372 : vector<16x1xf32> to vector<16x16xf32>
    %374 = arith.subf %370, %373 : vector<16x16xf32>
    %375 = math.exp %374 : vector<16x16xf32>
    %cst_112 = arith.constant dense<0.000000e+00> : vector<16xf32>
    %376 = vector.multi_reduction <add>, %375, %cst_112 [1] : vector<16x16xf32> to vector<16xf32>
    %377 = vector.shape_cast %376 : vector<16xf32> to vector<16x1xf32>
    %378 = tpu.reciprocal %377 {approx = true} : vector<16x1xf32> -> vector<16x1xf32>
    %379 = vector.broadcast %378 : vector<16x1xf32> to vector<16x16xf32>
    %380 = arith.mulf %375, %379 : vector<16x16xf32>
    %381 = arith.truncf %380 : vector<16x16xf32> to vector<16x16xbf16>
    %382 = arith.truncf %367 : vector<16x16xf32> to vector<16x16xbf16>
    %cst_113 = arith.constant dense<0.000000e+00> : vector<16x16xf32>
    %383 = tpu.matmul %381, %382, %cst_113 {dimension_numbers = #tpu.dot_dimension_numbers<[1], [0], [0], [1], [0, 0, 1, 1], [], []>} : vector<16x16xbf16>, vector<16x16xbf16>, vector<16x16xf32> -> vector<16x16xf32>
    %384 = vector.extract_strided_slice %364 {offsets = [32, 0], sizes = [16, 16], strides = [1, 1]} : vector<64x192xf32> to vector<16x16xf32>
    %385 = vector.extract_strided_slice %364 {offsets = [0, 64], sizes = [16, 16], strides = [1, 1]} : vector<64x192xf32> to vector<16x16xf32>
    %386 = vector.extract_strided_slice %364 {offsets = [0, 128], sizes = [16, 16], strides = [1, 1]} : vector<64x192xf32> to vector<16x16xf32>
    %387 = arith.truncf %384 : vector<16x16xf32> to vector<16x16xbf16>
    %388 = arith.truncf %385 : vector<16x16xf32> to vector<16x16xbf16>
    %cst_114 = arith.constant dense<0.000000e+00> : vector<16x16xf32>
    %389 = tpu.matmul %387, %388, %cst_114 {dimension_numbers = #tpu.dot_dimension_numbers<[1], [1], [0], [0], [0, 0, 1, 0], [], []>} : vector<16x16xbf16>, vector<16x16xbf16>, vector<16x16xf32> -> vector<16x16xf32>
    %cst_115 = arith.constant dense<0xFF800000> : vector<16xf32>
    %390 = vector.multi_reduction <maximumf>, %389, %cst_115 [1] : vector<16x16xf32> to vector<16xf32>
    %391 = vector.shape_cast %390 : vector<16xf32> to vector<16x1xf32>
    %392 = vector.broadcast %391 : vector<16x1xf32> to vector<16x16xf32>
    %393 = arith.subf %389, %392 : vector<16x16xf32>
    %394 = math.exp %393 : vector<16x16xf32>
    %cst_116 = arith.constant dense<0.000000e+00> : vector<16xf32>
    %395 = vector.multi_reduction <add>, %394, %cst_116 [1] : vector<16x16xf32> to vector<16xf32>
    %396 = vector.shape_cast %395 : vector<16xf32> to vector<16x1xf32>
    %397 = tpu.reciprocal %396 {approx = true} : vector<16x1xf32> -> vector<16x1xf32>
    %398 = vector.broadcast %397 : vector<16x1xf32> to vector<16x16xf32>
    %399 = arith.mulf %394, %398 : vector<16x16xf32>
    %400 = arith.truncf %399 : vector<16x16xf32> to vector<16x16xbf16>
    %401 = arith.truncf %386 : vector<16x16xf32> to vector<16x16xbf16>
    %cst_117 = arith.constant dense<0.000000e+00> : vector<16x16xf32>
    %402 = tpu.matmul %400, %401, %cst_117 {dimension_numbers = #tpu.dot_dimension_numbers<[1], [0], [0], [1], [0, 0, 1, 1], [], []>} : vector<16x16xbf16>, vector<16x16xbf16>, vector<16x16xf32> -> vector<16x16xf32>
    %403 = vector.extract_strided_slice %364 {offsets = [0, 16], sizes = [16, 16], strides = [1, 1]} : vector<64x192xf32> to vector<16x16xf32>
    %404 = vector.extract_strided_slice %364 {offsets = [32, 80], sizes = [16, 16], strides = [1, 1]} : vector<64x192xf32> to vector<16x16xf32>
    %405 = vector.extract_strided_slice %364 {offsets = [32, 144], sizes = [16, 16], strides = [1, 1]} : vector<64x192xf32> to vector<16x16xf32>
    %406 = arith.truncf %403 : vector<16x16xf32> to vector<16x16xbf16>
    %407 = arith.truncf %404 : vector<16x16xf32> to vector<16x16xbf16>
    %cst_118 = arith.constant dense<0.000000e+00> : vector<16x16xf32>
    %408 = tpu.matmul %406, %407, %cst_118 {dimension_numbers = #tpu.dot_dimension_numbers<[1], [1], [0], [0], [0, 0, 1, 0], [], []>} : vector<16x16xbf16>, vector<16x16xbf16>, vector<16x16xf32> -> vector<16x16xf32>
    %cst_119 = arith.constant dense<0xFF800000> : vector<16xf32>
    %409 = vector.multi_reduction <maximumf>, %408, %cst_119 [1] : vector<16x16xf32> to vector<16xf32>
    %410 = vector.shape_cast %409 : vector<16xf32> to vector<16x1xf32>
    %411 = vector.broadcast %410 : vector<16x1xf32> to vector<16x16xf32>
    %412 = arith.subf %408, %411 : vector<16x16xf32>
    %413 = math.exp %412 : vector<16x16xf32>
    %cst_120 = arith.constant dense<0.000000e+00> : vector<16xf32>
    %414 = vector.multi_reduction <add>, %413, %cst_120 [1] : vector<16x16xf32> to vector<16xf32>
    %415 = vector.shape_cast %414 : vector<16xf32> to vector<16x1xf32>
    %416 = tpu.reciprocal %415 {approx = true} : vector<16x1xf32> -> vector<16x1xf32>
    %417 = vector.broadcast %416 : vector<16x1xf32> to vector<16x16xf32>
    %418 = arith.mulf %413, %417 : vector<16x16xf32>
    %419 = arith.truncf %418 : vector<16x16xf32> to vector<16x16xbf16>
    %420 = arith.truncf %405 : vector<16x16xf32> to vector<16x16xbf16>
    %cst_121 = arith.constant dense<0.000000e+00> : vector<16x16xf32>
    %421 = tpu.matmul %419, %420, %cst_121 {dimension_numbers = #tpu.dot_dimension_numbers<[1], [0], [0], [1], [0, 0, 1, 1], [], []>} : vector<16x16xbf16>, vector<16x16xbf16>, vector<16x16xf32> -> vector<16x16xf32>
    %422 = vector.extract_strided_slice %364 {offsets = [32, 16], sizes = [16, 16], strides = [1, 1]} : vector<64x192xf32> to vector<16x16xf32>
    %423 = vector.extract_strided_slice %364 {offsets = [0, 80], sizes = [16, 16], strides = [1, 1]} : vector<64x192xf32> to vector<16x16xf32>
    %424 = vector.extract_strided_slice %364 {offsets = [0, 144], sizes = [16, 16], strides = [1, 1]} : vector<64x192xf32> to vector<16x16xf32>
    %425 = arith.truncf %422 : vector<16x16xf32> to vector<16x16xbf16>
    %426 = arith.truncf %423 : vector<16x16xf32> to vector<16x16xbf16>
    %cst_122 = arith.constant dense<0.000000e+00> : vector<16x16xf32>
    %427 = tpu.matmul %425, %426, %cst_122 {dimension_numbers = #tpu.dot_dimension_numbers<[1], [1], [0], [0], [0, 0, 1, 0], [], []>} : vector<16x16xbf16>, vector<16x16xbf16>, vector<16x16xf32> -> vector<16x16xf32>
    %cst_123 = arith.constant dense<0xFF800000> : vector<16xf32>
    %428 = vector.multi_reduction <maximumf>, %427, %cst_123 [1] : vector<16x16xf32> to vector<16xf32>
    %429 = vector.shape_cast %428 : vector<16xf32> to vector<16x1xf32>
    %430 = vector.broadcast %429 : vector<16x1xf32> to vector<16x16xf32>
    %431 = arith.subf %427, %430 : vector<16x16xf32>
    %432 = math.exp %431 : vector<16x16xf32>
    %cst_124 = arith.constant dense<0.000000e+00> : vector<16xf32>
    %433 = vector.multi_reduction <add>, %432, %cst_124 [1] : vector<16x16xf32> to vector<16xf32>
    %434 = vector.shape_cast %433 : vector<16xf32> to vector<16x1xf32>
    %435 = tpu.reciprocal %434 {approx = true} : vector<16x1xf32> -> vector<16x1xf32>
    %436 = vector.broadcast %435 : vector<16x1xf32> to vector<16x16xf32>
    %437 = arith.mulf %432, %436 : vector<16x16xf32>
    %438 = arith.truncf %437 : vector<16x16xf32> to vector<16x16xbf16>
    %439 = arith.truncf %424 : vector<16x16xf32> to vector<16x16xbf16>
    %cst_125 = arith.constant dense<0.000000e+00> : vector<16x16xf32>
    %440 = tpu.matmul %438, %439, %cst_125 {dimension_numbers = #tpu.dot_dimension_numbers<[1], [0], [0], [1], [0, 0, 1, 1], [], []>} : vector<16x16xbf16>, vector<16x16xbf16>, vector<16x16xf32> -> vector<16x16xf32>
    %441 = vector.extract_strided_slice %364 {offsets = [0, 32], sizes = [16, 16], strides = [1, 1]} : vector<64x192xf32> to vector<16x16xf32>
    %442 = vector.extract_strided_slice %364 {offsets = [32, 96], sizes = [16, 16], strides = [1, 1]} : vector<64x192xf32> to vector<16x16xf32>
    %443 = vector.extract_strided_slice %364 {offsets = [32, 160], sizes = [16, 16], strides = [1, 1]} : vector<64x192xf32> to vector<16x16xf32>
    %444 = arith.truncf %441 : vector<16x16xf32> to vector<16x16xbf16>
    %445 = arith.truncf %442 : vector<16x16xf32> to vector<16x16xbf16>
    %cst_126 = arith.constant dense<0.000000e+00> : vector<16x16xf32>
    %446 = tpu.matmul %444, %445, %cst_126 {dimension_numbers = #tpu.dot_dimension_numbers<[1], [1], [0], [0], [0, 0, 1, 0], [], []>} : vector<16x16xbf16>, vector<16x16xbf16>, vector<16x16xf32> -> vector<16x16xf32>
    %cst_127 = arith.constant dense<0xFF800000> : vector<16xf32>
    %447 = vector.multi_reduction <maximumf>, %446, %cst_127 [1] : vector<16x16xf32> to vector<16xf32>
    %448 = vector.shape_cast %447 : vector<16xf32> to vector<16x1xf32>
    %449 = vector.broadcast %448 : vector<16x1xf32> to vector<16x16xf32>
    %450 = arith.subf %446, %449 : vector<16x16xf32>
    %451 = math.exp %450 : vector<16x16xf32>
    %cst_128 = arith.constant dense<0.000000e+00> : vector<16xf32>
    %452 = vector.multi_reduction <add>, %451, %cst_128 [1] : vector<16x16xf32> to vector<16xf32>
    %453 = vector.shape_cast %452 : vector<16xf32> to vector<16x1xf32>
    %454 = tpu.reciprocal %453 {approx = true} : vector<16x1xf32> -> vector<16x1xf32>
    %455 = vector.broadcast %454 : vector<16x1xf32> to vector<16x16xf32>
    %456 = arith.mulf %451, %455 : vector<16x16xf32>
    %457 = arith.truncf %456 : vector<16x16xf32> to vector<16x16xbf16>
    %458 = arith.truncf %443 : vector<16x16xf32> to vector<16x16xbf16>
    %cst_129 = arith.constant dense<0.000000e+00> : vector<16x16xf32>
    %459 = tpu.matmul %457, %458, %cst_129 {dimension_numbers = #tpu.dot_dimension_numbers<[1], [0], [0], [1], [0, 0, 1, 1], [], []>} : vector<16x16xbf16>, vector<16x16xbf16>, vector<16x16xf32> -> vector<16x16xf32>
    %460 = vector.extract_strided_slice %364 {offsets = [32, 32], sizes = [16, 16], strides = [1, 1]} : vector<64x192xf32> to vector<16x16xf32>
    %461 = vector.extract_strided_slice %364 {offsets = [0, 96], sizes = [16, 16], strides = [1, 1]} : vector<64x192xf32> to vector<16x16xf32>
    %462 = vector.extract_strided_slice %364 {offsets = [0, 160], sizes = [16, 16], strides = [1, 1]} : vector<64x192xf32> to vector<16x16xf32>
    %463 = arith.truncf %460 : vector<16x16xf32> to vector<16x16xbf16>
    %464 = arith.truncf %461 : vector<16x16xf32> to vector<16x16xbf16>
    %cst_130 = arith.constant dense<0.000000e+00> : vector<16x16xf32>
    %465 = tpu.matmul %463, %464, %cst_130 {dimension_numbers = #tpu.dot_dimension_numbers<[1], [1], [0], [0], [0, 0, 1, 0], [], []>} : vector<16x16xbf16>, vector<16x16xbf16>, vector<16x16xf32> -> vector<16x16xf32>
    %cst_131 = arith.constant dense<0xFF800000> : vector<16xf32>
    %466 = vector.multi_reduction <maximumf>, %465, %cst_131 [1] : vector<16x16xf32> to vector<16xf32>
    %467 = vector.shape_cast %466 : vector<16xf32> to vector<16x1xf32>
    %468 = vector.broadcast %467 : vector<16x1xf32> to vector<16x16xf32>
    %469 = arith.subf %465, %468 : vector<16x16xf32>
    %470 = math.exp %469 : vector<16x16xf32>
    %cst_132 = arith.constant dense<0.000000e+00> : vector<16xf32>
    %471 = vector.multi_reduction <add>, %470, %cst_132 [1] : vector<16x16xf32> to vector<16xf32>
    %472 = vector.shape_cast %471 : vector<16xf32> to vector<16x1xf32>
    %473 = tpu.reciprocal %472 {approx = true} : vector<16x1xf32> -> vector<16x1xf32>
    %474 = vector.broadcast %473 : vector<16x1xf32> to vector<16x16xf32>
    %475 = arith.mulf %470, %474 : vector<16x16xf32>
    %476 = arith.truncf %475 : vector<16x16xf32> to vector<16x16xbf16>
    %477 = arith.truncf %462 : vector<16x16xf32> to vector<16x16xbf16>
    %cst_133 = arith.constant dense<0.000000e+00> : vector<16x16xf32>
    %478 = tpu.matmul %476, %477, %cst_133 {dimension_numbers = #tpu.dot_dimension_numbers<[1], [0], [0], [1], [0, 0, 1, 1], [], []>} : vector<16x16xbf16>, vector<16x16xbf16>, vector<16x16xf32> -> vector<16x16xf32>
    %479 = vector.extract_strided_slice %364 {offsets = [0, 48], sizes = [16, 16], strides = [1, 1]} : vector<64x192xf32> to vector<16x16xf32>
    %480 = vector.extract_strided_slice %364 {offsets = [32, 112], sizes = [16, 16], strides = [1, 1]} : vector<64x192xf32> to vector<16x16xf32>
    %481 = vector.extract_strided_slice %364 {offsets = [32, 176], sizes = [16, 16], strides = [1, 1]} : vector<64x192xf32> to vector<16x16xf32>
    %482 = arith.truncf %479 : vector<16x16xf32> to vector<16x16xbf16>
    %483 = arith.truncf %480 : vector<16x16xf32> to vector<16x16xbf16>
    %cst_134 = arith.constant dense<0.000000e+00> : vector<16x16xf32>
    %484 = tpu.matmul %482, %483, %cst_134 {dimension_numbers = #tpu.dot_dimension_numbers<[1], [1], [0], [0], [0, 0, 1, 0], [], []>} : vector<16x16xbf16>, vector<16x16xbf16>, vector<16x16xf32> -> vector<16x16xf32>
    %cst_135 = arith.constant dense<0xFF800000> : vector<16xf32>
    %485 = vector.multi_reduction <maximumf>, %484, %cst_135 [1] : vector<16x16xf32> to vector<16xf32>
    %486 = vector.shape_cast %485 : vector<16xf32> to vector<16x1xf32>
    %487 = vector.broadcast %486 : vector<16x1xf32> to vector<16x16xf32>
    %488 = arith.subf %484, %487 : vector<16x16xf32>
    %489 = math.exp %488 : vector<16x16xf32>
    %cst_136 = arith.constant dense<0.000000e+00> : vector<16xf32>
    %490 = vector.multi_reduction <add>, %489, %cst_136 [1] : vector<16x16xf32> to vector<16xf32>
    %491 = vector.shape_cast %490 : vector<16xf32> to vector<16x1xf32>
    %492 = tpu.reciprocal %491 {approx = true} : vector<16x1xf32> -> vector<16x1xf32>
    %493 = vector.broadcast %492 : vector<16x1xf32> to vector<16x16xf32>
    %494 = arith.mulf %489, %493 : vector<16x16xf32>
    %495 = arith.truncf %494 : vector<16x16xf32> to vector<16x16xbf16>
    %496 = arith.truncf %481 : vector<16x16xf32> to vector<16x16xbf16>
    %cst_137 = arith.constant dense<0.000000e+00> : vector<16x16xf32>
    %497 = tpu.matmul %495, %496, %cst_137 {dimension_numbers = #tpu.dot_dimension_numbers<[1], [0], [0], [1], [0, 0, 1, 1], [], []>} : vector<16x16xbf16>, vector<16x16xbf16>, vector<16x16xf32> -> vector<16x16xf32>
    %498 = vector.extract_strided_slice %364 {offsets = [32, 48], sizes = [16, 16], strides = [1, 1]} : vector<64x192xf32> to vector<16x16xf32>
    %499 = vector.extract_strided_slice %364 {offsets = [0, 112], sizes = [16, 16], strides = [1, 1]} : vector<64x192xf32> to vector<16x16xf32>
    %500 = vector.extract_strided_slice %364 {offsets = [0, 176], sizes = [16, 16], strides = [1, 1]} : vector<64x192xf32> to vector<16x16xf32>
    %501 = arith.truncf %498 : vector<16x16xf32> to vector<16x16xbf16>
    %502 = arith.truncf %499 : vector<16x16xf32> to vector<16x16xbf16>
    %cst_138 = arith.constant dense<0.000000e+00> : vector<16x16xf32>
    %503 = tpu.matmul %501, %502, %cst_138 {dimension_numbers = #tpu.dot_dimension_numbers<[1], [1], [0], [0], [0, 0, 1, 0], [], []>} : vector<16x16xbf16>, vector<16x16xbf16>, vector<16x16xf32> -> vector<16x16xf32>
    %cst_139 = arith.constant dense<0xFF800000> : vector<16xf32>
    %504 = vector.multi_reduction <maximumf>, %503, %cst_139 [1] : vector<16x16xf32> to vector<16xf32>
    %505 = vector.shape_cast %504 : vector<16xf32> to vector<16x1xf32>
    %506 = vector.broadcast %505 : vector<16x1xf32> to vector<16x16xf32>
    %507 = arith.subf %503, %506 : vector<16x16xf32>
    %508 = math.exp %507 : vector<16x16xf32>
    %cst_140 = arith.constant dense<0.000000e+00> : vector<16xf32>
    %509 = vector.multi_reduction <add>, %508, %cst_140 [1] : vector<16x16xf32> to vector<16xf32>
    %510 = vector.shape_cast %509 : vector<16xf32> to vector<16x1xf32>
    %511 = tpu.reciprocal %510 {approx = true} : vector<16x1xf32> -> vector<16x1xf32>
    %512 = vector.broadcast %511 : vector<16x1xf32> to vector<16x16xf32>
    %513 = arith.mulf %508, %512 : vector<16x16xf32>
    %514 = arith.truncf %513 : vector<16x16xf32> to vector<16x16xbf16>
    %515 = arith.truncf %500 : vector<16x16xf32> to vector<16x16xbf16>
    %cst_141 = arith.constant dense<0.000000e+00> : vector<16x16xf32>
    %516 = tpu.matmul %514, %515, %cst_141 {dimension_numbers = #tpu.dot_dimension_numbers<[1], [0], [0], [1], [0, 0, 1, 1], [], []>} : vector<16x16xbf16>, vector<16x16xbf16>, vector<16x16xf32> -> vector<16x16xf32>
    %517 = tpu.concatenate %383, %421, %459, %497 in 1 : vector<16x16xf32>, vector<16x16xf32>, vector<16x16xf32>, vector<16x16xf32> -> vector<16x64xf32>
    %518 = tpu.concatenate %402, %440, %478, %516 in 1 : vector<16x16xf32>, vector<16x16xf32>, vector<16x16xf32>, vector<16x16xf32> -> vector<16x64xf32>
    %519 = vector.extract_strided_slice %364 {offsets = [16, 0], sizes = [16, 16], strides = [1, 1]} : vector<64x192xf32> to vector<16x16xf32>
    %520 = vector.extract_strided_slice %364 {offsets = [48, 64], sizes = [16, 16], strides = [1, 1]} : vector<64x192xf32> to vector<16x16xf32>
    %521 = vector.extract_strided_slice %364 {offsets = [48, 128], sizes = [16, 16], strides = [1, 1]} : vector<64x192xf32> to vector<16x16xf32>
    %522 = arith.truncf %519 : vector<16x16xf32> to vector<16x16xbf16>
    %523 = arith.truncf %520 : vector<16x16xf32> to vector<16x16xbf16>
    %cst_142 = arith.constant dense<0.000000e+00> : vector<16x16xf32>
    %524 = tpu.matmul %522, %523, %cst_142 {dimension_numbers = #tpu.dot_dimension_numbers<[1], [1], [0], [0], [0, 0, 1, 0], [], []>} : vector<16x16xbf16>, vector<16x16xbf16>, vector<16x16xf32> -> vector<16x16xf32>
    %cst_143 = arith.constant dense<0xFF800000> : vector<16xf32>
    %525 = vector.multi_reduction <maximumf>, %524, %cst_143 [1] : vector<16x16xf32> to vector<16xf32>
    %526 = vector.shape_cast %525 : vector<16xf32> to vector<16x1xf32>
    %527 = vector.broadcast %526 : vector<16x1xf32> to vector<16x16xf32>
    %528 = arith.subf %524, %527 : vector<16x16xf32>
    %529 = math.exp %528 : vector<16x16xf32>
    %cst_144 = arith.constant dense<0.000000e+00> : vector<16xf32>
    %530 = vector.multi_reduction <add>, %529, %cst_144 [1] : vector<16x16xf32> to vector<16xf32>
    %531 = vector.shape_cast %530 : vector<16xf32> to vector<16x1xf32>
    %532 = tpu.reciprocal %531 {approx = true} : vector<16x1xf32> -> vector<16x1xf32>
    %533 = vector.broadcast %532 : vector<16x1xf32> to vector<16x16xf32>
    %534 = arith.mulf %529, %533 : vector<16x16xf32>
    %535 = arith.truncf %534 : vector<16x16xf32> to vector<16x16xbf16>
    %536 = arith.truncf %521 : vector<16x16xf32> to vector<16x16xbf16>
    %cst_145 = arith.constant dense<0.000000e+00> : vector<16x16xf32>
    %537 = tpu.matmul %535, %536, %cst_145 {dimension_numbers = #tpu.dot_dimension_numbers<[1], [0], [0], [1], [0, 0, 1, 1], [], []>} : vector<16x16xbf16>, vector<16x16xbf16>, vector<16x16xf32> -> vector<16x16xf32>
    %538 = vector.extract_strided_slice %364 {offsets = [48, 0], sizes = [16, 16], strides = [1, 1]} : vector<64x192xf32> to vector<16x16xf32>
    %539 = vector.extract_strided_slice %364 {offsets = [16, 64], sizes = [16, 16], strides = [1, 1]} : vector<64x192xf32> to vector<16x16xf32>
    %540 = vector.extract_strided_slice %364 {offsets = [16, 128], sizes = [16, 16], strides = [1, 1]} : vector<64x192xf32> to vector<16x16xf32>
    %541 = arith.truncf %538 : vector<16x16xf32> to vector<16x16xbf16>
    %542 = arith.truncf %539 : vector<16x16xf32> to vector<16x16xbf16>
    %cst_146 = arith.constant dense<0.000000e+00> : vector<16x16xf32>
    %543 = tpu.matmul %541, %542, %cst_146 {dimension_numbers = #tpu.dot_dimension_numbers<[1], [1], [0], [0], [0, 0, 1, 0], [], []>} : vector<16x16xbf16>, vector<16x16xbf16>, vector<16x16xf32> -> vector<16x16xf32>
    %cst_147 = arith.constant dense<0xFF800000> : vector<16xf32>
    %544 = vector.multi_reduction <maximumf>, %543, %cst_147 [1] : vector<16x16xf32> to vector<16xf32>
    %545 = vector.shape_cast %544 : vector<16xf32> to vector<16x1xf32>
    %546 = vector.broadcast %545 : vector<16x1xf32> to vector<16x16xf32>
    %547 = arith.subf %543, %546 : vector<16x16xf32>
    %548 = math.exp %547 : vector<16x16xf32>
    %cst_148 = arith.constant dense<0.000000e+00> : vector<16xf32>
    %549 = vector.multi_reduction <add>, %548, %cst_148 [1] : vector<16x16xf32> to vector<16xf32>
    %550 = vector.shape_cast %549 : vector<16xf32> to vector<16x1xf32>
    %551 = tpu.reciprocal %550 {approx = true} : vector<16x1xf32> -> vector<16x1xf32>
    %552 = vector.broadcast %551 : vector<16x1xf32> to vector<16x16xf32>
    %553 = arith.mulf %548, %552 : vector<16x16xf32>
    %554 = arith.truncf %553 : vector<16x16xf32> to vector<16x16xbf16>
    %555 = arith.truncf %540 : vector<16x16xf32> to vector<16x16xbf16>
    %cst_149 = arith.constant dense<0.000000e+00> : vector<16x16xf32>
    %556 = tpu.matmul %554, %555, %cst_149 {dimension_numbers = #tpu.dot_dimension_numbers<[1], [0], [0], [1], [0, 0, 1, 1], [], []>} : vector<16x16xbf16>, vector<16x16xbf16>, vector<16x16xf32> -> vector<16x16xf32>
    %557 = vector.extract_strided_slice %364 {offsets = [16, 16], sizes = [16, 16], strides = [1, 1]} : vector<64x192xf32> to vector<16x16xf32>
    %558 = vector.extract_strided_slice %364 {offsets = [48, 80], sizes = [16, 16], strides = [1, 1]} : vector<64x192xf32> to vector<16x16xf32>
    %559 = vector.extract_strided_slice %364 {offsets = [48, 144], sizes = [16, 16], strides = [1, 1]} : vector<64x192xf32> to vector<16x16xf32>
    %560 = arith.truncf %557 : vector<16x16xf32> to vector<16x16xbf16>
    %561 = arith.truncf %558 : vector<16x16xf32> to vector<16x16xbf16>
    %cst_150 = arith.constant dense<0.000000e+00> : vector<16x16xf32>
    %562 = tpu.matmul %560, %561, %cst_150 {dimension_numbers = #tpu.dot_dimension_numbers<[1], [1], [0], [0], [0, 0, 1, 0], [], []>} : vector<16x16xbf16>, vector<16x16xbf16>, vector<16x16xf32> -> vector<16x16xf32>
    %cst_151 = arith.constant dense<0xFF800000> : vector<16xf32>
    %563 = vector.multi_reduction <maximumf>, %562, %cst_151 [1] : vector<16x16xf32> to vector<16xf32>
    %564 = vector.shape_cast %563 : vector<16xf32> to vector<16x1xf32>
    %565 = vector.broadcast %564 : vector<16x1xf32> to vector<16x16xf32>
    %566 = arith.subf %562, %565 : vector<16x16xf32>
    %567 = math.exp %566 : vector<16x16xf32>
    %cst_152 = arith.constant dense<0.000000e+00> : vector<16xf32>
    %568 = vector.multi_reduction <add>, %567, %cst_152 [1] : vector<16x16xf32> to vector<16xf32>
    %569 = vector.shape_cast %568 : vector<16xf32> to vector<16x1xf32>
    %570 = tpu.reciprocal %569 {approx = true} : vector<16x1xf32> -> vector<16x1xf32>
    %571 = vector.broadcast %570 : vector<16x1xf32> to vector<16x16xf32>
    %572 = arith.mulf %567, %571 : vector<16x16xf32>
    %573 = arith.truncf %572 : vector<16x16xf32> to vector<16x16xbf16>
    %574 = arith.truncf %559 : vector<16x16xf32> to vector<16x16xbf16>
    %cst_153 = arith.constant dense<0.000000e+00> : vector<16x16xf32>
    %575 = tpu.matmul %573, %574, %cst_153 {dimension_numbers = #tpu.dot_dimension_numbers<[1], [0], [0], [1], [0, 0, 1, 1], [], []>} : vector<16x16xbf16>, vector<16x16xbf16>, vector<16x16xf32> -> vector<16x16xf32>
    %576 = vector.extract_strided_slice %364 {offsets = [48, 16], sizes = [16, 16], strides = [1, 1]} : vector<64x192xf32> to vector<16x16xf32>
    %577 = vector.extract_strided_slice %364 {offsets = [16, 80], sizes = [16, 16], strides = [1, 1]} : vector<64x192xf32> to vector<16x16xf32>
    %578 = vector.extract_strided_slice %364 {offsets = [16, 144], sizes = [16, 16], strides = [1, 1]} : vector<64x192xf32> to vector<16x16xf32>
    %579 = arith.truncf %576 : vector<16x16xf32> to vector<16x16xbf16>
    %580 = arith.truncf %577 : vector<16x16xf32> to vector<16x16xbf16>
    %cst_154 = arith.constant dense<0.000000e+00> : vector<16x16xf32>
    %581 = tpu.matmul %579, %580, %cst_154 {dimension_numbers = #tpu.dot_dimension_numbers<[1], [1], [0], [0], [0, 0, 1, 0], [], []>} : vector<16x16xbf16>, vector<16x16xbf16>, vector<16x16xf32> -> vector<16x16xf32>
    %cst_155 = arith.constant dense<0xFF800000> : vector<16xf32>
    %582 = vector.multi_reduction <maximumf>, %581, %cst_155 [1] : vector<16x16xf32> to vector<16xf32>
    %583 = vector.shape_cast %582 : vector<16xf32> to vector<16x1xf32>
    %584 = vector.broadcast %583 : vector<16x1xf32> to vector<16x16xf32>
    %585 = arith.subf %581, %584 : vector<16x16xf32>
    %586 = math.exp %585 : vector<16x16xf32>
    %cst_156 = arith.constant dense<0.000000e+00> : vector<16xf32>
    %587 = vector.multi_reduction <add>, %586, %cst_156 [1] : vector<16x16xf32> to vector<16xf32>
    %588 = vector.shape_cast %587 : vector<16xf32> to vector<16x1xf32>
    %589 = tpu.reciprocal %588 {approx = true} : vector<16x1xf32> -> vector<16x1xf32>
    %590 = vector.broadcast %589 : vector<16x1xf32> to vector<16x16xf32>
    %591 = arith.mulf %586, %590 : vector<16x16xf32>
    %592 = arith.truncf %591 : vector<16x16xf32> to vector<16x16xbf16>
    %593 = arith.truncf %578 : vector<16x16xf32> to vector<16x16xbf16>
    %cst_157 = arith.constant dense<0.000000e+00> : vector<16x16xf32>
    %594 = tpu.matmul %592, %593, %cst_157 {dimension_numbers = #tpu.dot_dimension_numbers<[1], [0], [0], [1], [0, 0, 1, 1], [], []>} : vector<16x16xbf16>, vector<16x16xbf16>, vector<16x16xf32> -> vector<16x16xf32>
    %595 = vector.extract_strided_slice %364 {offsets = [16, 32], sizes = [16, 16], strides = [1, 1]} : vector<64x192xf32> to vector<16x16xf32>
    %596 = vector.extract_strided_slice %364 {offsets = [48, 96], sizes = [16, 16], strides = [1, 1]} : vector<64x192xf32> to vector<16x16xf32>
    %597 = vector.extract_strided_slice %364 {offsets = [48, 160], sizes = [16, 16], strides = [1, 1]} : vector<64x192xf32> to vector<16x16xf32>
    %598 = arith.truncf %595 : vector<16x16xf32> to vector<16x16xbf16>
    %599 = arith.truncf %596 : vector<16x16xf32> to vector<16x16xbf16>
    %cst_158 = arith.constant dense<0.000000e+00> : vector<16x16xf32>
    %600 = tpu.matmul %598, %599, %cst_158 {dimension_numbers = #tpu.dot_dimension_numbers<[1], [1], [0], [0], [0, 0, 1, 0], [], []>} : vector<16x16xbf16>, vector<16x16xbf16>, vector<16x16xf32> -> vector<16x16xf32>
    %cst_159 = arith.constant dense<0xFF800000> : vector<16xf32>
    %601 = vector.multi_reduction <maximumf>, %600, %cst_159 [1] : vector<16x16xf32> to vector<16xf32>
    %602 = vector.shape_cast %601 : vector<16xf32> to vector<16x1xf32>
    %603 = vector.broadcast %602 : vector<16x1xf32> to vector<16x16xf32>
    %604 = arith.subf %600, %603 : vector<16x16xf32>
    %605 = math.exp %604 : vector<16x16xf32>
    %cst_160 = arith.constant dense<0.000000e+00> : vector<16xf32>
    %606 = vector.multi_reduction <add>, %605, %cst_160 [1] : vector<16x16xf32> to vector<16xf32>
    %607 = vector.shape_cast %606 : vector<16xf32> to vector<16x1xf32>
    %608 = tpu.reciprocal %607 {approx = true} : vector<16x1xf32> -> vector<16x1xf32>
    %609 = vector.broadcast %608 : vector<16x1xf32> to vector<16x16xf32>
    %610 = arith.mulf %605, %609 : vector<16x16xf32>
    %611 = arith.truncf %610 : vector<16x16xf32> to vector<16x16xbf16>
    %612 = arith.truncf %597 : vector<16x16xf32> to vector<16x16xbf16>
    %cst_161 = arith.constant dense<0.000000e+00> : vector<16x16xf32>
    %613 = tpu.matmul %611, %612, %cst_161 {dimension_numbers = #tpu.dot_dimension_numbers<[1], [0], [0], [1], [0, 0, 1, 1], [], []>} : vector<16x16xbf16>, vector<16x16xbf16>, vector<16x16xf32> -> vector<16x16xf32>
    %614 = vector.extract_strided_slice %364 {offsets = [48, 32], sizes = [16, 16], strides = [1, 1]} : vector<64x192xf32> to vector<16x16xf32>
    %615 = vector.extract_strided_slice %364 {offsets = [16, 96], sizes = [16, 16], strides = [1, 1]} : vector<64x192xf32> to vector<16x16xf32>
    %616 = vector.extract_strided_slice %364 {offsets = [16, 160], sizes = [16, 16], strides = [1, 1]} : vector<64x192xf32> to vector<16x16xf32>
    %617 = arith.truncf %614 : vector<16x16xf32> to vector<16x16xbf16>
    %618 = arith.truncf %615 : vector<16x16xf32> to vector<16x16xbf16>
    %cst_162 = arith.constant dense<0.000000e+00> : vector<16x16xf32>
    %619 = tpu.matmul %617, %618, %cst_162 {dimension_numbers = #tpu.dot_dimension_numbers<[1], [1], [0], [0], [0, 0, 1, 0], [], []>} : vector<16x16xbf16>, vector<16x16xbf16>, vector<16x16xf32> -> vector<16x16xf32>
    %cst_163 = arith.constant dense<0xFF800000> : vector<16xf32>
    %620 = vector.multi_reduction <maximumf>, %619, %cst_163 [1] : vector<16x16xf32> to vector<16xf32>
    %621 = vector.shape_cast %620 : vector<16xf32> to vector<16x1xf32>
    %622 = vector.broadcast %621 : vector<16x1xf32> to vector<16x16xf32>
    %623 = arith.subf %619, %622 : vector<16x16xf32>
    %624 = math.exp %623 : vector<16x16xf32>
    %cst_164 = arith.constant dense<0.000000e+00> : vector<16xf32>
    %625 = vector.multi_reduction <add>, %624, %cst_164 [1] : vector<16x16xf32> to vector<16xf32>
    %626 = vector.shape_cast %625 : vector<16xf32> to vector<16x1xf32>
    %627 = tpu.reciprocal %626 {approx = true} : vector<16x1xf32> -> vector<16x1xf32>
    %628 = vector.broadcast %627 : vector<16x1xf32> to vector<16x16xf32>
    %629 = arith.mulf %624, %628 : vector<16x16xf32>
    %630 = arith.truncf %629 : vector<16x16xf32> to vector<16x16xbf16>
    %631 = arith.truncf %616 : vector<16x16xf32> to vector<16x16xbf16>
    %cst_165 = arith.constant dense<0.000000e+00> : vector<16x16xf32>
    %632 = tpu.matmul %630, %631, %cst_165 {dimension_numbers = #tpu.dot_dimension_numbers<[1], [0], [0], [1], [0, 0, 1, 1], [], []>} : vector<16x16xbf16>, vector<16x16xbf16>, vector<16x16xf32> -> vector<16x16xf32>
    %633 = vector.extract_strided_slice %364 {offsets = [16, 48], sizes = [16, 16], strides = [1, 1]} : vector<64x192xf32> to vector<16x16xf32>
    %634 = vector.extract_strided_slice %364 {offsets = [48, 112], sizes = [16, 16], strides = [1, 1]} : vector<64x192xf32> to vector<16x16xf32>
    %635 = vector.extract_strided_slice %364 {offsets = [48, 176], sizes = [16, 16], strides = [1, 1]} : vector<64x192xf32> to vector<16x16xf32>
    %636 = arith.truncf %633 : vector<16x16xf32> to vector<16x16xbf16>
    %637 = arith.truncf %634 : vector<16x16xf32> to vector<16x16xbf16>
    %cst_166 = arith.constant dense<0.000000e+00> : vector<16x16xf32>
    %638 = tpu.matmul %636, %637, %cst_166 {dimension_numbers = #tpu.dot_dimension_numbers<[1], [1], [0], [0], [0, 0, 1, 0], [], []>} : vector<16x16xbf16>, vector<16x16xbf16>, vector<16x16xf32> -> vector<16x16xf32>
    %cst_167 = arith.constant dense<0xFF800000> : vector<16xf32>
    %639 = vector.multi_reduction <maximumf>, %638, %cst_167 [1] : vector<16x16xf32> to vector<16xf32>
    %640 = vector.shape_cast %639 : vector<16xf32> to vector<16x1xf32>
    %641 = vector.broadcast %640 : vector<16x1xf32> to vector<16x16xf32>
    %642 = arith.subf %638, %641 : vector<16x16xf32>
    %643 = math.exp %642 : vector<16x16xf32>
    %cst_168 = arith.constant dense<0.000000e+00> : vector<16xf32>
    %644 = vector.multi_reduction <add>, %643, %cst_168 [1] : vector<16x16xf32> to vector<16xf32>
    %645 = vector.shape_cast %644 : vector<16xf32> to vector<16x1xf32>
    %646 = tpu.reciprocal %645 {approx = true} : vector<16x1xf32> -> vector<16x1xf32>
    %647 = vector.broadcast %646 : vector<16x1xf32> to vector<16x16xf32>
    %648 = arith.mulf %643, %647 : vector<16x16xf32>
    %649 = arith.truncf %648 : vector<16x16xf32> to vector<16x16xbf16>
    %650 = arith.truncf %635 : vector<16x16xf32> to vector<16x16xbf16>
    %cst_169 = arith.constant dense<0.000000e+00> : vector<16x16xf32>
    %651 = tpu.matmul %649, %650, %cst_169 {dimension_numbers = #tpu.dot_dimension_numbers<[1], [0], [0], [1], [0, 0, 1, 1], [], []>} : vector<16x16xbf16>, vector<16x16xbf16>, vector<16x16xf32> -> vector<16x16xf32>
    %652 = vector.extract_strided_slice %364 {offsets = [48, 48], sizes = [16, 16], strides = [1, 1]} : vector<64x192xf32> to vector<16x16xf32>
    %653 = vector.extract_strided_slice %364 {offsets = [16, 112], sizes = [16, 16], strides = [1, 1]} : vector<64x192xf32> to vector<16x16xf32>
    %654 = vector.extract_strided_slice %364 {offsets = [16, 176], sizes = [16, 16], strides = [1, 1]} : vector<64x192xf32> to vector<16x16xf32>
    %655 = arith.truncf %652 : vector<16x16xf32> to vector<16x16xbf16>
    %656 = arith.truncf %653 : vector<16x16xf32> to vector<16x16xbf16>
    %cst_170 = arith.constant dense<0.000000e+00> : vector<16x16xf32>
    %657 = tpu.matmul %655, %656, %cst_170 {dimension_numbers = #tpu.dot_dimension_numbers<[1], [1], [0], [0], [0, 0, 1, 0], [], []>} : vector<16x16xbf16>, vector<16x16xbf16>, vector<16x16xf32> -> vector<16x16xf32>
    %cst_171 = arith.constant dense<0xFF800000> : vector<16xf32>
    %658 = vector.multi_reduction <maximumf>, %657, %cst_171 [1] : vector<16x16xf32> to vector<16xf32>
    %659 = vector.shape_cast %658 : vector<16xf32> to vector<16x1xf32>
    %660 = vector.broadcast %659 : vector<16x1xf32> to vector<16x16xf32>
    %661 = arith.subf %657, %660 : vector<16x16xf32>
    %662 = math.exp %661 : vector<16x16xf32>
    %cst_172 = arith.constant dense<0.000000e+00> : vector<16xf32>
    %663 = vector.multi_reduction <add>, %662, %cst_172 [1] : vector<16x16xf32> to vector<16xf32>
    %664 = vector.shape_cast %663 : vector<16xf32> to vector<16x1xf32>
    %665 = tpu.reciprocal %664 {approx = true} : vector<16x1xf32> -> vector<16x1xf32>
    %666 = vector.broadcast %665 : vector<16x1xf32> to vector<16x16xf32>
    %667 = arith.mulf %662, %666 : vector<16x16xf32>
    %668 = arith.truncf %667 : vector<16x16xf32> to vector<16x16xbf16>
    %669 = arith.truncf %654 : vector<16x16xf32> to vector<16x16xbf16>
    %cst_173 = arith.constant dense<0.000000e+00> : vector<16x16xf32>
    %670 = tpu.matmul %668, %669, %cst_173 {dimension_numbers = #tpu.dot_dimension_numbers<[1], [0], [0], [1], [0, 0, 1, 1], [], []>} : vector<16x16xbf16>, vector<16x16xbf16>, vector<16x16xf32> -> vector<16x16xf32>
    %671 = tpu.concatenate %537, %575, %613, %651 in 1 : vector<16x16xf32>, vector<16x16xf32>, vector<16x16xf32>, vector<16x16xf32> -> vector<16x64xf32>
    %672 = tpu.concatenate %556, %594, %632, %670 in 1 : vector<16x16xf32>, vector<16x16xf32>, vector<16x16xf32>, vector<16x16xf32> -> vector<16x64xf32>
    %673 = tpu.concatenate %517, %671, %518, %672 in 0 : vector<16x64xf32>, vector<16x64xf32>, vector<16x64xf32>, vector<16x64xf32> -> vector<64x64xf32>
    %674 = arith.truncf %673 : vector<64x64xf32> to vector<64x64xbf16>
    %c1_174 = arith.constant 1 : index
    %c0_175 = arith.constant 0 : index
    %c0_176 = arith.constant 0 : index
    %675 = vector.load %arg5[%c1_174, %c0_175, %c0_176] : memref<2x64x64xbf16, #tpu.memory_space<vmem>>, vector<1x64x64xbf16>
    %676 = vector.shape_cast %675 : vector<1x64x64xbf16> to vector<64x64xbf16>
    %cst_177 = arith.constant dense<0.000000e+00> : vector<64x64xf32>
    %677 = tpu.matmul %674, %676, %cst_177 {dimension_numbers = #tpu.dot_dimension_numbers<[1], [0], [0], [1], [0, 0, 1, 1], [], []>} : vector<64x64xbf16>, vector<64x64xbf16>, vector<64x64xf32> -> vector<64x64xf32>
    %c1_178 = arith.constant 1 : index
    %c0_179 = arith.constant 0 : index
    %c0_180 = arith.constant 0 : index
    %678 = vector.load %arg6[%c1_178, %c0_179, %c0_180] : memref<2x1x64xf32, #tpu.memory_space<vmem>>, vector<1x1x64xf32>
    %679 = vector.shape_cast %678 : vector<1x1x64xf32> to vector<1x64xf32>
    %680 = vector.broadcast %679 : vector<1x64xf32> to vector<64x64xf32>
    %681 = arith.addf %677, %680 : vector<64x64xf32>
    %c1_181 = arith.constant 1 : index
    %c0_182 = arith.constant 0 : index
    %c0_183 = arith.constant 0 : index
    %682 = vector.load %arg7[%c1_181, %c0_182, %c0_183] : memref<2x64x128xbf16, #tpu.memory_space<vmem>>, vector<1x64x128xbf16>
    %683 = vector.shape_cast %682 : vector<1x64x128xbf16> to vector<64x128xbf16>
    %cst_184 = arith.constant dense<0.000000e+00> : vector<64x128xf32>
    %684 = tpu.matmul %357, %683, %cst_184 {dimension_numbers = #tpu.dot_dimension_numbers<[1], [0], [0], [1], [0, 0, 1, 1], [], []>} : vector<64x64xbf16>, vector<64x128xbf16>, vector<64x128xf32> -> vector<64x128xf32>
    %685 = arith.truncf %681 : vector<64x64xf32> to vector<64x64xbf16>
    %c1_185 = arith.constant 1 : index
    %c0_186 = arith.constant 0 : index
    %c0_187 = arith.constant 0 : index
    %686 = vector.load %arg8[%c1_185, %c0_186, %c0_187] : memref<2x64x128xbf16, #tpu.memory_space<vmem>>, vector<1x64x128xbf16>
    %687 = vector.shape_cast %686 : vector<1x64x128xbf16> to vector<64x128xbf16>
    %cst_188 = arith.constant dense<0.000000e+00> : vector<64x128xf32>
    %688 = tpu.matmul %685, %687, %cst_188 {dimension_numbers = #tpu.dot_dimension_numbers<[1], [0], [0], [1], [0, 0, 1, 1], [], []>} : vector<64x64xbf16>, vector<64x128xbf16>, vector<64x128xf32> -> vector<64x128xf32>
    %689 = arith.addf %684, %688 : vector<64x128xf32>
    %c1_189 = arith.constant 1 : index
    %c0_190 = arith.constant 0 : index
    %c0_191 = arith.constant 0 : index
    %690 = vector.load %arg9[%c1_189, %c0_190, %c0_191] : memref<2x1x128xf32, #tpu.memory_space<vmem>>, vector<1x1x128xf32>
    %691 = vector.shape_cast %690 : vector<1x1x128xf32> to vector<1x128xf32>
    %692 = vector.broadcast %691 : vector<1x128xf32> to vector<64x128xf32>
    %693 = arith.mulf %689, %692 : vector<64x128xf32>
    %c1_192 = arith.constant 1 : index
    %c0_193 = arith.constant 0 : index
    %c0_194 = arith.constant 0 : index
    %694 = vector.load %arg10[%c1_192, %c0_193, %c0_194] : memref<2x1x128xf32, #tpu.memory_space<vmem>>, vector<1x1x128xf32>
    %695 = vector.shape_cast %694 : vector<1x1x128xf32> to vector<1x128xf32>
    %696 = vector.broadcast %695 : vector<1x128xf32> to vector<64x128xf32>
    %697 = arith.addf %693, %696 : vector<64x128xf32>
    %cst_195 = arith.constant 0.000000e+00 : f32
    %698 = vector.broadcast %cst_195 : f32 to vector<64x128xf32>
    %699 = arith.maximumf %697, %698 : vector<64x128xf32>
    %700 = arith.truncf %699 : vector<64x128xf32> to vector<64x128xbf16>
    %c1_196 = arith.constant 1 : index
    %c0_197 = arith.constant 0 : index
    %c0_198 = arith.constant 0 : index
    %701 = vector.load %arg11[%c1_196, %c0_197, %c0_198] : memref<2x128x64xbf16, #tpu.memory_space<vmem>>, vector<1x128x64xbf16>
    %702 = vector.shape_cast %701 : vector<1x128x64xbf16> to vector<128x64xbf16>
    %cst_199 = arith.constant dense<0.000000e+00> : vector<64x64xf32>
    %703 = tpu.matmul %700, %702, %cst_199 {dimension_numbers = #tpu.dot_dimension_numbers<[1], [0], [0], [1], [0, 0, 1, 1], [], []>} : vector<64x128xbf16>, vector<128x64xbf16>, vector<64x64xf32> -> vector<64x64xf32>
    %c1_200 = arith.constant 1 : index
    %c0_201 = arith.constant 0 : index
    %c0_202 = arith.constant 0 : index
    %704 = vector.load %arg12[%c1_200, %c0_201, %c0_202] : memref<2x1x64xf32, #tpu.memory_space<vmem>>, vector<1x1x64xf32>
    %705 = vector.shape_cast %704 : vector<1x1x64xf32> to vector<1x64xf32>
    %706 = vector.broadcast %705 : vector<1x64xf32> to vector<64x64xf32>
    %707 = arith.addf %703, %706 : vector<64x64xf32>
    %708 = arith.addf %356, %707 : vector<64x64xf32>
    %709 = vector.extract_strided_slice %708 {offsets = [0, 0], sizes = [32, 64], strides = [1, 1]} : vector<64x64xf32> to vector<32x64xf32>
    %710 = vector.shape_cast %709 : vector<32x64xf32> to vector<2x16x64xf32>
    %c0_203 = arith.constant 0 : index
    %c0_204 = arith.constant 0 : index
    %c0_205 = arith.constant 0 : index
    %711 = vector.load %arg13[%c0_203, %c0_204, %c0_205] : memref<2x16x64xf32, #tpu.memory_space<vmem>>, vector<2x16x64xf32>
    tpu.vector_store %arg13[%c0_203, %c0_204, %c0_205], %710 {strides = array<i32>} : memref<2x16x64xf32, #tpu.memory_space<vmem>>, vector<2x16x64xf32>,
    %712 = vector.extract_strided_slice %708 {offsets = [32, 0], sizes = [32, 64], strides = [1, 1]} : vector<64x64xf32> to vector<32x64xf32>
    %713 = vector.shape_cast %712 : vector<32x64xf32> to vector<2x16x64xf32>
    %c0_206 = arith.constant 0 : index
    %c0_207 = arith.constant 0 : index
    %c0_208 = arith.constant 0 : index
    %714 = vector.load %arg14[%c0_206, %c0_207, %c0_208] : memref<2x16x64xf32, #tpu.memory_space<vmem>>, vector<2x16x64xf32>
    tpu.vector_store %arg14[%c0_206, %c0_207, %c0_208], %713 {strides = array<i32>} : memref<2x16x64xf32, #tpu.memory_space<vmem>>, vector<2x16x64xf32>,
    return
  }
  func.func @transform_0(%arg0: i32) -> (i32, i32, i32) {
    %c0_i32 = arith.constant 0 : i32
    %c0_i32_0 = arith.constant 0 : i32
    %c0_i32_1 = arith.constant 0 : i32
    return %arg0, %c0_i32, %c0_i32_0 : i32, i32, i32
  }
  func.func @transform_1(%arg0: i32) -> (i32, i32, i32) {
    %c0_i32 = arith.constant 0 : i32
    %c0_i32_0 = arith.constant 0 : i32
    %c0_i32_1 = arith.constant 0 : i32
    return %arg0, %c0_i32, %c0_i32_0 : i32, i32, i32
  }
  func.func @transform_2(%arg0: i32) -> (i32, i32, i32) {
    %c0_i32 = arith.constant 0 : i32
    %c0_i32_0 = arith.constant 0 : i32
    %c0_i32_1 = arith.constant 0 : i32
    %c0_i32_2 = arith.constant 0 : i32
    return %c0_i32, %c0_i32_0, %c0_i32_1 : i32, i32, i32
  }
  func.func @transform_3(%arg0: i32) -> (i32, i32, i32) {
    %c0_i32 = arith.constant 0 : i32
    %c0_i32_0 = arith.constant 0 : i32
    %c0_i32_1 = arith.constant 0 : i32
    %c0_i32_2 = arith.constant 0 : i32
    return %c0_i32, %c0_i32_0, %c0_i32_1 : i32, i32, i32
  }
  func.func @transform_4(%arg0: i32) -> (i32, i32, i32) {
    %c0_i32 = arith.constant 0 : i32
    %c0_i32_0 = arith.constant 0 : i32
    %c0_i32_1 = arith.constant 0 : i32
    %c0_i32_2 = arith.constant 0 : i32
    return %c0_i32, %c0_i32_0, %c0_i32_1 : i32, i32, i32
  }
  func.func @transform_5(%arg0: i32) -> (i32, i32, i32) {
    %c0_i32 = arith.constant 0 : i32
    %c0_i32_0 = arith.constant 0 : i32
    %c0_i32_1 = arith.constant 0 : i32
    %c0_i32_2 = arith.constant 0 : i32
    return %c0_i32, %c0_i32_0, %c0_i32_1 : i32, i32, i32
  }
  func.func @transform_6(%arg0: i32) -> (i32, i32, i32) {
    %c0_i32 = arith.constant 0 : i32
    %c0_i32_0 = arith.constant 0 : i32
    %c0_i32_1 = arith.constant 0 : i32
    %c0_i32_2 = arith.constant 0 : i32
    return %c0_i32, %c0_i32_0, %c0_i32_1 : i32, i32, i32
  }
  func.func @transform_7(%arg0: i32) -> (i32, i32, i32) {
    %c0_i32 = arith.constant 0 : i32
    %c0_i32_0 = arith.constant 0 : i32
    %c0_i32_1 = arith.constant 0 : i32
    %c0_i32_2 = arith.constant 0 : i32
    return %c0_i32, %c0_i32_0, %c0_i32_1 : i32, i32, i32
  }
  func.func @transform_8(%arg0: i32) -> (i32, i32, i32) {
    %c0_i32 = arith.constant 0 : i32
    %c0_i32_0 = arith.constant 0 : i32
    %c0_i32_1 = arith.constant 0 : i32
    %c0_i32_2 = arith.constant 0 : i32
    return %c0_i32, %c0_i32_0, %c0_i32_1 : i32, i32, i32
  }
  func.func @transform_9(%arg0: i32) -> (i32, i32, i32) {
    %c0_i32 = arith.constant 0 : i32
    %c0_i32_0 = arith.constant 0 : i32
    %c0_i32_1 = arith.constant 0 : i32
    %c0_i32_2 = arith.constant 0 : i32
    return %c0_i32, %c0_i32_0, %c0_i32_1 : i32, i32, i32
  }
  func.func @transform_10(%arg0: i32) -> (i32, i32, i32) {
    %c0_i32 = arith.constant 0 : i32
    %c0_i32_0 = arith.constant 0 : i32
    %c0_i32_1 = arith.constant 0 : i32
    %c0_i32_2 = arith.constant 0 : i32
    return %c0_i32, %c0_i32_0, %c0_i32_1 : i32, i32, i32
  }
  func.func @transform_11(%arg0: i32) -> (i32, i32, i32) {
    %c0_i32 = arith.constant 0 : i32
    %c0_i32_0 = arith.constant 0 : i32
    %c0_i32_1 = arith.constant 0 : i32
    %c0_i32_2 = arith.constant 0 : i32
    return %c0_i32, %c0_i32_0, %c0_i32_1 : i32, i32, i32
  }
  func.func @transform_12(%arg0: i32) -> (i32, i32, i32) {
    %c0_i32 = arith.constant 0 : i32
    %c0_i32_0 = arith.constant 0 : i32
    %c0_i32_1 = arith.constant 0 : i32
    return %arg0, %c0_i32, %c0_i32_0 : i32, i32, i32
  }
  func.func @transform_13(%arg0: i32) -> (i32, i32, i32) {
    %c0_i32 = arith.constant 0 : i32
    %c0_i32_0 = arith.constant 0 : i32
    %c0_i32_1 = arith.constant 0 : i32
    return %arg0, %c0_i32, %c0_i32_0 : i32, i32, i32
  }
}

</mosaic_0001>

<llo_original>
// kernel: attentional_gnn.1
$region0: #{attentional_gnn.1}
  #allocation0 [shape = 'u32[]', space=smem, size = 0x4, offset = 0x4, fixed_abs, tag = 'smem constant byte address 0x4 - core index']
  #allocation1 [shape = 'u32[144,128]{1,0:T(1,128)}', space=vmem, size = 0x12000, scoped, tag = 'internal scratch']
  %s0 = inlined_call_operand.vmem [shape: f32[2,16,64], index: 0, kind: input, shape index: {}, may-alias: {0,12}]
  %s1 = inlined_call_operand.vmem [shape: f32[2,16,64], index: 1, kind: input, shape index: {}, may-alias: {1,13}]
  %s2 = inlined_call_operand.vmem [shape: bf16[2,64,192], index: 2, kind: input, shape index: {}]
  %s3 = inlined_call_operand.vmem [shape: f32[2,1,192], index: 3, kind: input, shape index: {}]
  %s4 = inlined_call_operand.vmem [shape: bf16[2,64,64], index: 4, kind: input, shape index: {}]
  %s5 = inlined_call_operand.vmem [shape: f32[2,1,64], index: 5, kind: input, shape index: {}]
  %s6 = inlined_call_operand.vmem [shape: bf16[2,64,128], index: 6, kind: input, shape index: {}]
  %s7 = inlined_call_operand.hbm [shape: bf16[2,64,128], index: 7, kind: input, shape index: {}]
  %s8 = inlined_call_operand.hbm [shape: f32[2,1,128], index: 8, kind: input, shape index: {}]
  %s9 = inlined_call_operand.hbm [shape: f32[2,1,128], index: 9, kind: input, shape index: {}]
  %s10 = inlined_call_operand.vmem [shape: bf16[2,128,64], index: 10, kind: input, shape index: {}]
  %s11 = inlined_call_operand.hbm [shape: f32[2,1,64], index: 11, kind: input, shape index: {}]
  %s12 = inlined_call_operand.vmem [shape: f32[2,16,64], index: 12, kind: output, shape index: {0}, may-alias: {0,12}]
  %s13 = inlined_call_operand.vmem [shape: f32[2,16,64], index: 13, kind: output, shape index: {1}, may-alias: {1,13}]
  %14 = xla_tuple %s12, %s13
  %s15 = sld [smem:[#allocation0]]
  $region82: #{attentional_gnn.1} parent=0
    _
  %s17 = ssub.s32 1, %s15
  %s18 = scalar_select 0, %s17, %s15
  $region1: #{attentional_gnn.1} parent=0
    #allocation2 [shape = 'u8[32768]{0}', space=vmem, size = 0x8000, scoped, tag = 'input window, operand 7, single buffered']
    #allocation3 [shape = 's32[1]{0}', space=sflag, size = 0x4, scoped, tag = 'scoped memory for attentional_gnn.1']
    #allocation4 [shape = 'u8[1024]{0}', space=vmem, size = 0x400, scoped, tag = 'input window, operand 8, single buffered']
    #allocation5 [shape = 's32[1]{0}', space=sflag, size = 0x4, scoped, tag = 'scoped memory for attentional_gnn.1']
    #allocation6 [shape = 'u8[1024]{0}', space=vmem, size = 0x400, scoped, tag = 'input window, operand 9, single buffered']
    #allocation7 [shape = 'u8[1024]{0}', space=vmem, size = 0x400, scoped, tag = 'input window, operand 11, single buffered']
    #allocation8 [shape = 's32[1]{0}', space=sflag, size = 0x4, scoped, tag = 'scoped memory for attentional_gnn.1']
    %19 = vsyncpa [#allocation3], 0
    %20 = vsyncpa [#allocation5], 0
    %21 = vsyncpa [#allocation8], 0
    // Predicated region
    $region2: #{attentional_gnn.1} parent=1 // pred_check
      _
    $region3: #{attentional_gnn.1} parent=1 // pred_check_branch
      %23 = sbr.rel (0) target = $region5
    $region4: #{attentional_gnn.1} parent=1 // pred_region
      _
    $region5: #{attentional_gnn.1} parent=1 // pred_fallthru
      _
    // Predicated region
    $region6: #{attentional_gnn.1} parent=1 // pred_check
      _
    $region7: #{attentional_gnn.1} parent=1 // pred_check_branch
      %25 = sbr.rel (0) target = $region9
    $region8: #{attentional_gnn.1} parent=1 // pred_region
      _
    $region9: #{attentional_gnn.1} parent=1 // pred_fallthru
      _
    // Predicated region
    $region10: #{attentional_gnn.1} parent=1 // pred_check
      _
    $region11: #{attentional_gnn.1} parent=1 // pred_check_branch
      %27 = sbr.rel (0) target = $region13
    $region12: #{attentional_gnn.1} parent=1 // pred_region
      _
    $region13: #{attentional_gnn.1} parent=1 // pred_fallthru
      _
    // Predicated region
    $region14: #{attentional_gnn.1} parent=1 // pred_check
      _
    $region15: #{attentional_gnn.1} parent=1 // pred_check_branch
      %29 = sbr.rel (0) target = $region17
    $region16: #{attentional_gnn.1} parent=1 // pred_region
      _
    $region17: #{attentional_gnn.1} parent=1 // pred_fallthru
      _
    // Predicated region
    $region18: #{attentional_gnn.1} parent=1 // pred_check
      _
    $region19: #{attentional_gnn.1} parent=1 // pred_check_branch
      %31 = sbr.rel (0) target = $region21
    $region20: #{attentional_gnn.1} parent=1 // pred_region
      _
    $region21: #{attentional_gnn.1} parent=1 // pred_fallthru
      _
    // Predicated region
    $region22: #{attentional_gnn.1} parent=1 // pred_check
      _
    $region23: #{attentional_gnn.1} parent=1 // pred_check_branch
      %33 = sbr.rel (0) target = $region25
    $region24: #{attentional_gnn.1} parent=1 // pred_region
      _
    $region25: #{attentional_gnn.1} parent=1 // pred_fallthru
      _
    // Predicated region
    $region26: #{attentional_gnn.1} parent=1 // pred_check
      _
    $region27: #{attentional_gnn.1} parent=1 // pred_check_branch
      %35 = sbr.rel (0) target = $region29
    $region28: #{attentional_gnn.1} parent=1 // pred_region
      _
    $region29: #{attentional_gnn.1} parent=1 // pred_fallthru
      _
    // Predicated region
    $region30: #{attentional_gnn.1} parent=1 // pred_check
      _
    $region31: #{attentional_gnn.1} parent=1 // pred_check_branch
      %37 = sbr.rel (0) target = $region33
    $region32: #{attentional_gnn.1} parent=1 // pred_region
      %s39 = ssub.s32 1024, 1024
      %40 = vsyncadd [#allocation3], %s39
      %s41 = sshll.u32 [#allocation2], 4
      %s42 = int_to_ptr.vmem [resolvable:$true] %s41
      %47 = dma.hbm_to_vmem [thread:$0]  %s7, 1024, %s42, [#allocation3], 64, 64, 4
    $region33: #{attentional_gnn.1} parent=1 // pred_fallthru
      _
    // Predicated region
    $region34: #{attentional_gnn.1} parent=1 // pred_check
      _
    $region35: #{attentional_gnn.1} parent=1 // pred_check_branch
      %49 = sbr.rel (0) target = $region37
    $region36: #{attentional_gnn.1} parent=1 // pred_region
      %s51 = ssub.s32 32, 32
      %52 = vsyncadd [#allocation5], %s51
      %s53 = sshll.u32 [#allocation4], 4
      %s54 = int_to_ptr.vmem [resolvable:$true] %s53
      %59 = dma.hbm_to_vmem [thread:$0]  %s8, 32, %s54, [#allocation5], 16, 16, 1
    $region37: #{attentional_gnn.1} parent=1 // pred_fallthru
      _
    // Predicated region
    $region38: #{attentional_gnn.1} parent=1 // pred_check
      _
    $region39: #{attentional_gnn.1} parent=1 // pred_check_branch
      %61 = sbr.rel (0) target = $region41
    $region40: #{attentional_gnn.1} parent=1 // pred_region
      %s63 = ssub.s32 32, 32
      %64 = vsyncadd [#allocation5], %s63
      %s65 = sshll.u32 [#allocation6], 4
      %s66 = int_to_ptr.vmem [resolvable:$true] %s65
      %71 = dma.hbm_to_vmem [thread:$0]  %s9, 32, %s66, [#allocation5], 16, 16, 1
    $region41: #{attentional_gnn.1} parent=1 // pred_fallthru
      _
    // Predicated region
    $region42: #{attentional_gnn.1} parent=1 // pred_check
      _
    $region43: #{attentional_gnn.1} parent=1 // pred_check_branch
      %73 = sbr.rel (0) target = $region45
    $region44: #{attentional_gnn.1} parent=1 // pred_region
      _
    $region45: #{attentional_gnn.1} parent=1 // pred_fallthru
      _
    // Predicated region
    $region46: #{attentional_gnn.1} parent=1 // pred_check
      _
    $region47: #{attentional_gnn.1} parent=1 // pred_check_branch
      %75 = sbr.rel (0) target = $region49
    $region48: #{attentional_gnn.1} parent=1 // pred_region
      %s77 = ssub.s32 32, 32
      %78 = vsyncadd [#allocation8], %s77
      %s79 = sshll.u32 [#allocation7], 4
      %s80 = int_to_ptr.vmem [resolvable:$true] %s79
      %85 = dma.hbm_to_vmem [thread:$0]  %s11, 32, %s80, [#allocation8], 16, 16, 1
    $region49: #{attentional_gnn.1} parent=1 // pred_fallthru
      _
    // Predicated region
    $region50: #{attentional_gnn.1} parent=1 // pred_check
      _
    $region51: #{attentional_gnn.1} parent=1 // pred_check_branch
      %87 = sbr.rel (0) target = $region53
    $region52: #{attentional_gnn.1} parent=1 // pred_region
      %88 = dma.done [#allocation3], 1024
    $region53: #{attentional_gnn.1} parent=1 // pred_fallthru
      _
    // Predicated region
    $region54: #{attentional_gnn.1} parent=1 // pred_check
      _
    $region55: #{attentional_gnn.1} parent=1 // pred_check_branch
      %90 = sbr.rel (0) target = $region57
    $region56: #{attentional_gnn.1} parent=1 // pred_region
      %91 = dma.done [#allocation5], 32
    $region57: #{attentional_gnn.1} parent=1 // pred_fallthru
      _
    // Predicated region
    $region58: #{attentional_gnn.1} parent=1 // pred_check
      _
    $region59: #{attentional_gnn.1} parent=1 // pred_check_branch
      %93 = sbr.rel (0) target = $region61
    $region60: #{attentional_gnn.1} parent=1 // pred_region
      %94 = dma.done [#allocation5], 32
    $region61: #{attentional_gnn.1} parent=1 // pred_fallthru
      _
    // Predicated region
    $region62: #{attentional_gnn.1} parent=1 // pred_check
      _
    $region63: #{attentional_gnn.1} parent=1 // pred_check_branch
      %96 = sbr.rel (0) target = $region65
    $region64: #{attentional_gnn.1} parent=1 // pred_region
      %97 = dma.done [#allocation8], 32
    $region65: #{attentional_gnn.1} parent=1 // pred_fallthru
      _
    %v99 = vld [vmem:[%s0] sm:$0xff]
    %v100 = vld [vmem:[%s0 + $0x8] sm:$0xff]
    %v101 = vld [vmem:[%s0 + $0x10] sm:$0xff]
    %v102 = vld [vmem:[%s0 + $0x18] sm:$0xff]
    %v103 = vld [vmem:[%s1] sm:$0xff]
    %v104 = vld [vmem:[%s1 + $0x8] sm:$0xff]
    %v105 = vld [vmem:[%s1 + $0x10] sm:$0xff]
    %v106 = vld [vmem:[%s1 + $0x18] sm:$0xff]
    %v107 = vpack.c.bf16 %v100, %v99
    %v108 = vpack.c.bf16 %v102, %v101
    %v109 = vpack.c.bf16 %v104, %v103
    %v110 = vpack.c.bf16 %v106, %v105
    %v111 = vld [vmem:[%s2] sm:$0xff]
    %v112 = vld [vmem:[%s2 + $0x8] sm:$0xff]
    %v113 = vld [vmem:[%s2 + $0x10] sm:$0xff]
    %v114 = vld [vmem:[%s2 + $0x18] sm:$0xff]
    %v115 = vld [vmem:[%s2 + $0x20] sm:$0xff]
    %v116 = vld [vmem:[%s2 + $0x28] sm:$0xff]
    %v117 = vld [vmem:[%s2 + $0x30] sm:$0xff]
    %v118 = vld [vmem:[%s2 + $0x38] sm:$0xff]
    %v119 = vld [vmem:[%s3] sm:$0x3]
    %v121 = vlaneseq
    %v122 = vshrl.u32 %v121, 7
    %v123 = vsub.s32 0, %v122
    %v124 = vrot.slane %v119, %v123
    %v125 = vlaneseq
    %v126 = vshrl.u32 %v125, 7
    %v127 = vsub.s32 1, %v126
    %v128 = vrot.slane %v119, %v127
    %v139 = vunpack.c.l.b16 %v111
    %v140 = vunpack.c.h.b16 %v111
    %v141 = vunpack.c.l.b16 %v112
    %v142 = vunpack.c.h.b16 %v112
    %v143 = vunpack.c.l.b16 %v113
    %v144 = vunpack.c.h.b16 %v113
    %v145 = vunpack.c.l.b16 %v114
    %v146 = vunpack.c.h.b16 %v114
    %v147 = vunpack.c.l.b16 %v115
    %v148 = vunpack.c.h.b16 %v115
    %v149 = vunpack.c.l.b16 %v116
    %v150 = vunpack.c.h.b16 %v116
    %v151 = vunpack.c.l.b16 %v117
    %v152 = vunpack.c.h.b16 %v117
    %v153 = vunpack.c.l.b16 %v118
    %v154 = vunpack.c.h.b16 %v118
    %v155 = vpack.c.b16 %v141, %v139
    %v156 = vpack.c.b16 %v142, %v140
    %v157 = vpack.c.b16 %v145, %v143
    %v158 = vpack.c.b16 %v146, %v144
    %v159 = vpack.c.b16 %v149, %v147
    %v160 = vpack.c.b16 %v150, %v148
    %v161 = vpack.c.b16 %v153, %v151
    %v162 = vpack.c.b16 %v154, %v152
    %vm171 = vcmask 523264
    %v173 = vsel %vm171, %v107, 0
    %v176 = vsel %vm171, %v108, 0
    %v179 = vsel %vm171, %v109, 0
    %v182 = vsel %vm171, %v110, 0
    %184 = vmatprep.subr.bf16.mxu0 0
    %185 = vmatpush1.bf16.msra.mxu0 0
    %186 = vmatprep.subr.bf16.mxu0 0
    %187 = vmatpush1.bf16.msra.mxu0 0
    %188 = vmatprep.subr.bf16.mxu0 0
    %189 = vmatpush1.bf16.msra.mxu0 0
    %190 = vmatprep.subr.bf16.mxu0 0
    %191 = vmatpush1.bf16.msra.mxu0 0
    %192 = vmatprep.subr.bf16.mxu0 %v162
    %193 = vmatpush1.bf16.msra.mxu0 %v161
    %194 = vmatprep.subr.bf16.mxu0 %v160
    %195 = vmatpush1.bf16.msra.mxu0 %v159
    %196 = vmatprep.subr.bf16.mxu0 %v158
    %197 = vmatpush1.bf16.msra.mxu0 %v157
    %198 = vmatprep.subr.bf16.mxu0 %v156
    %199 = vmatpush1.bf16.msra.mxu0 %v155
    %200 = vmatprep.subr.bf16.mxu0 0
    %201 = vmatpush2.bf16.msra.mxu0 0
    %202 = vmatprep.subr.bf16.mxu0 0
    %203 = vmatpush2.bf16.msra.mxu0 0
    %204 = vmatprep.subr.bf16.mxu0 0
    %205 = vmatpush2.bf16.msra.mxu0 0
    %206 = vmatprep.subr.bf16.mxu0 0
    %207 = vmatpush2.bf16.msra.mxu0 0
    %208 = vmatprep.subr.bf16.mxu0 0
    %209 = vmatpush2.bf16.msra.mxu0 0
    %210 = vmatprep.subr.bf16.mxu0 0
    %211 = vmatpush2.bf16.msra.mxu0 0
    %212 = vmatprep.subr.bf16.mxu0 0
    %213 = vmatpush2.bf16.msra.mxu0 0
    %214 = vmatprep.subr.bf16.mxu0 0
    %215 = vmatpush2.bf16.msra.mxu0 0
    %216 = vmatprep.mubr.bf16.mxu0 0
    %217 = vmatmul.mubr.bf16.gmra.mxu0 %v173
    %v218 = vpop.f32.mrf.mxu0
    %v219 = vadd.f32 %v124, %v218
    %v220 = vpop.f32.mrf.mxu0
    %v221 = vadd.f32 %v128, %v220
    %v222 = vpop.f32.mrf.mxu0
    %v223 = vadd.f32 %v124, %v222
    %v224 = vpop.f32.mrf.mxu0
    %v225 = vadd.f32 %v128, %v224
    %226 = vmatprep.mubr.bf16.mxu0 0
    %227 = vmatmul.mubr.bf16.gmra.mxu0 %v176
    %v228 = vpop.f32.mrf.mxu0
    %v229 = vadd.f32 %v124, %v228
    %v230 = vpop.f32.mrf.mxu0
    %v231 = vadd.f32 %v128, %v230
    %v232 = vpop.f32.mrf.mxu0
    %v233 = vadd.f32 %v124, %v232
    %v234 = vpop.f32.mrf.mxu0
    %v235 = vadd.f32 %v128, %v234
    %236 = vmatprep.mubr.bf16.mxu0 0
    %237 = vmatmul.mubr.bf16.gmra.mxu0 %v179
    %v238 = vpop.f32.mrf.mxu0
    %v239 = vadd.f32 %v124, %v238
    %v240 = vpop.f32.mrf.mxu0
    %v241 = vadd.f32 %v128, %v240
    %v242 = vpop.f32.mrf.mxu0
    %v243 = vadd.f32 %v124, %v242
    %v244 = vpop.f32.mrf.mxu0
    %v245 = vadd.f32 %v128, %v244
    %246 = vmatprep.mubr.bf16.mxu0 0
    %247 = vmatmul.mubr.bf16.gmra.mxu0 %v182
    %v248 = vpop.f32.mrf.mxu0
    %v249 = vadd.f32 %v124, %v248
    %v250 = vpop.f32.mrf.mxu0
    %v251 = vadd.f32 %v128, %v250
    %v252 = vpop.f32.mrf.mxu0
    %v253 = vadd.f32 %v124, %v252
    %v254 = vpop.f32.mrf.mxu0
    %v255 = vadd.f32 %v128, %v254
    %256 = vdwg.mxu0
    %v257 = vpack.c.bf16 %v223, %v219
    %259 = vrot.lane.b32.xlu0 %v257, 64
    %v260 = vpop.permute.xlu0 %259
    %vm261 = vcmask 130048
    %v263 = vsel %vm261, %v257, 0
    %v266 = vsel %vm261, %v260, 0
    %268 = vmatprep.subr.bf16.mxu0 0
    %269 = vmatpush1.bf16.xpose.msra.mxu0 0
    %270 = vmatprep.subr.bf16.mxu0 0
    %271 = vmatpush1.bf16.xpose.msra.mxu0 0
    %272 = vmatprep.subr.bf16.mxu0 0
    %273 = vmatpush1.bf16.xpose.msra.mxu0 0
    %274 = vmatprep.subr.bf16.mxu0 0
    %275 = vmatpush1.bf16.xpose.msra.mxu0 0
    %276 = vmatprep.subr.bf16.mxu0 0
    %277 = vmatpush1.bf16.xpose.msra.mxu0 0
    %278 = vmatprep.subr.bf16.mxu0 0
    %279 = vmatpush1.bf16.xpose.msra.mxu0 0
    %280 = vmatprep.subr.bf16.mxu0 0
    %281 = vmatpush1.bf16.xpose.msra.mxu0 0
    %282 = vmatprep.subr.bf16.mxu0 0
    %283 = vmatpush1.bf16.xpose.msra.mxu0 %v266
    %284 = vmatprep.subr.bf16.mxu0 0
    %285 = vmatpush2.bf16.xpose.msra.mxu0 0
    %286 = vmatprep.subr.bf16.mxu0 0
    %287 = vmatpush2.bf16.xpose.msra.mxu0 0
    %288 = vmatprep.subr.bf16.mxu0 0
    %289 = vmatpush2.bf16.xpose.msra.mxu0 0
    %290 = vmatprep.subr.bf16.mxu0 0
    %291 = vmatpush2.bf16.xpose.msra.mxu0 0
    %292 = vmatprep.subr.bf16.mxu0 0
    %293 = vmatpush2.bf16.xpose.msra.mxu0 0
    %294 = vmatprep.subr.bf16.mxu0 0
    %295 = vmatpush2.bf16.xpose.msra.mxu0 0
    %296 = vmatprep.subr.bf16.mxu0 0
    %297 = vmatpush2.bf16.xpose.msra.mxu0 0
    %298 = vmatprep.subr.bf16.mxu0 0
    %299 = vmatpush2.bf16.xpose.msra.mxu0 0
    %300 = vmatprep.mubr.bf16.mxu0 0
    %301 = vmatmul.mubr.bf16.gmra.mxu0 %v263
    %v302 = vpop.f32.mrf.mxu0
    %v303 = vadd.f32 0.0, %v302
    %v304 = vpop.f32.mrf.mxu0
    %v305 = vpop.f32.mrf.mxu0
    %v306 = vadd.f32 0.0, %v305
    %v307 = vpop.f32.mrf.mxu0
    %308 = vdwg.mxu0
    %v309 = vsel %vm261, %v303, -inf
    %310 = vmax.xlane.f32.xlu0 %v309
    %v311 = vpop.xlane.xlu0 %310
    %v312 = vsel %vm261, %v306, -inf
    %313 = vmax.xlane.f32.xlu0 %v312
    %v314 = vpop.xlane.xlu0 %313
    %v315 = vsub.f32 %v303, %v311
    %v316 = vsub.f32 %v306, %v314
    %v317 = vmul.f32 %v315, 1.442695
    %v318 = vpow.pop %v317
    %v319 = vmul.f32 %v316, 1.442695
    %v320 = vpow.pop %v319
    %v321 = vsel %vm261, %v318, 0.0
    %322 = vadd.xlane.f32.xlu0 %v321
    %v323 = vpop.xlane.xlu0 %322
    %v324 = vsel %vm261, %v320, 0.0
    %325 = vadd.xlane.f32.xlu0 %v324
    %v326 = vpop.xlane.xlu0 %325
    %v327 = vrcp.pop %v323
    %v328 = vrcp.pop %v326
    %v329 = vmul.f32 %v318, %v327
    %v330 = vmul.f32 %v320, %v328
    %v331 = vpack.c.bf16 %v330, %v329
    %v332 = vpack.c.bf16 %v225, %v221
    %v334 = vsel %vm261, %v331, 0
    %336 = vmatprep.subr.bf16.mxu0 0
    %337 = vmatpush1.bf16.msra.mxu0 0
    %338 = vmatprep.subr.bf16.mxu0 0
    %339 = vmatpush1.bf16.msra.mxu0 0
    %340 = vmatprep.subr.bf16.mxu0 0
    %341 = vmatpush1.bf16.msra.mxu0 0
    %342 = vmatprep.subr.bf16.mxu0 0
    %343 = vmatpush1.bf16.msra.mxu0 0
    %344 = vmatprep.subr.bf16.mxu0 0
    %345 = vmatpush1.bf16.msra.mxu0 0
    %346 = vmatprep.subr.bf16.mxu0 0
    %347 = vmatpush1.bf16.msra.mxu0 0
    %348 = vmatprep.subr.bf16.mxu0 0
    %349 = vmatpush1.bf16.msra.mxu0 0
    %350 = vmatprep.subr.bf16.mxu0 0
    %351 = vmatpush1.bf16.msra.mxu0 %v332
    %352 = vmatprep.subr.bf16.mxu0 0
    %353 = vmatpush2.bf16.msra.mxu0 0
    %354 = vmatprep.subr.bf16.mxu0 0
    %355 = vmatpush2.bf16.msra.mxu0 0
    %356 = vmatprep.subr.bf16.mxu0 0
    %357 = vmatpush2.bf16.msra.mxu0 0
    %358 = vmatprep.subr.bf16.mxu0 0
    %359 = vmatpush2.bf16.msra.mxu0 0
    %360 = vmatprep.subr.bf16.mxu0 0
    %361 = vmatpush2.bf16.msra.mxu0 0
    %362 = vmatprep.subr.bf16.mxu0 0
    %363 = vmatpush2.bf16.msra.mxu0 0
    %364 = vmatprep.subr.bf16.mxu0 0
    %365 = vmatpush2.bf16.msra.mxu0 0
    %366 = vmatprep.subr.bf16.mxu0 0
    %367 = vmatpush2.bf16.msra.mxu0 0
    %368 = vmatprep.mubr.bf16.mxu0 0
    %369 = vmatmul.mubr.bf16.gmra.mxu0 %v334
    %v370 = vpop.f32.mrf.mxu0
    %v371 = vadd.f32 0.0, %v370
    %v372 = vpop.f32.mrf.mxu0
    %v373 = vpop.f32.mrf.mxu0
    %v374 = vadd.f32 0.0, %v373
    %v375 = vpop.f32.mrf.mxu0
    %376 = vdwg.mxu0
    %v377 = vpack.c.bf16 %v243, %v239
    %379 = vrot.lane.b32.xlu0 %v377, 64
    %v380 = vpop.permute.xlu0 %379
    %v382 = vsel %vm261, %v377, 0
    %v385 = vsel %vm261, %v380, 0
    %387 = vmatprep.subr.bf16.mxu0 0
    %388 = vmatpush1.bf16.xpose.msra.mxu0 0
    %389 = vmatprep.subr.bf16.mxu0 0
    %390 = vmatpush1.bf16.xpose.msra.mxu0 0
    %391 = vmatprep.subr.bf16.mxu0 0
    %392 = vmatpush1.bf16.xpose.msra.mxu0 0
    %393 = vmatprep.subr.bf16.mxu0 0
    %394 = vmatpush1.bf16.xpose.msra.mxu0 0
    %395 = vmatprep.subr.bf16.mxu0 0
    %396 = vmatpush1.bf16.xpose.msra.mxu0 0
    %397 = vmatprep.subr.bf16.mxu0 0
    %398 = vmatpush1.bf16.xpose.msra.mxu0 0
    %399 = vmatprep.subr.bf16.mxu0 0
    %400 = vmatpush1.bf16.xpose.msra.mxu0 0
    %401 = vmatprep.subr.bf16.mxu0 0
    %402 = vmatpush1.bf16.xpose.msra.mxu0 %v385
    %403 = vmatprep.subr.bf16.mxu0 0
    %404 = vmatpush2.bf16.xpose.msra.mxu0 0
    %405 = vmatprep.subr.bf16.mxu0 0
    %406 = vmatpush2.bf16.xpose.msra.mxu0 0
    %407 = vmatprep.subr.bf16.mxu0 0
    %408 = vmatpush2.bf16.xpose.msra.mxu0 0
    %409 = vmatprep.subr.bf16.mxu0 0
    %410 = vmatpush2.bf16.xpose.msra.mxu0 0
    %411 = vmatprep.subr.bf16.mxu0 0
    %412 = vmatpush2.bf16.xpose.msra.mxu0 0
    %413 = vmatprep.subr.bf16.mxu0 0
    %414 = vmatpush2.bf16.xpose.msra.mxu0 0
    %415 = vmatprep.subr.bf16.mxu0 0
    %416 = vmatpush2.bf16.xpose.msra.mxu0 0
    %417 = vmatprep.subr.bf16.mxu0 0
    %418 = vmatpush2.bf16.xpose.msra.mxu0 0
    %419 = vmatprep.mubr.bf16.mxu0 0
    %420 = vmatmul.mubr.bf16.gmra.mxu0 %v382
    %v421 = vpop.f32.mrf.mxu0
    %v422 = vadd.f32 0.0, %v421
    %v423 = vpop.f32.mrf.mxu0
    %v424 = vpop.f32.mrf.mxu0
    %v425 = vadd.f32 0.0, %v424
    %v426 = vpop.f32.mrf.mxu0
    %427 = vdwg.mxu0
    %v428 = vsel %vm261, %v422, -inf
    %429 = vmax.xlane.f32.xlu0 %v428
    %v430 = vpop.xlane.xlu0 %429
    %v431 = vsel %vm261, %v425, -inf
    %432 = vmax.xlane.f32.xlu0 %v431
    %v433 = vpop.xlane.xlu0 %432
    %v434 = vsub.f32 %v422, %v430
    %v435 = vsub.f32 %v425, %v433
    %v436 = vmul.f32 %v434, 1.442695
    %v437 = vpow.pop %v436
    %v438 = vmul.f32 %v435, 1.442695
    %v439 = vpow.pop %v438
    %v440 = vsel %vm261, %v437, 0.0
    %441 = vadd.xlane.f32.xlu0 %v440
    %v442 = vpop.xlane.xlu0 %441
    %v443 = vsel %vm261, %v439, 0.0
    %444 = vadd.xlane.f32.xlu0 %v443
    %v445 = vpop.xlane.xlu0 %444
    %v446 = vrcp.pop %v442
    %v447 = vrcp.pop %v445
    %v448 = vmul.f32 %v437, %v446
    %v449 = vmul.f32 %v439, %v447
    %v450 = vpack.c.bf16 %v449, %v448
    %v451 = vpack.c.bf16 %v245, %v241
    %v453 = vsel %vm261, %v450, 0
    %455 = vmatprep.subr.bf16.mxu0 0
    %456 = vmatpush1.bf16.msra.mxu0 0
    %457 = vmatprep.subr.bf16.mxu0 0
    %458 = vmatpush1.bf16.msra.mxu0 0
    %459 = vmatprep.subr.bf16.mxu0 0
    %460 = vmatpush1.bf16.msra.mxu0 0
    %461 = vmatprep.subr.bf16.mxu0 0
    %462 = vmatpush1.bf16.msra.mxu0 0
    %463 = vmatprep.subr.bf16.mxu0 0
    %464 = vmatpush1.bf16.msra.mxu0 0
    %465 = vmatprep.subr.bf16.mxu0 0
    %466 = vmatpush1.bf16.msra.mxu0 0
    %467 = vmatprep.subr.bf16.mxu0 0
    %468 = vmatpush1.bf16.msra.mxu0 0
    %469 = vmatprep.subr.bf16.mxu0 0
    %470 = vmatpush1.bf16.msra.mxu0 %v451
    %471 = vmatprep.subr.bf16.mxu0 0
    %472 = vmatpush2.bf16.msra.mxu0 0
    %473 = vmatprep.subr.bf16.mxu0 0
    %474 = vmatpush2.bf16.msra.mxu0 0
    %475 = vmatprep.subr.bf16.mxu0 0
    %476 = vmatpush2.bf16.msra.mxu0 0
    %477 = vmatprep.subr.bf16.mxu0 0
    %478 = vmatpush2.bf16.msra.mxu0 0
    %479 = vmatprep.subr.bf16.mxu0 0
    %480 = vmatpush2.bf16.msra.mxu0 0
    %481 = vmatprep.subr.bf16.mxu0 0
    %482 = vmatpush2.bf16.msra.mxu0 0
    %483 = vmatprep.subr.bf16.mxu0 0
    %484 = vmatpush2.bf16.msra.mxu0 0
    %485 = vmatprep.subr.bf16.mxu0 0
    %486 = vmatpush2.bf16.msra.mxu0 0
    %487 = vmatprep.mubr.bf16.mxu0 0
    %488 = vmatmul.mubr.bf16.gmra.mxu0 %v453
    %v489 = vpop.f32.mrf.mxu0
    %v490 = vadd.f32 0.0, %v489
    %v491 = vpop.f32.mrf.mxu0
    %v492 = vpop.f32.mrf.mxu0
    %v493 = vadd.f32 0.0, %v492
    %v494 = vpop.f32.mrf.mxu0
    %495 = vdwg.mxu0
    %496 = vrot.lane.b32.xlu0 %v257, 112
    %v497 = vpop.permute.xlu0 %496
    %498 = vrot.lane.b32.xlu0 %v257, 48
    %v499 = vpop.permute.xlu0 %498
    %v501 = vsel %vm261, %v497, 0
    %v504 = vsel %vm261, %v499, 0
    %506 = vmatprep.subr.bf16.mxu0 0
    %507 = vmatpush1.bf16.xpose.msra.mxu0 0
    %508 = vmatprep.subr.bf16.mxu0 0
    %509 = vmatpush1.bf16.xpose.msra.mxu0 0
    %510 = vmatprep.subr.bf16.mxu0 0
    %511 = vmatpush1.bf16.xpose.msra.mxu0 0
    %512 = vmatprep.subr.bf16.mxu0 0
    %513 = vmatpush1.bf16.xpose.msra.mxu0 0
    %514 = vmatprep.subr.bf16.mxu0 0
    %515 = vmatpush1.bf16.xpose.msra.mxu0 0
    %516 = vmatprep.subr.bf16.mxu0 0
    %517 = vmatpush1.bf16.xpose.msra.mxu0 0
    %518 = vmatprep.subr.bf16.mxu0 0
    %519 = vmatpush1.bf16.xpose.msra.mxu0 0
    %520 = vmatprep.subr.bf16.mxu0 0
    %521 = vmatpush1.bf16.xpose.msra.mxu0 %v504
    %522 = vmatprep.subr.bf16.mxu0 0
    %523 = vmatpush2.bf16.xpose.msra.mxu0 0
    %524 = vmatprep.subr.bf16.mxu0 0
    %525 = vmatpush2.bf16.xpose.msra.mxu0 0
    %526 = vmatprep.subr.bf16.mxu0 0
    %527 = vmatpush2.bf16.xpose.msra.mxu0 0
    %528 = vmatprep.subr.bf16.mxu0 0
    %529 = vmatpush2.bf16.xpose.msra.mxu0 0
    %530 = vmatprep.subr.bf16.mxu0 0
    %531 = vmatpush2.bf16.xpose.msra.mxu0 0
    %532 = vmatprep.subr.bf16.mxu0 0
    %533 = vmatpush2.bf16.xpose.msra.mxu0 0
    %534 = vmatprep.subr.bf16.mxu0 0
    %535 = vmatpush2.bf16.xpose.msra.mxu0 0
    %536 = vmatprep.subr.bf16.mxu0 0
    %537 = vmatpush2.bf16.xpose.msra.mxu0 0
    %538 = vmatprep.mubr.bf16.mxu0 0
    %539 = vmatmul.mubr.bf16.gmra.mxu0 %v501
    %v540 = vpop.f32.mrf.mxu0
    %v541 = vadd.f32 0.0, %v540
    %v542 = vpop.f32.mrf.mxu0
    %v543 = vpop.f32.mrf.mxu0
    %v544 = vadd.f32 0.0, %v543
    %v545 = vpop.f32.mrf.mxu0
    %546 = vdwg.mxu0
    %v547 = vsel %vm261, %v541, -inf
    %548 = vmax.xlane.f32.xlu0 %v547
    %v549 = vpop.xlane.xlu0 %548
    %v550 = vsel %vm261, %v544, -inf
    %551 = vmax.xlane.f32.xlu0 %v550
    %v552 = vpop.xlane.xlu0 %551
    %v553 = vsub.f32 %v541, %v549
    %v554 = vsub.f32 %v544, %v552
    %v555 = vmul.f32 %v553, 1.442695
    %v556 = vpow.pop %v555
    %v557 = vmul.f32 %v554, 1.442695
    %v558 = vpow.pop %v557
    %v559 = vsel %vm261, %v556, 0.0
    %560 = vadd.xlane.f32.xlu0 %v559
    %v561 = vpop.xlane.xlu0 %560
    %v562 = vsel %vm261, %v558, 0.0
    %563 = vadd.xlane.f32.xlu0 %v562
    %v564 = vpop.xlane.xlu0 %563
    %v565 = vrcp.pop %v561
    %v566 = vrcp.pop %v564
    %v567 = vmul.f32 %v556, %v565
    %v568 = vmul.f32 %v558, %v566
    %v569 = vpack.c.bf16 %v568, %v567
    %571 = vrot.lane.b32.xlu0 %v332, 112
    %v572 = vpop.permute.xlu0 %571
    %v575 = vsel %vm261, %v569, 0
    %577 = vmatprep.subr.bf16.mxu0 0
    %578 = vmatpush1.bf16.msra.mxu0 0
    %579 = vmatprep.subr.bf16.mxu0 0
    %580 = vmatpush1.bf16.msra.mxu0 0
    %581 = vmatprep.subr.bf16.mxu0 0
    %582 = vmatpush1.bf16.msra.mxu0 0
    %583 = vmatprep.subr.bf16.mxu0 0
    %584 = vmatpush1.bf16.msra.mxu0 0
    %585 = vmatprep.subr.bf16.mxu0 0
    %586 = vmatpush1.bf16.msra.mxu0 0
    %587 = vmatprep.subr.bf16.mxu0 0
    %588 = vmatpush1.bf16.msra.mxu0 0
    %589 = vmatprep.subr.bf16.mxu0 0
    %590 = vmatpush1.bf16.msra.mxu0 0
    %591 = vmatprep.subr.bf16.mxu0 0
    %592 = vmatpush1.bf16.msra.mxu0 %v572
    %593 = vmatprep.subr.bf16.mxu0 0
    %594 = vmatpush2.bf16.msra.mxu0 0
    %595 = vmatprep.subr.bf16.mxu0 0
    %596 = vmatpush2.bf16.msra.mxu0 0
    %597 = vmatprep.subr.bf16.mxu0 0
    %598 = vmatpush2.bf16.msra.mxu0 0
    %599 = vmatprep.subr.bf16.mxu0 0
    %600 = vmatpush2.bf16.msra.mxu0 0
    %601 = vmatprep.subr.bf16.mxu0 0
    %602 = vmatpush2.bf16.msra.mxu0 0
    %603 = vmatprep.subr.bf16.mxu0 0
    %604 = vmatpush2.bf16.msra.mxu0 0
    %605 = vmatprep.subr.bf16.mxu0 0
    %606 = vmatpush2.bf16.msra.mxu0 0
    %607 = vmatprep.subr.bf16.mxu0 0
    %608 = vmatpush2.bf16.msra.mxu0 0
    %609 = vmatprep.mubr.bf16.mxu0 0
    %610 = vmatmul.mubr.bf16.gmra.mxu0 %v575
    %v611 = vpop.f32.mrf.mxu0
    %v612 = vadd.f32 0.0, %v611
    %v613 = vpop.f32.mrf.mxu0
    %v614 = vpop.f32.mrf.mxu0
    %v615 = vadd.f32 0.0, %v614
    %v616 = vpop.f32.mrf.mxu0
    %617 = vdwg.mxu0
    %618 = vrot.lane.b32.xlu0 %v377, 112
    %v619 = vpop.permute.xlu0 %618
    %620 = vrot.lane.b32.xlu0 %v377, 48
    %v621 = vpop.permute.xlu0 %620
    %v623 = vsel %vm261, %v619, 0
    %v626 = vsel %vm261, %v621, 0
    %628 = vmatprep.subr.bf16.mxu0 0
    %629 = vmatpush1.bf16.xpose.msra.mxu0 0
    %630 = vmatprep.subr.bf16.mxu0 0
    %631 = vmatpush1.bf16.xpose.msra.mxu0 0
    %632 = vmatprep.subr.bf16.mxu0 0
    %633 = vmatpush1.bf16.xpose.msra.mxu0 0
    %634 = vmatprep.subr.bf16.mxu0 0
    %635 = vmatpush1.bf16.xpose.msra.mxu0 0
    %636 = vmatprep.subr.bf16.mxu0 0
    %637 = vmatpush1.bf16.xpose.msra.mxu0 0
    %638 = vmatprep.subr.bf16.mxu0 0
    %639 = vmatpush1.bf16.xpose.msra.mxu0 0
    %640 = vmatprep.subr.bf16.mxu0 0
    %641 = vmatpush1.bf16.xpose.msra.mxu0 0
    %642 = vmatprep.subr.bf16.mxu0 0
    %643 = vmatpush1.bf16.xpose.msra.mxu0 %v626
    %644 = vmatprep.subr.bf16.mxu0 0
    %645 = vmatpush2.bf16.xpose.msra.mxu0 0
    %646 = vmatprep.subr.bf16.mxu0 0
    %647 = vmatpush2.bf16.xpose.msra.mxu0 0
    %648 = vmatprep.subr.bf16.mxu0 0
    %649 = vmatpush2.bf16.xpose.msra.mxu0 0
    %650 = vmatprep.subr.bf16.mxu0 0
    %651 = vmatpush2.bf16.xpose.msra.mxu0 0
    %652 = vmatprep.subr.bf16.mxu0 0
    %653 = vmatpush2.bf16.xpose.msra.mxu0 0
    %654 = vmatprep.subr.bf16.mxu0 0
    %655 = vmatpush2.bf16.xpose.msra.mxu0 0
    %656 = vmatprep.subr.bf16.mxu0 0
    %657 = vmatpush2.bf16.xpose.msra.mxu0 0
    %658 = vmatprep.subr.bf16.mxu0 0
    %659 = vmatpush2.bf16.xpose.msra.mxu0 0
    %660 = vmatprep.mubr.bf16.mxu0 0
    %661 = vmatmul.mubr.bf16.gmra.mxu0 %v623
    %v662 = vpop.f32.mrf.mxu0
    %v663 = vadd.f32 0.0, %v662
    %v664 = vpop.f32.mrf.mxu0
    %v665 = vpop.f32.mrf.mxu0
    %v666 = vadd.f32 0.0, %v665
    %v667 = vpop.f32.mrf.mxu0
    %668 = vdwg.mxu0
    %v669 = vsel %vm261, %v663, -inf
    %670 = vmax.xlane.f32.xlu0 %v669
    %v671 = vpop.xlane.xlu0 %670
    %v672 = vsel %vm261, %v666, -inf
    %673 = vmax.xlane.f32.xlu0 %v672
    %v674 = vpop.xlane.xlu0 %673
    %v675 = vsub.f32 %v663, %v671
    %v676 = vsub.f32 %v666, %v674
    %v677 = vmul.f32 %v675, 1.442695
    %v678 = vpow.pop %v677
    %v679 = vmul.f32 %v676, 1.442695
    %v680 = vpow.pop %v679
    %v681 = vsel %vm261, %v678, 0.0
    %682 = vadd.xlane.f32.xlu0 %v681
    %v683 = vpop.xlane.xlu0 %682
    %v684 = vsel %vm261, %v680, 0.0
    %685 = vadd.xlane.f32.xlu0 %v684
    %v686 = vpop.xlane.xlu0 %685
    %v687 = vrcp.pop %v683
    %v688 = vrcp.pop %v686
    %v689 = vmul.f32 %v678, %v687
    %v690 = vmul.f32 %v680, %v688
    %v691 = vpack.c.bf16 %v690, %v689
    %693 = vrot.lane.b32.xlu0 %v451, 112
    %v694 = vpop.permute.xlu0 %693
    %v697 = vsel %vm261, %v691, 0
    %699 = vmatprep.subr.bf16.mxu0 0
    %700 = vmatpush1.bf16.msra.mxu0 0
    %701 = vmatprep.subr.bf16.mxu0 0
    %702 = vmatpush1.bf16.msra.mxu0 0
    %703 = vmatprep.subr.bf16.mxu0 0
    %704 = vmatpush1.bf16.msra.mxu0 0
    %705 = vmatprep.subr.bf16.mxu0 0
    %706 = vmatpush1.bf16.msra.mxu0 0
    %707 = vmatprep.subr.bf16.mxu0 0
    %708 = vmatpush1.bf16.msra.mxu0 0
    %709 = vmatprep.subr.bf16.mxu0 0
    %710 = vmatpush1.bf16.msra.mxu0 0
    %711 = vmatprep.subr.bf16.mxu0 0
    %712 = vmatpush1.bf16.msra.mxu0 0
    %713 = vmatprep.subr.bf16.mxu0 0
    %714 = vmatpush1.bf16.msra.mxu0 %v694
    %715 = vmatprep.subr.bf16.mxu0 0
    %716 = vmatpush2.bf16.msra.mxu0 0
    %717 = vmatprep.subr.bf16.mxu0 0
    %718 = vmatpush2.bf16.msra.mxu0 0
    %719 = vmatprep.subr.bf16.mxu0 0
    %720 = vmatpush2.bf16.msra.mxu0 0
    %721 = vmatprep.subr.bf16.mxu0 0
    %722 = vmatpush2.bf16.msra.mxu0 0
    %723 = vmatprep.subr.bf16.mxu0 0
    %724 = vmatpush2.bf16.msra.mxu0 0
    %725 = vmatprep.subr.bf16.mxu0 0
    %726 = vmatpush2.bf16.msra.mxu0 0
    %727 = vmatprep.subr.bf16.mxu0 0
    %728 = vmatpush2.bf16.msra.mxu0 0
    %729 = vmatprep.subr.bf16.mxu0 0
    %730 = vmatpush2.bf16.msra.mxu0 0
    %731 = vmatprep.mubr.bf16.mxu0 0
    %732 = vmatmul.mubr.bf16.gmra.mxu0 %v697
    %v733 = vpop.f32.mrf.mxu0
    %v734 = vadd.f32 0.0, %v733
    %v735 = vpop.f32.mrf.mxu0
    %v736 = vpop.f32.mrf.mxu0
    %v737 = vadd.f32 0.0, %v736
    %v738 = vpop.f32.mrf.mxu0
    %739 = vdwg.mxu0
    %740 = vrot.lane.b32.xlu0 %v257, 96
    %v741 = vpop.permute.xlu0 %740
    %742 = vrot.lane.b32.xlu0 %v257, 32
    %v743 = vpop.permute.xlu0 %742
    %v745 = vsel %vm261, %v741, 0
    %v748 = vsel %vm261, %v743, 0
    %750 = vmatprep.subr.bf16.mxu0 0
    %751 = vmatpush1.bf16.xpose.msra.mxu0 0
    %752 = vmatprep.subr.bf16.mxu0 0
    %753 = vmatpush1.bf16.xpose.msra.mxu0 0
    %754 = vmatprep.subr.bf16.mxu0 0
    %755 = vmatpush1.bf16.xpose.msra.mxu0 0
    %756 = vmatprep.subr.bf16.mxu0 0
    %757 = vmatpush1.bf16.xpose.msra.mxu0 0
    %758 = vmatprep.subr.bf16.mxu0 0
    %759 = vmatpush1.bf16.xpose.msra.mxu0 0
    %760 = vmatprep.subr.bf16.mxu0 0
    %761 = vmatpush1.bf16.xpose.msra.mxu0 0
    %762 = vmatprep.subr.bf16.mxu0 0
    %763 = vmatpush1.bf16.xpose.msra.mxu0 0
    %764 = vmatprep.subr.bf16.mxu0 0
    %765 = vmatpush1.bf16.xpose.msra.mxu0 %v748
    %766 = vmatprep.subr.bf16.mxu0 0
    %767 = vmatpush2.bf16.xpose.msra.mxu0 0
    %768 = vmatprep.subr.bf16.mxu0 0
    %769 = vmatpush2.bf16.xpose.msra.mxu0 0
    %770 = vmatprep.subr.bf16.mxu0 0
    %771 = vmatpush2.bf16.xpose.msra.mxu0 0
    %772 = vmatprep.subr.bf16.mxu0 0
    %773 = vmatpush2.bf16.xpose.msra.mxu0 0
    %774 = vmatprep.subr.bf16.mxu0 0
    %775 = vmatpush2.bf16.xpose.msra.mxu0 0
    %776 = vmatprep.subr.bf16.mxu0 0
    %777 = vmatpush2.bf16.xpose.msra.mxu0 0
    %778 = vmatprep.subr.bf16.mxu0 0
    %779 = vmatpush2.bf16.xpose.msra.mxu0 0
    %780 = vmatprep.subr.bf16.mxu0 0
    %781 = vmatpush2.bf16.xpose.msra.mxu0 0
    %782 = vmatprep.mubr.bf16.mxu0 0
    %783 = vmatmul.mubr.bf16.gmra.mxu0 %v745
    %v784 = vpop.f32.mrf.mxu0
    %v785 = vadd.f32 0.0, %v784
    %v786 = vpop.f32.mrf.mxu0
    %v787 = vpop.f32.mrf.mxu0
    %v788 = vadd.f32 0.0, %v787
    %v789 = vpop.f32.mrf.mxu0
    %790 = vdwg.mxu0
    %v791 = vsel %vm261, %v785, -inf
    %792 = vmax.xlane.f32.xlu0 %v791
    %v793 = vpop.xlane.xlu0 %792
    %v794 = vsel %vm261, %v788, -inf
    %795 = vmax.xlane.f32.xlu0 %v794
    %v796 = vpop.xlane.xlu0 %795
    %v797 = vsub.f32 %v785, %v793
    %v798 = vsub.f32 %v788, %v796
    %v799 = vmul.f32 %v797, 1.442695
    %v800 = vpow.pop %v799
    %v801 = vmul.f32 %v798, 1.442695
    %v802 = vpow.pop %v801
    %v803 = vsel %vm261, %v800, 0.0
    %804 = vadd.xlane.f32.xlu0 %v803
    %v805 = vpop.xlane.xlu0 %804
    %v806 = vsel %vm261, %v802, 0.0
    %807 = vadd.xlane.f32.xlu0 %v806
    %v808 = vpop.xlane.xlu0 %807
    %v809 = vrcp.pop %v805
    %v810 = vrcp.pop %v808
    %v811 = vmul.f32 %v800, %v809
    %v812 = vmul.f32 %v802, %v810
    %v813 = vpack.c.bf16 %v812, %v811
    %814 = vrot.lane.b32.xlu0 %v332, 96
    %v815 = vpop.permute.xlu0 %814
    %v818 = vsel %vm261, %v813, 0
    %820 = vmatprep.subr.bf16.mxu0 0
    %821 = vmatpush1.bf16.msra.mxu0 0
    %822 = vmatprep.subr.bf16.mxu0 0
    %823 = vmatpush1.bf16.msra.mxu0 0
    %824 = vmatprep.subr.bf16.mxu0 0
    %825 = vmatpush1.bf16.msra.mxu0 0
    %826 = vmatprep.subr.bf16.mxu0 0
    %827 = vmatpush1.bf16.msra.mxu0 0
    %828 = vmatprep.subr.bf16.mxu0 0
    %829 = vmatpush1.bf16.msra.mxu0 0
    %830 = vmatprep.subr.bf16.mxu0 0
    %831 = vmatpush1.bf16.msra.mxu0 0
    %832 = vmatprep.subr.bf16.mxu0 0
    %833 = vmatpush1.bf16.msra.mxu0 0
    %834 = vmatprep.subr.bf16.mxu0 0
    %835 = vmatpush1.bf16.msra.mxu0 %v815
    %836 = vmatprep.subr.bf16.mxu0 0
    %837 = vmatpush2.bf16.msra.mxu0 0
    %838 = vmatprep.subr.bf16.mxu0 0
    %839 = vmatpush2.bf16.msra.mxu0 0
    %840 = vmatprep.subr.bf16.mxu0 0
    %841 = vmatpush2.bf16.msra.mxu0 0
    %842 = vmatprep.subr.bf16.mxu0 0
    %843 = vmatpush2.bf16.msra.mxu0 0
    %844 = vmatprep.subr.bf16.mxu0 0
    %845 = vmatpush2.bf16.msra.mxu0 0
    %846 = vmatprep.subr.bf16.mxu0 0
    %847 = vmatpush2.bf16.msra.mxu0 0
    %848 = vmatprep.subr.bf16.mxu0 0
    %849 = vmatpush2.bf16.msra.mxu0 0
    %850 = vmatprep.subr.bf16.mxu0 0
    %851 = vmatpush2.bf16.msra.mxu0 0
    %852 = vmatprep.mubr.bf16.mxu0 0
    %853 = vmatmul.mubr.bf16.gmra.mxu0 %v818
    %v854 = vpop.f32.mrf.mxu0
    %v855 = vadd.f32 0.0, %v854
    %v856 = vpop.f32.mrf.mxu0
    %v857 = vpop.f32.mrf.mxu0
    %v858 = vadd.f32 0.0, %v857
    %v859 = vpop.f32.mrf.mxu0
    %860 = vdwg.mxu0
    %861 = vrot.lane.b32.xlu0 %v377, 96
    %v862 = vpop.permute.xlu0 %861
    %863 = vrot.lane.b32.xlu0 %v377, 32
    %v864 = vpop.permute.xlu0 %863
    %v866 = vsel %vm261, %v862, 0
    %v869 = vsel %vm261, %v864, 0
    %871 = vmatprep.subr.bf16.mxu0 0
    %872 = vmatpush1.bf16.xpose.msra.mxu0 0
    %873 = vmatprep.subr.bf16.mxu0 0
    %874 = vmatpush1.bf16.xpose.msra.mxu0 0
    %875 = vmatprep.subr.bf16.mxu0 0
    %876 = vmatpush1.bf16.xpose.msra.mxu0 0
    %877 = vmatprep.subr.bf16.mxu0 0
    %878 = vmatpush1.bf16.xpose.msra.mxu0 0
    %879 = vmatprep.subr.bf16.mxu0 0
    %880 = vmatpush1.bf16.xpose.msra.mxu0 0
    %881 = vmatprep.subr.bf16.mxu0 0
    %882 = vmatpush1.bf16.xpose.msra.mxu0 0
    %883 = vmatprep.subr.bf16.mxu0 0
    %884 = vmatpush1.bf16.xpose.msra.mxu0 0
    %885 = vmatprep.subr.bf16.mxu0 0
    %886 = vmatpush1.bf16.xpose.msra.mxu0 %v869
    %887 = vmatprep.subr.bf16.mxu0 0
    %888 = vmatpush2.bf16.xpose.msra.mxu0 0
    %889 = vmatprep.subr.bf16.mxu0 0
    %890 = vmatpush2.bf16.xpose.msra.mxu0 0
    %891 = vmatprep.subr.bf16.mxu0 0
    %892 = vmatpush2.bf16.xpose.msra.mxu0 0
    %893 = vmatprep.subr.bf16.mxu0 0
    %894 = vmatpush2.bf16.xpose.msra.mxu0 0
    %895 = vmatprep.subr.bf16.mxu0 0
    %896 = vmatpush2.bf16.xpose.msra.mxu0 0
    %897 = vmatprep.subr.bf16.mxu0 0
    %898 = vmatpush2.bf16.xpose.msra.mxu0 0
    %899 = vmatprep.subr.bf16.mxu0 0
    %900 = vmatpush2.bf16.xpose.msra.mxu0 0
    %901 = vmatprep.subr.bf16.mxu0 0
    %902 = vmatpush2.bf16.xpose.msra.mxu0 0
    %903 = vmatprep.mubr.bf16.mxu0 0
    %904 = vmatmul.mubr.bf16.gmra.mxu0 %v866
    %v905 = vpop.f32.mrf.mxu0
    %v906 = vadd.f32 0.0, %v905
    %v907 = vpop.f32.mrf.mxu0
    %v908 = vpop.f32.mrf.mxu0
    %v909 = vadd.f32 0.0, %v908
    %v910 = vpop.f32.mrf.mxu0
    %911 = vdwg.mxu0
    %v912 = vsel %vm261, %v906, -inf
    %913 = vmax.xlane.f32.xlu0 %v912
    %v914 = vpop.xlane.xlu0 %913
    %v915 = vsel %vm261, %v909, -inf
    %916 = vmax.xlane.f32.xlu0 %v915
    %v917 = vpop.xlane.xlu0 %916
    %v918 = vsub.f32 %v906, %v914
    %v919 = vsub.f32 %v909, %v917
    %v920 = vmul.f32 %v918, 1.442695
    %v921 = vpow.pop %v920
    %v922 = vmul.f32 %v919, 1.442695
    %v923 = vpow.pop %v922
    %v924 = vsel %vm261, %v921, 0.0
    %925 = vadd.xlane.f32.xlu0 %v924
    %v926 = vpop.xlane.xlu0 %925
    %v927 = vsel %vm261, %v923, 0.0
    %928 = vadd.xlane.f32.xlu0 %v927
    %v929 = vpop.xlane.xlu0 %928
    %v930 = vrcp.pop %v926
    %v931 = vrcp.pop %v929
    %v932 = vmul.f32 %v921, %v930
    %v933 = vmul.f32 %v923, %v931
    %v934 = vpack.c.bf16 %v933, %v932
    %935 = vrot.lane.b32.xlu0 %v451, 96
    %v936 = vpop.permute.xlu0 %935
    %v939 = vsel %vm261, %v934, 0
    %941 = vmatprep.subr.bf16.mxu0 0
    %942 = vmatpush1.bf16.msra.mxu0 0
    %943 = vmatprep.subr.bf16.mxu0 0
    %944 = vmatpush1.bf16.msra.mxu0 0
    %945 = vmatprep.subr.bf16.mxu0 0
    %946 = vmatpush1.bf16.msra.mxu0 0
    %947 = vmatprep.subr.bf16.mxu0 0
    %948 = vmatpush1.bf16.msra.mxu0 0
    %949 = vmatprep.subr.bf16.mxu0 0
    %950 = vmatpush1.bf16.msra.mxu0 0
    %951 = vmatprep.subr.bf16.mxu0 0
    %952 = vmatpush1.bf16.msra.mxu0 0
    %953 = vmatprep.subr.bf16.mxu0 0
    %954 = vmatpush1.bf16.msra.mxu0 0
    %955 = vmatprep.subr.bf16.mxu0 0
    %956 = vmatpush1.bf16.msra.mxu0 %v936
    %957 = vmatprep.subr.bf16.mxu0 0
    %958 = vmatpush2.bf16.msra.mxu0 0
    %959 = vmatprep.subr.bf16.mxu0 0
    %960 = vmatpush2.bf16.msra.mxu0 0
    %961 = vmatprep.subr.bf16.mxu0 0
    %962 = vmatpush2.bf16.msra.mxu0 0
    %963 = vmatprep.subr.bf16.mxu0 0
    %964 = vmatpush2.bf16.msra.mxu0 0
    %965 = vmatprep.subr.bf16.mxu0 0
    %966 = vmatpush2.bf16.msra.mxu0 0
    %967 = vmatprep.subr.bf16.mxu0 0
    %968 = vmatpush2.bf16.msra.mxu0 0
    %969 = vmatprep.subr.bf16.mxu0 0
    %970 = vmatpush2.bf16.msra.mxu0 0
    %971 = vmatprep.subr.bf16.mxu0 0
    %972 = vmatpush2.bf16.msra.mxu0 0
    %973 = vmatprep.mubr.bf16.mxu0 0
    %974 = vmatmul.mubr.bf16.gmra.mxu0 %v939
    %v975 = vpop.f32.mrf.mxu0
    %v976 = vadd.f32 0.0, %v975
    %v977 = vpop.f32.mrf.mxu0
    %v978 = vpop.f32.mrf.mxu0
    %v979 = vadd.f32 0.0, %v978
    %v980 = vpop.f32.mrf.mxu0
    %981 = vdwg.mxu0
    %982 = vrot.lane.b32.xlu0 %v257, 80
    %v983 = vpop.permute.xlu0 %982
    %984 = vrot.lane.b32.xlu0 %v257, 16
    %v985 = vpop.permute.xlu0 %984
    %v987 = vsel %vm261, %v983, 0
    %v990 = vsel %vm261, %v985, 0
    %992 = vmatprep.subr.bf16.mxu0 0
    %993 = vmatpush1.bf16.xpose.msra.mxu0 0
    %994 = vmatprep.subr.bf16.mxu0 0
    %995 = vmatpush1.bf16.xpose.msra.mxu0 0
    %996 = vmatprep.subr.bf16.mxu0 0
    %997 = vmatpush1.bf16.xpose.msra.mxu0 0
    %998 = vmatprep.subr.bf16.mxu0 0
    %999 = vmatpush1.bf16.xpose.msra.mxu0 0
    %1000 = vmatprep.subr.bf16.mxu0 0
    %1001 = vmatpush1.bf16.xpose.msra.mxu0 0
    %1002 = vmatprep.subr.bf16.mxu0 0
    %1003 = vmatpush1.bf16.xpose.msra.mxu0 0
    %1004 = vmatprep.subr.bf16.mxu0 0
    %1005 = vmatpush1.bf16.xpose.msra.mxu0 0
    %1006 = vmatprep.subr.bf16.mxu0 0
    %1007 = vmatpush1.bf16.xpose.msra.mxu0 %v990
    %1008 = vmatprep.subr.bf16.mxu0 0
    %1009 = vmatpush2.bf16.xpose.msra.mxu0 0
    %1010 = vmatprep.subr.bf16.mxu0 0
    %1011 = vmatpush2.bf16.xpose.msra.mxu0 0
    %1012 = vmatprep.subr.bf16.mxu0 0
    %1013 = vmatpush2.bf16.xpose.msra.mxu0 0
    %1014 = vmatprep.subr.bf16.mxu0 0
    %1015 = vmatpush2.bf16.xpose.msra.mxu0 0
    %1016 = vmatprep.subr.bf16.mxu0 0
    %1017 = vmatpush2.bf16.xpose.msra.mxu0 0
    %1018 = vmatprep.subr.bf16.mxu0 0
    %1019 = vmatpush2.bf16.xpose.msra.mxu0 0
    %1020 = vmatprep.subr.bf16.mxu0 0
    %1021 = vmatpush2.bf16.xpose.msra.mxu0 0
    %1022 = vmatprep.subr.bf16.mxu0 0
    %1023 = vmatpush2.bf16.xpose.msra.mxu0 0
    %1024 = vmatprep.mubr.bf16.mxu0 0
    %1025 = vmatmul.mubr.bf16.gmra.mxu0 %v987
    %v1026 = vpop.f32.mrf.mxu0
    %v1027 = vadd.f32 0.0, %v1026
    %v1028 = vpop.f32.mrf.mxu0
    %v1029 = vpop.f32.mrf.mxu0
    %v1030 = vadd.f32 0.0, %v1029
    %v1031 = vpop.f32.mrf.mxu0
    %1032 = vdwg.mxu0
    %v1033 = vsel %vm261, %v1027, -inf
    %1034 = vmax.xlane.f32.xlu0 %v1033
    %v1035 = vpop.xlane.xlu0 %1034
    %v1036 = vsel %vm261, %v1030, -inf
    %1037 = vmax.xlane.f32.xlu0 %v1036
    %v1038 = vpop.xlane.xlu0 %1037
    %v1039 = vsub.f32 %v1027, %v1035
    %v1040 = vsub.f32 %v1030, %v1038
    %v1041 = vmul.f32 %v1039, 1.442695
    %v1042 = vpow.pop %v1041
    %v1043 = vmul.f32 %v1040, 1.442695
    %v1044 = vpow.pop %v1043
    %v1045 = vsel %vm261, %v1042, 0.0
    %1046 = vadd.xlane.f32.xlu0 %v1045
    %v1047 = vpop.xlane.xlu0 %1046
    %v1048 = vsel %vm261, %v1044, 0.0
    %1049 = vadd.xlane.f32.xlu0 %v1048
    %v1050 = vpop.xlane.xlu0 %1049
    %v1051 = vrcp.pop %v1047
    %v1052 = vrcp.pop %v1050
    %v1053 = vmul.f32 %v1042, %v1051
    %v1054 = vmul.f32 %v1044, %v1052
    %v1055 = vpack.c.bf16 %v1054, %v1053
    %1056 = vrot.lane.b32.xlu0 %v332, 80
    %v1057 = vpop.permute.xlu0 %1056
    %v1060 = vsel %vm261, %v1055, 0
    %1062 = vmatprep.subr.bf16.mxu0 0
    %1063 = vmatpush1.bf16.msra.mxu0 0
    %1064 = vmatprep.subr.bf16.mxu0 0
    %1065 = vmatpush1.bf16.msra.mxu0 0
    %1066 = vmatprep.subr.bf16.mxu0 0
    %1067 = vmatpush1.bf16.msra.mxu0 0
    %1068 = vmatprep.subr.bf16.mxu0 0
    %1069 = vmatpush1.bf16.msra.mxu0 0
    %1070 = vmatprep.subr.bf16.mxu0 0
    %1071 = vmatpush1.bf16.msra.mxu0 0
    %1072 = vmatprep.subr.bf16.mxu0 0
    %1073 = vmatpush1.bf16.msra.mxu0 0
    %1074 = vmatprep.subr.bf16.mxu0 0
    %1075 = vmatpush1.bf16.msra.mxu0 0
    %1076 = vmatprep.subr.bf16.mxu0 0
    %1077 = vmatpush1.bf16.msra.mxu0 %v1057
    %1078 = vmatprep.subr.bf16.mxu0 0
    %1079 = vmatpush2.bf16.msra.mxu0 0
    %1080 = vmatprep.subr.bf16.mxu0 0
    %1081 = vmatpush2.bf16.msra.mxu0 0
    %1082 = vmatprep.subr.bf16.mxu0 0
    %1083 = vmatpush2.bf16.msra.mxu0 0
    %1084 = vmatprep.subr.bf16.mxu0 0
    %1085 = vmatpush2.bf16.msra.mxu0 0
    %1086 = vmatprep.subr.bf16.mxu0 0
    %1087 = vmatpush2.bf16.msra.mxu0 0
    %1088 = vmatprep.subr.bf16.mxu0 0
    %1089 = vmatpush2.bf16.msra.mxu0 0
    %1090 = vmatprep.subr.bf16.mxu0 0
    %1091 = vmatpush2.bf16.msra.mxu0 0
    %1092 = vmatprep.subr.bf16.mxu0 0
    %1093 = vmatpush2.bf16.msra.mxu0 0
    %1094 = vmatprep.mubr.bf16.mxu0 0
    %1095 = vmatmul.mubr.bf16.gmra.mxu0 %v1060
    %v1096 = vpop.f32.mrf.mxu0
    %v1097 = vadd.f32 0.0, %v1096
    %v1098 = vpop.f32.mrf.mxu0
    %v1099 = vpop.f32.mrf.mxu0
    %v1100 = vadd.f32 0.0, %v1099
    %v1101 = vpop.f32.mrf.mxu0
    %1102 = vdwg.mxu0
    %1103 = vrot.lane.b32.xlu0 %v377, 80
    %v1104 = vpop.permute.xlu0 %1103
    %1105 = vrot.lane.b32.xlu0 %v377, 16
    %v1106 = vpop.permute.xlu0 %1105
    %v1108 = vsel %vm261, %v1104, 0
    %v1111 = vsel %vm261, %v1106, 0
    %1113 = vmatprep.subr.bf16.mxu0 0
    %1114 = vmatpush1.bf16.xpose.msra.mxu0 0
    %1115 = vmatprep.subr.bf16.mxu0 0
    %1116 = vmatpush1.bf16.xpose.msra.mxu0 0
    %1117 = vmatprep.subr.bf16.mxu0 0
    %1118 = vmatpush1.bf16.xpose.msra.mxu0 0
    %1119 = vmatprep.subr.bf16.mxu0 0
    %1120 = vmatpush1.bf16.xpose.msra.mxu0 0
    %1121 = vmatprep.subr.bf16.mxu0 0
    %1122 = vmatpush1.bf16.xpose.msra.mxu0 0
    %1123 = vmatprep.subr.bf16.mxu0 0
    %1124 = vmatpush1.bf16.xpose.msra.mxu0 0
    %1125 = vmatprep.subr.bf16.mxu0 0
    %1126 = vmatpush1.bf16.xpose.msra.mxu0 0
    %1127 = vmatprep.subr.bf16.mxu0 0
    %1128 = vmatpush1.bf16.xpose.msra.mxu0 %v1111
    %1129 = vmatprep.subr.bf16.mxu0 0
    %1130 = vmatpush2.bf16.xpose.msra.mxu0 0
    %1131 = vmatprep.subr.bf16.mxu0 0
    %1132 = vmatpush2.bf16.xpose.msra.mxu0 0
    %1133 = vmatprep.subr.bf16.mxu0 0
    %1134 = vmatpush2.bf16.xpose.msra.mxu0 0
    %1135 = vmatprep.subr.bf16.mxu0 0
    %1136 = vmatpush2.bf16.xpose.msra.mxu0 0
    %1137 = vmatprep.subr.bf16.mxu0 0
    %1138 = vmatpush2.bf16.xpose.msra.mxu0 0
    %1139 = vmatprep.subr.bf16.mxu0 0
    %1140 = vmatpush2.bf16.xpose.msra.mxu0 0
    %1141 = vmatprep.subr.bf16.mxu0 0
    %1142 = vmatpush2.bf16.xpose.msra.mxu0 0
    %1143 = vmatprep.subr.bf16.mxu0 0
    %1144 = vmatpush2.bf16.xpose.msra.mxu0 0
    %1145 = vmatprep.mubr.bf16.mxu0 0
    %1146 = vmatmul.mubr.bf16.gmra.mxu0 %v1108
    %v1147 = vpop.f32.mrf.mxu0
    %v1148 = vadd.f32 0.0, %v1147
    %v1149 = vpop.f32.mrf.mxu0
    %v1150 = vpop.f32.mrf.mxu0
    %v1151 = vadd.f32 0.0, %v1150
    %v1152 = vpop.f32.mrf.mxu0
    %1153 = vdwg.mxu0
    %v1154 = vsel %vm261, %v1148, -inf
    %1155 = vmax.xlane.f32.xlu0 %v1154
    %v1156 = vpop.xlane.xlu0 %1155
    %v1157 = vsel %vm261, %v1151, -inf
    %1158 = vmax.xlane.f32.xlu0 %v1157
    %v1159 = vpop.xlane.xlu0 %1158
    %v1160 = vsub.f32 %v1148, %v1156
    %v1161 = vsub.f32 %v1151, %v1159
    %v1162 = vmul.f32 %v1160, 1.442695
    %v1163 = vpow.pop %v1162
    %v1164 = vmul.f32 %v1161, 1.442695
    %v1165 = vpow.pop %v1164
    %v1166 = vsel %vm261, %v1163, 0.0
    %1167 = vadd.xlane.f32.xlu0 %v1166
    %v1168 = vpop.xlane.xlu0 %1167
    %v1169 = vsel %vm261, %v1165, 0.0
    %1170 = vadd.xlane.f32.xlu0 %v1169
    %v1171 = vpop.xlane.xlu0 %1170
    %v1172 = vrcp.pop %v1168
    %v1173 = vrcp.pop %v1171
    %v1174 = vmul.f32 %v1163, %v1172
    %v1175 = vmul.f32 %v1165, %v1173
    %v1176 = vpack.c.bf16 %v1175, %v1174
    %1177 = vrot.lane.b32.xlu0 %v451, 80
    %v1178 = vpop.permute.xlu0 %1177
    %v1181 = vsel %vm261, %v1176, 0
    %1183 = vmatprep.subr.bf16.mxu0 0
    %1184 = vmatpush1.bf16.msra.mxu0 0
    %1185 = vmatprep.subr.bf16.mxu0 0
    %1186 = vmatpush1.bf16.msra.mxu0 0
    %1187 = vmatprep.subr.bf16.mxu0 0
    %1188 = vmatpush1.bf16.msra.mxu0 0
    %1189 = vmatprep.subr.bf16.mxu0 0
    %1190 = vmatpush1.bf16.msra.mxu0 0
    %1191 = vmatprep.subr.bf16.mxu0 0
    %1192 = vmatpush1.bf16.msra.mxu0 0
    %1193 = vmatprep.subr.bf16.mxu0 0
    %1194 = vmatpush1.bf16.msra.mxu0 0
    %1195 = vmatprep.subr.bf16.mxu0 0
    %1196 = vmatpush1.bf16.msra.mxu0 0
    %1197 = vmatprep.subr.bf16.mxu0 0
    %1198 = vmatpush1.bf16.msra.mxu0 %v1178
    %1199 = vmatprep.subr.bf16.mxu0 0
    %1200 = vmatpush2.bf16.msra.mxu0 0
    %1201 = vmatprep.subr.bf16.mxu0 0
    %1202 = vmatpush2.bf16.msra.mxu0 0
    %1203 = vmatprep.subr.bf16.mxu0 0
    %1204 = vmatpush2.bf16.msra.mxu0 0
    %1205 = vmatprep.subr.bf16.mxu0 0
    %1206 = vmatpush2.bf16.msra.mxu0 0
    %1207 = vmatprep.subr.bf16.mxu0 0
    %1208 = vmatpush2.bf16.msra.mxu0 0
    %1209 = vmatprep.subr.bf16.mxu0 0
    %1210 = vmatpush2.bf16.msra.mxu0 0
    %1211 = vmatprep.subr.bf16.mxu0 0
    %1212 = vmatpush2.bf16.msra.mxu0 0
    %1213 = vmatprep.subr.bf16.mxu0 0
    %1214 = vmatpush2.bf16.msra.mxu0 0
    %1215 = vmatprep.mubr.bf16.mxu0 0
    %1216 = vmatmul.mubr.bf16.gmra.mxu0 %v1181
    %v1217 = vpop.f32.mrf.mxu0
    %v1218 = vadd.f32 0.0, %v1217
    %v1219 = vpop.f32.mrf.mxu0
    %v1220 = vpop.f32.mrf.mxu0
    %v1221 = vadd.f32 0.0, %v1220
    %v1222 = vpop.f32.mrf.mxu0
    %1223 = vdwg.mxu0
    %1226 = vrot.lane.b32.xlu0 %v612, 16
    %v1227 = vpop.permute.xlu0 %1226
    %1228 = vrot.lane.b32.xlu0 %v615, 16
    %v1229 = vpop.permute.xlu0 %1228
    %1234 = vrot.lane.b32.xlu0 %v855, 32
    %v1235 = vpop.permute.xlu0 %1234
    %1236 = vrot.lane.b32.xlu0 %v858, 32
    %v1237 = vpop.permute.xlu0 %1236
    %1242 = vrot.lane.b32.xlu0 %v1097, 48
    %v1243 = vpop.permute.xlu0 %1242
    %1244 = vrot.lane.b32.xlu0 %v1100, 48
    %v1245 = vpop.permute.xlu0 %1244
    %v1248 = vsel %vm261, %v371, %v1227
    %v1249 = vsel %vm261, %v374, %v1229
    %vm1250 = vcmask 261120
    %v1251 = vsel %vm1250, %v1248, %v1235
    %v1252 = vsel %vm1250, %v1249, %v1237
    %vm1253 = vcmask 392192
    %v1254 = vsel %vm1253, %v1251, %v1243
    %v1255 = vsel %vm1253, %v1252, %v1245
    %1258 = vrot.lane.b32.xlu0 %v734, 16
    %v1259 = vpop.permute.xlu0 %1258
    %1260 = vrot.lane.b32.xlu0 %v737, 16
    %v1261 = vpop.permute.xlu0 %1260
    %1266 = vrot.lane.b32.xlu0 %v976, 32
    %v1267 = vpop.permute.xlu0 %1266
    %1268 = vrot.lane.b32.xlu0 %v979, 32
    %v1269 = vpop.permute.xlu0 %1268
    %1274 = vrot.lane.b32.xlu0 %v1218, 48
    %v1275 = vpop.permute.xlu0 %1274
    %1276 = vrot.lane.b32.xlu0 %v1221, 48
    %v1277 = vpop.permute.xlu0 %1276
    %v1280 = vsel %vm261, %v490, %v1259
    %v1281 = vsel %vm261, %v493, %v1261
    %v1282 = vsel %vm1250, %v1280, %v1267
    %v1283 = vsel %vm1250, %v1281, %v1269
    %v1284 = vsel %vm1253, %v1282, %v1275
    %v1285 = vsel %vm1253, %v1283, %v1277
    %v1286 = vpack.c.bf16 %v233, %v229
    %1288 = vrot.lane.b32.xlu0 %v1286, 64
    %v1289 = vpop.permute.xlu0 %1288
    %v1291 = vsel %vm261, %v1286, 0
    %v1294 = vsel %vm261, %v1289, 0
    %1296 = vmatprep.subr.bf16.mxu0 0
    %1297 = vmatpush1.bf16.xpose.msra.mxu0 0
    %1298 = vmatprep.subr.bf16.mxu0 0
    %1299 = vmatpush1.bf16.xpose.msra.mxu0 0
    %1300 = vmatprep.subr.bf16.mxu0 0
    %1301 = vmatpush1.bf16.xpose.msra.mxu0 0
    %1302 = vmatprep.subr.bf16.mxu0 0
    %1303 = vmatpush1.bf16.xpose.msra.mxu0 0
    %1304 = vmatprep.subr.bf16.mxu0 0
    %1305 = vmatpush1.bf16.xpose.msra.mxu0 0
    %1306 = vmatprep.subr.bf16.mxu0 0
    %1307 = vmatpush1.bf16.xpose.msra.mxu0 0
    %1308 = vmatprep.subr.bf16.mxu0 0
    %1309 = vmatpush1.bf16.xpose.msra.mxu0 0
    %1310 = vmatprep.subr.bf16.mxu0 0
    %1311 = vmatpush1.bf16.xpose.msra.mxu0 %v1294
    %1312 = vmatprep.subr.bf16.mxu0 0
    %1313 = vmatpush2.bf16.xpose.msra.mxu0 0
    %1314 = vmatprep.subr.bf16.mxu0 0
    %1315 = vmatpush2.bf16.xpose.msra.mxu0 0
    %1316 = vmatprep.subr.bf16.mxu0 0
    %1317 = vmatpush2.bf16.xpose.msra.mxu0 0
    %1318 = vmatprep.subr.bf16.mxu0 0
    %1319 = vmatpush2.bf16.xpose.msra.mxu0 0
    %1320 = vmatprep.subr.bf16.mxu0 0
    %1321 = vmatpush2.bf16.xpose.msra.mxu0 0
    %1322 = vmatprep.subr.bf16.mxu0 0
    %1323 = vmatpush2.bf16.xpose.msra.mxu0 0
    %1324 = vmatprep.subr.bf16.mxu0 0
    %1325 = vmatpush2.bf16.xpose.msra.mxu0 0
    %1326 = vmatprep.subr.bf16.mxu0 0
    %1327 = vmatpush2.bf16.xpose.msra.mxu0 0
    %1328 = vmatprep.mubr.bf16.mxu0 0
    %1329 = vmatmul.mubr.bf16.gmra.mxu0 %v1291
    %v1330 = vpop.f32.mrf.mxu0
    %v1331 = vadd.f32 0.0, %v1330
    %v1332 = vpop.f32.mrf.mxu0
    %v1333 = vpop.f32.mrf.mxu0
    %v1334 = vadd.f32 0.0, %v1333
    %v1335 = vpop.f32.mrf.mxu0
    %1336 = vdwg.mxu0
    %v1337 = vsel %vm261, %v1331, -inf
    %1338 = vmax.xlane.f32.xlu0 %v1337
    %v1339 = vpop.xlane.xlu0 %1338
    %v1340 = vsel %vm261, %v1334, -inf
    %1341 = vmax.xlane.f32.xlu0 %v1340
    %v1342 = vpop.xlane.xlu0 %1341
    %v1343 = vsub.f32 %v1331, %v1339
    %v1344 = vsub.f32 %v1334, %v1342
    %v1345 = vmul.f32 %v1343, 1.442695
    %v1346 = vpow.pop %v1345
    %v1347 = vmul.f32 %v1344, 1.442695
    %v1348 = vpow.pop %v1347
    %v1349 = vsel %vm261, %v1346, 0.0
    %1350 = vadd.xlane.f32.xlu0 %v1349
    %v1351 = vpop.xlane.xlu0 %1350
    %v1352 = vsel %vm261, %v1348, 0.0
    %1353 = vadd.xlane.f32.xlu0 %v1352
    %v1354 = vpop.xlane.xlu0 %1353
    %v1355 = vrcp.pop %v1351
    %v1356 = vrcp.pop %v1354
    %v1357 = vmul.f32 %v1346, %v1355
    %v1358 = vmul.f32 %v1348, %v1356
    %v1359 = vpack.c.bf16 %v1358, %v1357
    %v1360 = vpack.c.bf16 %v235, %v231
    %v1362 = vsel %vm261, %v1359, 0
    %1364 = vmatprep.subr.bf16.mxu0 0
    %1365 = vmatpush1.bf16.msra.mxu0 0
    %1366 = vmatprep.subr.bf16.mxu0 0
    %1367 = vmatpush1.bf16.msra.mxu0 0
    %1368 = vmatprep.subr.bf16.mxu0 0
    %1369 = vmatpush1.bf16.msra.mxu0 0
    %1370 = vmatprep.subr.bf16.mxu0 0
    %1371 = vmatpush1.bf16.msra.mxu0 0
    %1372 = vmatprep.subr.bf16.mxu0 0
    %1373 = vmatpush1.bf16.msra.mxu0 0
    %1374 = vmatprep.subr.bf16.mxu0 0
    %1375 = vmatpush1.bf16.msra.mxu0 0
    %1376 = vmatprep.subr.bf16.mxu0 0
    %1377 = vmatpush1.bf16.msra.mxu0 0
    %1378 = vmatprep.subr.bf16.mxu0 0
    %1379 = vmatpush1.bf16.msra.mxu0 %v1360
    %1380 = vmatprep.subr.bf16.mxu0 0
    %1381 = vmatpush2.bf16.msra.mxu0 0
    %1382 = vmatprep.subr.bf16.mxu0 0
    %1383 = vmatpush2.bf16.msra.mxu0 0
    %1384 = vmatprep.subr.bf16.mxu0 0
    %1385 = vmatpush2.bf16.msra.mxu0 0
    %1386 = vmatprep.subr.bf16.mxu0 0
    %1387 = vmatpush2.bf16.msra.mxu0 0
    %1388 = vmatprep.subr.bf16.mxu0 0
    %1389 = vmatpush2.bf16.msra.mxu0 0
    %1390 = vmatprep.subr.bf16.mxu0 0
    %1391 = vmatpush2.bf16.msra.mxu0 0
    %1392 = vmatprep.subr.bf16.mxu0 0
    %1393 = vmatpush2.bf16.msra.mxu0 0
    %1394 = vmatprep.subr.bf16.mxu0 0
    %1395 = vmatpush2.bf16.msra.mxu0 0
    %1396 = vmatprep.mubr.bf16.mxu0 0
    %1397 = vmatmul.mubr.bf16.gmra.mxu0 %v1362
    %v1398 = vpop.f32.mrf.mxu0
    %v1399 = vadd.f32 0.0, %v1398
    %v1400 = vpop.f32.mrf.mxu0
    %v1401 = vpop.f32.mrf.mxu0
    %v1402 = vadd.f32 0.0, %v1401
    %v1403 = vpop.f32.mrf.mxu0
    %1404 = vdwg.mxu0
    %v1405 = vpack.c.bf16 %v253, %v249
    %1407 = vrot.lane.b32.xlu0 %v1405, 64
    %v1408 = vpop.permute.xlu0 %1407
    %v1410 = vsel %vm261, %v1405, 0
    %v1413 = vsel %vm261, %v1408, 0
    %1415 = vmatprep.subr.bf16.mxu0 0
    %1416 = vmatpush1.bf16.xpose.msra.mxu0 0
    %1417 = vmatprep.subr.bf16.mxu0 0
    %1418 = vmatpush1.bf16.xpose.msra.mxu0 0
    %1419 = vmatprep.subr.bf16.mxu0 0
    %1420 = vmatpush1.bf16.xpose.msra.mxu0 0
    %1421 = vmatprep.subr.bf16.mxu0 0
    %1422 = vmatpush1.bf16.xpose.msra.mxu0 0
    %1423 = vmatprep.subr.bf16.mxu0 0
    %1424 = vmatpush1.bf16.xpose.msra.mxu0 0
    %1425 = vmatprep.subr.bf16.mxu0 0
    %1426 = vmatpush1.bf16.xpose.msra.mxu0 0
    %1427 = vmatprep.subr.bf16.mxu0 0
    %1428 = vmatpush1.bf16.xpose.msra.mxu0 0
    %1429 = vmatprep.subr.bf16.mxu0 0
    %1430 = vmatpush1.bf16.xpose.msra.mxu0 %v1413
    %1431 = vmatprep.subr.bf16.mxu0 0
    %1432 = vmatpush2.bf16.xpose.msra.mxu0 0
    %1433 = vmatprep.subr.bf16.mxu0 0
    %1434 = vmatpush2.bf16.xpose.msra.mxu0 0
    %1435 = vmatprep.subr.bf16.mxu0 0
    %1436 = vmatpush2.bf16.xpose.msra.mxu0 0
    %1437 = vmatprep.subr.bf16.mxu0 0
    %1438 = vmatpush2.bf16.xpose.msra.mxu0 0
    %1439 = vmatprep.subr.bf16.mxu0 0
    %1440 = vmatpush2.bf16.xpose.msra.mxu0 0
    %1441 = vmatprep.subr.bf16.mxu0 0
    %1442 = vmatpush2.bf16.xpose.msra.mxu0 0
    %1443 = vmatprep.subr.bf16.mxu0 0
    %1444 = vmatpush2.bf16.xpose.msra.mxu0 0
    %1445 = vmatprep.subr.bf16.mxu0 0
    %1446 = vmatpush2.bf16.xpose.msra.mxu0 0
    %1447 = vmatprep.mubr.bf16.mxu0 0
    %1448 = vmatmul.mubr.bf16.gmra.mxu0 %v1410
    %v1449 = vpop.f32.mrf.mxu0
    %v1450 = vadd.f32 0.0, %v1449
    %v1451 = vpop.f32.mrf.mxu0
    %v1452 = vpop.f32.mrf.mxu0
    %v1453 = vadd.f32 0.0, %v1452
    %v1454 = vpop.f32.mrf.mxu0
    %1455 = vdwg.mxu0
    %v1456 = vsel %vm261, %v1450, -inf
    %1457 = vmax.xlane.f32.xlu0 %v1456
    %v1458 = vpop.xlane.xlu0 %1457
    %v1459 = vsel %vm261, %v1453, -inf
    %1460 = vmax.xlane.f32.xlu0 %v1459
    %v1461 = vpop.xlane.xlu0 %1460
    %v1462 = vsub.f32 %v1450, %v1458
    %v1463 = vsub.f32 %v1453, %v1461
    %v1464 = vmul.f32 %v1462, 1.442695
    %v1465 = vpow.pop %v1464
    %v1466 = vmul.f32 %v1463, 1.442695
    %v1467 = vpow.pop %v1466
    %v1468 = vsel %vm261, %v1465, 0.0
    %1469 = vadd.xlane.f32.xlu0 %v1468
    %v1470 = vpop.xlane.xlu0 %1469
    %v1471 = vsel %vm261, %v1467, 0.0
    %1472 = vadd.xlane.f32.xlu0 %v1471
    %v1473 = vpop.xlane.xlu0 %1472
    %v1474 = vrcp.pop %v1470
    %v1475 = vrcp.pop %v1473
    %v1476 = vmul.f32 %v1465, %v1474
    %v1477 = vmul.f32 %v1467, %v1475
    %v1478 = vpack.c.bf16 %v1477, %v1476
    %v1479 = vpack.c.bf16 %v255, %v251
    %v1481 = vsel %vm261, %v1478, 0
    %1483 = vmatprep.subr.bf16.mxu0 0
    %1484 = vmatpush1.bf16.msra.mxu0 0
    %1485 = vmatprep.subr.bf16.mxu0 0
    %1486 = vmatpush1.bf16.msra.mxu0 0
    %1487 = vmatprep.subr.bf16.mxu0 0
    %1488 = vmatpush1.bf16.msra.mxu0 0
    %1489 = vmatprep.subr.bf16.mxu0 0
    %1490 = vmatpush1.bf16.msra.mxu0 0
    %1491 = vmatprep.subr.bf16.mxu0 0
    %1492 = vmatpush1.bf16.msra.mxu0 0
    %1493 = vmatprep.subr.bf16.mxu0 0
    %1494 = vmatpush1.bf16.msra.mxu0 0
    %1495 = vmatprep.subr.bf16.mxu0 0
    %1496 = vmatpush1.bf16.msra.mxu0 0
    %1497 = vmatprep.subr.bf16.mxu0 0
    %1498 = vmatpush1.bf16.msra.mxu0 %v1479
    %1499 = vmatprep.subr.bf16.mxu0 0
    %1500 = vmatpush2.bf16.msra.mxu0 0
    %1501 = vmatprep.subr.bf16.mxu0 0
    %1502 = vmatpush2.bf16.msra.mxu0 0
    %1503 = vmatprep.subr.bf16.mxu0 0
    %1504 = vmatpush2.bf16.msra.mxu0 0
    %1505 = vmatprep.subr.bf16.mxu0 0
    %1506 = vmatpush2.bf16.msra.mxu0 0
    %1507 = vmatprep.subr.bf16.mxu0 0
    %1508 = vmatpush2.bf16.msra.mxu0 0
    %1509 = vmatprep.subr.bf16.mxu0 0
    %1510 = vmatpush2.bf16.msra.mxu0 0
    %1511 = vmatprep.subr.bf16.mxu0 0
    %1512 = vmatpush2.bf16.msra.mxu0 0
    %1513 = vmatprep.subr.bf16.mxu0 0
    %1514 = vmatpush2.bf16.msra.mxu0 0
    %1515 = vmatprep.mubr.bf16.mxu0 0
    %1516 = vmatmul.mubr.bf16.gmra.mxu0 %v1481
    %v1517 = vpop.f32.mrf.mxu0
    %v1518 = vadd.f32 0.0, %v1517
    %v1519 = vpop.f32.mrf.mxu0
    %v1520 = vpop.f32.mrf.mxu0
    %v1521 = vadd.f32 0.0, %v1520
    %v1522 = vpop.f32.mrf.mxu0
    %1523 = vdwg.mxu0
    %1524 = vrot.lane.b32.xlu0 %v1286, 112
    %v1525 = vpop.permute.xlu0 %1524
    %1526 = vrot.lane.b32.xlu0 %v1286, 48
    %v1527 = vpop.permute.xlu0 %1526
    %v1529 = vsel %vm261, %v1525, 0
    %v1532 = vsel %vm261, %v1527, 0
    %1534 = vmatprep.subr.bf16.mxu0 0
    %1535 = vmatpush1.bf16.xpose.msra.mxu0 0
    %1536 = vmatprep.subr.bf16.mxu0 0
    %1537 = vmatpush1.bf16.xpose.msra.mxu0 0
    %1538 = vmatprep.subr.bf16.mxu0 0
    %1539 = vmatpush1.bf16.xpose.msra.mxu0 0
    %1540 = vmatprep.subr.bf16.mxu0 0
    %1541 = vmatpush1.bf16.xpose.msra.mxu0 0
    %1542 = vmatprep.subr.bf16.mxu0 0
    %1543 = vmatpush1.bf16.xpose.msra.mxu0 0
    %1544 = vmatprep.subr.bf16.mxu0 0
    %1545 = vmatpush1.bf16.xpose.msra.mxu0 0
    %1546 = vmatprep.subr.bf16.mxu0 0
    %1547 = vmatpush1.bf16.xpose.msra.mxu0 0
    %1548 = vmatprep.subr.bf16.mxu0 0
    %1549 = vmatpush1.bf16.xpose.msra.mxu0 %v1532
    %1550 = vmatprep.subr.bf16.mxu0 0
    %1551 = vmatpush2.bf16.xpose.msra.mxu0 0
    %1552 = vmatprep.subr.bf16.mxu0 0
    %1553 = vmatpush2.bf16.xpose.msra.mxu0 0
    %1554 = vmatprep.subr.bf16.mxu0 0
    %1555 = vmatpush2.bf16.xpose.msra.mxu0 0
    %1556 = vmatprep.subr.bf16.mxu0 0
    %1557 = vmatpush2.bf16.xpose.msra.mxu0 0
    %1558 = vmatprep.subr.bf16.mxu0 0
    %1559 = vmatpush2.bf16.xpose.msra.mxu0 0
    %1560 = vmatprep.subr.bf16.mxu0 0
    %1561 = vmatpush2.bf16.xpose.msra.mxu0 0
    %1562 = vmatprep.subr.bf16.mxu0 0
    %1563 = vmatpush2.bf16.xpose.msra.mxu0 0
    %1564 = vmatprep.subr.bf16.mxu0 0
    %1565 = vmatpush2.bf16.xpose.msra.mxu0 0
    %1566 = vmatprep.mubr.bf16.mxu0 0
    %1567 = vmatmul.mubr.bf16.gmra.mxu0 %v1529
    %v1568 = vpop.f32.mrf.mxu0
    %v1569 = vadd.f32 0.0, %v1568
    %v1570 = vpop.f32.mrf.mxu0
    %v1571 = vpop.f32.mrf.mxu0
    %v1572 = vadd.f32 0.0, %v1571
    %v1573 = vpop.f32.mrf.mxu0
    %1574 = vdwg.mxu0
    %v1575 = vsel %vm261, %v1569, -inf
    %1576 = vmax.xlane.f32.xlu0 %v1575
    %v1577 = vpop.xlane.xlu0 %1576
    %v1578 = vsel %vm261, %v1572, -inf
    %1579 = vmax.xlane.f32.xlu0 %v1578
    %v1580 = vpop.xlane.xlu0 %1579
    %v1581 = vsub.f32 %v1569, %v1577
    %v1582 = vsub.f32 %v1572, %v1580
    %v1583 = vmul.f32 %v1581, 1.442695
    %v1584 = vpow.pop %v1583
    %v1585 = vmul.f32 %v1582, 1.442695
    %v1586 = vpow.pop %v1585
    %v1587 = vsel %vm261, %v1584, 0.0
    %1588 = vadd.xlane.f32.xlu0 %v1587
    %v1589 = vpop.xlane.xlu0 %1588
    %v1590 = vsel %vm261, %v1586, 0.0
    %1591 = vadd.xlane.f32.xlu0 %v1590
    %v1592 = vpop.xlane.xlu0 %1591
    %v1593 = vrcp.pop %v1589
    %v1594 = vrcp.pop %v1592
    %v1595 = vmul.f32 %v1584, %v1593
    %v1596 = vmul.f32 %v1586, %v1594
    %v1597 = vpack.c.bf16 %v1596, %v1595
    %1599 = vrot.lane.b32.xlu0 %v1360, 112
    %v1600 = vpop.permute.xlu0 %1599
    %v1603 = vsel %vm261, %v1597, 0
    %1605 = vmatprep.subr.bf16.mxu0 0
    %1606 = vmatpush1.bf16.msra.mxu0 0
    %1607 = vmatprep.subr.bf16.mxu0 0
    %1608 = vmatpush1.bf16.msra.mxu0 0
    %1609 = vmatprep.subr.bf16.mxu0 0
    %1610 = vmatpush1.bf16.msra.mxu0 0
    %1611 = vmatprep.subr.bf16.mxu0 0
    %1612 = vmatpush1.bf16.msra.mxu0 0
    %1613 = vmatprep.subr.bf16.mxu0 0
    %1614 = vmatpush1.bf16.msra.mxu0 0
    %1615 = vmatprep.subr.bf16.mxu0 0
    %1616 = vmatpush1.bf16.msra.mxu0 0
    %1617 = vmatprep.subr.bf16.mxu0 0
    %1618 = vmatpush1.bf16.msra.mxu0 0
    %1619 = vmatprep.subr.bf16.mxu0 0
    %1620 = vmatpush1.bf16.msra.mxu0 %v1600
    %1621 = vmatprep.subr.bf16.mxu0 0
    %1622 = vmatpush2.bf16.msra.mxu0 0
    %1623 = vmatprep.subr.bf16.mxu0 0
    %1624 = vmatpush2.bf16.msra.mxu0 0
    %1625 = vmatprep.subr.bf16.mxu0 0
    %1626 = vmatpush2.bf16.msra.mxu0 0
    %1627 = vmatprep.subr.bf16.mxu0 0
    %1628 = vmatpush2.bf16.msra.mxu0 0
    %1629 = vmatprep.subr.bf16.mxu0 0
    %1630 = vmatpush2.bf16.msra.mxu0 0
    %1631 = vmatprep.subr.bf16.mxu0 0
    %1632 = vmatpush2.bf16.msra.mxu0 0
    %1633 = vmatprep.subr.bf16.mxu0 0
    %1634 = vmatpush2.bf16.msra.mxu0 0
    %1635 = vmatprep.subr.bf16.mxu0 0
    %1636 = vmatpush2.bf16.msra.mxu0 0
    %1637 = vmatprep.mubr.bf16.mxu0 0
    %1638 = vmatmul.mubr.bf16.gmra.mxu0 %v1603
    %v1639 = vpop.f32.mrf.mxu0
    %v1640 = vadd.f32 0.0, %v1639
    %v1641 = vpop.f32.mrf.mxu0
    %v1642 = vpop.f32.mrf.mxu0
    %v1643 = vadd.f32 0.0, %v1642
    %v1644 = vpop.f32.mrf.mxu0
    %1645 = vdwg.mxu0
    %1646 = vrot.lane.b32.xlu0 %v1405, 112
    %v1647 = vpop.permute.xlu0 %1646
    %1648 = vrot.lane.b32.xlu0 %v1405, 48
    %v1649 = vpop.permute.xlu0 %1648
    %v1651 = vsel %vm261, %v1647, 0
    %v1654 = vsel %vm261, %v1649, 0
    %1656 = vmatprep.subr.bf16.mxu0 0
    %1657 = vmatpush1.bf16.xpose.msra.mxu0 0
    %1658 = vmatprep.subr.bf16.mxu0 0
    %1659 = vmatpush1.bf16.xpose.msra.mxu0 0
    %1660 = vmatprep.subr.bf16.mxu0 0
    %1661 = vmatpush1.bf16.xpose.msra.mxu0 0
    %1662 = vmatprep.subr.bf16.mxu0 0
    %1663 = vmatpush1.bf16.xpose.msra.mxu0 0
    %1664 = vmatprep.subr.bf16.mxu0 0
    %1665 = vmatpush1.bf16.xpose.msra.mxu0 0
    %1666 = vmatprep.subr.bf16.mxu0 0
    %1667 = vmatpush1.bf16.xpose.msra.mxu0 0
    %1668 = vmatprep.subr.bf16.mxu0 0
    %1669 = vmatpush1.bf16.xpose.msra.mxu0 0
    %1670 = vmatprep.subr.bf16.mxu0 0
    %1671 = vmatpush1.bf16.xpose.msra.mxu0 %v1654
    %1672 = vmatprep.subr.bf16.mxu0 0
    %1673 = vmatpush2.bf16.xpose.msra.mxu0 0
    %1674 = vmatprep.subr.bf16.mxu0 0
    %1675 = vmatpush2.bf16.xpose.msra.mxu0 0
    %1676 = vmatprep.subr.bf16.mxu0 0
    %1677 = vmatpush2.bf16.xpose.msra.mxu0 0
    %1678 = vmatprep.subr.bf16.mxu0 0
    %1679 = vmatpush2.bf16.xpose.msra.mxu0 0
    %1680 = vmatprep.subr.bf16.mxu0 0
    %1681 = vmatpush2.bf16.xpose.msra.mxu0 0
    %1682 = vmatprep.subr.bf16.mxu0 0
    %1683 = vmatpush2.bf16.xpose.msra.mxu0 0
    %1684 = vmatprep.subr.bf16.mxu0 0
    %1685 = vmatpush2.bf16.xpose.msra.mxu0 0
    %1686 = vmatprep.subr.bf16.mxu0 0
    %1687 = vmatpush2.bf16.xpose.msra.mxu0 0
    %1688 = vmatprep.mubr.bf16.mxu0 0
    %1689 = vmatmul.mubr.bf16.gmra.mxu0 %v1651
    %v1690 = vpop.f32.mrf.mxu0
    %v1691 = vadd.f32 0.0, %v1690
    %v1692 = vpop.f32.mrf.mxu0
    %v1693 = vpop.f32.mrf.mxu0
    %v1694 = vadd.f32 0.0, %v1693
    %v1695 = vpop.f32.mrf.mxu0
    %1696 = vdwg.mxu0
    %v1697 = vsel %vm261, %v1691, -inf
    %1698 = vmax.xlane.f32.xlu0 %v1697
    %v1699 = vpop.xlane.xlu0 %1698
    %v1700 = vsel %vm261, %v1694, -inf
    %1701 = vmax.xlane.f32.xlu0 %v1700
    %v1702 = vpop.xlane.xlu0 %1701
    %v1703 = vsub.f32 %v1691, %v1699
    %v1704 = vsub.f32 %v1694, %v1702
    %v1705 = vmul.f32 %v1703, 1.442695
    %v1706 = vpow.pop %v1705
    %v1707 = vmul.f32 %v1704, 1.442695
    %v1708 = vpow.pop %v1707
    %v1709 = vsel %vm261, %v1706, 0.0
    %1710 = vadd.xlane.f32.xlu0 %v1709
    %v1711 = vpop.xlane.xlu0 %1710
    %v1712 = vsel %vm261, %v1708, 0.0
    %1713 = vadd.xlane.f32.xlu0 %v1712
    %v1714 = vpop.xlane.xlu0 %1713
    %v1715 = vrcp.pop %v1711
    %v1716 = vrcp.pop %v1714
    %v1717 = vmul.f32 %v1706, %v1715
    %v1718 = vmul.f32 %v1708, %v1716
    %v1719 = vpack.c.bf16 %v1718, %v1717
    %1721 = vrot.lane.b32.xlu0 %v1479, 112
    %v1722 = vpop.permute.xlu0 %1721
    %v1725 = vsel %vm261, %v1719, 0
    %1727 = vmatprep.subr.bf16.mxu0 0
    %1728 = vmatpush1.bf16.msra.mxu0 0
    %1729 = vmatprep.subr.bf16.mxu0 0
    %1730 = vmatpush1.bf16.msra.mxu0 0
    %1731 = vmatprep.subr.bf16.mxu0 0
    %1732 = vmatpush1.bf16.msra.mxu0 0
    %1733 = vmatprep.subr.bf16.mxu0 0
    %1734 = vmatpush1.bf16.msra.mxu0 0
    %1735 = vmatprep.subr.bf16.mxu0 0
    %1736 = vmatpush1.bf16.msra.mxu0 0
    %1737 = vmatprep.subr.bf16.mxu0 0
    %1738 = vmatpush1.bf16.msra.mxu0 0
    %1739 = vmatprep.subr.bf16.mxu0 0
    %1740 = vmatpush1.bf16.msra.mxu0 0
    %1741 = vmatprep.subr.bf16.mxu0 0
    %1742 = vmatpush1.bf16.msra.mxu0 %v1722
    %1743 = vmatprep.subr.bf16.mxu0 0
    %1744 = vmatpush2.bf16.msra.mxu0 0
    %1745 = vmatprep.subr.bf16.mxu0 0
    %1746 = vmatpush2.bf16.msra.mxu0 0
    %1747 = vmatprep.subr.bf16.mxu0 0
    %1748 = vmatpush2.bf16.msra.mxu0 0
    %1749 = vmatprep.subr.bf16.mxu0 0
    %1750 = vmatpush2.bf16.msra.mxu0 0
    %1751 = vmatprep.subr.bf16.mxu0 0
    %1752 = vmatpush2.bf16.msra.mxu0 0
    %1753 = vmatprep.subr.bf16.mxu0 0
    %1754 = vmatpush2.bf16.msra.mxu0 0
    %1755 = vmatprep.subr.bf16.mxu0 0
    %1756 = vmatpush2.bf16.msra.mxu0 0
    %1757 = vmatprep.subr.bf16.mxu0 0
    %1758 = vmatpush2.bf16.msra.mxu0 0
    %1759 = vmatprep.mubr.bf16.mxu0 0
    %1760 = vmatmul.mubr.bf16.gmra.mxu0 %v1725
    %v1761 = vpop.f32.mrf.mxu0
    %v1762 = vadd.f32 0.0, %v1761
    %v1763 = vpop.f32.mrf.mxu0
    %v1764 = vpop.f32.mrf.mxu0
    %v1765 = vadd.f32 0.0, %v1764
    %v1766 = vpop.f32.mrf.mxu0
    %1767 = vdwg.mxu0
    %1768 = vrot.lane.b32.xlu0 %v1286, 96
    %v1769 = vpop.permute.xlu0 %1768
    %1770 = vrot.lane.b32.xlu0 %v1286, 32
    %v1771 = vpop.permute.xlu0 %1770
    %v1773 = vsel %vm261, %v1769, 0
    %v1776 = vsel %vm261, %v1771, 0
    %1778 = vmatprep.subr.bf16.mxu0 0
    %1779 = vmatpush1.bf16.xpose.msra.mxu0 0
    %1780 = vmatprep.subr.bf16.mxu0 0
    %1781 = vmatpush1.bf16.xpose.msra.mxu0 0
    %1782 = vmatprep.subr.bf16.mxu0 0
    %1783 = vmatpush1.bf16.xpose.msra.mxu0 0
    %1784 = vmatprep.subr.bf16.mxu0 0
    %1785 = vmatpush1.bf16.xpose.msra.mxu0 0
    %1786 = vmatprep.subr.bf16.mxu0 0
    %1787 = vmatpush1.bf16.xpose.msra.mxu0 0
    %1788 = vmatprep.subr.bf16.mxu0 0
    %1789 = vmatpush1.bf16.xpose.msra.mxu0 0
    %1790 = vmatprep.subr.bf16.mxu0 0
    %1791 = vmatpush1.bf16.xpose.msra.mxu0 0
    %1792 = vmatprep.subr.bf16.mxu0 0
    %1793 = vmatpush1.bf16.xpose.msra.mxu0 %v1776
    %1794 = vmatprep.subr.bf16.mxu0 0
    %1795 = vmatpush2.bf16.xpose.msra.mxu0 0
    %1796 = vmatprep.subr.bf16.mxu0 0
    %1797 = vmatpush2.bf16.xpose.msra.mxu0 0
    %1798 = vmatprep.subr.bf16.mxu0 0
    %1799 = vmatpush2.bf16.xpose.msra.mxu0 0
    %1800 = vmatprep.subr.bf16.mxu0 0
    %1801 = vmatpush2.bf16.xpose.msra.mxu0 0
    %1802 = vmatprep.subr.bf16.mxu0 0
    %1803 = vmatpush2.bf16.xpose.msra.mxu0 0
    %1804 = vmatprep.subr.bf16.mxu0 0
    %1805 = vmatpush2.bf16.xpose.msra.mxu0 0
    %1806 = vmatprep.subr.bf16.mxu0 0
    %1807 = vmatpush2.bf16.xpose.msra.mxu0 0
    %1808 = vmatprep.subr.bf16.mxu0 0
    %1809 = vmatpush2.bf16.xpose.msra.mxu0 0
    %1810 = vmatprep.mubr.bf16.mxu0 0
    %1811 = vmatmul.mubr.bf16.gmra.mxu0 %v1773
    %v1812 = vpop.f32.mrf.mxu0
    %v1813 = vadd.f32 0.0, %v1812
    %v1814 = vpop.f32.mrf.mxu0
    %v1815 = vpop.f32.mrf.mxu0
    %v1816 = vadd.f32 0.0, %v1815
    %v1817 = vpop.f32.mrf.mxu0
    %1818 = vdwg.mxu0
    %v1819 = vsel %vm261, %v1813, -inf
    %1820 = vmax.xlane.f32.xlu0 %v1819
    %v1821 = vpop.xlane.xlu0 %1820
    %v1822 = vsel %vm261, %v1816, -inf
    %1823 = vmax.xlane.f32.xlu0 %v1822
    %v1824 = vpop.xlane.xlu0 %1823
    %v1825 = vsub.f32 %v1813, %v1821
    %v1826 = vsub.f32 %v1816, %v1824
    %v1827 = vmul.f32 %v1825, 1.442695
    %v1828 = vpow.pop %v1827
    %v1829 = vmul.f32 %v1826, 1.442695
    %v1830 = vpow.pop %v1829
    %v1831 = vsel %vm261, %v1828, 0.0
    %1832 = vadd.xlane.f32.xlu0 %v1831
    %v1833 = vpop.xlane.xlu0 %1832
    %v1834 = vsel %vm261, %v1830, 0.0
    %1835 = vadd.xlane.f32.xlu0 %v1834
    %v1836 = vpop.xlane.xlu0 %1835
    %v1837 = vrcp.pop %v1833
    %v1838 = vrcp.pop %v1836
    %v1839 = vmul.f32 %v1828, %v1837
    %v1840 = vmul.f32 %v1830, %v1838
    %v1841 = vpack.c.bf16 %v1840, %v1839
    %1842 = vrot.lane.b32.xlu0 %v1360, 96
    %v1843 = vpop.permute.xlu0 %1842
    %v1846 = vsel %vm261, %v1841, 0
    %1848 = vmatprep.subr.bf16.mxu0 0
    %1849 = vmatpush1.bf16.msra.mxu0 0
    %1850 = vmatprep.subr.bf16.mxu0 0
    %1851 = vmatpush1.bf16.msra.mxu0 0
    %1852 = vmatprep.subr.bf16.mxu0 0
    %1853 = vmatpush1.bf16.msra.mxu0 0
    %1854 = vmatprep.subr.bf16.mxu0 0
    %1855 = vmatpush1.bf16.msra.mxu0 0
    %1856 = vmatprep.subr.bf16.mxu0 0
    %1857 = vmatpush1.bf16.msra.mxu0 0
    %1858 = vmatprep.subr.bf16.mxu0 0
    %1859 = vmatpush1.bf16.msra.mxu0 0
    %1860 = vmatprep.subr.bf16.mxu0 0
    %1861 = vmatpush1.bf16.msra.mxu0 0
    %1862 = vmatprep.subr.bf16.mxu0 0
    %1863 = vmatpush1.bf16.msra.mxu0 %v1843
    %1864 = vmatprep.subr.bf16.mxu0 0
    %1865 = vmatpush2.bf16.msra.mxu0 0
    %1866 = vmatprep.subr.bf16.mxu0 0
    %1867 = vmatpush2.bf16.msra.mxu0 0
    %1868 = vmatprep.subr.bf16.mxu0 0
    %1869 = vmatpush2.bf16.msra.mxu0 0
    %1870 = vmatprep.subr.bf16.mxu0 0
    %1871 = vmatpush2.bf16.msra.mxu0 0
    %1872 = vmatprep.subr.bf16.mxu0 0
    %1873 = vmatpush2.bf16.msra.mxu0 0
    %1874 = vmatprep.subr.bf16.mxu0 0
    %1875 = vmatpush2.bf16.msra.mxu0 0
    %1876 = vmatprep.subr.bf16.mxu0 0
    %1877 = vmatpush2.bf16.msra.mxu0 0
    %1878 = vmatprep.subr.bf16.mxu0 0
    %1879 = vmatpush2.bf16.msra.mxu0 0
    %1880 = vmatprep.mubr.bf16.mxu0 0
    %1881 = vmatmul.mubr.bf16.gmra.mxu0 %v1846
    %v1882 = vpop.f32.mrf.mxu0
    %v1883 = vadd.f32 0.0, %v1882
    %v1884 = vpop.f32.mrf.mxu0
    %v1885 = vpop.f32.mrf.mxu0
    %v1886 = vadd.f32 0.0, %v1885
    %v1887 = vpop.f32.mrf.mxu0
    %1888 = vdwg.mxu0
    %1889 = vrot.lane.b32.xlu0 %v1405, 96
    %v1890 = vpop.permute.xlu0 %1889
    %1891 = vrot.lane.b32.xlu0 %v1405, 32
    %v1892 = vpop.permute.xlu0 %1891
    %v1894 = vsel %vm261, %v1890, 0
    %v1897 = vsel %vm261, %v1892, 0
    %1899 = vmatprep.subr.bf16.mxu0 0
    %1900 = vmatpush1.bf16.xpose.msra.mxu0 0
    %1901 = vmatprep.subr.bf16.mxu0 0
    %1902 = vmatpush1.bf16.xpose.msra.mxu0 0
    %1903 = vmatprep.subr.bf16.mxu0 0
    %1904 = vmatpush1.bf16.xpose.msra.mxu0 0
    %1905 = vmatprep.subr.bf16.mxu0 0
    %1906 = vmatpush1.bf16.xpose.msra.mxu0 0
    %1907 = vmatprep.subr.bf16.mxu0 0
    %1908 = vmatpush1.bf16.xpose.msra.mxu0 0
    %1909 = vmatprep.subr.bf16.mxu0 0
    %1910 = vmatpush1.bf16.xpose.msra.mxu0 0
    %1911 = vmatprep.subr.bf16.mxu0 0
    %1912 = vmatpush1.bf16.xpose.msra.mxu0 0
    %1913 = vmatprep.subr.bf16.mxu0 0
    %1914 = vmatpush1.bf16.xpose.msra.mxu0 %v1897
    %1915 = vmatprep.subr.bf16.mxu0 0
    %1916 = vmatpush2.bf16.xpose.msra.mxu0 0
    %1917 = vmatprep.subr.bf16.mxu0 0
    %1918 = vmatpush2.bf16.xpose.msra.mxu0 0
    %1919 = vmatprep.subr.bf16.mxu0 0
    %1920 = vmatpush2.bf16.xpose.msra.mxu0 0
    %1921 = vmatprep.subr.bf16.mxu0 0
    %1922 = vmatpush2.bf16.xpose.msra.mxu0 0
    %1923 = vmatprep.subr.bf16.mxu0 0
    %1924 = vmatpush2.bf16.xpose.msra.mxu0 0
    %1925 = vmatprep.subr.bf16.mxu0 0
    %1926 = vmatpush2.bf16.xpose.msra.mxu0 0
    %1927 = vmatprep.subr.bf16.mxu0 0
    %1928 = vmatpush2.bf16.xpose.msra.mxu0 0
    %1929 = vmatprep.subr.bf16.mxu0 0
    %1930 = vmatpush2.bf16.xpose.msra.mxu0 0
    %1931 = vmatprep.mubr.bf16.mxu0 0
    %1932 = vmatmul.mubr.bf16.gmra.mxu0 %v1894
    %v1933 = vpop.f32.mrf.mxu0
    %v1934 = vadd.f32 0.0, %v1933
    %v1935 = vpop.f32.mrf.mxu0
    %v1936 = vpop.f32.mrf.mxu0
    %v1937 = vadd.f32 0.0, %v1936
    %v1938 = vpop.f32.mrf.mxu0
    %1939 = vdwg.mxu0
    %v1940 = vsel %vm261, %v1934, -inf
    %1941 = vmax.xlane.f32.xlu0 %v1940
    %v1942 = vpop.xlane.xlu0 %1941
    %v1943 = vsel %vm261, %v1937, -inf
    %1944 = vmax.xlane.f32.xlu0 %v1943
    %v1945 = vpop.xlane.xlu0 %1944
    %v1946 = vsub.f32 %v1934, %v1942
    %v1947 = vsub.f32 %v1937, %v1945
    %v1948 = vmul.f32 %v1946, 1.442695
    %v1949 = vpow.pop %v1948
    %v1950 = vmul.f32 %v1947, 1.442695
    %v1951 = vpow.pop %v1950
    %v1952 = vsel %vm261, %v1949, 0.0
    %1953 = vadd.xlane.f32.xlu0 %v1952
    %v1954 = vpop.xlane.xlu0 %1953
    %v1955 = vsel %vm261, %v1951, 0.0
    %1956 = vadd.xlane.f32.xlu0 %v1955
    %v1957 = vpop.xlane.xlu0 %1956
    %v1958 = vrcp.pop %v1954
    %v1959 = vrcp.pop %v1957
    %v1960 = vmul.f32 %v1949, %v1958
    %v1961 = vmul.f32 %v1951, %v1959
    %v1962 = vpack.c.bf16 %v1961, %v1960
    %1963 = vrot.lane.b32.xlu0 %v1479, 96
    %v1964 = vpop.permute.xlu0 %1963
    %v1967 = vsel %vm261, %v1962, 0
    %1969 = vmatprep.subr.bf16.mxu0 0
    %1970 = vmatpush1.bf16.msra.mxu0 0
    %1971 = vmatprep.subr.bf16.mxu0 0
    %1972 = vmatpush1.bf16.msra.mxu0 0
    %1973 = vmatprep.subr.bf16.mxu0 0
    %1974 = vmatpush1.bf16.msra.mxu0 0
    %1975 = vmatprep.subr.bf16.mxu0 0
    %1976 = vmatpush1.bf16.msra.mxu0 0
    %1977 = vmatprep.subr.bf16.mxu0 0
    %1978 = vmatpush1.bf16.msra.mxu0 0
    %1979 = vmatprep.subr.bf16.mxu0 0
    %1980 = vmatpush1.bf16.msra.mxu0 0
    %1981 = vmatprep.subr.bf16.mxu0 0
    %1982 = vmatpush1.bf16.msra.mxu0 0
    %1983 = vmatprep.subr.bf16.mxu0 0
    %1984 = vmatpush1.bf16.msra.mxu0 %v1964
    %1985 = vmatprep.subr.bf16.mxu0 0
    %1986 = vmatpush2.bf16.msra.mxu0 0
    %1987 = vmatprep.subr.bf16.mxu0 0
    %1988 = vmatpush2.bf16.msra.mxu0 0
    %1989 = vmatprep.subr.bf16.mxu0 0
    %1990 = vmatpush2.bf16.msra.mxu0 0
    %1991 = vmatprep.subr.bf16.mxu0 0
    %1992 = vmatpush2.bf16.msra.mxu0 0
    %1993 = vmatprep.subr.bf16.mxu0 0
    %1994 = vmatpush2.bf16.msra.mxu0 0
    %1995 = vmatprep.subr.bf16.mxu0 0
    %1996 = vmatpush2.bf16.msra.mxu0 0
    %1997 = vmatprep.subr.bf16.mxu0 0
    %1998 = vmatpush2.bf16.msra.mxu0 0
    %1999 = vmatprep.subr.bf16.mxu0 0
    %2000 = vmatpush2.bf16.msra.mxu0 0
    %2001 = vmatprep.mubr.bf16.mxu0 0
    %2002 = vmatmul.mubr.bf16.gmra.mxu0 %v1967
    %v2003 = vpop.f32.mrf.mxu0
    %v2004 = vadd.f32 0.0, %v2003
    %v2005 = vpop.f32.mrf.mxu0
    %v2006 = vpop.f32.mrf.mxu0
    %v2007 = vadd.f32 0.0, %v2006
    %v2008 = vpop.f32.mrf.mxu0
    %2009 = vdwg.mxu0
    %2010 = vrot.lane.b32.xlu0 %v1286, 80
    %v2011 = vpop.permute.xlu0 %2010
    %2012 = vrot.lane.b32.xlu0 %v1286, 16
    %v2013 = vpop.permute.xlu0 %2012
    %v2015 = vsel %vm261, %v2011, 0
    %v2018 = vsel %vm261, %v2013, 0
    %2020 = vmatprep.subr.bf16.mxu0 0
    %2021 = vmatpush1.bf16.xpose.msra.mxu0 0
    %2022 = vmatprep.subr.bf16.mxu0 0
    %2023 = vmatpush1.bf16.xpose.msra.mxu0 0
    %2024 = vmatprep.subr.bf16.mxu0 0
    %2025 = vmatpush1.bf16.xpose.msra.mxu0 0
    %2026 = vmatprep.subr.bf16.mxu0 0
    %2027 = vmatpush1.bf16.xpose.msra.mxu0 0
    %2028 = vmatprep.subr.bf16.mxu0 0
    %2029 = vmatpush1.bf16.xpose.msra.mxu0 0
    %2030 = vmatprep.subr.bf16.mxu0 0
    %2031 = vmatpush1.bf16.xpose.msra.mxu0 0
    %2032 = vmatprep.subr.bf16.mxu0 0
    %2033 = vmatpush1.bf16.xpose.msra.mxu0 0
    %2034 = vmatprep.subr.bf16.mxu0 0
    %2035 = vmatpush1.bf16.xpose.msra.mxu0 %v2018
    %2036 = vmatprep.subr.bf16.mxu0 0
    %2037 = vmatpush2.bf16.xpose.msra.mxu0 0
    %2038 = vmatprep.subr.bf16.mxu0 0
    %2039 = vmatpush2.bf16.xpose.msra.mxu0 0
    %2040 = vmatprep.subr.bf16.mxu0 0
    %2041 = vmatpush2.bf16.xpose.msra.mxu0 0
    %2042 = vmatprep.subr.bf16.mxu0 0
    %2043 = vmatpush2.bf16.xpose.msra.mxu0 0
    %2044 = vmatprep.subr.bf16.mxu0 0
    %2045 = vmatpush2.bf16.xpose.msra.mxu0 0
    %2046 = vmatprep.subr.bf16.mxu0 0
    %2047 = vmatpush2.bf16.xpose.msra.mxu0 0
    %2048 = vmatprep.subr.bf16.mxu0 0
    %2049 = vmatpush2.bf16.xpose.msra.mxu0 0
    %2050 = vmatprep.subr.bf16.mxu0 0
    %2051 = vmatpush2.bf16.xpose.msra.mxu0 0
    %2052 = vmatprep.mubr.bf16.mxu0 0
    %2053 = vmatmul.mubr.bf16.gmra.mxu0 %v2015
    %v2054 = vpop.f32.mrf.mxu0
    %v2055 = vadd.f32 0.0, %v2054
    %v2056 = vpop.f32.mrf.mxu0
    %v2057 = vpop.f32.mrf.mxu0
    %v2058 = vadd.f32 0.0, %v2057
    %v2059 = vpop.f32.mrf.mxu0
    %2060 = vdwg.mxu0
    %v2061 = vsel %vm261, %v2055, -inf
    %2062 = vmax.xlane.f32.xlu0 %v2061
    %v2063 = vpop.xlane.xlu0 %2062
    %v2064 = vsel %vm261, %v2058, -inf
    %2065 = vmax.xlane.f32.xlu0 %v2064
    %v2066 = vpop.xlane.xlu0 %2065
    %v2067 = vsub.f32 %v2055, %v2063
    %v2068 = vsub.f32 %v2058, %v2066
    %v2069 = vmul.f32 %v2067, 1.442695
    %v2070 = vpow.pop %v2069
    %v2071 = vmul.f32 %v2068, 1.442695
    %v2072 = vpow.pop %v2071
    %v2073 = vsel %vm261, %v2070, 0.0
    %2074 = vadd.xlane.f32.xlu0 %v2073
    %v2075 = vpop.xlane.xlu0 %2074
    %v2076 = vsel %vm261, %v2072, 0.0
    %2077 = vadd.xlane.f32.xlu0 %v2076
    %v2078 = vpop.xlane.xlu0 %2077
    %v2079 = vrcp.pop %v2075
    %v2080 = vrcp.pop %v2078
    %v2081 = vmul.f32 %v2070, %v2079
    %v2082 = vmul.f32 %v2072, %v2080
    %v2083 = vpack.c.bf16 %v2082, %v2081
    %2084 = vrot.lane.b32.xlu0 %v1360, 80
    %v2085 = vpop.permute.xlu0 %2084
    %v2088 = vsel %vm261, %v2083, 0
    %2090 = vmatprep.subr.bf16.mxu0 0
    %2091 = vmatpush1.bf16.msra.mxu0 0
    %2092 = vmatprep.subr.bf16.mxu0 0
    %2093 = vmatpush1.bf16.msra.mxu0 0
    %2094 = vmatprep.subr.bf16.mxu0 0
    %2095 = vmatpush1.bf16.msra.mxu0 0
    %2096 = vmatprep.subr.bf16.mxu0 0
    %2097 = vmatpush1.bf16.msra.mxu0 0
    %2098 = vmatprep.subr.bf16.mxu0 0
    %2099 = vmatpush1.bf16.msra.mxu0 0
    %2100 = vmatprep.subr.bf16.mxu0 0
    %2101 = vmatpush1.bf16.msra.mxu0 0
    %2102 = vmatprep.subr.bf16.mxu0 0
    %2103 = vmatpush1.bf16.msra.mxu0 0
    %2104 = vmatprep.subr.bf16.mxu0 0
    %2105 = vmatpush1.bf16.msra.mxu0 %v2085
    %2106 = vmatprep.subr.bf16.mxu0 0
    %2107 = vmatpush2.bf16.msra.mxu0 0
    %2108 = vmatprep.subr.bf16.mxu0 0
    %2109 = vmatpush2.bf16.msra.mxu0 0
    %2110 = vmatprep.subr.bf16.mxu0 0
    %2111 = vmatpush2.bf16.msra.mxu0 0
    %2112 = vmatprep.subr.bf16.mxu0 0
    %2113 = vmatpush2.bf16.msra.mxu0 0
    %2114 = vmatprep.subr.bf16.mxu0 0
    %2115 = vmatpush2.bf16.msra.mxu0 0
    %2116 = vmatprep.subr.bf16.mxu0 0
    %2117 = vmatpush2.bf16.msra.mxu0 0
    %2118 = vmatprep.subr.bf16.mxu0 0
    %2119 = vmatpush2.bf16.msra.mxu0 0
    %2120 = vmatprep.subr.bf16.mxu0 0
    %2121 = vmatpush2.bf16.msra.mxu0 0
    %2122 = vmatprep.mubr.bf16.mxu0 0
    %2123 = vmatmul.mubr.bf16.gmra.mxu0 %v2088
    %v2124 = vpop.f32.mrf.mxu0
    %v2125 = vadd.f32 0.0, %v2124
    %v2126 = vpop.f32.mrf.mxu0
    %v2127 = vpop.f32.mrf.mxu0
    %v2128 = vadd.f32 0.0, %v2127
    %v2129 = vpop.f32.mrf.mxu0
    %2130 = vdwg.mxu0
    %2131 = vrot.lane.b32.xlu0 %v1405, 80
    %v2132 = vpop.permute.xlu0 %2131
    %2133 = vrot.lane.b32.xlu0 %v1405, 16
    %v2134 = vpop.permute.xlu0 %2133
    %v2136 = vsel %vm261, %v2132, 0
    %v2139 = vsel %vm261, %v2134, 0
    %2141 = vmatprep.subr.bf16.mxu0 0
    %2142 = vmatpush1.bf16.xpose.msra.mxu0 0
    %2143 = vmatprep.subr.bf16.mxu0 0
    %2144 = vmatpush1.bf16.xpose.msra.mxu0 0
    %2145 = vmatprep.subr.bf16.mxu0 0
    %2146 = vmatpush1.bf16.xpose.msra.mxu0 0
    %2147 = vmatprep.subr.bf16.mxu0 0
    %2148 = vmatpush1.bf16.xpose.msra.mxu0 0
    %2149 = vmatprep.subr.bf16.mxu0 0
    %2150 = vmatpush1.bf16.xpose.msra.mxu0 0
    %2151 = vmatprep.subr.bf16.mxu0 0
    %2152 = vmatpush1.bf16.xpose.msra.mxu0 0
    %2153 = vmatprep.subr.bf16.mxu0 0
    %2154 = vmatpush1.bf16.xpose.msra.mxu0 0
    %2155 = vmatprep.subr.bf16.mxu0 0
    %2156 = vmatpush1.bf16.xpose.msra.mxu0 %v2139
    %2157 = vmatprep.subr.bf16.mxu0 0
    %2158 = vmatpush2.bf16.xpose.msra.mxu0 0
    %2159 = vmatprep.subr.bf16.mxu0 0
    %2160 = vmatpush2.bf16.xpose.msra.mxu0 0
    %2161 = vmatprep.subr.bf16.mxu0 0
    %2162 = vmatpush2.bf16.xpose.msra.mxu0 0
    %2163 = vmatprep.subr.bf16.mxu0 0
    %2164 = vmatpush2.bf16.xpose.msra.mxu0 0
    %2165 = vmatprep.subr.bf16.mxu0 0
    %2166 = vmatpush2.bf16.xpose.msra.mxu0 0
    %2167 = vmatprep.subr.bf16.mxu0 0
    %2168 = vmatpush2.bf16.xpose.msra.mxu0 0
    %2169 = vmatprep.subr.bf16.mxu0 0
    %2170 = vmatpush2.bf16.xpose.msra.mxu0 0
    %2171 = vmatprep.subr.bf16.mxu0 0
    %2172 = vmatpush2.bf16.xpose.msra.mxu0 0
    %2173 = vmatprep.mubr.bf16.mxu0 0
    %2174 = vmatmul.mubr.bf16.gmra.mxu0 %v2136
    %v2175 = vpop.f32.mrf.mxu0
    %v2176 = vadd.f32 0.0, %v2175
    %v2177 = vpop.f32.mrf.mxu0
    %v2178 = vpop.f32.mrf.mxu0
    %v2179 = vadd.f32 0.0, %v2178
    %v2180 = vpop.f32.mrf.mxu0
    %2181 = vdwg.mxu0
    %v2182 = vsel %vm261, %v2176, -inf
    %2183 = vmax.xlane.f32.xlu0 %v2182
    %v2184 = vpop.xlane.xlu0 %2183
    %v2185 = vsel %vm261, %v2179, -inf
    %2186 = vmax.xlane.f32.xlu0 %v2185
    %v2187 = vpop.xlane.xlu0 %2186
    %v2188 = vsub.f32 %v2176, %v2184
    %v2189 = vsub.f32 %v2179, %v2187
    %v2190 = vmul.f32 %v2188, 1.442695
    %v2191 = vpow.pop %v2190
    %v2192 = vmul.f32 %v2189, 1.442695
    %v2193 = vpow.pop %v2192
    %v2194 = vsel %vm261, %v2191, 0.0
    %2195 = vadd.xlane.f32.xlu0 %v2194
    %v2196 = vpop.xlane.xlu0 %2195
    %v2197 = vsel %vm261, %v2193, 0.0
    %2198 = vadd.xlane.f32.xlu0 %v2197
    %v2199 = vpop.xlane.xlu0 %2198
    %v2200 = vrcp.pop %v2196
    %v2201 = vrcp.pop %v2199
    %v2202 = vmul.f32 %v2191, %v2200
    %v2203 = vmul.f32 %v2193, %v2201
    %v2204 = vpack.c.bf16 %v2203, %v2202
    %2205 = vrot.lane.b32.xlu0 %v1479, 80
    %v2206 = vpop.permute.xlu0 %2205
    %v2209 = vsel %vm261, %v2204, 0
    %2211 = vmatprep.subr.bf16.mxu0 0
    %2212 = vmatpush1.bf16.msra.mxu0 0
    %2213 = vmatprep.subr.bf16.mxu0 0
    %2214 = vmatpush1.bf16.msra.mxu0 0
    %2215 = vmatprep.subr.bf16.mxu0 0
    %2216 = vmatpush1.bf16.msra.mxu0 0
    %2217 = vmatprep.subr.bf16.mxu0 0
    %2218 = vmatpush1.bf16.msra.mxu0 0
    %2219 = vmatprep.subr.bf16.mxu0 0
    %2220 = vmatpush1.bf16.msra.mxu0 0
    %2221 = vmatprep.subr.bf16.mxu0 0
    %2222 = vmatpush1.bf16.msra.mxu0 0
    %2223 = vmatprep.subr.bf16.mxu0 0
    %2224 = vmatpush1.bf16.msra.mxu0 0
    %2225 = vmatprep.subr.bf16.mxu0 0
    %2226 = vmatpush1.bf16.msra.mxu0 %v2206
    %2227 = vmatprep.subr.bf16.mxu0 0
    %2228 = vmatpush2.bf16.msra.mxu0 0
    %2229 = vmatprep.subr.bf16.mxu0 0
    %2230 = vmatpush2.bf16.msra.mxu0 0
    %2231 = vmatprep.subr.bf16.mxu0 0
    %2232 = vmatpush2.bf16.msra.mxu0 0
    %2233 = vmatprep.subr.bf16.mxu0 0
    %2234 = vmatpush2.bf16.msra.mxu0 0
    %2235 = vmatprep.subr.bf16.mxu0 0
    %2236 = vmatpush2.bf16.msra.mxu0 0
    %2237 = vmatprep.subr.bf16.mxu0 0
    %2238 = vmatpush2.bf16.msra.mxu0 0
    %2239 = vmatprep.subr.bf16.mxu0 0
    %2240 = vmatpush2.bf16.msra.mxu0 0
    %2241 = vmatprep.subr.bf16.mxu0 0
    %2242 = vmatpush2.bf16.msra.mxu0 0
    %2243 = vmatprep.mubr.bf16.mxu0 0
    %2244 = vmatmul.mubr.bf16.gmra.mxu0 %v2209
    %v2245 = vpop.f32.mrf.mxu0
    %v2246 = vadd.f32 0.0, %v2245
    %v2247 = vpop.f32.mrf.mxu0
    %v2248 = vpop.f32.mrf.mxu0
    %v2249 = vadd.f32 0.0, %v2248
    %v2250 = vpop.f32.mrf.mxu0
    %2251 = vdwg.mxu0
    %2254 = vrot.lane.b32.xlu0 %v1640, 16
    %v2255 = vpop.permute.xlu0 %2254
    %2256 = vrot.lane.b32.xlu0 %v1643, 16
    %v2257 = vpop.permute.xlu0 %2256
    %2262 = vrot.lane.b32.xlu0 %v1883, 32
    %v2263 = vpop.permute.xlu0 %2262
    %2264 = vrot.lane.b32.xlu0 %v1886, 32
    %v2265 = vpop.permute.xlu0 %2264
    %2270 = vrot.lane.b32.xlu0 %v2125, 48
    %v2271 = vpop.permute.xlu0 %2270
    %2272 = vrot.lane.b32.xlu0 %v2128, 48
    %v2273 = vpop.permute.xlu0 %2272
    %v2276 = vsel %vm261, %v1399, %v2255
    %v2277 = vsel %vm261, %v1402, %v2257
    %v2278 = vsel %vm1250, %v2276, %v2263
    %v2279 = vsel %vm1250, %v2277, %v2265
    %v2280 = vsel %vm1253, %v2278, %v2271
    %v2281 = vsel %vm1253, %v2279, %v2273
    %2284 = vrot.lane.b32.xlu0 %v1762, 16
    %v2285 = vpop.permute.xlu0 %2284
    %2286 = vrot.lane.b32.xlu0 %v1765, 16
    %v2287 = vpop.permute.xlu0 %2286
    %2292 = vrot.lane.b32.xlu0 %v2004, 32
    %v2293 = vpop.permute.xlu0 %2292
    %2294 = vrot.lane.b32.xlu0 %v2007, 32
    %v2295 = vpop.permute.xlu0 %2294
    %2300 = vrot.lane.b32.xlu0 %v2246, 48
    %v2301 = vpop.permute.xlu0 %2300
    %2302 = vrot.lane.b32.xlu0 %v2249, 48
    %v2303 = vpop.permute.xlu0 %2302
    %v2306 = vsel %vm261, %v1518, %v2285
    %v2307 = vsel %vm261, %v1521, %v2287
    %v2308 = vsel %vm1250, %v2306, %v2293
    %v2309 = vsel %vm1250, %v2307, %v2295
    %v2310 = vsel %vm1253, %v2308, %v2301
    %v2311 = vsel %vm1253, %v2309, %v2303
    %v2312 = vpack.c.bf16 %v1255, %v1254
    %v2313 = vpack.c.bf16 %v2281, %v2280
    %v2314 = vpack.c.bf16 %v1285, %v1284
    %v2315 = vpack.c.bf16 %v2311, %v2310
    %v2316 = vld [vmem:[%s4] sm:$0xf]
    %v2317 = vld [vmem:[%s4 + $0x4] sm:$0xf]
    %v2318 = vld [vmem:[%s4 + $0x8] sm:$0xf]
    %v2319 = vld [vmem:[%s4 + $0xc] sm:$0xf]
    %v2320 = vld [vmem:[%s4 + $0x10] sm:$0xf]
    %v2321 = vld [vmem:[%s4 + $0x14] sm:$0xf]
    %v2322 = vld [vmem:[%s4 + $0x18] sm:$0xf]
    %v2323 = vld [vmem:[%s4 + $0x1c] sm:$0xf]
    %v2324 = vld [vmem:[%s5] sm:$0x1]
    %v2326 = vlaneseq
    %v2327 = vshrl.u32 %v2326, 7
    %v2328 = vsub.s32 0, %v2327
    %v2329 = vrot.slane %v2324, %v2328
    %v2339 = vunpack.c.l.b16 %v2316
    %v2340 = vunpack.c.l.b16 %v2317
    %v2341 = vunpack.c.l.b16 %v2318
    %v2342 = vunpack.c.l.b16 %v2319
    %v2343 = vunpack.c.l.b16 %v2320
    %v2344 = vunpack.c.l.b16 %v2321
    %v2345 = vunpack.c.l.b16 %v2322
    %v2346 = vunpack.c.l.b16 %v2323
    %v2347 = vpack.c.b16 %v2340, %v2339
    %v2348 = vpack.c.b16 %v2342, %v2341
    %v2349 = vpack.c.b16 %v2344, %v2343
    %v2350 = vpack.c.b16 %v2346, %v2345
    %v2356 = vsel %vm171, %v2312, 0
    %v2359 = vsel %vm171, %v2313, 0
    %v2362 = vsel %vm171, %v2314, 0
    %v2365 = vsel %vm171, %v2315, 0
    %2367 = vmatprep.subr.bf16.mxu0 0
    %2368 = vmatpush1.bf16.msra.mxu0 0
    %2369 = vmatprep.subr.bf16.mxu0 0
    %2370 = vmatpush1.bf16.msra.mxu0 0
    %2371 = vmatprep.subr.bf16.mxu0 0
    %2372 = vmatpush1.bf16.msra.mxu0 0
    %2373 = vmatprep.subr.bf16.mxu0 0
    %2374 = vmatpush1.bf16.msra.mxu0 0
    %2375 = vmatprep.subr.bf16.mxu0 0
    %2376 = vmatpush1.bf16.msra.mxu0 %v2350
    %2377 = vmatprep.subr.bf16.mxu0 0
    %2378 = vmatpush1.bf16.msra.mxu0 %v2349
    %2379 = vmatprep.subr.bf16.mxu0 0
    %2380 = vmatpush1.bf16.msra.mxu0 %v2348
    %2381 = vmatprep.subr.bf16.mxu0 0
    %2382 = vmatpush1.bf16.msra.mxu0 %v2347
    %2383 = vmatprep.subr.bf16.mxu0 0
    %2384 = vmatpush2.bf16.msra.mxu0 0
    %2385 = vmatprep.subr.bf16.mxu0 0
    %2386 = vmatpush2.bf16.msra.mxu0 0
    %2387 = vmatprep.subr.bf16.mxu0 0
    %2388 = vmatpush2.bf16.msra.mxu0 0
    %2389 = vmatprep.subr.bf16.mxu0 0
    %2390 = vmatpush2.bf16.msra.mxu0 0
    %2391 = vmatprep.subr.bf16.mxu0 0
    %2392 = vmatpush2.bf16.msra.mxu0 0
    %2393 = vmatprep.subr.bf16.mxu0 0
    %2394 = vmatpush2.bf16.msra.mxu0 0
    %2395 = vmatprep.subr.bf16.mxu0 0
    %2396 = vmatpush2.bf16.msra.mxu0 0
    %2397 = vmatprep.subr.bf16.mxu0 0
    %2398 = vmatpush2.bf16.msra.mxu0 0
    %2399 = vmatprep.mubr.bf16.mxu0 0
    %2400 = vmatmul.mubr.bf16.gmra.mxu0 %v2356
    %v2401 = vpop.f32.mrf.mxu0
    %v2402 = vadd.f32 %v2329, %v2401
    %v2403 = vpop.f32.mrf.mxu0
    %v2404 = vpop.f32.mrf.mxu0
    %v2405 = vadd.f32 %v2329, %v2404
    %v2406 = vpop.f32.mrf.mxu0
    %2407 = vmatprep.mubr.bf16.mxu0 0
    %2408 = vmatmul.mubr.bf16.gmra.mxu0 %v2359
    %v2409 = vpop.f32.mrf.mxu0
    %v2410 = vadd.f32 %v2329, %v2409
    %v2411 = vpop.f32.mrf.mxu0
    %v2412 = vpop.f32.mrf.mxu0
    %v2413 = vadd.f32 %v2329, %v2412
    %v2414 = vpop.f32.mrf.mxu0
    %2415 = vmatprep.mubr.bf16.mxu0 0
    %2416 = vmatmul.mubr.bf16.gmra.mxu0 %v2362
    %v2417 = vpop.f32.mrf.mxu0
    %v2418 = vadd.f32 %v2329, %v2417
    %v2419 = vpop.f32.mrf.mxu0
    %v2420 = vpop.f32.mrf.mxu0
    %v2421 = vadd.f32 %v2329, %v2420
    %v2422 = vpop.f32.mrf.mxu0
    %2423 = vmatprep.mubr.bf16.mxu0 0
    %2424 = vmatmul.mubr.bf16.gmra.mxu0 %v2365
    %v2425 = vpop.f32.mrf.mxu0
    %v2426 = vadd.f32 %v2329, %v2425
    %v2427 = vpop.f32.mrf.mxu0
    %v2428 = vpop.f32.mrf.mxu0
    %v2429 = vadd.f32 %v2329, %v2428
    %v2430 = vpop.f32.mrf.mxu0
    %2431 = vdwg.mxu0
    %v2432 = vld [vmem:[%s6] sm:$0xf]
    %v2433 = vld [vmem:[%s6 + $0x4] sm:$0xf]
    %v2434 = vld [vmem:[%s6 + $0x8] sm:$0xf]
    %v2435 = vld [vmem:[%s6 + $0xc] sm:$0xf]
    %v2436 = vld [vmem:[%s6 + $0x10] sm:$0xf]
    %v2437 = vld [vmem:[%s6 + $0x14] sm:$0xf]
    %v2438 = vld [vmem:[%s6 + $0x18] sm:$0xf]
    %v2439 = vld [vmem:[%s6 + $0x1c] sm:$0xf]
    %v2440 = vpack.c.bf16 %v2405, %v2402
    %v2441 = vpack.c.bf16 %v2413, %v2410
    %v2442 = vpack.c.bf16 %v2421, %v2418
    %v2443 = vpack.c.bf16 %v2429, %v2426
    %v2444 = vld [vmem:[#allocation2] sm:$0xf]
    %v2445 = vld [vmem:[#allocation2 + $0x4] sm:$0xf]
    %v2446 = vld [vmem:[#allocation2 + $0x8] sm:$0xf]
    %v2447 = vld [vmem:[#allocation2 + $0xc] sm:$0xf]
    %v2448 = vld [vmem:[#allocation2 + $0x10] sm:$0xf]
    %v2449 = vld [vmem:[#allocation2 + $0x14] sm:$0xf]
    %v2450 = vld [vmem:[#allocation2 + $0x18] sm:$0xf]
    %v2451 = vld [vmem:[#allocation2 + $0x1c] sm:$0xf]
    %v2460 = vunpack.c.l.b16 %v2444
    %v2461 = vunpack.c.l.b16 %v2445
    %v2462 = vunpack.c.l.b16 %v2446
    %v2463 = vunpack.c.l.b16 %v2447
    %v2464 = vunpack.c.l.b16 %v2448
    %v2465 = vunpack.c.l.b16 %v2449
    %v2466 = vunpack.c.l.b16 %v2450
    %v2467 = vunpack.c.l.b16 %v2451
    %v2468 = vpack.c.b16 %v2461, %v2460
    %v2469 = vpack.c.b16 %v2463, %v2462
    %v2470 = vpack.c.b16 %v2465, %v2464
    %v2471 = vpack.c.b16 %v2467, %v2466
    %v2477 = vsel %vm171, %v2440, 0
    %v2480 = vsel %vm171, %v2441, 0
    %v2483 = vsel %vm171, %v2442, 0
    %v2486 = vsel %vm171, %v2443, 0
    %2488 = vmatprep.subr.bf16.mxu0 0
    %2489 = vmatpush1.bf16.msra.mxu0 0
    %2490 = vmatprep.subr.bf16.mxu0 0
    %2491 = vmatpush1.bf16.msra.mxu0 0
    %2492 = vmatprep.subr.bf16.mxu0 0
    %2493 = vmatpush1.bf16.msra.mxu0 0
    %2494 = vmatprep.subr.bf16.mxu0 0
    %2495 = vmatpush1.bf16.msra.mxu0 0
    %2496 = vmatprep.subr.bf16.mxu0 0
    %2497 = vmatpush1.bf16.msra.mxu0 %v2471
    %2498 = vmatprep.subr.bf16.mxu0 0
    %2499 = vmatpush1.bf16.msra.mxu0 %v2470
    %2500 = vmatprep.subr.bf16.mxu0 0
    %2501 = vmatpush1.bf16.msra.mxu0 %v2469
    %2502 = vmatprep.subr.bf16.mxu0 0
    %2503 = vmatpush1.bf16.msra.mxu0 %v2468
    %2504 = vmatprep.subr.bf16.mxu0 0
    %2505 = vmatpush2.bf16.msra.mxu0 0
    %2506 = vmatprep.subr.bf16.mxu0 0
    %2507 = vmatpush2.bf16.msra.mxu0 0
    %2508 = vmatprep.subr.bf16.mxu0 0
    %2509 = vmatpush2.bf16.msra.mxu0 0
    %2510 = vmatprep.subr.bf16.mxu0 0
    %2511 = vmatpush2.bf16.msra.mxu0 0
    %2512 = vmatprep.subr.bf16.mxu0 0
    %2513 = vmatpush2.bf16.msra.mxu0 0
    %2514 = vmatprep.subr.bf16.mxu0 0
    %2515 = vmatpush2.bf16.msra.mxu0 0
    %2516 = vmatprep.subr.bf16.mxu0 0
    %2517 = vmatpush2.bf16.msra.mxu0 0
    %2518 = vmatprep.subr.bf16.mxu0 0
    %2519 = vmatpush2.bf16.msra.mxu0 0
    %2520 = vmatprep.mubr.bf16.mxu0 0
    %2521 = vmatmul.mubr.bf16.gmra.mxu0 %v2477
    %v2522 = vpop.f32.mrf.mxu0
    %v2523 = vadd.f32 0.0, %v2522
    %v2524 = vpop.f32.mrf.mxu0
    %v2525 = vpop.f32.mrf.mxu0
    %v2526 = vadd.f32 0.0, %v2525
    %v2527 = vpop.f32.mrf.mxu0
    %2528 = vmatprep.mubr.bf16.mxu0 0
    %2529 = vmatmul.mubr.bf16.gmra.mxu0 %v2480
    %v2530 = vpop.f32.mrf.mxu0
    %v2531 = vadd.f32 0.0, %v2530
    %v2532 = vpop.f32.mrf.mxu0
    %v2533 = vpop.f32.mrf.mxu0
    %v2534 = vadd.f32 0.0, %v2533
    %v2535 = vpop.f32.mrf.mxu0
    %2536 = vmatprep.mubr.bf16.mxu0 0
    %2537 = vmatmul.mubr.bf16.gmra.mxu0 %v2483
    %v2538 = vpop.f32.mrf.mxu0
    %v2539 = vadd.f32 0.0, %v2538
    %v2540 = vpop.f32.mrf.mxu0
    %v2541 = vpop.f32.mrf.mxu0
    %v2542 = vadd.f32 0.0, %v2541
    %v2543 = vpop.f32.mrf.mxu0
    %2544 = vmatprep.mubr.bf16.mxu0 0
    %2545 = vmatmul.mubr.bf16.gmra.mxu0 %v2486
    %v2546 = vpop.f32.mrf.mxu0
    %v2547 = vadd.f32 0.0, %v2546
    %v2548 = vpop.f32.mrf.mxu0
    %v2549 = vpop.f32.mrf.mxu0
    %v2550 = vadd.f32 0.0, %v2549
    %v2551 = vpop.f32.mrf.mxu0
    %2552 = vdwg.mxu0
    %v2561 = vunpack.c.l.b16 %v2432
    %v2562 = vunpack.c.l.b16 %v2433
    %v2563 = vunpack.c.l.b16 %v2434
    %v2564 = vunpack.c.l.b16 %v2435
    %v2565 = vunpack.c.l.b16 %v2436
    %v2566 = vunpack.c.l.b16 %v2437
    %v2567 = vunpack.c.l.b16 %v2438
    %v2568 = vunpack.c.l.b16 %v2439
    %v2569 = vpack.c.b16 %v2562, %v2561
    %v2570 = vpack.c.b16 %v2564, %v2563
    %v2571 = vpack.c.b16 %v2566, %v2565
    %v2572 = vpack.c.b16 %v2568, %v2567
    %2577 = vmatprep.subr.bf16.mxu0 0
    %2578 = vmatpush1.bf16.msra.mxu0 0
    %2579 = vmatprep.subr.bf16.mxu0 0
    %2580 = vmatpush1.bf16.msra.mxu0 0
    %2581 = vmatprep.subr.bf16.mxu0 0
    %2582 = vmatpush1.bf16.msra.mxu0 0
    %2583 = vmatprep.subr.bf16.mxu0 0
    %2584 = vmatpush1.bf16.msra.mxu0 0
    %2585 = vmatprep.subr.bf16.mxu0 0
    %2586 = vmatpush1.bf16.msra.mxu0 %v2572
    %2587 = vmatprep.subr.bf16.mxu0 0
    %2588 = vmatpush1.bf16.msra.mxu0 %v2571
    %2589 = vmatprep.subr.bf16.mxu0 0
    %2590 = vmatpush1.bf16.msra.mxu0 %v2570
    %2591 = vmatprep.subr.bf16.mxu0 0
    %2592 = vmatpush1.bf16.msra.mxu0 %v2569
    %2593 = vmatprep.subr.bf16.mxu0 0
    %2594 = vmatpush2.bf16.msra.mxu0 0
    %2595 = vmatprep.subr.bf16.mxu0 0
    %2596 = vmatpush2.bf16.msra.mxu0 0
    %2597 = vmatprep.subr.bf16.mxu0 0
    %2598 = vmatpush2.bf16.msra.mxu0 0
    %2599 = vmatprep.subr.bf16.mxu0 0
    %2600 = vmatpush2.bf16.msra.mxu0 0
    %2601 = vmatprep.subr.bf16.mxu0 0
    %2602 = vmatpush2.bf16.msra.mxu0 0
    %2603 = vmatprep.subr.bf16.mxu0 0
    %2604 = vmatpush2.bf16.msra.mxu0 0
    %2605 = vmatprep.subr.bf16.mxu0 0
    %2606 = vmatpush2.bf16.msra.mxu0 0
    %2607 = vmatprep.subr.bf16.mxu0 0
    %2608 = vmatpush2.bf16.msra.mxu0 0
    %2609 = vmatprep.mubr.bf16.mxu0 0
    %2610 = vmatmul.mubr.bf16.gmra.mxu0 %v173
    %v2611 = vpop.f32.mrf.mxu0
    %v2612 = vadd.f32 %v2523, %v2611
    %v2613 = vpop.f32.mrf.mxu0
    %v2614 = vpop.f32.mrf.mxu0
    %v2615 = vadd.f32 %v2526, %v2614
    %v2616 = vpop.f32.mrf.mxu0
    %2617 = vmatprep.mubr.bf16.mxu0 0
    %2618 = vmatmul.mubr.bf16.gmra.mxu0 %v176
    %v2619 = vpop.f32.mrf.mxu0
    %v2620 = vadd.f32 %v2531, %v2619
    %v2621 = vpop.f32.mrf.mxu0
    %v2622 = vpop.f32.mrf.mxu0
    %v2623 = vadd.f32 %v2534, %v2622
    %v2624 = vpop.f32.mrf.mxu0
    %2625 = vmatprep.mubr.bf16.mxu0 0
    %2626 = vmatmul.mubr.bf16.gmra.mxu0 %v179
    %v2627 = vpop.f32.mrf.mxu0
    %v2628 = vadd.f32 %v2539, %v2627
    %v2629 = vpop.f32.mrf.mxu0
    %v2630 = vpop.f32.mrf.mxu0
    %v2631 = vadd.f32 %v2542, %v2630
    %v2632 = vpop.f32.mrf.mxu0
    %2633 = vmatprep.mubr.bf16.mxu0 0
    %2634 = vmatmul.mubr.bf16.gmra.mxu0 %v182
    %v2635 = vpop.f32.mrf.mxu0
    %v2636 = vadd.f32 %v2547, %v2635
    %v2637 = vpop.f32.mrf.mxu0
    %v2638 = vpop.f32.mrf.mxu0
    %v2639 = vadd.f32 %v2550, %v2638
    %v2640 = vpop.f32.mrf.mxu0
    %2641 = vdwg.mxu0
    %v2642 = vld [vmem:[#allocation4] sm:$0x1]
    %v2644 = vlaneseq
    %v2645 = vshrl.u32 %v2644, 7
    %v2646 = vsub.s32 0, %v2645
    %v2647 = vrot.slane %v2642, %v2646
    %v2649 = vmul.f32 %v2612, %v2647
    %v2650 = vmul.f32 %v2615, %v2647
    %v2651 = vmul.f32 %v2620, %v2647
    %v2652 = vmul.f32 %v2623, %v2647
    %v2653 = vmul.f32 %v2628, %v2647
    %v2654 = vmul.f32 %v2631, %v2647
    %v2655 = vmul.f32 %v2636, %v2647
    %v2656 = vmul.f32 %v2639, %v2647
    %v2657 = vld [vmem:[#allocation6] sm:$0x1]
    %v2659 = vlaneseq
    %v2660 = vshrl.u32 %v2659, 7
    %v2661 = vsub.s32 0, %v2660
    %v2662 = vrot.slane %v2657, %v2661
    %v2664 = vadd.f32 %v2649, %v2662
    %v2665 = vadd.f32 %v2650, %v2662
    %v2666 = vadd.f32 %v2651, %v2662
    %v2667 = vadd.f32 %v2652, %v2662
    %v2668 = vadd.f32 %v2653, %v2662
    %v2669 = vadd.f32 %v2654, %v2662
    %v2670 = vadd.f32 %v2655, %v2662
    %v2671 = vadd.f32 %v2656, %v2662
    %v2672 = vmax.f32 %v2664, 0.0
    %v2673 = vmax.f32 %v2665, 0.0
    %v2674 = vmax.f32 %v2666, 0.0
    %v2675 = vmax.f32 %v2667, 0.0
    %v2676 = vmax.f32 %v2668, 0.0
    %v2677 = vmax.f32 %v2669, 0.0
    %v2678 = vmax.f32 %v2670, 0.0
    %v2679 = vmax.f32 %v2671, 0.0
    %v2680 = vpack.c.bf16 %v2673, %v2672
    %v2681 = vpack.c.bf16 %v2675, %v2674
    %v2682 = vpack.c.bf16 %v2677, %v2676
    %v2683 = vpack.c.bf16 %v2679, %v2678
    %v2684 = vld [vmem:[%s10] sm:$0xf]
    %v2685 = vld [vmem:[%s10 + $0x4] sm:$0xf]
    %v2686 = vld [vmem:[%s10 + $0x8] sm:$0xf]
    %v2687 = vld [vmem:[%s10 + $0xc] sm:$0xf]
    %v2688 = vld [vmem:[%s10 + $0x10] sm:$0xf]
    %v2689 = vld [vmem:[%s10 + $0x14] sm:$0xf]
    %v2690 = vld [vmem:[%s10 + $0x18] sm:$0xf]
    %v2691 = vld [vmem:[%s10 + $0x1c] sm:$0xf]
    %v2692 = vld [vmem:[%s10 + $0x20] sm:$0xf]
    %v2693 = vld [vmem:[%s10 + $0x24] sm:$0xf]
    %v2694 = vld [vmem:[%s10 + $0x28] sm:$0xf]
    %v2695 = vld [vmem:[%s10 + $0x2c] sm:$0xf]
    %v2696 = vld [vmem:[%s10 + $0x30] sm:$0xf]
    %v2697 = vld [vmem:[%s10 + $0x34] sm:$0xf]
    %v2698 = vld [vmem:[%s10 + $0x38] sm:$0xf]
    %v2699 = vld [vmem:[%s10 + $0x3c] sm:$0xf]
    %v2700 = vld [vmem:[#allocation7] sm:$0x1]
    %v2702 = vlaneseq
    %v2703 = vshrl.u32 %v2702, 7
    %v2704 = vsub.s32 0, %v2703
    %v2705 = vrot.slane %v2700, %v2704
    %v2723 = vunpack.c.l.b16 %v2684
    %v2724 = vunpack.c.l.b16 %v2685
    %v2725 = vunpack.c.l.b16 %v2686
    %v2726 = vunpack.c.l.b16 %v2687
    %v2727 = vunpack.c.l.b16 %v2688
    %v2728 = vunpack.c.l.b16 %v2689
    %v2729 = vunpack.c.l.b16 %v2690
    %v2730 = vunpack.c.l.b16 %v2691
    %v2731 = vunpack.c.l.b16 %v2692
    %v2732 = vunpack.c.l.b16 %v2693
    %v2733 = vunpack.c.l.b16 %v2694
    %v2734 = vunpack.c.l.b16 %v2695
    %v2735 = vunpack.c.l.b16 %v2696
    %v2736 = vunpack.c.l.b16 %v2697
    %v2737 = vunpack.c.l.b16 %v2698
    %v2738 = vunpack.c.l.b16 %v2699
    %v2739 = vpack.c.b16 %v2724, %v2723
    %v2740 = vpack.c.b16 %v2726, %v2725
    %v2741 = vpack.c.b16 %v2728, %v2727
    %v2742 = vpack.c.b16 %v2730, %v2729
    %v2743 = vpack.c.b16 %v2732, %v2731
    %v2744 = vpack.c.b16 %v2734, %v2733
    %v2745 = vpack.c.b16 %v2736, %v2735
    %v2746 = vpack.c.b16 %v2738, %v2737
    %2755 = vmatprep.subr.bf16.mxu0 0
    %2756 = vmatpush1.bf16.msra.mxu0 %v2746
    %2757 = vmatprep.subr.bf16.mxu0 0
    %2758 = vmatpush1.bf16.msra.mxu0 %v2745
    %2759 = vmatprep.subr.bf16.mxu0 0
    %2760 = vmatpush1.bf16.msra.mxu0 %v2744
    %2761 = vmatprep.subr.bf16.mxu0 0
    %2762 = vmatpush1.bf16.msra.mxu0 %v2743
    %2763 = vmatprep.subr.bf16.mxu0 0
    %2764 = vmatpush1.bf16.msra.mxu0 %v2742
    %2765 = vmatprep.subr.bf16.mxu0 0
    %2766 = vmatpush1.bf16.msra.mxu0 %v2741
    %2767 = vmatprep.subr.bf16.mxu0 0
    %2768 = vmatpush1.bf16.msra.mxu0 %v2740
    %2769 = vmatprep.subr.bf16.mxu0 0
    %2770 = vmatpush1.bf16.msra.mxu0 %v2739
    %2771 = vmatprep.subr.bf16.mxu0 0
    %2772 = vmatpush2.bf16.msra.mxu0 0
    %2773 = vmatprep.subr.bf16.mxu0 0
    %2774 = vmatpush2.bf16.msra.mxu0 0
    %2775 = vmatprep.subr.bf16.mxu0 0
    %2776 = vmatpush2.bf16.msra.mxu0 0
    %2777 = vmatprep.subr.bf16.mxu0 0
    %2778 = vmatpush2.bf16.msra.mxu0 0
    %2779 = vmatprep.subr.bf16.mxu0 0
    %2780 = vmatpush2.bf16.msra.mxu0 0
    %2781 = vmatprep.subr.bf16.mxu0 0
    %2782 = vmatpush2.bf16.msra.mxu0 0
    %2783 = vmatprep.subr.bf16.mxu0 0
    %2784 = vmatpush2.bf16.msra.mxu0 0
    %2785 = vmatprep.subr.bf16.mxu0 0
    %2786 = vmatpush2.bf16.msra.mxu0 0
    %2787 = vmatprep.mubr.bf16.mxu0 0
    %2788 = vmatmul.mubr.bf16.gmra.mxu0 %v2680
    %v2789 = vpop.f32.mrf.mxu0
    %v2790 = vadd.f32 %v2705, %v2789
    %v2791 = vpop.f32.mrf.mxu0
    %v2792 = vpop.f32.mrf.mxu0
    %v2793 = vadd.f32 %v2705, %v2792
    %v2794 = vpop.f32.mrf.mxu0
    %2795 = vmatprep.mubr.bf16.mxu0 0
    %2796 = vmatmul.mubr.bf16.gmra.mxu0 %v2681
    %v2797 = vpop.f32.mrf.mxu0
    %v2798 = vadd.f32 %v2705, %v2797
    %v2799 = vpop.f32.mrf.mxu0
    %v2800 = vpop.f32.mrf.mxu0
    %v2801 = vadd.f32 %v2705, %v2800
    %v2802 = vpop.f32.mrf.mxu0
    %2803 = vmatprep.mubr.bf16.mxu0 0
    %2804 = vmatmul.mubr.bf16.gmra.mxu0 %v2682
    %v2805 = vpop.f32.mrf.mxu0
    %v2806 = vadd.f32 %v2705, %v2805
    %v2807 = vpop.f32.mrf.mxu0
    %v2808 = vpop.f32.mrf.mxu0
    %v2809 = vadd.f32 %v2705, %v2808
    %v2810 = vpop.f32.mrf.mxu0
    %2811 = vmatprep.mubr.bf16.mxu0 0
    %2812 = vmatmul.mubr.bf16.gmra.mxu0 %v2683
    %v2813 = vpop.f32.mrf.mxu0
    %v2814 = vadd.f32 %v2705, %v2813
    %v2815 = vpop.f32.mrf.mxu0
    %v2816 = vpop.f32.mrf.mxu0
    %v2817 = vadd.f32 %v2705, %v2816
    %v2818 = vpop.f32.mrf.mxu0
    %2819 = vdwg.mxu0
    %v2820 = vadd.f32 %v99, %v2790
    %v2821 = vadd.f32 %v100, %v2793
    %v2822 = vadd.f32 %v101, %v2798
    %v2823 = vadd.f32 %v102, %v2801
    %v2824 = vadd.f32 %v103, %v2806
    %v2825 = vadd.f32 %v104, %v2809
    %v2826 = vadd.f32 %v105, %v2814
    %v2827 = vadd.f32 %v106, %v2817
    %v2828 = vpack.c.bf16 %v2821, %v2820
    %v2829 = vpack.c.bf16 %v2823, %v2822
    %v2830 = vpack.c.bf16 %v2825, %v2824
    %v2831 = vpack.c.bf16 %v2827, %v2826
    %s2832 = scalar_lea.vmem %s2, 64
    %v2833 = vld [vmem:[%s2832] sm:$0xff]
    %v2834 = vld [vmem:[%s2832 + $0x8] sm:$0xff]
    %v2835 = vld [vmem:[%s2832 + $0x10] sm:$0xff]
    %v2836 = vld [vmem:[%s2832 + $0x18] sm:$0xff]
    %v2837 = vld [vmem:[%s2832 + $0x20] sm:$0xff]
    %v2838 = vld [vmem:[%s2832 + $0x28] sm:$0xff]
    %v2839 = vld [vmem:[%s2832 + $0x30] sm:$0xff]
    %v2840 = vld [vmem:[%s2832 + $0x38] sm:$0xff]
    %s2841 = scalar_lea.vmem %s3, 2
    %v2842 = vld [vmem:[%s2841] sm:$0x3]
    %v2844 = vlaneseq
    %v2845 = vshrl.u32 %v2844, 7
    %v2846 = vsub.s32 0, %v2845
    %v2847 = vrot.slane %v2842, %v2846
    %v2848 = vlaneseq
    %v2849 = vshrl.u32 %v2848, 7
    %v2850 = vsub.s32 1, %v2849
    %v2851 = vrot.slane %v2842, %v2850
    %v2862 = vunpack.c.l.b16 %v2833
    %v2863 = vunpack.c.h.b16 %v2833
    %v2864 = vunpack.c.l.b16 %v2834
    %v2865 = vunpack.c.h.b16 %v2834
    %v2866 = vunpack.c.l.b16 %v2835
    %v2867 = vunpack.c.h.b16 %v2835
    %v2868 = vunpack.c.l.b16 %v2836
    %v2869 = vunpack.c.h.b16 %v2836
    %v2870 = vunpack.c.l.b16 %v2837
    %v2871 = vunpack.c.h.b16 %v2837
    %v2872 = vunpack.c.l.b16 %v2838
    %v2873 = vunpack.c.h.b16 %v2838
    %v2874 = vunpack.c.l.b16 %v2839
    %v2875 = vunpack.c.h.b16 %v2839
    %v2876 = vunpack.c.l.b16 %v2840
    %v2877 = vunpack.c.h.b16 %v2840
    %v2878 = vpack.c.b16 %v2864, %v2862
    %v2879 = vpack.c.b16 %v2865, %v2863
    %v2880 = vpack.c.b16 %v2868, %v2866
    %v2881 = vpack.c.b16 %v2869, %v2867
    %v2882 = vpack.c.b16 %v2872, %v2870
    %v2883 = vpack.c.b16 %v2873, %v2871
    %v2884 = vpack.c.b16 %v2876, %v2874
    %v2885 = vpack.c.b16 %v2877, %v2875
    %v2895 = vsel %vm171, %v2828, 0
    %v2898 = vsel %vm171, %v2829, 0
    %v2901 = vsel %vm171, %v2830, 0
    %v2904 = vsel %vm171, %v2831, 0
    %2906 = vmatprep.subr.bf16.mxu0 0
    %2907 = vmatpush1.bf16.msra.mxu0 0
    %2908 = vmatprep.subr.bf16.mxu0 0
    %2909 = vmatpush1.bf16.msra.mxu0 0
    %2910 = vmatprep.subr.bf16.mxu0 0
    %2911 = vmatpush1.bf16.msra.mxu0 0
    %2912 = vmatprep.subr.bf16.mxu0 0
    %2913 = vmatpush1.bf16.msra.mxu0 0
    %2914 = vmatprep.subr.bf16.mxu0 %v2885
    %2915 = vmatpush1.bf16.msra.mxu0 %v2884
    %2916 = vmatprep.subr.bf16.mxu0 %v2883
    %2917 = vmatpush1.bf16.msra.mxu0 %v2882
    %2918 = vmatprep.subr.bf16.mxu0 %v2881
    %2919 = vmatpush1.bf16.msra.mxu0 %v2880
    %2920 = vmatprep.subr.bf16.mxu0 %v2879
    %2921 = vmatpush1.bf16.msra.mxu0 %v2878
    %2922 = vmatprep.subr.bf16.mxu0 0
    %2923 = vmatpush2.bf16.msra.mxu0 0
    %2924 = vmatprep.subr.bf16.mxu0 0
    %2925 = vmatpush2.bf16.msra.mxu0 0
    %2926 = vmatprep.subr.bf16.mxu0 0
    %2927 = vmatpush2.bf16.msra.mxu0 0
    %2928 = vmatprep.subr.bf16.mxu0 0
    %2929 = vmatpush2.bf16.msra.mxu0 0
    %2930 = vmatprep.subr.bf16.mxu0 0
    %2931 = vmatpush2.bf16.msra.mxu0 0
    %2932 = vmatprep.subr.bf16.mxu0 0
    %2933 = vmatpush2.bf16.msra.mxu0 0
    %2934 = vmatprep.subr.bf16.mxu0 0
    %2935 = vmatpush2.bf16.msra.mxu0 0
    %2936 = vmatprep.subr.bf16.mxu0 0
    %2937 = vmatpush2.bf16.msra.mxu0 0
    %2938 = vmatprep.mubr.bf16.mxu0 0
    %2939 = vmatmul.mubr.bf16.gmra.mxu0 %v2895
    %v2940 = vpop.f32.mrf.mxu0
    %v2941 = vadd.f32 %v2847, %v2940
    %v2942 = vpop.f32.mrf.mxu0
    %v2943 = vadd.f32 %v2851, %v2942
    %v2944 = vpop.f32.mrf.mxu0
    %v2945 = vadd.f32 %v2847, %v2944
    %v2946 = vpop.f32.mrf.mxu0
    %v2947 = vadd.f32 %v2851, %v2946
    %2948 = vmatprep.mubr.bf16.mxu0 0
    %2949 = vmatmul.mubr.bf16.gmra.mxu0 %v2898
    %v2950 = vpop.f32.mrf.mxu0
    %v2951 = vadd.f32 %v2847, %v2950
    %v2952 = vpop.f32.mrf.mxu0
    %v2953 = vadd.f32 %v2851, %v2952
    %v2954 = vpop.f32.mrf.mxu0
    %v2955 = vadd.f32 %v2847, %v2954
    %v2956 = vpop.f32.mrf.mxu0
    %v2957 = vadd.f32 %v2851, %v2956
    %2958 = vmatprep.mubr.bf16.mxu0 0
    %2959 = vmatmul.mubr.bf16.gmra.mxu0 %v2901
    %v2960 = vpop.f32.mrf.mxu0
    %v2961 = vadd.f32 %v2847, %v2960
    %v2962 = vpop.f32.mrf.mxu0
    %v2963 = vadd.f32 %v2851, %v2962
    %v2964 = vpop.f32.mrf.mxu0
    %v2965 = vadd.f32 %v2847, %v2964
    %v2966 = vpop.f32.mrf.mxu0
    %v2967 = vadd.f32 %v2851, %v2966
    %2968 = vmatprep.mubr.bf16.mxu0 0
    %2969 = vmatmul.mubr.bf16.gmra.mxu0 %v2904
    %v2970 = vpop.f32.mrf.mxu0
    %v2971 = vadd.f32 %v2847, %v2970
    %v2972 = vpop.f32.mrf.mxu0
    %v2973 = vadd.f32 %v2851, %v2972
    %v2974 = vpop.f32.mrf.mxu0
    %v2975 = vadd.f32 %v2847, %v2974
    %v2976 = vpop.f32.mrf.mxu0
    %v2977 = vadd.f32 %v2851, %v2976
    %2978 = vdwg.mxu0
    %v2979 = vpack.c.bf16 %v2945, %v2941
    %v2980 = vpack.c.bf16 %v2965, %v2961
    %2982 = vrot.lane.b32.xlu0 %v2980, 64
    %v2983 = vpop.permute.xlu0 %2982
    %v2985 = vsel %vm261, %v2979, 0
    %v2988 = vsel %vm261, %v2983, 0
    %2990 = vmatprep.subr.bf16.mxu0 0
    %2991 = vmatpush1.bf16.xpose.msra.mxu0 0
    %2992 = vmatprep.subr.bf16.mxu0 0
    %2993 = vmatpush1.bf16.xpose.msra.mxu0 0
    %2994 = vmatprep.subr.bf16.mxu0 0
    %2995 = vmatpush1.bf16.xpose.msra.mxu0 0
    %2996 = vmatprep.subr.bf16.mxu0 0
    %2997 = vmatpush1.bf16.xpose.msra.mxu0 0
    %2998 = vmatprep.subr.bf16.mxu0 0
    %2999 = vmatpush1.bf16.xpose.msra.mxu0 0
    %3000 = vmatprep.subr.bf16.mxu0 0
    %3001 = vmatpush1.bf16.xpose.msra.mxu0 0
    %3002 = vmatprep.subr.bf16.mxu0 0
    %3003 = vmatpush1.bf16.xpose.msra.mxu0 0
    %3004 = vmatprep.subr.bf16.mxu0 0
    %3005 = vmatpush1.bf16.xpose.msra.mxu0 %v2988
    %3006 = vmatprep.subr.bf16.mxu0 0
    %3007 = vmatpush2.bf16.xpose.msra.mxu0 0
    %3008 = vmatprep.subr.bf16.mxu0 0
    %3009 = vmatpush2.bf16.xpose.msra.mxu0 0
    %3010 = vmatprep.subr.bf16.mxu0 0
    %3011 = vmatpush2.bf16.xpose.msra.mxu0 0
    %3012 = vmatprep.subr.bf16.mxu0 0
    %3013 = vmatpush2.bf16.xpose.msra.mxu0 0
    %3014 = vmatprep.subr.bf16.mxu0 0
    %3015 = vmatpush2.bf16.xpose.msra.mxu0 0
    %3016 = vmatprep.subr.bf16.mxu0 0
    %3017 = vmatpush2.bf16.xpose.msra.mxu0 0
    %3018 = vmatprep.subr.bf16.mxu0 0
    %3019 = vmatpush2.bf16.xpose.msra.mxu0 0
    %3020 = vmatprep.subr.bf16.mxu0 0
    %3021 = vmatpush2.bf16.xpose.msra.mxu0 0
    %3022 = vmatprep.mubr.bf16.mxu0 0
    %3023 = vmatmul.mubr.bf16.gmra.mxu0 %v2985
    %v3024 = vpop.f32.mrf.mxu0
    %v3025 = vadd.f32 0.0, %v3024
    %v3026 = vpop.f32.mrf.mxu0
    %v3027 = vpop.f32.mrf.mxu0
    %v3028 = vadd.f32 0.0, %v3027
    %v3029 = vpop.f32.mrf.mxu0
    %3030 = vdwg.mxu0
    %v3031 = vsel %vm261, %v3025, -inf
    %3032 = vmax.xlane.f32.xlu0 %v3031
    %v3033 = vpop.xlane.xlu0 %3032
    %v3034 = vsel %vm261, %v3028, -inf
    %3035 = vmax.xlane.f32.xlu0 %v3034
    %v3036 = vpop.xlane.xlu0 %3035
    %v3037 = vsub.f32 %v3025, %v3033
    %v3038 = vsub.f32 %v3028, %v3036
    %v3039 = vmul.f32 %v3037, 1.442695
    %v3040 = vpow.pop %v3039
    %v3041 = vmul.f32 %v3038, 1.442695
    %v3042 = vpow.pop %v3041
    %v3043 = vsel %vm261, %v3040, 0.0
    %3044 = vadd.xlane.f32.xlu0 %v3043
    %v3045 = vpop.xlane.xlu0 %3044
    %v3046 = vsel %vm261, %v3042, 0.0
    %3047 = vadd.xlane.f32.xlu0 %v3046
    %v3048 = vpop.xlane.xlu0 %3047
    %v3049 = vrcp.pop %v3045
    %v3050 = vrcp.pop %v3048
    %v3051 = vmul.f32 %v3040, %v3049
    %v3052 = vmul.f32 %v3042, %v3050
    %v3053 = vpack.c.bf16 %v3052, %v3051
    %v3054 = vpack.c.bf16 %v2967, %v2963
    %v3056 = vsel %vm261, %v3053, 0
    %3058 = vmatprep.subr.bf16.mxu0 0
    %3059 = vmatpush1.bf16.msra.mxu0 0
    %3060 = vmatprep.subr.bf16.mxu0 0
    %3061 = vmatpush1.bf16.msra.mxu0 0
    %3062 = vmatprep.subr.bf16.mxu0 0
    %3063 = vmatpush1.bf16.msra.mxu0 0
    %3064 = vmatprep.subr.bf16.mxu0 0
    %3065 = vmatpush1.bf16.msra.mxu0 0
    %3066 = vmatprep.subr.bf16.mxu0 0
    %3067 = vmatpush1.bf16.msra.mxu0 0
    %3068 = vmatprep.subr.bf16.mxu0 0
    %3069 = vmatpush1.bf16.msra.mxu0 0
    %3070 = vmatprep.subr.bf16.mxu0 0
    %3071 = vmatpush1.bf16.msra.mxu0 0
    %3072 = vmatprep.subr.bf16.mxu0 0
    %3073 = vmatpush1.bf16.msra.mxu0 %v3054
    %3074 = vmatprep.subr.bf16.mxu0 0
    %3075 = vmatpush2.bf16.msra.mxu0 0
    %3076 = vmatprep.subr.bf16.mxu0 0
    %3077 = vmatpush2.bf16.msra.mxu0 0
    %3078 = vmatprep.subr.bf16.mxu0 0
    %3079 = vmatpush2.bf16.msra.mxu0 0
    %3080 = vmatprep.subr.bf16.mxu0 0
    %3081 = vmatpush2.bf16.msra.mxu0 0
    %3082 = vmatprep.subr.bf16.mxu0 0
    %3083 = vmatpush2.bf16.msra.mxu0 0
    %3084 = vmatprep.subr.bf16.mxu0 0
    %3085 = vmatpush2.bf16.msra.mxu0 0
    %3086 = vmatprep.subr.bf16.mxu0 0
    %3087 = vmatpush2.bf16.msra.mxu0 0
    %3088 = vmatprep.subr.bf16.mxu0 0
    %3089 = vmatpush2.bf16.msra.mxu0 0
    %3090 = vmatprep.mubr.bf16.mxu0 0
    %3091 = vmatmul.mubr.bf16.gmra.mxu0 %v3056
    %v3092 = vpop.f32.mrf.mxu0
    %v3093 = vadd.f32 0.0, %v3092
    %v3094 = vpop.f32.mrf.mxu0
    %v3095 = vpop.f32.mrf.mxu0
    %v3096 = vadd.f32 0.0, %v3095
    %v3097 = vpop.f32.mrf.mxu0
    %3098 = vdwg.mxu0
    %3100 = vrot.lane.b32.xlu0 %v2979, 64
    %v3101 = vpop.permute.xlu0 %3100
    %v3103 = vsel %vm261, %v2980, 0
    %v3106 = vsel %vm261, %v3101, 0
    %3108 = vmatprep.subr.bf16.mxu0 0
    %3109 = vmatpush1.bf16.xpose.msra.mxu0 0
    %3110 = vmatprep.subr.bf16.mxu0 0
    %3111 = vmatpush1.bf16.xpose.msra.mxu0 0
    %3112 = vmatprep.subr.bf16.mxu0 0
    %3113 = vmatpush1.bf16.xpose.msra.mxu0 0
    %3114 = vmatprep.subr.bf16.mxu0 0
    %3115 = vmatpush1.bf16.xpose.msra.mxu0 0
    %3116 = vmatprep.subr.bf16.mxu0 0
    %3117 = vmatpush1.bf16.xpose.msra.mxu0 0
    %3118 = vmatprep.subr.bf16.mxu0 0
    %3119 = vmatpush1.bf16.xpose.msra.mxu0 0
    %3120 = vmatprep.subr.bf16.mxu0 0
    %3121 = vmatpush1.bf16.xpose.msra.mxu0 0
    %3122 = vmatprep.subr.bf16.mxu0 0
    %3123 = vmatpush1.bf16.xpose.msra.mxu0 %v3106
    %3124 = vmatprep.subr.bf16.mxu0 0
    %3125 = vmatpush2.bf16.xpose.msra.mxu0 0
    %3126 = vmatprep.subr.bf16.mxu0 0
    %3127 = vmatpush2.bf16.xpose.msra.mxu0 0
    %3128 = vmatprep.subr.bf16.mxu0 0
    %3129 = vmatpush2.bf16.xpose.msra.mxu0 0
    %3130 = vmatprep.subr.bf16.mxu0 0
    %3131 = vmatpush2.bf16.xpose.msra.mxu0 0
    %3132 = vmatprep.subr.bf16.mxu0 0
    %3133 = vmatpush2.bf16.xpose.msra.mxu0 0
    %3134 = vmatprep.subr.bf16.mxu0 0
    %3135 = vmatpush2.bf16.xpose.msra.mxu0 0
    %3136 = vmatprep.subr.bf16.mxu0 0
    %3137 = vmatpush2.bf16.xpose.msra.mxu0 0
    %3138 = vmatprep.subr.bf16.mxu0 0
    %3139 = vmatpush2.bf16.xpose.msra.mxu0 0
    %3140 = vmatprep.mubr.bf16.mxu0 0
    %3141 = vmatmul.mubr.bf16.gmra.mxu0 %v3103
    %v3142 = vpop.f32.mrf.mxu0
    %v3143 = vadd.f32 0.0, %v3142
    %v3144 = vpop.f32.mrf.mxu0
    %v3145 = vpop.f32.mrf.mxu0
    %v3146 = vadd.f32 0.0, %v3145
    %v3147 = vpop.f32.mrf.mxu0
    %3148 = vdwg.mxu0
    %v3149 = vsel %vm261, %v3143, -inf
    %3150 = vmax.xlane.f32.xlu0 %v3149
    %v3151 = vpop.xlane.xlu0 %3150
    %v3152 = vsel %vm261, %v3146, -inf
    %3153 = vmax.xlane.f32.xlu0 %v3152
    %v3154 = vpop.xlane.xlu0 %3153
    %v3155 = vsub.f32 %v3143, %v3151
    %v3156 = vsub.f32 %v3146, %v3154
    %v3157 = vmul.f32 %v3155, 1.442695
    %v3158 = vpow.pop %v3157
    %v3159 = vmul.f32 %v3156, 1.442695
    %v3160 = vpow.pop %v3159
    %v3161 = vsel %vm261, %v3158, 0.0
    %3162 = vadd.xlane.f32.xlu0 %v3161
    %v3163 = vpop.xlane.xlu0 %3162
    %v3164 = vsel %vm261, %v3160, 0.0
    %3165 = vadd.xlane.f32.xlu0 %v3164
    %v3166 = vpop.xlane.xlu0 %3165
    %v3167 = vrcp.pop %v3163
    %v3168 = vrcp.pop %v3166
    %v3169 = vmul.f32 %v3158, %v3167
    %v3170 = vmul.f32 %v3160, %v3168
    %v3171 = vpack.c.bf16 %v3170, %v3169
    %v3172 = vpack.c.bf16 %v2947, %v2943
    %v3174 = vsel %vm261, %v3171, 0
    %3176 = vmatprep.subr.bf16.mxu0 0
    %3177 = vmatpush1.bf16.msra.mxu0 0
    %3178 = vmatprep.subr.bf16.mxu0 0
    %3179 = vmatpush1.bf16.msra.mxu0 0
    %3180 = vmatprep.subr.bf16.mxu0 0
    %3181 = vmatpush1.bf16.msra.mxu0 0
    %3182 = vmatprep.subr.bf16.mxu0 0
    %3183 = vmatpush1.bf16.msra.mxu0 0
    %3184 = vmatprep.subr.bf16.mxu0 0
    %3185 = vmatpush1.bf16.msra.mxu0 0
    %3186 = vmatprep.subr.bf16.mxu0 0
    %3187 = vmatpush1.bf16.msra.mxu0 0
    %3188 = vmatprep.subr.bf16.mxu0 0
    %3189 = vmatpush1.bf16.msra.mxu0 0
    %3190 = vmatprep.subr.bf16.mxu0 0
    %3191 = vmatpush1.bf16.msra.mxu0 %v3172
    %3192 = vmatprep.subr.bf16.mxu0 0
    %3193 = vmatpush2.bf16.msra.mxu0 0
    %3194 = vmatprep.subr.bf16.mxu0 0
    %3195 = vmatpush2.bf16.msra.mxu0 0
    %3196 = vmatprep.subr.bf16.mxu0 0
    %3197 = vmatpush2.bf16.msra.mxu0 0
    %3198 = vmatprep.subr.bf16.mxu0 0
    %3199 = vmatpush2.bf16.msra.mxu0 0
    %3200 = vmatprep.subr.bf16.mxu0 0
    %3201 = vmatpush2.bf16.msra.mxu0 0
    %3202 = vmatprep.subr.bf16.mxu0 0
    %3203 = vmatpush2.bf16.msra.mxu0 0
    %3204 = vmatprep.subr.bf16.mxu0 0
    %3205 = vmatpush2.bf16.msra.mxu0 0
    %3206 = vmatprep.subr.bf16.mxu0 0
    %3207 = vmatpush2.bf16.msra.mxu0 0
    %3208 = vmatprep.mubr.bf16.mxu0 0
    %3209 = vmatmul.mubr.bf16.gmra.mxu0 %v3174
    %v3210 = vpop.f32.mrf.mxu0
    %v3211 = vadd.f32 0.0, %v3210
    %v3212 = vpop.f32.mrf.mxu0
    %v3213 = vpop.f32.mrf.mxu0
    %v3214 = vadd.f32 0.0, %v3213
    %v3215 = vpop.f32.mrf.mxu0
    %3216 = vdwg.mxu0
    %3217 = vrot.lane.b32.xlu0 %v2979, 112
    %v3218 = vpop.permute.xlu0 %3217
    %3219 = vrot.lane.b32.xlu0 %v2980, 48
    %v3220 = vpop.permute.xlu0 %3219
    %v3222 = vsel %vm261, %v3218, 0
    %v3225 = vsel %vm261, %v3220, 0
    %3227 = vmatprep.subr.bf16.mxu0 0
    %3228 = vmatpush1.bf16.xpose.msra.mxu0 0
    %3229 = vmatprep.subr.bf16.mxu0 0
    %3230 = vmatpush1.bf16.xpose.msra.mxu0 0
    %3231 = vmatprep.subr.bf16.mxu0 0
    %3232 = vmatpush1.bf16.xpose.msra.mxu0 0
    %3233 = vmatprep.subr.bf16.mxu0 0
    %3234 = vmatpush1.bf16.xpose.msra.mxu0 0
    %3235 = vmatprep.subr.bf16.mxu0 0
    %3236 = vmatpush1.bf16.xpose.msra.mxu0 0
    %3237 = vmatprep.subr.bf16.mxu0 0
    %3238 = vmatpush1.bf16.xpose.msra.mxu0 0
    %3239 = vmatprep.subr.bf16.mxu0 0
    %3240 = vmatpush1.bf16.xpose.msra.mxu0 0
    %3241 = vmatprep.subr.bf16.mxu0 0
    %3242 = vmatpush1.bf16.xpose.msra.mxu0 %v3225
    %3243 = vmatprep.subr.bf16.mxu0 0
    %3244 = vmatpush2.bf16.xpose.msra.mxu0 0
    %3245 = vmatprep.subr.bf16.mxu0 0
    %3246 = vmatpush2.bf16.xpose.msra.mxu0 0
    %3247 = vmatprep.subr.bf16.mxu0 0
    %3248 = vmatpush2.bf16.xpose.msra.mxu0 0
    %3249 = vmatprep.subr.bf16.mxu0 0
    %3250 = vmatpush2.bf16.xpose.msra.mxu0 0
    %3251 = vmatprep.subr.bf16.mxu0 0
    %3252 = vmatpush2.bf16.xpose.msra.mxu0 0
    %3253 = vmatprep.subr.bf16.mxu0 0
    %3254 = vmatpush2.bf16.xpose.msra.mxu0 0
    %3255 = vmatprep.subr.bf16.mxu0 0
    %3256 = vmatpush2.bf16.xpose.msra.mxu0 0
    %3257 = vmatprep.subr.bf16.mxu0 0
    %3258 = vmatpush2.bf16.xpose.msra.mxu0 0
    %3259 = vmatprep.mubr.bf16.mxu0 0
    %3260 = vmatmul.mubr.bf16.gmra.mxu0 %v3222
    %v3261 = vpop.f32.mrf.mxu0
    %v3262 = vadd.f32 0.0, %v3261
    %v3263 = vpop.f32.mrf.mxu0
    %v3264 = vpop.f32.mrf.mxu0
    %v3265 = vadd.f32 0.0, %v3264
    %v3266 = vpop.f32.mrf.mxu0
    %3267 = vdwg.mxu0
    %v3268 = vsel %vm261, %v3262, -inf
    %3269 = vmax.xlane.f32.xlu0 %v3268
    %v3270 = vpop.xlane.xlu0 %3269
    %v3271 = vsel %vm261, %v3265, -inf
    %3272 = vmax.xlane.f32.xlu0 %v3271
    %v3273 = vpop.xlane.xlu0 %3272
    %v3274 = vsub.f32 %v3262, %v3270
    %v3275 = vsub.f32 %v3265, %v3273
    %v3276 = vmul.f32 %v3274, 1.442695
    %v3277 = vpow.pop %v3276
    %v3278 = vmul.f32 %v3275, 1.442695
    %v3279 = vpow.pop %v3278
    %v3280 = vsel %vm261, %v3277, 0.0
    %3281 = vadd.xlane.f32.xlu0 %v3280
    %v3282 = vpop.xlane.xlu0 %3281
    %v3283 = vsel %vm261, %v3279, 0.0
    %3284 = vadd.xlane.f32.xlu0 %v3283
    %v3285 = vpop.xlane.xlu0 %3284
    %v3286 = vrcp.pop %v3282
    %v3287 = vrcp.pop %v3285
    %v3288 = vmul.f32 %v3277, %v3286
    %v3289 = vmul.f32 %v3279, %v3287
    %v3290 = vpack.c.bf16 %v3289, %v3288
    %3292 = vrot.lane.b32.xlu0 %v3054, 112
    %v3293 = vpop.permute.xlu0 %3292
    %v3296 = vsel %vm261, %v3290, 0
    %3298 = vmatprep.subr.bf16.mxu0 0
    %3299 = vmatpush1.bf16.msra.mxu0 0
    %3300 = vmatprep.subr.bf16.mxu0 0
    %3301 = vmatpush1.bf16.msra.mxu0 0
    %3302 = vmatprep.subr.bf16.mxu0 0
    %3303 = vmatpush1.bf16.msra.mxu0 0
    %3304 = vmatprep.subr.bf16.mxu0 0
    %3305 = vmatpush1.bf16.msra.mxu0 0
    %3306 = vmatprep.subr.bf16.mxu0 0
    %3307 = vmatpush1.bf16.msra.mxu0 0
    %3308 = vmatprep.subr.bf16.mxu0 0
    %3309 = vmatpush1.bf16.msra.mxu0 0
    %3310 = vmatprep.subr.bf16.mxu0 0
    %3311 = vmatpush1.bf16.msra.mxu0 0
    %3312 = vmatprep.subr.bf16.mxu0 0
    %3313 = vmatpush1.bf16.msra.mxu0 %v3293
    %3314 = vmatprep.subr.bf16.mxu0 0
    %3315 = vmatpush2.bf16.msra.mxu0 0
    %3316 = vmatprep.subr.bf16.mxu0 0
    %3317 = vmatpush2.bf16.msra.mxu0 0
    %3318 = vmatprep.subr.bf16.mxu0 0
    %3319 = vmatpush2.bf16.msra.mxu0 0
    %3320 = vmatprep.subr.bf16.mxu0 0
    %3321 = vmatpush2.bf16.msra.mxu0 0
    %3322 = vmatprep.subr.bf16.mxu0 0
    %3323 = vmatpush2.bf16.msra.mxu0 0
    %3324 = vmatprep.subr.bf16.mxu0 0
    %3325 = vmatpush2.bf16.msra.mxu0 0
    %3326 = vmatprep.subr.bf16.mxu0 0
    %3327 = vmatpush2.bf16.msra.mxu0 0
    %3328 = vmatprep.subr.bf16.mxu0 0
    %3329 = vmatpush2.bf16.msra.mxu0 0
    %3330 = vmatprep.mubr.bf16.mxu0 0
    %3331 = vmatmul.mubr.bf16.gmra.mxu0 %v3296
    %v3332 = vpop.f32.mrf.mxu0
    %v3333 = vadd.f32 0.0, %v3332
    %v3334 = vpop.f32.mrf.mxu0
    %v3335 = vpop.f32.mrf.mxu0
    %v3336 = vadd.f32 0.0, %v3335
    %v3337 = vpop.f32.mrf.mxu0
    %3338 = vdwg.mxu0
    %3339 = vrot.lane.b32.xlu0 %v2980, 112
    %v3340 = vpop.permute.xlu0 %3339
    %3341 = vrot.lane.b32.xlu0 %v2979, 48
    %v3342 = vpop.permute.xlu0 %3341
    %v3344 = vsel %vm261, %v3340, 0
    %v3347 = vsel %vm261, %v3342, 0
    %3349 = vmatprep.subr.bf16.mxu0 0
    %3350 = vmatpush1.bf16.xpose.msra.mxu0 0
    %3351 = vmatprep.subr.bf16.mxu0 0
    %3352 = vmatpush1.bf16.xpose.msra.mxu0 0
    %3353 = vmatprep.subr.bf16.mxu0 0
    %3354 = vmatpush1.bf16.xpose.msra.mxu0 0
    %3355 = vmatprep.subr.bf16.mxu0 0
    %3356 = vmatpush1.bf16.xpose.msra.mxu0 0
    %3357 = vmatprep.subr.bf16.mxu0 0
    %3358 = vmatpush1.bf16.xpose.msra.mxu0 0
    %3359 = vmatprep.subr.bf16.mxu0 0
    %3360 = vmatpush1.bf16.xpose.msra.mxu0 0
    %3361 = vmatprep.subr.bf16.mxu0 0
    %3362 = vmatpush1.bf16.xpose.msra.mxu0 0
    %3363 = vmatprep.subr.bf16.mxu0 0
    %3364 = vmatpush1.bf16.xpose.msra.mxu0 %v3347
    %3365 = vmatprep.subr.bf16.mxu0 0
    %3366 = vmatpush2.bf16.xpose.msra.mxu0 0
    %3367 = vmatprep.subr.bf16.mxu0 0
    %3368 = vmatpush2.bf16.xpose.msra.mxu0 0
    %3369 = vmatprep.subr.bf16.mxu0 0
    %3370 = vmatpush2.bf16.xpose.msra.mxu0 0
    %3371 = vmatprep.subr.bf16.mxu0 0
    %3372 = vmatpush2.bf16.xpose.msra.mxu0 0
    %3373 = vmatprep.subr.bf16.mxu0 0
    %3374 = vmatpush2.bf16.xpose.msra.mxu0 0
    %3375 = vmatprep.subr.bf16.mxu0 0
    %3376 = vmatpush2.bf16.xpose.msra.mxu0 0
    %3377 = vmatprep.subr.bf16.mxu0 0
    %3378 = vmatpush2.bf16.xpose.msra.mxu0 0
    %3379 = vmatprep.subr.bf16.mxu0 0
    %3380 = vmatpush2.bf16.xpose.msra.mxu0 0
    %3381 = vmatprep.mubr.bf16.mxu0 0
    %3382 = vmatmul.mubr.bf16.gmra.mxu0 %v3344
    %v3383 = vpop.f32.mrf.mxu0
    %v3384 = vadd.f32 0.0, %v3383
    %v3385 = vpop.f32.mrf.mxu0
    %v3386 = vpop.f32.mrf.mxu0
    %v3387 = vadd.f32 0.0, %v3386
    %v3388 = vpop.f32.mrf.mxu0
    %3389 = vdwg.mxu0
    %v3390 = vsel %vm261, %v3384, -inf
    %3391 = vmax.xlane.f32.xlu0 %v3390
    %v3392 = vpop.xlane.xlu0 %3391
    %v3393 = vsel %vm261, %v3387, -inf
    %3394 = vmax.xlane.f32.xlu0 %v3393
    %v3395 = vpop.xlane.xlu0 %3394
    %v3396 = vsub.f32 %v3384, %v3392
    %v3397 = vsub.f32 %v3387, %v3395
    %v3398 = vmul.f32 %v3396, 1.442695
    %v3399 = vpow.pop %v3398
    %v3400 = vmul.f32 %v3397, 1.442695
    %v3401 = vpow.pop %v3400
    %v3402 = vsel %vm261, %v3399, 0.0
    %3403 = vadd.xlane.f32.xlu0 %v3402
    %v3404 = vpop.xlane.xlu0 %3403
    %v3405 = vsel %vm261, %v3401, 0.0
    %3406 = vadd.xlane.f32.xlu0 %v3405
    %v3407 = vpop.xlane.xlu0 %3406
    %v3408 = vrcp.pop %v3404
    %v3409 = vrcp.pop %v3407
    %v3410 = vmul.f32 %v3399, %v3408
    %v3411 = vmul.f32 %v3401, %v3409
    %v3412 = vpack.c.bf16 %v3411, %v3410
    %3414 = vrot.lane.b32.xlu0 %v3172, 112
    %v3415 = vpop.permute.xlu0 %3414
    %v3418 = vsel %vm261, %v3412, 0
    %3420 = vmatprep.subr.bf16.mxu0 0
    %3421 = vmatpush1.bf16.msra.mxu0 0
    %3422 = vmatprep.subr.bf16.mxu0 0
    %3423 = vmatpush1.bf16.msra.mxu0 0
    %3424 = vmatprep.subr.bf16.mxu0 0
    %3425 = vmatpush1.bf16.msra.mxu0 0
    %3426 = vmatprep.subr.bf16.mxu0 0
    %3427 = vmatpush1.bf16.msra.mxu0 0
    %3428 = vmatprep.subr.bf16.mxu0 0
    %3429 = vmatpush1.bf16.msra.mxu0 0
    %3430 = vmatprep.subr.bf16.mxu0 0
    %3431 = vmatpush1.bf16.msra.mxu0 0
    %3432 = vmatprep.subr.bf16.mxu0 0
    %3433 = vmatpush1.bf16.msra.mxu0 0
    %3434 = vmatprep.subr.bf16.mxu0 0
    %3435 = vmatpush1.bf16.msra.mxu0 %v3415
    %3436 = vmatprep.subr.bf16.mxu0 0
    %3437 = vmatpush2.bf16.msra.mxu0 0
    %3438 = vmatprep.subr.bf16.mxu0 0
    %3439 = vmatpush2.bf16.msra.mxu0 0
    %3440 = vmatprep.subr.bf16.mxu0 0
    %3441 = vmatpush2.bf16.msra.mxu0 0
    %3442 = vmatprep.subr.bf16.mxu0 0
    %3443 = vmatpush2.bf16.msra.mxu0 0
    %3444 = vmatprep.subr.bf16.mxu0 0
    %3445 = vmatpush2.bf16.msra.mxu0 0
    %3446 = vmatprep.subr.bf16.mxu0 0
    %3447 = vmatpush2.bf16.msra.mxu0 0
    %3448 = vmatprep.subr.bf16.mxu0 0
    %3449 = vmatpush2.bf16.msra.mxu0 0
    %3450 = vmatprep.subr.bf16.mxu0 0
    %3451 = vmatpush2.bf16.msra.mxu0 0
    %3452 = vmatprep.mubr.bf16.mxu0 0
    %3453 = vmatmul.mubr.bf16.gmra.mxu0 %v3418
    %v3454 = vpop.f32.mrf.mxu0
    %v3455 = vadd.f32 0.0, %v3454
    %v3456 = vpop.f32.mrf.mxu0
    %v3457 = vpop.f32.mrf.mxu0
    %v3458 = vadd.f32 0.0, %v3457
    %v3459 = vpop.f32.mrf.mxu0
    %3460 = vdwg.mxu0
    %3461 = vrot.lane.b32.xlu0 %v2979, 96
    %v3462 = vpop.permute.xlu0 %3461
    %3463 = vrot.lane.b32.xlu0 %v2980, 32
    %v3464 = vpop.permute.xlu0 %3463
    %v3466 = vsel %vm261, %v3462, 0
    %v3469 = vsel %vm261, %v3464, 0
    %3471 = vmatprep.subr.bf16.mxu0 0
    %3472 = vmatpush1.bf16.xpose.msra.mxu0 0
    %3473 = vmatprep.subr.bf16.mxu0 0
    %3474 = vmatpush1.bf16.xpose.msra.mxu0 0
    %3475 = vmatprep.subr.bf16.mxu0 0
    %3476 = vmatpush1.bf16.xpose.msra.mxu0 0
    %3477 = vmatprep.subr.bf16.mxu0 0
    %3478 = vmatpush1.bf16.xpose.msra.mxu0 0
    %3479 = vmatprep.subr.bf16.mxu0 0
    %3480 = vmatpush1.bf16.xpose.msra.mxu0 0
    %3481 = vmatprep.subr.bf16.mxu0 0
    %3482 = vmatpush1.bf16.xpose.msra.mxu0 0
    %3483 = vmatprep.subr.bf16.mxu0 0
    %3484 = vmatpush1.bf16.xpose.msra.mxu0 0
    %3485 = vmatprep.subr.bf16.mxu0 0
    %3486 = vmatpush1.bf16.xpose.msra.mxu0 %v3469
    %3487 = vmatprep.subr.bf16.mxu0 0
    %3488 = vmatpush2.bf16.xpose.msra.mxu0 0
    %3489 = vmatprep.subr.bf16.mxu0 0
    %3490 = vmatpush2.bf16.xpose.msra.mxu0 0
    %3491 = vmatprep.subr.bf16.mxu0 0
    %3492 = vmatpush2.bf16.xpose.msra.mxu0 0
    %3493 = vmatprep.subr.bf16.mxu0 0
    %3494 = vmatpush2.bf16.xpose.msra.mxu0 0
    %3495 = vmatprep.subr.bf16.mxu0 0
    %3496 = vmatpush2.bf16.xpose.msra.mxu0 0
    %3497 = vmatprep.subr.bf16.mxu0 0
    %3498 = vmatpush2.bf16.xpose.msra.mxu0 0
    %3499 = vmatprep.subr.bf16.mxu0 0
    %3500 = vmatpush2.bf16.xpose.msra.mxu0 0
    %3501 = vmatprep.subr.bf16.mxu0 0
    %3502 = vmatpush2.bf16.xpose.msra.mxu0 0
    %3503 = vmatprep.mubr.bf16.mxu0 0
    %3504 = vmatmul.mubr.bf16.gmra.mxu0 %v3466
    %v3505 = vpop.f32.mrf.mxu0
    %v3506 = vadd.f32 0.0, %v3505
    %v3507 = vpop.f32.mrf.mxu0
    %v3508 = vpop.f32.mrf.mxu0
    %v3509 = vadd.f32 0.0, %v3508
    %v3510 = vpop.f32.mrf.mxu0
    %3511 = vdwg.mxu0
    %v3512 = vsel %vm261, %v3506, -inf
    %3513 = vmax.xlane.f32.xlu0 %v3512
    %v3514 = vpop.xlane.xlu0 %3513
    %v3515 = vsel %vm261, %v3509, -inf
    %3516 = vmax.xlane.f32.xlu0 %v3515
    %v3517 = vpop.xlane.xlu0 %3516
    %v3518 = vsub.f32 %v3506, %v3514
    %v3519 = vsub.f32 %v3509, %v3517
    %v3520 = vmul.f32 %v3518, 1.442695
    %v3521 = vpow.pop %v3520
    %v3522 = vmul.f32 %v3519, 1.442695
    %v3523 = vpow.pop %v3522
    %v3524 = vsel %vm261, %v3521, 0.0
    %3525 = vadd.xlane.f32.xlu0 %v3524
    %v3526 = vpop.xlane.xlu0 %3525
    %v3527 = vsel %vm261, %v3523, 0.0
    %3528 = vadd.xlane.f32.xlu0 %v3527
    %v3529 = vpop.xlane.xlu0 %3528
    %v3530 = vrcp.pop %v3526
    %v3531 = vrcp.pop %v3529
    %v3532 = vmul.f32 %v3521, %v3530
    %v3533 = vmul.f32 %v3523, %v3531
    %v3534 = vpack.c.bf16 %v3533, %v3532
    %3535 = vrot.lane.b32.xlu0 %v3054, 96
    %v3536 = vpop.permute.xlu0 %3535
    %v3539 = vsel %vm261, %v3534, 0
    %3541 = vmatprep.subr.bf16.mxu0 0
    %3542 = vmatpush1.bf16.msra.mxu0 0
    %3543 = vmatprep.subr.bf16.mxu0 0
    %3544 = vmatpush1.bf16.msra.mxu0 0
    %3545 = vmatprep.subr.bf16.mxu0 0
    %3546 = vmatpush1.bf16.msra.mxu0 0
    %3547 = vmatprep.subr.bf16.mxu0 0
    %3548 = vmatpush1.bf16.msra.mxu0 0
    %3549 = vmatprep.subr.bf16.mxu0 0
    %3550 = vmatpush1.bf16.msra.mxu0 0
    %3551 = vmatprep.subr.bf16.mxu0 0
    %3552 = vmatpush1.bf16.msra.mxu0 0
    %3553 = vmatprep.subr.bf16.mxu0 0
    %3554 = vmatpush1.bf16.msra.mxu0 0
    %3555 = vmatprep.subr.bf16.mxu0 0
    %3556 = vmatpush1.bf16.msra.mxu0 %v3536
    %3557 = vmatprep.subr.bf16.mxu0 0
    %3558 = vmatpush2.bf16.msra.mxu0 0
    %3559 = vmatprep.subr.bf16.mxu0 0
    %3560 = vmatpush2.bf16.msra.mxu0 0
    %3561 = vmatprep.subr.bf16.mxu0 0
    %3562 = vmatpush2.bf16.msra.mxu0 0
    %3563 = vmatprep.subr.bf16.mxu0 0
    %3564 = vmatpush2.bf16.msra.mxu0 0
    %3565 = vmatprep.subr.bf16.mxu0 0
    %3566 = vmatpush2.bf16.msra.mxu0 0
    %3567 = vmatprep.subr.bf16.mxu0 0
    %3568 = vmatpush2.bf16.msra.mxu0 0
    %3569 = vmatprep.subr.bf16.mxu0 0
    %3570 = vmatpush2.bf16.msra.mxu0 0
    %3571 = vmatprep.subr.bf16.mxu0 0
    %3572 = vmatpush2.bf16.msra.mxu0 0
    %3573 = vmatprep.mubr.bf16.mxu0 0
    %3574 = vmatmul.mubr.bf16.gmra.mxu0 %v3539
    %v3575 = vpop.f32.mrf.mxu0
    %v3576 = vadd.f32 0.0, %v3575
    %v3577 = vpop.f32.mrf.mxu0
    %v3578 = vpop.f32.mrf.mxu0
    %v3579 = vadd.f32 0.0, %v3578
    %v3580 = vpop.f32.mrf.mxu0
    %3581 = vdwg.mxu0
    %3582 = vrot.lane.b32.xlu0 %v2980, 96
    %v3583 = vpop.permute.xlu0 %3582
    %3584 = vrot.lane.b32.xlu0 %v2979, 32
    %v3585 = vpop.permute.xlu0 %3584
    %v3587 = vsel %vm261, %v3583, 0
    %v3590 = vsel %vm261, %v3585, 0
    %3592 = vmatprep.subr.bf16.mxu0 0
    %3593 = vmatpush1.bf16.xpose.msra.mxu0 0
    %3594 = vmatprep.subr.bf16.mxu0 0
    %3595 = vmatpush1.bf16.xpose.msra.mxu0 0
    %3596 = vmatprep.subr.bf16.mxu0 0
    %3597 = vmatpush1.bf16.xpose.msra.mxu0 0
    %3598 = vmatprep.subr.bf16.mxu0 0
    %3599 = vmatpush1.bf16.xpose.msra.mxu0 0
    %3600 = vmatprep.subr.bf16.mxu0 0
    %3601 = vmatpush1.bf16.xpose.msra.mxu0 0
    %3602 = vmatprep.subr.bf16.mxu0 0
    %3603 = vmatpush1.bf16.xpose.msra.mxu0 0
    %3604 = vmatprep.subr.bf16.mxu0 0
    %3605 = vmatpush1.bf16.xpose.msra.mxu0 0
    %3606 = vmatprep.subr.bf16.mxu0 0
    %3607 = vmatpush1.bf16.xpose.msra.mxu0 %v3590
    %3608 = vmatprep.subr.bf16.mxu0 0
    %3609 = vmatpush2.bf16.xpose.msra.mxu0 0
    %3610 = vmatprep.subr.bf16.mxu0 0
    %3611 = vmatpush2.bf16.xpose.msra.mxu0 0
    %3612 = vmatprep.subr.bf16.mxu0 0
    %3613 = vmatpush2.bf16.xpose.msra.mxu0 0
    %3614 = vmatprep.subr.bf16.mxu0 0
    %3615 = vmatpush2.bf16.xpose.msra.mxu0 0
    %3616 = vmatprep.subr.bf16.mxu0 0
    %3617 = vmatpush2.bf16.xpose.msra.mxu0 0
    %3618 = vmatprep.subr.bf16.mxu0 0
    %3619 = vmatpush2.bf16.xpose.msra.mxu0 0
    %3620 = vmatprep.subr.bf16.mxu0 0
    %3621 = vmatpush2.bf16.xpose.msra.mxu0 0
    %3622 = vmatprep.subr.bf16.mxu0 0
    %3623 = vmatpush2.bf16.xpose.msra.mxu0 0
    %3624 = vmatprep.mubr.bf16.mxu0 0
    %3625 = vmatmul.mubr.bf16.gmra.mxu0 %v3587
    %v3626 = vpop.f32.mrf.mxu0
    %v3627 = vadd.f32 0.0, %v3626
    %v3628 = vpop.f32.mrf.mxu0
    %v3629 = vpop.f32.mrf.mxu0
    %v3630 = vadd.f32 0.0, %v3629
    %v3631 = vpop.f32.mrf.mxu0
    %3632 = vdwg.mxu0
    %v3633 = vsel %vm261, %v3627, -inf
    %3634 = vmax.xlane.f32.xlu0 %v3633
    %v3635 = vpop.xlane.xlu0 %3634
    %v3636 = vsel %vm261, %v3630, -inf
    %3637 = vmax.xlane.f32.xlu0 %v3636
    %v3638 = vpop.xlane.xlu0 %3637
    %v3639 = vsub.f32 %v3627, %v3635
    %v3640 = vsub.f32 %v3630, %v3638
    %v3641 = vmul.f32 %v3639, 1.442695
    %v3642 = vpow.pop %v3641
    %v3643 = vmul.f32 %v3640, 1.442695
    %v3644 = vpow.pop %v3643
    %v3645 = vsel %vm261, %v3642, 0.0
    %3646 = vadd.xlane.f32.xlu0 %v3645
    %v3647 = vpop.xlane.xlu0 %3646
    %v3648 = vsel %vm261, %v3644, 0.0
    %3649 = vadd.xlane.f32.xlu0 %v3648
    %v3650 = vpop.xlane.xlu0 %3649
    %v3651 = vrcp.pop %v3647
    %v3652 = vrcp.pop %v3650
    %v3653 = vmul.f32 %v3642, %v3651
    %v3654 = vmul.f32 %v3644, %v3652
    %v3655 = vpack.c.bf16 %v3654, %v3653
    %3656 = vrot.lane.b32.xlu0 %v3172, 96
    %v3657 = vpop.permute.xlu0 %3656
    %v3660 = vsel %vm261, %v3655, 0
    %3662 = vmatprep.subr.bf16.mxu0 0
    %3663 = vmatpush1.bf16.msra.mxu0 0
    %3664 = vmatprep.subr.bf16.mxu0 0
    %3665 = vmatpush1.bf16.msra.mxu0 0
    %3666 = vmatprep.subr.bf16.mxu0 0
    %3667 = vmatpush1.bf16.msra.mxu0 0
    %3668 = vmatprep.subr.bf16.mxu0 0
    %3669 = vmatpush1.bf16.msra.mxu0 0
    %3670 = vmatprep.subr.bf16.mxu0 0
    %3671 = vmatpush1.bf16.msra.mxu0 0
    %3672 = vmatprep.subr.bf16.mxu0 0
    %3673 = vmatpush1.bf16.msra.mxu0 0
    %3674 = vmatprep.subr.bf16.mxu0 0
    %3675 = vmatpush1.bf16.msra.mxu0 0
    %3676 = vmatprep.subr.bf16.mxu0 0
    %3677 = vmatpush1.bf16.msra.mxu0 %v3657
    %3678 = vmatprep.subr.bf16.mxu0 0
    %3679 = vmatpush2.bf16.msra.mxu0 0
    %3680 = vmatprep.subr.bf16.mxu0 0
    %3681 = vmatpush2.bf16.msra.mxu0 0
    %3682 = vmatprep.subr.bf16.mxu0 0
    %3683 = vmatpush2.bf16.msra.mxu0 0
    %3684 = vmatprep.subr.bf16.mxu0 0
    %3685 = vmatpush2.bf16.msra.mxu0 0
    %3686 = vmatprep.subr.bf16.mxu0 0
    %3687 = vmatpush2.bf16.msra.mxu0 0
    %3688 = vmatprep.subr.bf16.mxu0 0
    %3689 = vmatpush2.bf16.msra.mxu0 0
    %3690 = vmatprep.subr.bf16.mxu0 0
    %3691 = vmatpush2.bf16.msra.mxu0 0
    %3692 = vmatprep.subr.bf16.mxu0 0
    %3693 = vmatpush2.bf16.msra.mxu0 0
    %3694 = vmatprep.mubr.bf16.mxu0 0
    %3695 = vmatmul.mubr.bf16.gmra.mxu0 %v3660
    %v3696 = vpop.f32.mrf.mxu0
    %v3697 = vadd.f32 0.0, %v3696
    %v3698 = vpop.f32.mrf.mxu0
    %v3699 = vpop.f32.mrf.mxu0
    %v3700 = vadd.f32 0.0, %v3699
    %v3701 = vpop.f32.mrf.mxu0
    %3702 = vdwg.mxu0
    %3703 = vrot.lane.b32.xlu0 %v2979, 80
    %v3704 = vpop.permute.xlu0 %3703
    %3705 = vrot.lane.b32.xlu0 %v2980, 16
    %v3706 = vpop.permute.xlu0 %3705
    %v3708 = vsel %vm261, %v3704, 0
    %v3711 = vsel %vm261, %v3706, 0
    %3713 = vmatprep.subr.bf16.mxu0 0
    %3714 = vmatpush1.bf16.xpose.msra.mxu0 0
    %3715 = vmatprep.subr.bf16.mxu0 0
    %3716 = vmatpush1.bf16.xpose.msra.mxu0 0
    %3717 = vmatprep.subr.bf16.mxu0 0
    %3718 = vmatpush1.bf16.xpose.msra.mxu0 0
    %3719 = vmatprep.subr.bf16.mxu0 0
    %3720 = vmatpush1.bf16.xpose.msra.mxu0 0
    %3721 = vmatprep.subr.bf16.mxu0 0
    %3722 = vmatpush1.bf16.xpose.msra.mxu0 0
    %3723 = vmatprep.subr.bf16.mxu0 0
    %3724 = vmatpush1.bf16.xpose.msra.mxu0 0
    %3725 = vmatprep.subr.bf16.mxu0 0
    %3726 = vmatpush1.bf16.xpose.msra.mxu0 0
    %3727 = vmatprep.subr.bf16.mxu0 0
    %3728 = vmatpush1.bf16.xpose.msra.mxu0 %v3711
    %3729 = vmatprep.subr.bf16.mxu0 0
    %3730 = vmatpush2.bf16.xpose.msra.mxu0 0
    %3731 = vmatprep.subr.bf16.mxu0 0
    %3732 = vmatpush2.bf16.xpose.msra.mxu0 0
    %3733 = vmatprep.subr.bf16.mxu0 0
    %3734 = vmatpush2.bf16.xpose.msra.mxu0 0
    %3735 = vmatprep.subr.bf16.mxu0 0
    %3736 = vmatpush2.bf16.xpose.msra.mxu0 0
    %3737 = vmatprep.subr.bf16.mxu0 0
    %3738 = vmatpush2.bf16.xpose.msra.mxu0 0
    %3739 = vmatprep.subr.bf16.mxu0 0
    %3740 = vmatpush2.bf16.xpose.msra.mxu0 0
    %3741 = vmatprep.subr.bf16.mxu0 0
    %3742 = vmatpush2.bf16.xpose.msra.mxu0 0
    %3743 = vmatprep.subr.bf16.mxu0 0
    %3744 = vmatpush2.bf16.xpose.msra.mxu0 0
    %3745 = vmatprep.mubr.bf16.mxu0 0
    %3746 = vmatmul.mubr.bf16.gmra.mxu0 %v3708
    %v3747 = vpop.f32.mrf.mxu0
    %v3748 = vadd.f32 0.0, %v3747
    %v3749 = vpop.f32.mrf.mxu0
    %v3750 = vpop.f32.mrf.mxu0
    %v3751 = vadd.f32 0.0, %v3750
    %v3752 = vpop.f32.mrf.mxu0
    %3753 = vdwg.mxu0
    %v3754 = vsel %vm261, %v3748, -inf
    %3755 = vmax.xlane.f32.xlu0 %v3754
    %v3756 = vpop.xlane.xlu0 %3755
    %v3757 = vsel %vm261, %v3751, -inf
    %3758 = vmax.xlane.f32.xlu0 %v3757
    %v3759 = vpop.xlane.xlu0 %3758
    %v3760 = vsub.f32 %v3748, %v3756
    %v3761 = vsub.f32 %v3751, %v3759
    %v3762 = vmul.f32 %v3760, 1.442695
    %v3763 = vpow.pop %v3762
    %v3764 = vmul.f32 %v3761, 1.442695
    %v3765 = vpow.pop %v3764
    %v3766 = vsel %vm261, %v3763, 0.0
    %3767 = vadd.xlane.f32.xlu0 %v3766
    %v3768 = vpop.xlane.xlu0 %3767
    %v3769 = vsel %vm261, %v3765, 0.0
    %3770 = vadd.xlane.f32.xlu0 %v3769
    %v3771 = vpop.xlane.xlu0 %3770
    %v3772 = vrcp.pop %v3768
    %v3773 = vrcp.pop %v3771
    %v3774 = vmul.f32 %v3763, %v3772
    %v3775 = vmul.f32 %v3765, %v3773
    %v3776 = vpack.c.bf16 %v3775, %v3774
    %3777 = vrot.lane.b32.xlu0 %v3054, 80
    %v3778 = vpop.permute.xlu0 %3777
    %v3781 = vsel %vm261, %v3776, 0
    %3783 = vmatprep.subr.bf16.mxu0 0
    %3784 = vmatpush1.bf16.msra.mxu0 0
    %3785 = vmatprep.subr.bf16.mxu0 0
    %3786 = vmatpush1.bf16.msra.mxu0 0
    %3787 = vmatprep.subr.bf16.mxu0 0
    %3788 = vmatpush1.bf16.msra.mxu0 0
    %3789 = vmatprep.subr.bf16.mxu0 0
    %3790 = vmatpush1.bf16.msra.mxu0 0
    %3791 = vmatprep.subr.bf16.mxu0 0
    %3792 = vmatpush1.bf16.msra.mxu0 0
    %3793 = vmatprep.subr.bf16.mxu0 0
    %3794 = vmatpush1.bf16.msra.mxu0 0
    %3795 = vmatprep.subr.bf16.mxu0 0
    %3796 = vmatpush1.bf16.msra.mxu0 0
    %3797 = vmatprep.subr.bf16.mxu0 0
    %3798 = vmatpush1.bf16.msra.mxu0 %v3778
    %3799 = vmatprep.subr.bf16.mxu0 0
    %3800 = vmatpush2.bf16.msra.mxu0 0
    %3801 = vmatprep.subr.bf16.mxu0 0
    %3802 = vmatpush2.bf16.msra.mxu0 0
    %3803 = vmatprep.subr.bf16.mxu0 0
    %3804 = vmatpush2.bf16.msra.mxu0 0
    %3805 = vmatprep.subr.bf16.mxu0 0
    %3806 = vmatpush2.bf16.msra.mxu0 0
    %3807 = vmatprep.subr.bf16.mxu0 0
    %3808 = vmatpush2.bf16.msra.mxu0 0
    %3809 = vmatprep.subr.bf16.mxu0 0
    %3810 = vmatpush2.bf16.msra.mxu0 0
    %3811 = vmatprep.subr.bf16.mxu0 0
    %3812 = vmatpush2.bf16.msra.mxu0 0
    %3813 = vmatprep.subr.bf16.mxu0 0
    %3814 = vmatpush2.bf16.msra.mxu0 0
    %3815 = vmatprep.mubr.bf16.mxu0 0
    %3816 = vmatmul.mubr.bf16.gmra.mxu0 %v3781
    %v3817 = vpop.f32.mrf.mxu0
    %v3818 = vadd.f32 0.0, %v3817
    %v3819 = vpop.f32.mrf.mxu0
    %v3820 = vpop.f32.mrf.mxu0
    %v3821 = vadd.f32 0.0, %v3820
    %v3822 = vpop.f32.mrf.mxu0
    %3823 = vdwg.mxu0
    %3824 = vrot.lane.b32.xlu0 %v2980, 80
    %v3825 = vpop.permute.xlu0 %3824
    %3826 = vrot.lane.b32.xlu0 %v2979, 16
    %v3827 = vpop.permute.xlu0 %3826
    %v3829 = vsel %vm261, %v3825, 0
    %v3832 = vsel %vm261, %v3827, 0
    %3834 = vmatprep.subr.bf16.mxu0 0
    %3835 = vmatpush1.bf16.xpose.msra.mxu0 0
    %3836 = vmatprep.subr.bf16.mxu0 0
    %3837 = vmatpush1.bf16.xpose.msra.mxu0 0
    %3838 = vmatprep.subr.bf16.mxu0 0
    %3839 = vmatpush1.bf16.xpose.msra.mxu0 0
    %3840 = vmatprep.subr.bf16.mxu0 0
    %3841 = vmatpush1.bf16.xpose.msra.mxu0 0
    %3842 = vmatprep.subr.bf16.mxu0 0
    %3843 = vmatpush1.bf16.xpose.msra.mxu0 0
    %3844 = vmatprep.subr.bf16.mxu0 0
    %3845 = vmatpush1.bf16.xpose.msra.mxu0 0
    %3846 = vmatprep.subr.bf16.mxu0 0
    %3847 = vmatpush1.bf16.xpose.msra.mxu0 0
    %3848 = vmatprep.subr.bf16.mxu0 0
    %3849 = vmatpush1.bf16.xpose.msra.mxu0 %v3832
    %3850 = vmatprep.subr.bf16.mxu0 0
    %3851 = vmatpush2.bf16.xpose.msra.mxu0 0
    %3852 = vmatprep.subr.bf16.mxu0 0
    %3853 = vmatpush2.bf16.xpose.msra.mxu0 0
    %3854 = vmatprep.subr.bf16.mxu0 0
    %3855 = vmatpush2.bf16.xpose.msra.mxu0 0
    %3856 = vmatprep.subr.bf16.mxu0 0
    %3857 = vmatpush2.bf16.xpose.msra.mxu0 0
    %3858 = vmatprep.subr.bf16.mxu0 0
    %3859 = vmatpush2.bf16.xpose.msra.mxu0 0
    %3860 = vmatprep.subr.bf16.mxu0 0
    %3861 = vmatpush2.bf16.xpose.msra.mxu0 0
    %3862 = vmatprep.subr.bf16.mxu0 0
    %3863 = vmatpush2.bf16.xpose.msra.mxu0 0
    %3864 = vmatprep.subr.bf16.mxu0 0
    %3865 = vmatpush2.bf16.xpose.msra.mxu0 0
    %3866 = vmatprep.mubr.bf16.mxu0 0
    %3867 = vmatmul.mubr.bf16.gmra.mxu0 %v3829
    %v3868 = vpop.f32.mrf.mxu0
    %v3869 = vadd.f32 0.0, %v3868
    %v3870 = vpop.f32.mrf.mxu0
    %v3871 = vpop.f32.mrf.mxu0
    %v3872 = vadd.f32 0.0, %v3871
    %v3873 = vpop.f32.mrf.mxu0
    %3874 = vdwg.mxu0
    %v3875 = vsel %vm261, %v3869, -inf
    %3876 = vmax.xlane.f32.xlu0 %v3875
    %v3877 = vpop.xlane.xlu0 %3876
    %v3878 = vsel %vm261, %v3872, -inf
    %3879 = vmax.xlane.f32.xlu0 %v3878
    %v3880 = vpop.xlane.xlu0 %3879
    %v3881 = vsub.f32 %v3869, %v3877
    %v3882 = vsub.f32 %v3872, %v3880
    %v3883 = vmul.f32 %v3881, 1.442695
    %v3884 = vpow.pop %v3883
    %v3885 = vmul.f32 %v3882, 1.442695
    %v3886 = vpow.pop %v3885
    %v3887 = vsel %vm261, %v3884, 0.0
    %3888 = vadd.xlane.f32.xlu0 %v3887
    %v3889 = vpop.xlane.xlu0 %3888
    %v3890 = vsel %vm261, %v3886, 0.0
    %3891 = vadd.xlane.f32.xlu0 %v3890
    %v3892 = vpop.xlane.xlu0 %3891
    %v3893 = vrcp.pop %v3889
    %v3894 = vrcp.pop %v3892
    %v3895 = vmul.f32 %v3884, %v3893
    %v3896 = vmul.f32 %v3886, %v3894
    %v3897 = vpack.c.bf16 %v3896, %v3895
    %3898 = vrot.lane.b32.xlu0 %v3172, 80
    %v3899 = vpop.permute.xlu0 %3898
    %v3902 = vsel %vm261, %v3897, 0
    %3904 = vmatprep.subr.bf16.mxu0 0
    %3905 = vmatpush1.bf16.msra.mxu0 0
    %3906 = vmatprep.subr.bf16.mxu0 0
    %3907 = vmatpush1.bf16.msra.mxu0 0
    %3908 = vmatprep.subr.bf16.mxu0 0
    %3909 = vmatpush1.bf16.msra.mxu0 0
    %3910 = vmatprep.subr.bf16.mxu0 0
    %3911 = vmatpush1.bf16.msra.mxu0 0
    %3912 = vmatprep.subr.bf16.mxu0 0
    %3913 = vmatpush1.bf16.msra.mxu0 0
    %3914 = vmatprep.subr.bf16.mxu0 0
    %3915 = vmatpush1.bf16.msra.mxu0 0
    %3916 = vmatprep.subr.bf16.mxu0 0
    %3917 = vmatpush1.bf16.msra.mxu0 0
    %3918 = vmatprep.subr.bf16.mxu0 0
    %3919 = vmatpush1.bf16.msra.mxu0 %v3899
    %3920 = vmatprep.subr.bf16.mxu0 0
    %3921 = vmatpush2.bf16.msra.mxu0 0
    %3922 = vmatprep.subr.bf16.mxu0 0
    %3923 = vmatpush2.bf16.msra.mxu0 0
    %3924 = vmatprep.subr.bf16.mxu0 0
    %3925 = vmatpush2.bf16.msra.mxu0 0
    %3926 = vmatprep.subr.bf16.mxu0 0
    %3927 = vmatpush2.bf16.msra.mxu0 0
    %3928 = vmatprep.subr.bf16.mxu0 0
    %3929 = vmatpush2.bf16.msra.mxu0 0
    %3930 = vmatprep.subr.bf16.mxu0 0
    %3931 = vmatpush2.bf16.msra.mxu0 0
    %3932 = vmatprep.subr.bf16.mxu0 0
    %3933 = vmatpush2.bf16.msra.mxu0 0
    %3934 = vmatprep.subr.bf16.mxu0 0
    %3935 = vmatpush2.bf16.msra.mxu0 0
    %3936 = vmatprep.mubr.bf16.mxu0 0
    %3937 = vmatmul.mubr.bf16.gmra.mxu0 %v3902
    %v3938 = vpop.f32.mrf.mxu0
    %v3939 = vadd.f32 0.0, %v3938
    %v3940 = vpop.f32.mrf.mxu0
    %v3941 = vpop.f32.mrf.mxu0
    %v3942 = vadd.f32 0.0, %v3941
    %v3943 = vpop.f32.mrf.mxu0
    %3944 = vdwg.mxu0
    %3947 = vrot.lane.b32.xlu0 %v3333, 16
    %v3948 = vpop.permute.xlu0 %3947
    %3949 = vrot.lane.b32.xlu0 %v3336, 16
    %v3950 = vpop.permute.xlu0 %3949
    %3955 = vrot.lane.b32.xlu0 %v3576, 32
    %v3956 = vpop.permute.xlu0 %3955
    %3957 = vrot.lane.b32.xlu0 %v3579, 32
    %v3958 = vpop.permute.xlu0 %3957
    %3963 = vrot.lane.b32.xlu0 %v3818, 48
    %v3964 = vpop.permute.xlu0 %3963
    %3965 = vrot.lane.b32.xlu0 %v3821, 48
    %v3966 = vpop.permute.xlu0 %3965
    %v3969 = vsel %vm261, %v3093, %v3948
    %v3970 = vsel %vm261, %v3096, %v3950
    %v3971 = vsel %vm1250, %v3969, %v3956
    %v3972 = vsel %vm1250, %v3970, %v3958
    %v3973 = vsel %vm1253, %v3971, %v3964
    %v3974 = vsel %vm1253, %v3972, %v3966
    %3977 = vrot.lane.b32.xlu0 %v3455, 16
    %v3978 = vpop.permute.xlu0 %3977
    %3979 = vrot.lane.b32.xlu0 %v3458, 16
    %v3980 = vpop.permute.xlu0 %3979
    %3985 = vrot.lane.b32.xlu0 %v3697, 32
    %v3986 = vpop.permute.xlu0 %3985
    %3987 = vrot.lane.b32.xlu0 %v3700, 32
    %v3988 = vpop.permute.xlu0 %3987
    %3993 = vrot.lane.b32.xlu0 %v3939, 48
    %v3994 = vpop.permute.xlu0 %3993
    %3995 = vrot.lane.b32.xlu0 %v3942, 48
    %v3996 = vpop.permute.xlu0 %3995
    %v3999 = vsel %vm261, %v3211, %v3978
    %v4000 = vsel %vm261, %v3214, %v3980
    %v4001 = vsel %vm1250, %v3999, %v3986
    %v4002 = vsel %vm1250, %v4000, %v3988
    %v4003 = vsel %vm1253, %v4001, %v3994
    %v4004 = vsel %vm1253, %v4002, %v3996
    %v4005 = vpack.c.bf16 %v2955, %v2951
    %v4006 = vpack.c.bf16 %v2975, %v2971
    %4008 = vrot.lane.b32.xlu0 %v4006, 64
    %v4009 = vpop.permute.xlu0 %4008
    %v4011 = vsel %vm261, %v4005, 0
    %v4014 = vsel %vm261, %v4009, 0
    %4016 = vmatprep.subr.bf16.mxu0 0
    %4017 = vmatpush1.bf16.xpose.msra.mxu0 0
    %4018 = vmatprep.subr.bf16.mxu0 0
    %4019 = vmatpush1.bf16.xpose.msra.mxu0 0
    %4020 = vmatprep.subr.bf16.mxu0 0
    %4021 = vmatpush1.bf16.xpose.msra.mxu0 0
    %4022 = vmatprep.subr.bf16.mxu0 0
    %4023 = vmatpush1.bf16.xpose.msra.mxu0 0
    %4024 = vmatprep.subr.bf16.mxu0 0
    %4025 = vmatpush1.bf16.xpose.msra.mxu0 0
    %4026 = vmatprep.subr.bf16.mxu0 0
    %4027 = vmatpush1.bf16.xpose.msra.mxu0 0
    %4028 = vmatprep.subr.bf16.mxu0 0
    %4029 = vmatpush1.bf16.xpose.msra.mxu0 0
    %4030 = vmatprep.subr.bf16.mxu0 0
    %4031 = vmatpush1.bf16.xpose.msra.mxu0 %v4014
    %4032 = vmatprep.subr.bf16.mxu0 0
    %4033 = vmatpush2.bf16.xpose.msra.mxu0 0
    %4034 = vmatprep.subr.bf16.mxu0 0
    %4035 = vmatpush2.bf16.xpose.msra.mxu0 0
    %4036 = vmatprep.subr.bf16.mxu0 0
    %4037 = vmatpush2.bf16.xpose.msra.mxu0 0
    %4038 = vmatprep.subr.bf16.mxu0 0
    %4039 = vmatpush2.bf16.xpose.msra.mxu0 0
    %4040 = vmatprep.subr.bf16.mxu0 0
    %4041 = vmatpush2.bf16.xpose.msra.mxu0 0
    %4042 = vmatprep.subr.bf16.mxu0 0
    %4043 = vmatpush2.bf16.xpose.msra.mxu0 0
    %4044 = vmatprep.subr.bf16.mxu0 0
    %4045 = vmatpush2.bf16.xpose.msra.mxu0 0
    %4046 = vmatprep.subr.bf16.mxu0 0
    %4047 = vmatpush2.bf16.xpose.msra.mxu0 0
    %4048 = vmatprep.mubr.bf16.mxu0 0
    %4049 = vmatmul.mubr.bf16.gmra.mxu0 %v4011
    %v4050 = vpop.f32.mrf.mxu0
    %v4051 = vadd.f32 0.0, %v4050
    %v4052 = vpop.f32.mrf.mxu0
    %v4053 = vpop.f32.mrf.mxu0
    %v4054 = vadd.f32 0.0, %v4053
    %v4055 = vpop.f32.mrf.mxu0
    %4056 = vdwg.mxu0
    %v4057 = vsel %vm261, %v4051, -inf
    %4058 = vmax.xlane.f32.xlu0 %v4057
    %v4059 = vpop.xlane.xlu0 %4058
    %v4060 = vsel %vm261, %v4054, -inf
    %4061 = vmax.xlane.f32.xlu0 %v4060
    %v4062 = vpop.xlane.xlu0 %4061
    %v4063 = vsub.f32 %v4051, %v4059
    %v4064 = vsub.f32 %v4054, %v4062
    %v4065 = vmul.f32 %v4063, 1.442695
    %v4066 = vpow.pop %v4065
    %v4067 = vmul.f32 %v4064, 1.442695
    %v4068 = vpow.pop %v4067
    %v4069 = vsel %vm261, %v4066, 0.0
    %4070 = vadd.xlane.f32.xlu0 %v4069
    %v4071 = vpop.xlane.xlu0 %4070
    %v4072 = vsel %vm261, %v4068, 0.0
    %4073 = vadd.xlane.f32.xlu0 %v4072
    %v4074 = vpop.xlane.xlu0 %4073
    %v4075 = vrcp.pop %v4071
    %v4076 = vrcp.pop %v4074
    %v4077 = vmul.f32 %v4066, %v4075
    %v4078 = vmul.f32 %v4068, %v4076
    %v4079 = vpack.c.bf16 %v4078, %v4077
    %v4080 = vpack.c.bf16 %v2977, %v2973
    %v4082 = vsel %vm261, %v4079, 0
    %4084 = vmatprep.subr.bf16.mxu0 0
    %4085 = vmatpush1.bf16.msra.mxu0 0
    %4086 = vmatprep.subr.bf16.mxu0 0
    %4087 = vmatpush1.bf16.msra.mxu0 0
    %4088 = vmatprep.subr.bf16.mxu0 0
    %4089 = vmatpush1.bf16.msra.mxu0 0
    %4090 = vmatprep.subr.bf16.mxu0 0
    %4091 = vmatpush1.bf16.msra.mxu0 0
    %4092 = vmatprep.subr.bf16.mxu0 0
    %4093 = vmatpush1.bf16.msra.mxu0 0
    %4094 = vmatprep.subr.bf16.mxu0 0
    %4095 = vmatpush1.bf16.msra.mxu0 0
    %4096 = vmatprep.subr.bf16.mxu0 0
    %4097 = vmatpush1.bf16.msra.mxu0 0
    %4098 = vmatprep.subr.bf16.mxu0 0
    %4099 = vmatpush1.bf16.msra.mxu0 %v4080
    %4100 = vmatprep.subr.bf16.mxu0 0
    %4101 = vmatpush2.bf16.msra.mxu0 0
    %4102 = vmatprep.subr.bf16.mxu0 0
    %4103 = vmatpush2.bf16.msra.mxu0 0
    %4104 = vmatprep.subr.bf16.mxu0 0
    %4105 = vmatpush2.bf16.msra.mxu0 0
    %4106 = vmatprep.subr.bf16.mxu0 0
    %4107 = vmatpush2.bf16.msra.mxu0 0
    %4108 = vmatprep.subr.bf16.mxu0 0
    %4109 = vmatpush2.bf16.msra.mxu0 0
    %4110 = vmatprep.subr.bf16.mxu0 0
    %4111 = vmatpush2.bf16.msra.mxu0 0
    %4112 = vmatprep.subr.bf16.mxu0 0
    %4113 = vmatpush2.bf16.msra.mxu0 0
    %4114 = vmatprep.subr.bf16.mxu0 0
    %4115 = vmatpush2.bf16.msra.mxu0 0
    %4116 = vmatprep.mubr.bf16.mxu0 0
    %4117 = vmatmul.mubr.bf16.gmra.mxu0 %v4082
    %v4118 = vpop.f32.mrf.mxu0
    %v4119 = vadd.f32 0.0, %v4118
    %v4120 = vpop.f32.mrf.mxu0
    %v4121 = vpop.f32.mrf.mxu0
    %v4122 = vadd.f32 0.0, %v4121
    %v4123 = vpop.f32.mrf.mxu0
    %4124 = vdwg.mxu0
    %4126 = vrot.lane.b32.xlu0 %v4005, 64
    %v4127 = vpop.permute.xlu0 %4126
    %v4129 = vsel %vm261, %v4006, 0
    %v4132 = vsel %vm261, %v4127, 0
    %4134 = vmatprep.subr.bf16.mxu0 0
    %4135 = vmatpush1.bf16.xpose.msra.mxu0 0
    %4136 = vmatprep.subr.bf16.mxu0 0
    %4137 = vmatpush1.bf16.xpose.msra.mxu0 0
    %4138 = vmatprep.subr.bf16.mxu0 0
    %4139 = vmatpush1.bf16.xpose.msra.mxu0 0
    %4140 = vmatprep.subr.bf16.mxu0 0
    %4141 = vmatpush1.bf16.xpose.msra.mxu0 0
    %4142 = vmatprep.subr.bf16.mxu0 0
    %4143 = vmatpush1.bf16.xpose.msra.mxu0 0
    %4144 = vmatprep.subr.bf16.mxu0 0
    %4145 = vmatpush1.bf16.xpose.msra.mxu0 0
    %4146 = vmatprep.subr.bf16.mxu0 0
    %4147 = vmatpush1.bf16.xpose.msra.mxu0 0
    %4148 = vmatprep.subr.bf16.mxu0 0
    %4149 = vmatpush1.bf16.xpose.msra.mxu0 %v4132
    %4150 = vmatprep.subr.bf16.mxu0 0
    %4151 = vmatpush2.bf16.xpose.msra.mxu0 0
    %4152 = vmatprep.subr.bf16.mxu0 0
    %4153 = vmatpush2.bf16.xpose.msra.mxu0 0
    %4154 = vmatprep.subr.bf16.mxu0 0
    %4155 = vmatpush2.bf16.xpose.msra.mxu0 0
    %4156 = vmatprep.subr.bf16.mxu0 0
    %4157 = vmatpush2.bf16.xpose.msra.mxu0 0
    %4158 = vmatprep.subr.bf16.mxu0 0
    %4159 = vmatpush2.bf16.xpose.msra.mxu0 0
    %4160 = vmatprep.subr.bf16.mxu0 0
    %4161 = vmatpush2.bf16.xpose.msra.mxu0 0
    %4162 = vmatprep.subr.bf16.mxu0 0
    %4163 = vmatpush2.bf16.xpose.msra.mxu0 0
    %4164 = vmatprep.subr.bf16.mxu0 0
    %4165 = vmatpush2.bf16.xpose.msra.mxu0 0
    %4166 = vmatprep.mubr.bf16.mxu0 0
    %4167 = vmatmul.mubr.bf16.gmra.mxu0 %v4129
    %v4168 = vpop.f32.mrf.mxu0
    %v4169 = vadd.f32 0.0, %v4168
    %v4170 = vpop.f32.mrf.mxu0
    %v4171 = vpop.f32.mrf.mxu0
    %v4172 = vadd.f32 0.0, %v4171
    %v4173 = vpop.f32.mrf.mxu0
    %4174 = vdwg.mxu0
    %v4175 = vsel %vm261, %v4169, -inf
    %4176 = vmax.xlane.f32.xlu0 %v4175
    %v4177 = vpop.xlane.xlu0 %4176
    %v4178 = vsel %vm261, %v4172, -inf
    %4179 = vmax.xlane.f32.xlu0 %v4178
    %v4180 = vpop.xlane.xlu0 %4179
    %v4181 = vsub.f32 %v4169, %v4177
    %v4182 = vsub.f32 %v4172, %v4180
    %v4183 = vmul.f32 %v4181, 1.442695
    %v4184 = vpow.pop %v4183
    %v4185 = vmul.f32 %v4182, 1.442695
    %v4186 = vpow.pop %v4185
    %v4187 = vsel %vm261, %v4184, 0.0
    %4188 = vadd.xlane.f32.xlu0 %v4187
    %v4189 = vpop.xlane.xlu0 %4188
    %v4190 = vsel %vm261, %v4186, 0.0
    %4191 = vadd.xlane.f32.xlu0 %v4190
    %v4192 = vpop.xlane.xlu0 %4191
    %v4193 = vrcp.pop %v4189
    %v4194 = vrcp.pop %v4192
    %v4195 = vmul.f32 %v4184, %v4193
    %v4196 = vmul.f32 %v4186, %v4194
    %v4197 = vpack.c.bf16 %v4196, %v4195
    %v4198 = vpack.c.bf16 %v2957, %v2953
    %v4200 = vsel %vm261, %v4197, 0
    %4202 = vmatprep.subr.bf16.mxu0 0
    %4203 = vmatpush1.bf16.msra.mxu0 0
    %4204 = vmatprep.subr.bf16.mxu0 0
    %4205 = vmatpush1.bf16.msra.mxu0 0
    %4206 = vmatprep.subr.bf16.mxu0 0
    %4207 = vmatpush1.bf16.msra.mxu0 0
    %4208 = vmatprep.subr.bf16.mxu0 0
    %4209 = vmatpush1.bf16.msra.mxu0 0
    %4210 = vmatprep.subr.bf16.mxu0 0
    %4211 = vmatpush1.bf16.msra.mxu0 0
    %4212 = vmatprep.subr.bf16.mxu0 0
    %4213 = vmatpush1.bf16.msra.mxu0 0
    %4214 = vmatprep.subr.bf16.mxu0 0
    %4215 = vmatpush1.bf16.msra.mxu0 0
    %4216 = vmatprep.subr.bf16.mxu0 0
    %4217 = vmatpush1.bf16.msra.mxu0 %v4198
    %4218 = vmatprep.subr.bf16.mxu0 0
    %4219 = vmatpush2.bf16.msra.mxu0 0
    %4220 = vmatprep.subr.bf16.mxu0 0
    %4221 = vmatpush2.bf16.msra.mxu0 0
    %4222 = vmatprep.subr.bf16.mxu0 0
    %4223 = vmatpush2.bf16.msra.mxu0 0
    %4224 = vmatprep.subr.bf16.mxu0 0
    %4225 = vmatpush2.bf16.msra.mxu0 0
    %4226 = vmatprep.subr.bf16.mxu0 0
    %4227 = vmatpush2.bf16.msra.mxu0 0
    %4228 = vmatprep.subr.bf16.mxu0 0
    %4229 = vmatpush2.bf16.msra.mxu0 0
    %4230 = vmatprep.subr.bf16.mxu0 0
    %4231 = vmatpush2.bf16.msra.mxu0 0
    %4232 = vmatprep.subr.bf16.mxu0 0
    %4233 = vmatpush2.bf16.msra.mxu0 0
    %4234 = vmatprep.mubr.bf16.mxu0 0
    %4235 = vmatmul.mubr.bf16.gmra.mxu0 %v4200
    %v4236 = vpop.f32.mrf.mxu0
    %v4237 = vadd.f32 0.0, %v4236
    %v4238 = vpop.f32.mrf.mxu0
    %v4239 = vpop.f32.mrf.mxu0
    %v4240 = vadd.f32 0.0, %v4239
    %v4241 = vpop.f32.mrf.mxu0
    %4242 = vdwg.mxu0
    %4243 = vrot.lane.b32.xlu0 %v4005, 112
    %v4244 = vpop.permute.xlu0 %4243
    %4245 = vrot.lane.b32.xlu0 %v4006, 48
    %v4246 = vpop.permute.xlu0 %4245
    %v4248 = vsel %vm261, %v4244, 0
    %v4251 = vsel %vm261, %v4246, 0
    %4253 = vmatprep.subr.bf16.mxu0 0
    %4254 = vmatpush1.bf16.xpose.msra.mxu0 0
    %4255 = vmatprep.subr.bf16.mxu0 0
    %4256 = vmatpush1.bf16.xpose.msra.mxu0 0
    %4257 = vmatprep.subr.bf16.mxu0 0
    %4258 = vmatpush1.bf16.xpose.msra.mxu0 0
    %4259 = vmatprep.subr.bf16.mxu0 0
    %4260 = vmatpush1.bf16.xpose.msra.mxu0 0
    %4261 = vmatprep.subr.bf16.mxu0 0
    %4262 = vmatpush1.bf16.xpose.msra.mxu0 0
    %4263 = vmatprep.subr.bf16.mxu0 0
    %4264 = vmatpush1.bf16.xpose.msra.mxu0 0
    %4265 = vmatprep.subr.bf16.mxu0 0
    %4266 = vmatpush1.bf16.xpose.msra.mxu0 0
    %4267 = vmatprep.subr.bf16.mxu0 0
    %4268 = vmatpush1.bf16.xpose.msra.mxu0 %v4251
    %4269 = vmatprep.subr.bf16.mxu0 0
    %4270 = vmatpush2.bf16.xpose.msra.mxu0 0
    %4271 = vmatprep.subr.bf16.mxu0 0
    %4272 = vmatpush2.bf16.xpose.msra.mxu0 0
    %4273 = vmatprep.subr.bf16.mxu0 0
    %4274 = vmatpush2.bf16.xpose.msra.mxu0 0
    %4275 = vmatprep.subr.bf16.mxu0 0
    %4276 = vmatpush2.bf16.xpose.msra.mxu0 0
    %4277 = vmatprep.subr.bf16.mxu0 0
    %4278 = vmatpush2.bf16.xpose.msra.mxu0 0
    %4279 = vmatprep.subr.bf16.mxu0 0
    %4280 = vmatpush2.bf16.xpose.msra.mxu0 0
    %4281 = vmatprep.subr.bf16.mxu0 0
    %4282 = vmatpush2.bf16.xpose.msra.mxu0 0
    %4283 = vmatprep.subr.bf16.mxu0 0
    %4284 = vmatpush2.bf16.xpose.msra.mxu0 0
    %4285 = vmatprep.mubr.bf16.mxu0 0
    %4286 = vmatmul.mubr.bf16.gmra.mxu0 %v4248
    %v4287 = vpop.f32.mrf.mxu0
    %v4288 = vadd.f32 0.0, %v4287
    %v4289 = vpop.f32.mrf.mxu0
    %v4290 = vpop.f32.mrf.mxu0
    %v4291 = vadd.f32 0.0, %v4290
    %v4292 = vpop.f32.mrf.mxu0
    %4293 = vdwg.mxu0
    %v4294 = vsel %vm261, %v4288, -inf
    %4295 = vmax.xlane.f32.xlu0 %v4294
    %v4296 = vpop.xlane.xlu0 %4295
    %v4297 = vsel %vm261, %v4291, -inf
    %4298 = vmax.xlane.f32.xlu0 %v4297
    %v4299 = vpop.xlane.xlu0 %4298
    %v4300 = vsub.f32 %v4288, %v4296
    %v4301 = vsub.f32 %v4291, %v4299
    %v4302 = vmul.f32 %v4300, 1.442695
    %v4303 = vpow.pop %v4302
    %v4304 = vmul.f32 %v4301, 1.442695
    %v4305 = vpow.pop %v4304
    %v4306 = vsel %vm261, %v4303, 0.0
    %4307 = vadd.xlane.f32.xlu0 %v4306
    %v4308 = vpop.xlane.xlu0 %4307
    %v4309 = vsel %vm261, %v4305, 0.0
    %4310 = vadd.xlane.f32.xlu0 %v4309
    %v4311 = vpop.xlane.xlu0 %4310
    %v4312 = vrcp.pop %v4308
    %v4313 = vrcp.pop %v4311
    %v4314 = vmul.f32 %v4303, %v4312
    %v4315 = vmul.f32 %v4305, %v4313
    %v4316 = vpack.c.bf16 %v4315, %v4314
    %4318 = vrot.lane.b32.xlu0 %v4080, 112
    %v4319 = vpop.permute.xlu0 %4318
    %v4322 = vsel %vm261, %v4316, 0
    %4324 = vmatprep.subr.bf16.mxu0 0
    %4325 = vmatpush1.bf16.msra.mxu0 0
    %4326 = vmatprep.subr.bf16.mxu0 0
    %4327 = vmatpush1.bf16.msra.mxu0 0
    %4328 = vmatprep.subr.bf16.mxu0 0
    %4329 = vmatpush1.bf16.msra.mxu0 0
    %4330 = vmatprep.subr.bf16.mxu0 0
    %4331 = vmatpush1.bf16.msra.mxu0 0
    %4332 = vmatprep.subr.bf16.mxu0 0
    %4333 = vmatpush1.bf16.msra.mxu0 0
    %4334 = vmatprep.subr.bf16.mxu0 0
    %4335 = vmatpush1.bf16.msra.mxu0 0
    %4336 = vmatprep.subr.bf16.mxu0 0
    %4337 = vmatpush1.bf16.msra.mxu0 0
    %4338 = vmatprep.subr.bf16.mxu0 0
    %4339 = vmatpush1.bf16.msra.mxu0 %v4319
    %4340 = vmatprep.subr.bf16.mxu0 0
    %4341 = vmatpush2.bf16.msra.mxu0 0
    %4342 = vmatprep.subr.bf16.mxu0 0
    %4343 = vmatpush2.bf16.msra.mxu0 0
    %4344 = vmatprep.subr.bf16.mxu0 0
    %4345 = vmatpush2.bf16.msra.mxu0 0
    %4346 = vmatprep.subr.bf16.mxu0 0
    %4347 = vmatpush2.bf16.msra.mxu0 0
    %4348 = vmatprep.subr.bf16.mxu0 0
    %4349 = vmatpush2.bf16.msra.mxu0 0
    %4350 = vmatprep.subr.bf16.mxu0 0
    %4351 = vmatpush2.bf16.msra.mxu0 0
    %4352 = vmatprep.subr.bf16.mxu0 0
    %4353 = vmatpush2.bf16.msra.mxu0 0
    %4354 = vmatprep.subr.bf16.mxu0 0
    %4355 = vmatpush2.bf16.msra.mxu0 0
    %4356 = vmatprep.mubr.bf16.mxu0 0
    %4357 = vmatmul.mubr.bf16.gmra.mxu0 %v4322
    %v4358 = vpop.f32.mrf.mxu0
    %v4359 = vadd.f32 0.0, %v4358
    %v4360 = vpop.f32.mrf.mxu0
    %v4361 = vpop.f32.mrf.mxu0
    %v4362 = vadd.f32 0.0, %v4361
    %v4363 = vpop.f32.mrf.mxu0
    %4364 = vdwg.mxu0
    %4365 = vrot.lane.b32.xlu0 %v4006, 112
    %v4366 = vpop.permute.xlu0 %4365
    %4367 = vrot.lane.b32.xlu0 %v4005, 48
    %v4368 = vpop.permute.xlu0 %4367
    %v4370 = vsel %vm261, %v4366, 0
    %v4373 = vsel %vm261, %v4368, 0
    %4375 = vmatprep.subr.bf16.mxu0 0
    %4376 = vmatpush1.bf16.xpose.msra.mxu0 0
    %4377 = vmatprep.subr.bf16.mxu0 0
    %4378 = vmatpush1.bf16.xpose.msra.mxu0 0
    %4379 = vmatprep.subr.bf16.mxu0 0
    %4380 = vmatpush1.bf16.xpose.msra.mxu0 0
    %4381 = vmatprep.subr.bf16.mxu0 0
    %4382 = vmatpush1.bf16.xpose.msra.mxu0 0
    %4383 = vmatprep.subr.bf16.mxu0 0
    %4384 = vmatpush1.bf16.xpose.msra.mxu0 0
    %4385 = vmatprep.subr.bf16.mxu0 0
    %4386 = vmatpush1.bf16.xpose.msra.mxu0 0
    %4387 = vmatprep.subr.bf16.mxu0 0
    %4388 = vmatpush1.bf16.xpose.msra.mxu0 0
    %4389 = vmatprep.subr.bf16.mxu0 0
    %4390 = vmatpush1.bf16.xpose.msra.mxu0 %v4373
    %4391 = vmatprep.subr.bf16.mxu0 0
    %4392 = vmatpush2.bf16.xpose.msra.mxu0 0
    %4393 = vmatprep.subr.bf16.mxu0 0
    %4394 = vmatpush2.bf16.xpose.msra.mxu0 0
    %4395 = vmatprep.subr.bf16.mxu0 0
    %4396 = vmatpush2.bf16.xpose.msra.mxu0 0
    %4397 = vmatprep.subr.bf16.mxu0 0
    %4398 = vmatpush2.bf16.xpose.msra.mxu0 0
    %4399 = vmatprep.subr.bf16.mxu0 0
    %4400 = vmatpush2.bf16.xpose.msra.mxu0 0
    %4401 = vmatprep.subr.bf16.mxu0 0
    %4402 = vmatpush2.bf16.xpose.msra.mxu0 0
    %4403 = vmatprep.subr.bf16.mxu0 0
    %4404 = vmatpush2.bf16.xpose.msra.mxu0 0
    %4405 = vmatprep.subr.bf16.mxu0 0
    %4406 = vmatpush2.bf16.xpose.msra.mxu0 0
    %4407 = vmatprep.mubr.bf16.mxu0 0
    %4408 = vmatmul.mubr.bf16.gmra.mxu0 %v4370
    %v4409 = vpop.f32.mrf.mxu0
    %v4410 = vadd.f32 0.0, %v4409
    %v4411 = vpop.f32.mrf.mxu0
    %v4412 = vpop.f32.mrf.mxu0
    %v4413 = vadd.f32 0.0, %v4412
    %v4414 = vpop.f32.mrf.mxu0
    %4415 = vdwg.mxu0
    %v4416 = vsel %vm261, %v4410, -inf
    %4417 = vmax.xlane.f32.xlu0 %v4416
    %v4418 = vpop.xlane.xlu0 %4417
    %v4419 = vsel %vm261, %v4413, -inf
    %4420 = vmax.xlane.f32.xlu0 %v4419
    %v4421 = vpop.xlane.xlu0 %4420
    %v4422 = vsub.f32 %v4410, %v4418
    %v4423 = vsub.f32 %v4413, %v4421
    %v4424 = vmul.f32 %v4422, 1.442695
    %v4425 = vpow.pop %v4424
    %v4426 = vmul.f32 %v4423, 1.442695
    %v4427 = vpow.pop %v4426
    %v4428 = vsel %vm261, %v4425, 0.0
    %4429 = vadd.xlane.f32.xlu0 %v4428
    %v4430 = vpop.xlane.xlu0 %4429
    %v4431 = vsel %vm261, %v4427, 0.0
    %4432 = vadd.xlane.f32.xlu0 %v4431
    %v4433 = vpop.xlane.xlu0 %4432
    %v4434 = vrcp.pop %v4430
    %v4435 = vrcp.pop %v4433
    %v4436 = vmul.f32 %v4425, %v4434
    %v4437 = vmul.f32 %v4427, %v4435
    %v4438 = vpack.c.bf16 %v4437, %v4436
    %4440 = vrot.lane.b32.xlu0 %v4198, 112
    %v4441 = vpop.permute.xlu0 %4440
    %v4444 = vsel %vm261, %v4438, 0
    %4446 = vmatprep.subr.bf16.mxu0 0
    %4447 = vmatpush1.bf16.msra.mxu0 0
    %4448 = vmatprep.subr.bf16.mxu0 0
    %4449 = vmatpush1.bf16.msra.mxu0 0
    %4450 = vmatprep.subr.bf16.mxu0 0
    %4451 = vmatpush1.bf16.msra.mxu0 0
    %4452 = vmatprep.subr.bf16.mxu0 0
    %4453 = vmatpush1.bf16.msra.mxu0 0
    %4454 = vmatprep.subr.bf16.mxu0 0
    %4455 = vmatpush1.bf16.msra.mxu0 0
    %4456 = vmatprep.subr.bf16.mxu0 0
    %4457 = vmatpush1.bf16.msra.mxu0 0
    %4458 = vmatprep.subr.bf16.mxu0 0
    %4459 = vmatpush1.bf16.msra.mxu0 0
    %4460 = vmatprep.subr.bf16.mxu0 0
    %4461 = vmatpush1.bf16.msra.mxu0 %v4441
    %4462 = vmatprep.subr.bf16.mxu0 0
    %4463 = vmatpush2.bf16.msra.mxu0 0
    %4464 = vmatprep.subr.bf16.mxu0 0
    %4465 = vmatpush2.bf16.msra.mxu0 0
    %4466 = vmatprep.subr.bf16.mxu0 0
    %4467 = vmatpush2.bf16.msra.mxu0 0
    %4468 = vmatprep.subr.bf16.mxu0 0
    %4469 = vmatpush2.bf16.msra.mxu0 0
    %4470 = vmatprep.subr.bf16.mxu0 0
    %4471 = vmatpush2.bf16.msra.mxu0 0
    %4472 = vmatprep.subr.bf16.mxu0 0
    %4473 = vmatpush2.bf16.msra.mxu0 0
    %4474 = vmatprep.subr.bf16.mxu0 0
    %4475 = vmatpush2.bf16.msra.mxu0 0
    %4476 = vmatprep.subr.bf16.mxu0 0
    %4477 = vmatpush2.bf16.msra.mxu0 0
    %4478 = vmatprep.mubr.bf16.mxu0 0
    %4479 = vmatmul.mubr.bf16.gmra.mxu0 %v4444
    %v4480 = vpop.f32.mrf.mxu0
    %v4481 = vadd.f32 0.0, %v4480
    %v4482 = vpop.f32.mrf.mxu0
    %v4483 = vpop.f32.mrf.mxu0
    %v4484 = vadd.f32 0.0, %v4483
    %v4485 = vpop.f32.mrf.mxu0
    %4486 = vdwg.mxu0
    %4487 = vrot.lane.b32.xlu0 %v4005, 96
    %v4488 = vpop.permute.xlu0 %4487
    %4489 = vrot.lane.b32.xlu0 %v4006, 32
    %v4490 = vpop.permute.xlu0 %4489
    %v4492 = vsel %vm261, %v4488, 0
    %v4495 = vsel %vm261, %v4490, 0
    %4497 = vmatprep.subr.bf16.mxu0 0
    %4498 = vmatpush1.bf16.xpose.msra.mxu0 0
    %4499 = vmatprep.subr.bf16.mxu0 0
    %4500 = vmatpush1.bf16.xpose.msra.mxu0 0
    %4501 = vmatprep.subr.bf16.mxu0 0
    %4502 = vmatpush1.bf16.xpose.msra.mxu0 0
    %4503 = vmatprep.subr.bf16.mxu0 0
    %4504 = vmatpush1.bf16.xpose.msra.mxu0 0
    %4505 = vmatprep.subr.bf16.mxu0 0
    %4506 = vmatpush1.bf16.xpose.msra.mxu0 0
    %4507 = vmatprep.subr.bf16.mxu0 0
    %4508 = vmatpush1.bf16.xpose.msra.mxu0 0
    %4509 = vmatprep.subr.bf16.mxu0 0
    %4510 = vmatpush1.bf16.xpose.msra.mxu0 0
    %4511 = vmatprep.subr.bf16.mxu0 0
    %4512 = vmatpush1.bf16.xpose.msra.mxu0 %v4495
    %4513 = vmatprep.subr.bf16.mxu0 0
    %4514 = vmatpush2.bf16.xpose.msra.mxu0 0
    %4515 = vmatprep.subr.bf16.mxu0 0
    %4516 = vmatpush2.bf16.xpose.msra.mxu0 0
    %4517 = vmatprep.subr.bf16.mxu0 0
    %4518 = vmatpush2.bf16.xpose.msra.mxu0 0
    %4519 = vmatprep.subr.bf16.mxu0 0
    %4520 = vmatpush2.bf16.xpose.msra.mxu0 0
    %4521 = vmatprep.subr.bf16.mxu0 0
    %4522 = vmatpush2.bf16.xpose.msra.mxu0 0
    %4523 = vmatprep.subr.bf16.mxu0 0
    %4524 = vmatpush2.bf16.xpose.msra.mxu0 0
    %4525 = vmatprep.subr.bf16.mxu0 0
    %4526 = vmatpush2.bf16.xpose.msra.mxu0 0
    %4527 = vmatprep.subr.bf16.mxu0 0
    %4528 = vmatpush2.bf16.xpose.msra.mxu0 0
    %4529 = vmatprep.mubr.bf16.mxu0 0
    %4530 = vmatmul.mubr.bf16.gmra.mxu0 %v4492
    %v4531 = vpop.f32.mrf.mxu0
    %v4532 = vadd.f32 0.0, %v4531
    %v4533 = vpop.f32.mrf.mxu0
    %v4534 = vpop.f32.mrf.mxu0
    %v4535 = vadd.f32 0.0, %v4534
    %v4536 = vpop.f32.mrf.mxu0
    %4537 = vdwg.mxu0
    %v4538 = vsel %vm261, %v4532, -inf
    %4539 = vmax.xlane.f32.xlu0 %v4538
    %v4540 = vpop.xlane.xlu0 %4539
    %v4541 = vsel %vm261, %v4535, -inf
    %4542 = vmax.xlane.f32.xlu0 %v4541
    %v4543 = vpop.xlane.xlu0 %4542
    %v4544 = vsub.f32 %v4532, %v4540
    %v4545 = vsub.f32 %v4535, %v4543
    %v4546 = vmul.f32 %v4544, 1.442695
    %v4547 = vpow.pop %v4546
    %v4548 = vmul.f32 %v4545, 1.442695
    %v4549 = vpow.pop %v4548
    %v4550 = vsel %vm261, %v4547, 0.0
    %4551 = vadd.xlane.f32.xlu0 %v4550
    %v4552 = vpop.xlane.xlu0 %4551
    %v4553 = vsel %vm261, %v4549, 0.0
    %4554 = vadd.xlane.f32.xlu0 %v4553
    %v4555 = vpop.xlane.xlu0 %4554
    %v4556 = vrcp.pop %v4552
    %v4557 = vrcp.pop %v4555
    %v4558 = vmul.f32 %v4547, %v4556
    %v4559 = vmul.f32 %v4549, %v4557
    %v4560 = vpack.c.bf16 %v4559, %v4558
    %4561 = vrot.lane.b32.xlu0 %v4080, 96
    %v4562 = vpop.permute.xlu0 %4561
    %v4565 = vsel %vm261, %v4560, 0
    %4567 = vmatprep.subr.bf16.mxu0 0
    %4568 = vmatpush1.bf16.msra.mxu0 0
    %4569 = vmatprep.subr.bf16.mxu0 0
    %4570 = vmatpush1.bf16.msra.mxu0 0
    %4571 = vmatprep.subr.bf16.mxu0 0
    %4572 = vmatpush1.bf16.msra.mxu0 0
    %4573 = vmatprep.subr.bf16.mxu0 0
    %4574 = vmatpush1.bf16.msra.mxu0 0
    %4575 = vmatprep.subr.bf16.mxu0 0
    %4576 = vmatpush1.bf16.msra.mxu0 0
    %4577 = vmatprep.subr.bf16.mxu0 0
    %4578 = vmatpush1.bf16.msra.mxu0 0
    %4579 = vmatprep.subr.bf16.mxu0 0
    %4580 = vmatpush1.bf16.msra.mxu0 0
    %4581 = vmatprep.subr.bf16.mxu0 0
    %4582 = vmatpush1.bf16.msra.mxu0 %v4562
    %4583 = vmatprep.subr.bf16.mxu0 0
    %4584 = vmatpush2.bf16.msra.mxu0 0
    %4585 = vmatprep.subr.bf16.mxu0 0
    %4586 = vmatpush2.bf16.msra.mxu0 0
    %4587 = vmatprep.subr.bf16.mxu0 0
    %4588 = vmatpush2.bf16.msra.mxu0 0
    %4589 = vmatprep.subr.bf16.mxu0 0
    %4590 = vmatpush2.bf16.msra.mxu0 0
    %4591 = vmatprep.subr.bf16.mxu0 0
    %4592 = vmatpush2.bf16.msra.mxu0 0
    %4593 = vmatprep.subr.bf16.mxu0 0
    %4594 = vmatpush2.bf16.msra.mxu0 0
    %4595 = vmatprep.subr.bf16.mxu0 0
    %4596 = vmatpush2.bf16.msra.mxu0 0
    %4597 = vmatprep.subr.bf16.mxu0 0
    %4598 = vmatpush2.bf16.msra.mxu0 0
    %4599 = vmatprep.mubr.bf16.mxu0 0
    %4600 = vmatmul.mubr.bf16.gmra.mxu0 %v4565
    %v4601 = vpop.f32.mrf.mxu0
    %v4602 = vadd.f32 0.0, %v4601
    %v4603 = vpop.f32.mrf.mxu0
    %v4604 = vpop.f32.mrf.mxu0
    %v4605 = vadd.f32 0.0, %v4604
    %v4606 = vpop.f32.mrf.mxu0
    %4607 = vdwg.mxu0
    %4608 = vrot.lane.b32.xlu0 %v4006, 96
    %v4609 = vpop.permute.xlu0 %4608
    %4610 = vrot.lane.b32.xlu0 %v4005, 32
    %v4611 = vpop.permute.xlu0 %4610
    %v4613 = vsel %vm261, %v4609, 0
    %v4616 = vsel %vm261, %v4611, 0
    %4618 = vmatprep.subr.bf16.mxu0 0
    %4619 = vmatpush1.bf16.xpose.msra.mxu0 0
    %4620 = vmatprep.subr.bf16.mxu0 0
    %4621 = vmatpush1.bf16.xpose.msra.mxu0 0
    %4622 = vmatprep.subr.bf16.mxu0 0
    %4623 = vmatpush1.bf16.xpose.msra.mxu0 0
    %4624 = vmatprep.subr.bf16.mxu0 0
    %4625 = vmatpush1.bf16.xpose.msra.mxu0 0
    %4626 = vmatprep.subr.bf16.mxu0 0
    %4627 = vmatpush1.bf16.xpose.msra.mxu0 0
    %4628 = vmatprep.subr.bf16.mxu0 0
    %4629 = vmatpush1.bf16.xpose.msra.mxu0 0
    %4630 = vmatprep.subr.bf16.mxu0 0
    %4631 = vmatpush1.bf16.xpose.msra.mxu0 0
    %4632 = vmatprep.subr.bf16.mxu0 0
    %4633 = vmatpush1.bf16.xpose.msra.mxu0 %v4616
    %4634 = vmatprep.subr.bf16.mxu0 0
    %4635 = vmatpush2.bf16.xpose.msra.mxu0 0
    %4636 = vmatprep.subr.bf16.mxu0 0
    %4637 = vmatpush2.bf16.xpose.msra.mxu0 0
    %4638 = vmatprep.subr.bf16.mxu0 0
    %4639 = vmatpush2.bf16.xpose.msra.mxu0 0
    %4640 = vmatprep.subr.bf16.mxu0 0
    %4641 = vmatpush2.bf16.xpose.msra.mxu0 0
    %4642 = vmatprep.subr.bf16.mxu0 0
    %4643 = vmatpush2.bf16.xpose.msra.mxu0 0
    %4644 = vmatprep.subr.bf16.mxu0 0
    %4645 = vmatpush2.bf16.xpose.msra.mxu0 0
    %4646 = vmatprep.subr.bf16.mxu0 0
    %4647 = vmatpush2.bf16.xpose.msra.mxu0 0
    %4648 = vmatprep.subr.bf16.mxu0 0
    %4649 = vmatpush2.bf16.xpose.msra.mxu0 0
    %4650 = vmatprep.mubr.bf16.mxu0 0
    %4651 = vmatmul.mubr.bf16.gmra.mxu0 %v4613
    %v4652 = vpop.f32.mrf.mxu0
    %v4653 = vadd.f32 0.0, %v4652
    %v4654 = vpop.f32.mrf.mxu0
    %v4655 = vpop.f32.mrf.mxu0
    %v4656 = vadd.f32 0.0, %v4655
    %v4657 = vpop.f32.mrf.mxu0
    %4658 = vdwg.mxu0
    %v4659 = vsel %vm261, %v4653, -inf
    %4660 = vmax.xlane.f32.xlu0 %v4659
    %v4661 = vpop.xlane.xlu0 %4660
    %v4662 = vsel %vm261, %v4656, -inf
    %4663 = vmax.xlane.f32.xlu0 %v4662
    %v4664 = vpop.xlane.xlu0 %4663
    %v4665 = vsub.f32 %v4653, %v4661
    %v4666 = vsub.f32 %v4656, %v4664
    %v4667 = vmul.f32 %v4665, 1.442695
    %v4668 = vpow.pop %v4667
    %v4669 = vmul.f32 %v4666, 1.442695
    %v4670 = vpow.pop %v4669
    %v4671 = vsel %vm261, %v4668, 0.0
    %4672 = vadd.xlane.f32.xlu0 %v4671
    %v4673 = vpop.xlane.xlu0 %4672
    %v4674 = vsel %vm261, %v4670, 0.0
    %4675 = vadd.xlane.f32.xlu0 %v4674
    %v4676 = vpop.xlane.xlu0 %4675
    %v4677 = vrcp.pop %v4673
    %v4678 = vrcp.pop %v4676
    %v4679 = vmul.f32 %v4668, %v4677
    %v4680 = vmul.f32 %v4670, %v4678
    %v4681 = vpack.c.bf16 %v4680, %v4679
    %4682 = vrot.lane.b32.xlu0 %v4198, 96
    %v4683 = vpop.permute.xlu0 %4682
    %v4686 = vsel %vm261, %v4681, 0
    %4688 = vmatprep.subr.bf16.mxu0 0
    %4689 = vmatpush1.bf16.msra.mxu0 0
    %4690 = vmatprep.subr.bf16.mxu0 0
    %4691 = vmatpush1.bf16.msra.mxu0 0
    %4692 = vmatprep.subr.bf16.mxu0 0
    %4693 = vmatpush1.bf16.msra.mxu0 0
    %4694 = vmatprep.subr.bf16.mxu0 0
    %4695 = vmatpush1.bf16.msra.mxu0 0
    %4696 = vmatprep.subr.bf16.mxu0 0
    %4697 = vmatpush1.bf16.msra.mxu0 0
    %4698 = vmatprep.subr.bf16.mxu0 0
    %4699 = vmatpush1.bf16.msra.mxu0 0
    %4700 = vmatprep.subr.bf16.mxu0 0
    %4701 = vmatpush1.bf16.msra.mxu0 0
    %4702 = vmatprep.subr.bf16.mxu0 0
    %4703 = vmatpush1.bf16.msra.mxu0 %v4683
    %4704 = vmatprep.subr.bf16.mxu0 0
    %4705 = vmatpush2.bf16.msra.mxu0 0
    %4706 = vmatprep.subr.bf16.mxu0 0
    %4707 = vmatpush2.bf16.msra.mxu0 0
    %4708 = vmatprep.subr.bf16.mxu0 0
    %4709 = vmatpush2.bf16.msra.mxu0 0
    %4710 = vmatprep.subr.bf16.mxu0 0
    %4711 = vmatpush2.bf16.msra.mxu0 0
    %4712 = vmatprep.subr.bf16.mxu0 0
    %4713 = vmatpush2.bf16.msra.mxu0 0
    %4714 = vmatprep.subr.bf16.mxu0 0
    %4715 = vmatpush2.bf16.msra.mxu0 0
    %4716 = vmatprep.subr.bf16.mxu0 0
    %4717 = vmatpush2.bf16.msra.mxu0 0
    %4718 = vmatprep.subr.bf16.mxu0 0
    %4719 = vmatpush2.bf16.msra.mxu0 0
    %4720 = vmatprep.mubr.bf16.mxu0 0
    %4721 = vmatmul.mubr.bf16.gmra.mxu0 %v4686
    %v4722 = vpop.f32.mrf.mxu0
    %v4723 = vadd.f32 0.0, %v4722
    %v4724 = vpop.f32.mrf.mxu0
    %v4725 = vpop.f32.mrf.mxu0
    %v4726 = vadd.f32 0.0, %v4725
    %v4727 = vpop.f32.mrf.mxu0
    %4728 = vdwg.mxu0
    %4729 = vrot.lane.b32.xlu0 %v4005, 80
    %v4730 = vpop.permute.xlu0 %4729
    %4731 = vrot.lane.b32.xlu0 %v4006, 16
    %v4732 = vpop.permute.xlu0 %4731
    %v4734 = vsel %vm261, %v4730, 0
    %v4737 = vsel %vm261, %v4732, 0
    %4739 = vmatprep.subr.bf16.mxu0 0
    %4740 = vmatpush1.bf16.xpose.msra.mxu0 0
    %4741 = vmatprep.subr.bf16.mxu0 0
    %4742 = vmatpush1.bf16.xpose.msra.mxu0 0
    %4743 = vmatprep.subr.bf16.mxu0 0
    %4744 = vmatpush1.bf16.xpose.msra.mxu0 0
    %4745 = vmatprep.subr.bf16.mxu0 0
    %4746 = vmatpush1.bf16.xpose.msra.mxu0 0
    %4747 = vmatprep.subr.bf16.mxu0 0
    %4748 = vmatpush1.bf16.xpose.msra.mxu0 0
    %4749 = vmatprep.subr.bf16.mxu0 0
    %4750 = vmatpush1.bf16.xpose.msra.mxu0 0
    %4751 = vmatprep.subr.bf16.mxu0 0
    %4752 = vmatpush1.bf16.xpose.msra.mxu0 0
    %4753 = vmatprep.subr.bf16.mxu0 0
    %4754 = vmatpush1.bf16.xpose.msra.mxu0 %v4737
    %4755 = vmatprep.subr.bf16.mxu0 0
    %4756 = vmatpush2.bf16.xpose.msra.mxu0 0
    %4757 = vmatprep.subr.bf16.mxu0 0
    %4758 = vmatpush2.bf16.xpose.msra.mxu0 0
    %4759 = vmatprep.subr.bf16.mxu0 0
    %4760 = vmatpush2.bf16.xpose.msra.mxu0 0
    %4761 = vmatprep.subr.bf16.mxu0 0
    %4762 = vmatpush2.bf16.xpose.msra.mxu0 0
    %4763 = vmatprep.subr.bf16.mxu0 0
    %4764 = vmatpush2.bf16.xpose.msra.mxu0 0
    %4765 = vmatprep.subr.bf16.mxu0 0
    %4766 = vmatpush2.bf16.xpose.msra.mxu0 0
    %4767 = vmatprep.subr.bf16.mxu0 0
    %4768 = vmatpush2.bf16.xpose.msra.mxu0 0
    %4769 = vmatprep.subr.bf16.mxu0 0
    %4770 = vmatpush2.bf16.xpose.msra.mxu0 0
    %4771 = vmatprep.mubr.bf16.mxu0 0
    %4772 = vmatmul.mubr.bf16.gmra.mxu0 %v4734
    %v4773 = vpop.f32.mrf.mxu0
    %v4774 = vadd.f32 0.0, %v4773
    %v4775 = vpop.f32.mrf.mxu0
    %v4776 = vpop.f32.mrf.mxu0
    %v4777 = vadd.f32 0.0, %v4776
    %v4778 = vpop.f32.mrf.mxu0
    %4779 = vdwg.mxu0
    %v4780 = vsel %vm261, %v4774, -inf
    %4781 = vmax.xlane.f32.xlu0 %v4780
    %v4782 = vpop.xlane.xlu0 %4781
    %v4783 = vsel %vm261, %v4777, -inf
    %4784 = vmax.xlane.f32.xlu0 %v4783
    %v4785 = vpop.xlane.xlu0 %4784
    %v4786 = vsub.f32 %v4774, %v4782
    %v4787 = vsub.f32 %v4777, %v4785
    %v4788 = vmul.f32 %v4786, 1.442695
    %v4789 = vpow.pop %v4788
    %v4790 = vmul.f32 %v4787, 1.442695
    %v4791 = vpow.pop %v4790
    %v4792 = vsel %vm261, %v4789, 0.0
    %4793 = vadd.xlane.f32.xlu0 %v4792
    %v4794 = vpop.xlane.xlu0 %4793
    %v4795 = vsel %vm261, %v4791, 0.0
    %4796 = vadd.xlane.f32.xlu0 %v4795
    %v4797 = vpop.xlane.xlu0 %4796
    %v4798 = vrcp.pop %v4794
    %v4799 = vrcp.pop %v4797
    %v4800 = vmul.f32 %v4789, %v4798
    %v4801 = vmul.f32 %v4791, %v4799
    %v4802 = vpack.c.bf16 %v4801, %v4800
    %4803 = vrot.lane.b32.xlu0 %v4080, 80
    %v4804 = vpop.permute.xlu0 %4803
    %v4807 = vsel %vm261, %v4802, 0
    %4809 = vmatprep.subr.bf16.mxu0 0
    %4810 = vmatpush1.bf16.msra.mxu0 0
    %4811 = vmatprep.subr.bf16.mxu0 0
    %4812 = vmatpush1.bf16.msra.mxu0 0
    %4813 = vmatprep.subr.bf16.mxu0 0
    %4814 = vmatpush1.bf16.msra.mxu0 0
    %4815 = vmatprep.subr.bf16.mxu0 0
    %4816 = vmatpush1.bf16.msra.mxu0 0
    %4817 = vmatprep.subr.bf16.mxu0 0
    %4818 = vmatpush1.bf16.msra.mxu0 0
    %4819 = vmatprep.subr.bf16.mxu0 0
    %4820 = vmatpush1.bf16.msra.mxu0 0
    %4821 = vmatprep.subr.bf16.mxu0 0
    %4822 = vmatpush1.bf16.msra.mxu0 0
    %4823 = vmatprep.subr.bf16.mxu0 0
    %4824 = vmatpush1.bf16.msra.mxu0 %v4804
    %4825 = vmatprep.subr.bf16.mxu0 0
    %4826 = vmatpush2.bf16.msra.mxu0 0
    %4827 = vmatprep.subr.bf16.mxu0 0
    %4828 = vmatpush2.bf16.msra.mxu0 0
    %4829 = vmatprep.subr.bf16.mxu0 0
    %4830 = vmatpush2.bf16.msra.mxu0 0
    %4831 = vmatprep.subr.bf16.mxu0 0
    %4832 = vmatpush2.bf16.msra.mxu0 0
    %4833 = vmatprep.subr.bf16.mxu0 0
    %4834 = vmatpush2.bf16.msra.mxu0 0
    %4835 = vmatprep.subr.bf16.mxu0 0
    %4836 = vmatpush2.bf16.msra.mxu0 0
    %4837 = vmatprep.subr.bf16.mxu0 0
    %4838 = vmatpush2.bf16.msra.mxu0 0
    %4839 = vmatprep.subr.bf16.mxu0 0
    %4840 = vmatpush2.bf16.msra.mxu0 0
    %4841 = vmatprep.mubr.bf16.mxu0 0
    %4842 = vmatmul.mubr.bf16.gmra.mxu0 %v4807
    %v4843 = vpop.f32.mrf.mxu0
    %v4844 = vadd.f32 0.0, %v4843
    %v4845 = vpop.f32.mrf.mxu0
    %v4846 = vpop.f32.mrf.mxu0
    %v4847 = vadd.f32 0.0, %v4846
    %v4848 = vpop.f32.mrf.mxu0
    %4849 = vdwg.mxu0
    %4850 = vrot.lane.b32.xlu0 %v4006, 80
    %v4851 = vpop.permute.xlu0 %4850
    %4852 = vrot.lane.b32.xlu0 %v4005, 16
    %v4853 = vpop.permute.xlu0 %4852
    %v4855 = vsel %vm261, %v4851, 0
    %v4858 = vsel %vm261, %v4853, 0
    %4860 = vmatprep.subr.bf16.mxu0 0
    %4861 = vmatpush1.bf16.xpose.msra.mxu0 0
    %4862 = vmatprep.subr.bf16.mxu0 0
    %4863 = vmatpush1.bf16.xpose.msra.mxu0 0
    %4864 = vmatprep.subr.bf16.mxu0 0
    %4865 = vmatpush1.bf16.xpose.msra.mxu0 0
    %4866 = vmatprep.subr.bf16.mxu0 0
    %4867 = vmatpush1.bf16.xpose.msra.mxu0 0
    %4868 = vmatprep.subr.bf16.mxu0 0
    %4869 = vmatpush1.bf16.xpose.msra.mxu0 0
    %4870 = vmatprep.subr.bf16.mxu0 0
    %4871 = vmatpush1.bf16.xpose.msra.mxu0 0
    %4872 = vmatprep.subr.bf16.mxu0 0
    %4873 = vmatpush1.bf16.xpose.msra.mxu0 0
    %4874 = vmatprep.subr.bf16.mxu0 0
    %4875 = vmatpush1.bf16.xpose.msra.mxu0 %v4858
    %4876 = vmatprep.subr.bf16.mxu0 0
    %4877 = vmatpush2.bf16.xpose.msra.mxu0 0
    %4878 = vmatprep.subr.bf16.mxu0 0
    %4879 = vmatpush2.bf16.xpose.msra.mxu0 0
    %4880 = vmatprep.subr.bf16.mxu0 0
    %4881 = vmatpush2.bf16.xpose.msra.mxu0 0
    %4882 = vmatprep.subr.bf16.mxu0 0
    %4883 = vmatpush2.bf16.xpose.msra.mxu0 0
    %4884 = vmatprep.subr.bf16.mxu0 0
    %4885 = vmatpush2.bf16.xpose.msra.mxu0 0
    %4886 = vmatprep.subr.bf16.mxu0 0
    %4887 = vmatpush2.bf16.xpose.msra.mxu0 0
    %4888 = vmatprep.subr.bf16.mxu0 0
    %4889 = vmatpush2.bf16.xpose.msra.mxu0 0
    %4890 = vmatprep.subr.bf16.mxu0 0
    %4891 = vmatpush2.bf16.xpose.msra.mxu0 0
    %4892 = vmatprep.mubr.bf16.mxu0 0
    %4893 = vmatmul.mubr.bf16.gmra.mxu0 %v4855
    %v4894 = vpop.f32.mrf.mxu0
    %v4895 = vadd.f32 0.0, %v4894
    %v4896 = vpop.f32.mrf.mxu0
    %v4897 = vpop.f32.mrf.mxu0
    %v4898 = vadd.f32 0.0, %v4897
    %v4899 = vpop.f32.mrf.mxu0
    %4900 = vdwg.mxu0
    %v4901 = vsel %vm261, %v4895, -inf
    %4902 = vmax.xlane.f32.xlu0 %v4901
    %v4903 = vpop.xlane.xlu0 %4902
    %v4904 = vsel %vm261, %v4898, -inf
    %4905 = vmax.xlane.f32.xlu0 %v4904
    %v4906 = vpop.xlane.xlu0 %4905
    %v4907 = vsub.f32 %v4895, %v4903
    %v4908 = vsub.f32 %v4898, %v4906
    %v4909 = vmul.f32 %v4907, 1.442695
    %v4910 = vpow.pop %v4909
    %v4911 = vmul.f32 %v4908, 1.442695
    %v4912 = vpow.pop %v4911
    %v4913 = vsel %vm261, %v4910, 0.0
    %4914 = vadd.xlane.f32.xlu0 %v4913
    %v4915 = vpop.xlane.xlu0 %4914
    %v4916 = vsel %vm261, %v4912, 0.0
    %4917 = vadd.xlane.f32.xlu0 %v4916
    %v4918 = vpop.xlane.xlu0 %4917
    %v4919 = vrcp.pop %v4915
    %v4920 = vrcp.pop %v4918
    %v4921 = vmul.f32 %v4910, %v4919
    %v4922 = vmul.f32 %v4912, %v4920
    %v4923 = vpack.c.bf16 %v4922, %v4921
    %4924 = vrot.lane.b32.xlu0 %v4198, 80
    %v4925 = vpop.permute.xlu0 %4924
    %v4928 = vsel %vm261, %v4923, 0
    %4930 = vmatprep.subr.bf16.mxu0 0
    %4931 = vmatpush1.bf16.msra.mxu0 0
    %4932 = vmatprep.subr.bf16.mxu0 0
    %4933 = vmatpush1.bf16.msra.mxu0 0
    %4934 = vmatprep.subr.bf16.mxu0 0
    %4935 = vmatpush1.bf16.msra.mxu0 0
    %4936 = vmatprep.subr.bf16.mxu0 0
    %4937 = vmatpush1.bf16.msra.mxu0 0
    %4938 = vmatprep.subr.bf16.mxu0 0
    %4939 = vmatpush1.bf16.msra.mxu0 0
    %4940 = vmatprep.subr.bf16.mxu0 0
    %4941 = vmatpush1.bf16.msra.mxu0 0
    %4942 = vmatprep.subr.bf16.mxu0 0
    %4943 = vmatpush1.bf16.msra.mxu0 0
    %4944 = vmatprep.subr.bf16.mxu0 0
    %4945 = vmatpush1.bf16.msra.mxu0 %v4925
    %4946 = vmatprep.subr.bf16.mxu0 0
    %4947 = vmatpush2.bf16.msra.mxu0 0
    %4948 = vmatprep.subr.bf16.mxu0 0
    %4949 = vmatpush2.bf16.msra.mxu0 0
    %4950 = vmatprep.subr.bf16.mxu0 0
    %4951 = vmatpush2.bf16.msra.mxu0 0
    %4952 = vmatprep.subr.bf16.mxu0 0
    %4953 = vmatpush2.bf16.msra.mxu0 0
    %4954 = vmatprep.subr.bf16.mxu0 0
    %4955 = vmatpush2.bf16.msra.mxu0 0
    %4956 = vmatprep.subr.bf16.mxu0 0
    %4957 = vmatpush2.bf16.msra.mxu0 0
    %4958 = vmatprep.subr.bf16.mxu0 0
    %4959 = vmatpush2.bf16.msra.mxu0 0
    %4960 = vmatprep.subr.bf16.mxu0 0
    %4961 = vmatpush2.bf16.msra.mxu0 0
    %4962 = vmatprep.mubr.bf16.mxu0 0
    %4963 = vmatmul.mubr.bf16.gmra.mxu0 %v4928
    %v4964 = vpop.f32.mrf.mxu0
    %v4965 = vadd.f32 0.0, %v4964
    %v4966 = vpop.f32.mrf.mxu0
    %v4967 = vpop.f32.mrf.mxu0
    %v4968 = vadd.f32 0.0, %v4967
    %v4969 = vpop.f32.mrf.mxu0
    %4970 = vdwg.mxu0
    %4973 = vrot.lane.b32.xlu0 %v4359, 16
    %v4974 = vpop.permute.xlu0 %4973
    %4975 = vrot.lane.b32.xlu0 %v4362, 16
    %v4976 = vpop.permute.xlu0 %4975
    %4981 = vrot.lane.b32.xlu0 %v4602, 32
    %v4982 = vpop.permute.xlu0 %4981
    %4983 = vrot.lane.b32.xlu0 %v4605, 32
    %v4984 = vpop.permute.xlu0 %4983
    %4989 = vrot.lane.b32.xlu0 %v4844, 48
    %v4990 = vpop.permute.xlu0 %4989
    %4991 = vrot.lane.b32.xlu0 %v4847, 48
    %v4992 = vpop.permute.xlu0 %4991
    %v4995 = vsel %vm261, %v4119, %v4974
    %v4996 = vsel %vm261, %v4122, %v4976
    %v4997 = vsel %vm1250, %v4995, %v4982
    %v4998 = vsel %vm1250, %v4996, %v4984
    %v4999 = vsel %vm1253, %v4997, %v4990
    %v5000 = vsel %vm1253, %v4998, %v4992
    %5003 = vrot.lane.b32.xlu0 %v4481, 16
    %v5004 = vpop.permute.xlu0 %5003
    %5005 = vrot.lane.b32.xlu0 %v4484, 16
    %v5006 = vpop.permute.xlu0 %5005
    %5011 = vrot.lane.b32.xlu0 %v4723, 32
    %v5012 = vpop.permute.xlu0 %5011
    %5013 = vrot.lane.b32.xlu0 %v4726, 32
    %v5014 = vpop.permute.xlu0 %5013
    %5019 = vrot.lane.b32.xlu0 %v4965, 48
    %v5020 = vpop.permute.xlu0 %5019
    %5021 = vrot.lane.b32.xlu0 %v4968, 48
    %v5022 = vpop.permute.xlu0 %5021
    %v5025 = vsel %vm261, %v4237, %v5004
    %v5026 = vsel %vm261, %v4240, %v5006
    %v5027 = vsel %vm1250, %v5025, %v5012
    %v5028 = vsel %vm1250, %v5026, %v5014
    %v5029 = vsel %vm1253, %v5027, %v5020
    %v5030 = vsel %vm1253, %v5028, %v5022
    %v5031 = vpack.c.bf16 %v3974, %v3973
    %v5032 = vpack.c.bf16 %v5000, %v4999
    %v5033 = vpack.c.bf16 %v4004, %v4003
    %v5034 = vpack.c.bf16 %v5030, %v5029
    %s5035 = scalar_lea.vmem %s4, 32
    %v5036 = vld [vmem:[%s5035] sm:$0xf]
    %v5037 = vld [vmem:[%s5035 + $0x4] sm:$0xf]
    %v5038 = vld [vmem:[%s5035 + $0x8] sm:$0xf]
    %v5039 = vld [vmem:[%s5035 + $0xc] sm:$0xf]
    %v5040 = vld [vmem:[%s5035 + $0x10] sm:$0xf]
    %v5041 = vld [vmem:[%s5035 + $0x14] sm:$0xf]
    %v5042 = vld [vmem:[%s5035 + $0x18] sm:$0xf]
    %v5043 = vld [vmem:[%s5035 + $0x1c] sm:$0xf]
    %s5044 = scalar_lea.vmem %s5, 1
    %v5045 = vld [vmem:[%s5044] sm:$0x1]
    %v5047 = vlaneseq
    %v5048 = vshrl.u32 %v5047, 7
    %v5049 = vsub.s32 0, %v5048
    %v5050 = vrot.slane %v5045, %v5049
    %v5060 = vunpack.c.l.b16 %v5036
    %v5061 = vunpack.c.l.b16 %v5037
    %v5062 = vunpack.c.l.b16 %v5038
    %v5063 = vunpack.c.l.b16 %v5039
    %v5064 = vunpack.c.l.b16 %v5040
    %v5065 = vunpack.c.l.b16 %v5041
    %v5066 = vunpack.c.l.b16 %v5042
    %v5067 = vunpack.c.l.b16 %v5043
    %v5068 = vpack.c.b16 %v5061, %v5060
    %v5069 = vpack.c.b16 %v5063, %v5062
    %v5070 = vpack.c.b16 %v5065, %v5064
    %v5071 = vpack.c.b16 %v5067, %v5066
    %v5077 = vsel %vm171, %v5031, 0
    %v5080 = vsel %vm171, %v5032, 0
    %v5083 = vsel %vm171, %v5033, 0
    %v5086 = vsel %vm171, %v5034, 0
    %5088 = vmatprep.subr.bf16.mxu0 0
    %5089 = vmatpush1.bf16.msra.mxu0 0
    %5090 = vmatprep.subr.bf16.mxu0 0
    %5091 = vmatpush1.bf16.msra.mxu0 0
    %5092 = vmatprep.subr.bf16.mxu0 0
    %5093 = vmatpush1.bf16.msra.mxu0 0
    %5094 = vmatprep.subr.bf16.mxu0 0
    %5095 = vmatpush1.bf16.msra.mxu0 0
    %5096 = vmatprep.subr.bf16.mxu0 0
    %5097 = vmatpush1.bf16.msra.mxu0 %v5071
    %5098 = vmatprep.subr.bf16.mxu0 0
    %5099 = vmatpush1.bf16.msra.mxu0 %v5070
    %5100 = vmatprep.subr.bf16.mxu0 0
    %5101 = vmatpush1.bf16.msra.mxu0 %v5069
    %5102 = vmatprep.subr.bf16.mxu0 0
    %5103 = vmatpush1.bf16.msra.mxu0 %v5068
    %5104 = vmatprep.subr.bf16.mxu0 0
    %5105 = vmatpush2.bf16.msra.mxu0 0
    %5106 = vmatprep.subr.bf16.mxu0 0
    %5107 = vmatpush2.bf16.msra.mxu0 0
    %5108 = vmatprep.subr.bf16.mxu0 0
    %5109 = vmatpush2.bf16.msra.mxu0 0
    %5110 = vmatprep.subr.bf16.mxu0 0
    %5111 = vmatpush2.bf16.msra.mxu0 0
    %5112 = vmatprep.subr.bf16.mxu0 0
    %5113 = vmatpush2.bf16.msra.mxu0 0
    %5114 = vmatprep.subr.bf16.mxu0 0
    %5115 = vmatpush2.bf16.msra.mxu0 0
    %5116 = vmatprep.subr.bf16.mxu0 0
    %5117 = vmatpush2.bf16.msra.mxu0 0
    %5118 = vmatprep.subr.bf16.mxu0 0
    %5119 = vmatpush2.bf16.msra.mxu0 0
    %5120 = vmatprep.mubr.bf16.mxu0 0
    %5121 = vmatmul.mubr.bf16.gmra.mxu0 %v5077
    %v5122 = vpop.f32.mrf.mxu0
    %v5123 = vadd.f32 %v5050, %v5122
    %v5124 = vpop.f32.mrf.mxu0
    %v5125 = vpop.f32.mrf.mxu0
    %v5126 = vadd.f32 %v5050, %v5125
    %v5127 = vpop.f32.mrf.mxu0
    %5128 = vmatprep.mubr.bf16.mxu0 0
    %5129 = vmatmul.mubr.bf16.gmra.mxu0 %v5080
    %v5130 = vpop.f32.mrf.mxu0
    %v5131 = vadd.f32 %v5050, %v5130
    %v5132 = vpop.f32.mrf.mxu0
    %v5133 = vpop.f32.mrf.mxu0
    %v5134 = vadd.f32 %v5050, %v5133
    %v5135 = vpop.f32.mrf.mxu0
    %5136 = vmatprep.mubr.bf16.mxu0 0
    %5137 = vmatmul.mubr.bf16.gmra.mxu0 %v5083
    %v5138 = vpop.f32.mrf.mxu0
    %v5139 = vadd.f32 %v5050, %v5138
    %v5140 = vpop.f32.mrf.mxu0
    %v5141 = vpop.f32.mrf.mxu0
    %v5142 = vadd.f32 %v5050, %v5141
    %v5143 = vpop.f32.mrf.mxu0
    %5144 = vmatprep.mubr.bf16.mxu0 0
    %5145 = vmatmul.mubr.bf16.gmra.mxu0 %v5086
    %v5146 = vpop.f32.mrf.mxu0
    %v5147 = vadd.f32 %v5050, %v5146
    %v5148 = vpop.f32.mrf.mxu0
    %v5149 = vpop.f32.mrf.mxu0
    %v5150 = vadd.f32 %v5050, %v5149
    %v5151 = vpop.f32.mrf.mxu0
    %5152 = vdwg.mxu0
    %s5153 = scalar_lea.vmem %s6, 32
    %v5154 = vld [vmem:[%s5153] sm:$0xf]
    %v5155 = vld [vmem:[%s5153 + $0x4] sm:$0xf]
    %v5156 = vld [vmem:[%s5153 + $0x8] sm:$0xf]
    %v5157 = vld [vmem:[%s5153 + $0xc] sm:$0xf]
    %v5158 = vld [vmem:[%s5153 + $0x10] sm:$0xf]
    %v5159 = vld [vmem:[%s5153 + $0x14] sm:$0xf]
    %v5160 = vld [vmem:[%s5153 + $0x18] sm:$0xf]
    %v5161 = vld [vmem:[%s5153 + $0x1c] sm:$0xf]
    %v5162 = vpack.c.bf16 %v5126, %v5123
    %v5163 = vpack.c.bf16 %v5134, %v5131
    %v5164 = vpack.c.bf16 %v5142, %v5139
    %v5165 = vpack.c.bf16 %v5150, %v5147
    %s5166 = scalar_lea.vmem [#allocation2], 32
    %v5167 = vld [vmem:[%s5166] sm:$0xf]
    %v5168 = vld [vmem:[%s5166 + $0x4] sm:$0xf]
    %v5169 = vld [vmem:[%s5166 + $0x8] sm:$0xf]
    %v5170 = vld [vmem:[%s5166 + $0xc] sm:$0xf]
    %v5171 = vld [vmem:[%s5166 + $0x10] sm:$0xf]
    %v5172 = vld [vmem:[%s5166 + $0x14] sm:$0xf]
    %v5173 = vld [vmem:[%s5166 + $0x18] sm:$0xf]
    %v5174 = vld [vmem:[%s5166 + $0x1c] sm:$0xf]
    %v5183 = vunpack.c.l.b16 %v5167
    %v5184 = vunpack.c.l.b16 %v5168
    %v5185 = vunpack.c.l.b16 %v5169
    %v5186 = vunpack.c.l.b16 %v5170
    %v5187 = vunpack.c.l.b16 %v5171
    %v5188 = vunpack.c.l.b16 %v5172
    %v5189 = vunpack.c.l.b16 %v5173
    %v5190 = vunpack.c.l.b16 %v5174
    %v5191 = vpack.c.b16 %v5184, %v5183
    %v5192 = vpack.c.b16 %v5186, %v5185
    %v5193 = vpack.c.b16 %v5188, %v5187
    %v5194 = vpack.c.b16 %v5190, %v5189
    %v5200 = vsel %vm171, %v5162, 0
    %v5203 = vsel %vm171, %v5163, 0
    %v5206 = vsel %vm171, %v5164, 0
    %v5209 = vsel %vm171, %v5165, 0
    %5211 = vmatprep.subr.bf16.mxu0 0
    %5212 = vmatpush1.bf16.msra.mxu0 0
    %5213 = vmatprep.subr.bf16.mxu0 0
    %5214 = vmatpush1.bf16.msra.mxu0 0
    %5215 = vmatprep.subr.bf16.mxu0 0
    %5216 = vmatpush1.bf16.msra.mxu0 0
    %5217 = vmatprep.subr.bf16.mxu0 0
    %5218 = vmatpush1.bf16.msra.mxu0 0
    %5219 = vmatprep.subr.bf16.mxu0 0
    %5220 = vmatpush1.bf16.msra.mxu0 %v5194
    %5221 = vmatprep.subr.bf16.mxu0 0
    %5222 = vmatpush1.bf16.msra.mxu0 %v5193
    %5223 = vmatprep.subr.bf16.mxu0 0
    %5224 = vmatpush1.bf16.msra.mxu0 %v5192
    %5225 = vmatprep.subr.bf16.mxu0 0
    %5226 = vmatpush1.bf16.msra.mxu0 %v5191
    %5227 = vmatprep.subr.bf16.mxu0 0
    %5228 = vmatpush2.bf16.msra.mxu0 0
    %5229 = vmatprep.subr.bf16.mxu0 0
    %5230 = vmatpush2.bf16.msra.mxu0 0
    %5231 = vmatprep.subr.bf16.mxu0 0
    %5232 = vmatpush2.bf16.msra.mxu0 0
    %5233 = vmatprep.subr.bf16.mxu0 0
    %5234 = vmatpush2.bf16.msra.mxu0 0
    %5235 = vmatprep.subr.bf16.mxu0 0
    %5236 = vmatpush2.bf16.msra.mxu0 0
    %5237 = vmatprep.subr.bf16.mxu0 0
    %5238 = vmatpush2.bf16.msra.mxu0 0
    %5239 = vmatprep.subr.bf16.mxu0 0
    %5240 = vmatpush2.bf16.msra.mxu0 0
    %5241 = vmatprep.subr.bf16.mxu0 0
    %5242 = vmatpush2.bf16.msra.mxu0 0
    %5243 = vmatprep.mubr.bf16.mxu0 0
    %5244 = vmatmul.mubr.bf16.gmra.mxu0 %v5200
    %v5245 = vpop.f32.mrf.mxu0
    %v5246 = vadd.f32 0.0, %v5245
    %v5247 = vpop.f32.mrf.mxu0
    %v5248 = vpop.f32.mrf.mxu0
    %v5249 = vadd.f32 0.0, %v5248
    %v5250 = vpop.f32.mrf.mxu0
    %5251 = vmatprep.mubr.bf16.mxu0 0
    %5252 = vmatmul.mubr.bf16.gmra.mxu0 %v5203
    %v5253 = vpop.f32.mrf.mxu0
    %v5254 = vadd.f32 0.0, %v5253
    %v5255 = vpop.f32.mrf.mxu0
    %v5256 = vpop.f32.mrf.mxu0
    %v5257 = vadd.f32 0.0, %v5256
    %v5258 = vpop.f32.mrf.mxu0
    %5259 = vmatprep.mubr.bf16.mxu0 0
    %5260 = vmatmul.mubr.bf16.gmra.mxu0 %v5206
    %v5261 = vpop.f32.mrf.mxu0
    %v5262 = vadd.f32 0.0, %v5261
    %v5263 = vpop.f32.mrf.mxu0
    %v5264 = vpop.f32.mrf.mxu0
    %v5265 = vadd.f32 0.0, %v5264
    %v5266 = vpop.f32.mrf.mxu0
    %5267 = vmatprep.mubr.bf16.mxu0 0
    %5268 = vmatmul.mubr.bf16.gmra.mxu0 %v5209
    %v5269 = vpop.f32.mrf.mxu0
    %v5270 = vadd.f32 0.0, %v5269
    %v5271 = vpop.f32.mrf.mxu0
    %v5272 = vpop.f32.mrf.mxu0
    %v5273 = vadd.f32 0.0, %v5272
    %v5274 = vpop.f32.mrf.mxu0
    %5275 = vdwg.mxu0
    %v5284 = vunpack.c.l.b16 %v5154
    %v5285 = vunpack.c.l.b16 %v5155
    %v5286 = vunpack.c.l.b16 %v5156
    %v5287 = vunpack.c.l.b16 %v5157
    %v5288 = vunpack.c.l.b16 %v5158
    %v5289 = vunpack.c.l.b16 %v5159
    %v5290 = vunpack.c.l.b16 %v5160
    %v5291 = vunpack.c.l.b16 %v5161
    %v5292 = vpack.c.b16 %v5285, %v5284
    %v5293 = vpack.c.b16 %v5287, %v5286
    %v5294 = vpack.c.b16 %v5289, %v5288
    %v5295 = vpack.c.b16 %v5291, %v5290
    %5300 = vmatprep.subr.bf16.mxu0 0
    %5301 = vmatpush1.bf16.msra.mxu0 0
    %5302 = vmatprep.subr.bf16.mxu0 0
    %5303 = vmatpush1.bf16.msra.mxu0 0
    %5304 = vmatprep.subr.bf16.mxu0 0
    %5305 = vmatpush1.bf16.msra.mxu0 0
    %5306 = vmatprep.subr.bf16.mxu0 0
    %5307 = vmatpush1.bf16.msra.mxu0 0
    %5308 = vmatprep.subr.bf16.mxu0 0
    %5309 = vmatpush1.bf16.msra.mxu0 %v5295
    %5310 = vmatprep.subr.bf16.mxu0 0
    %5311 = vmatpush1.bf16.msra.mxu0 %v5294
    %5312 = vmatprep.subr.bf16.mxu0 0
    %5313 = vmatpush1.bf16.msra.mxu0 %v5293
    %5314 = vmatprep.subr.bf16.mxu0 0
    %5315 = vmatpush1.bf16.msra.mxu0 %v5292
    %5316 = vmatprep.subr.bf16.mxu0 0
    %5317 = vmatpush2.bf16.msra.mxu0 0
    %5318 = vmatprep.subr.bf16.mxu0 0
    %5319 = vmatpush2.bf16.msra.mxu0 0
    %5320 = vmatprep.subr.bf16.mxu0 0
    %5321 = vmatpush2.bf16.msra.mxu0 0
    %5322 = vmatprep.subr.bf16.mxu0 0
    %5323 = vmatpush2.bf16.msra.mxu0 0
    %5324 = vmatprep.subr.bf16.mxu0 0
    %5325 = vmatpush2.bf16.msra.mxu0 0
    %5326 = vmatprep.subr.bf16.mxu0 0
    %5327 = vmatpush2.bf16.msra.mxu0 0
    %5328 = vmatprep.subr.bf16.mxu0 0
    %5329 = vmatpush2.bf16.msra.mxu0 0
    %5330 = vmatprep.subr.bf16.mxu0 0
    %5331 = vmatpush2.bf16.msra.mxu0 0
    %5332 = vmatprep.mubr.bf16.mxu0 0
    %5333 = vmatmul.mubr.bf16.gmra.mxu0 %v2895
    %v5334 = vpop.f32.mrf.mxu0
    %v5335 = vadd.f32 %v5246, %v5334
    %v5336 = vpop.f32.mrf.mxu0
    %v5337 = vpop.f32.mrf.mxu0
    %v5338 = vadd.f32 %v5249, %v5337
    %v5339 = vpop.f32.mrf.mxu0
    %5340 = vmatprep.mubr.bf16.mxu0 0
    %5341 = vmatmul.mubr.bf16.gmra.mxu0 %v2898
    %v5342 = vpop.f32.mrf.mxu0
    %v5343 = vadd.f32 %v5254, %v5342
    %v5344 = vpop.f32.mrf.mxu0
    %v5345 = vpop.f32.mrf.mxu0
    %v5346 = vadd.f32 %v5257, %v5345
    %v5347 = vpop.f32.mrf.mxu0
    %5348 = vmatprep.mubr.bf16.mxu0 0
    %5349 = vmatmul.mubr.bf16.gmra.mxu0 %v2901
    %v5350 = vpop.f32.mrf.mxu0
    %v5351 = vadd.f32 %v5262, %v5350
    %v5352 = vpop.f32.mrf.mxu0
    %v5353 = vpop.f32.mrf.mxu0
    %v5354 = vadd.f32 %v5265, %v5353
    %v5355 = vpop.f32.mrf.mxu0
    %5356 = vmatprep.mubr.bf16.mxu0 0
    %5357 = vmatmul.mubr.bf16.gmra.mxu0 %v2904
    %v5358 = vpop.f32.mrf.mxu0
    %v5359 = vadd.f32 %v5270, %v5358
    %v5360 = vpop.f32.mrf.mxu0
    %v5361 = vpop.f32.mrf.mxu0
    %v5362 = vadd.f32 %v5273, %v5361
    %v5363 = vpop.f32.mrf.mxu0
    %5364 = vdwg.mxu0
    %s5365 = scalar_lea.vmem [#allocation4], 1
    %v5366 = vld [vmem:[%s5365] sm:$0x1]
    %v5368 = vlaneseq
    %v5369 = vshrl.u32 %v5368, 7
    %v5370 = vsub.s32 0, %v5369
    %v5371 = vrot.slane %v5366, %v5370
    %v5373 = vmul.f32 %v5335, %v5371
    %v5374 = vmul.f32 %v5338, %v5371
    %v5375 = vmul.f32 %v5343, %v5371
    %v5376 = vmul.f32 %v5346, %v5371
    %v5377 = vmul.f32 %v5351, %v5371
    %v5378 = vmul.f32 %v5354, %v5371
    %v5379 = vmul.f32 %v5359, %v5371
    %v5380 = vmul.f32 %v5362, %v5371
    %s5381 = scalar_lea.vmem [#allocation6], 1
    %v5382 = vld [vmem:[%s5381] sm:$0x1]
    %v5384 = vlaneseq
    %v5385 = vshrl.u32 %v5384, 7
    %v5386 = vsub.s32 0, %v5385
    %v5387 = vrot.slane %v5382, %v5386
    %v5389 = vadd.f32 %v5373, %v5387
    %v5390 = vadd.f32 %v5374, %v5387
    %v5391 = vadd.f32 %v5375, %v5387
    %v5392 = vadd.f32 %v5376, %v5387
    %v5393 = vadd.f32 %v5377, %v5387
    %v5394 = vadd.f32 %v5378, %v5387
    %v5395 = vadd.f32 %v5379, %v5387
    %v5396 = vadd.f32 %v5380, %v5387
    %v5397 = vmax.f32 %v5389, 0.0
    %v5398 = vmax.f32 %v5390, 0.0
    %v5399 = vmax.f32 %v5391, 0.0
    %v5400 = vmax.f32 %v5392, 0.0
    %v5401 = vmax.f32 %v5393, 0.0
    %v5402 = vmax.f32 %v5394, 0.0
    %v5403 = vmax.f32 %v5395, 0.0
    %v5404 = vmax.f32 %v5396, 0.0
    %v5405 = vpack.c.bf16 %v5398, %v5397
    %v5406 = vpack.c.bf16 %v5400, %v5399
    %v5407 = vpack.c.bf16 %v5402, %v5401
    %v5408 = vpack.c.bf16 %v5404, %v5403
    %s5409 = scalar_lea.vmem %s10, 64
    %v5410 = vld [vmem:[%s5409] sm:$0xf]
    %v5411 = vld [vmem:[%s5409 + $0x4] sm:$0xf]
    %v5412 = vld [vmem:[%s5409 + $0x8] sm:$0xf]
    %v5413 = vld [vmem:[%s5409 + $0xc] sm:$0xf]
    %v5414 = vld [vmem:[%s5409 + $0x10] sm:$0xf]
    %v5415 = vld [vmem:[%s5409 + $0x14] sm:$0xf]
    %v5416 = vld [vmem:[%s5409 + $0x18] sm:$0xf]
    %v5417 = vld [vmem:[%s5409 + $0x1c] sm:$0xf]
    %v5418 = vld [vmem:[%s5409 + $0x20] sm:$0xf]
    %v5419 = vld [vmem:[%s5409 + $0x24] sm:$0xf]
    %v5420 = vld [vmem:[%s5409 + $0x28] sm:$0xf]
    %v5421 = vld [vmem:[%s5409 + $0x2c] sm:$0xf]
    %v5422 = vld [vmem:[%s5409 + $0x30] sm:$0xf]
    %v5423 = vld [vmem:[%s5409 + $0x34] sm:$0xf]
    %v5424 = vld [vmem:[%s5409 + $0x38] sm:$0xf]
    %v5425 = vld [vmem:[%s5409 + $0x3c] sm:$0xf]
    %s5426 = scalar_lea.vmem [#allocation7], 1
    %v5427 = vld [vmem:[%s5426] sm:$0x1]
    %v5429 = vlaneseq
    %v5430 = vshrl.u32 %v5429, 7
    %v5431 = vsub.s32 0, %v5430
    %v5432 = vrot.slane %v5427, %v5431
    %v5450 = vunpack.c.l.b16 %v5410
    %v5451 = vunpack.c.l.b16 %v5411
    %v5452 = vunpack.c.l.b16 %v5412
    %v5453 = vunpack.c.l.b16 %v5413
    %v5454 = vunpack.c.l.b16 %v5414
    %v5455 = vunpack.c.l.b16 %v5415
    %v5456 = vunpack.c.l.b16 %v5416
    %v5457 = vunpack.c.l.b16 %v5417
    %v5458 = vunpack.c.l.b16 %v5418
    %v5459 = vunpack.c.l.b16 %v5419
    %v5460 = vunpack.c.l.b16 %v5420
    %v5461 = vunpack.c.l.b16 %v5421
    %v5462 = vunpack.c.l.b16 %v5422
    %v5463 = vunpack.c.l.b16 %v5423
    %v5464 = vunpack.c.l.b16 %v5424
    %v5465 = vunpack.c.l.b16 %v5425
    %v5466 = vpack.c.b16 %v5451, %v5450
    %v5467 = vpack.c.b16 %v5453, %v5452
    %v5468 = vpack.c.b16 %v5455, %v5454
    %v5469 = vpack.c.b16 %v5457, %v5456
    %v5470 = vpack.c.b16 %v5459, %v5458
    %v5471 = vpack.c.b16 %v5461, %v5460
    %v5472 = vpack.c.b16 %v5463, %v5462
    %v5473 = vpack.c.b16 %v5465, %v5464
    %5482 = vmatprep.subr.bf16.mxu0 0
    %5483 = vmatpush1.bf16.msra.mxu0 %v5473
    %5484 = vmatprep.subr.bf16.mxu0 0
    %5485 = vmatpush1.bf16.msra.mxu0 %v5472
    %5486 = vmatprep.subr.bf16.mxu0 0
    %5487 = vmatpush1.bf16.msra.mxu0 %v5471
    %5488 = vmatprep.subr.bf16.mxu0 0
    %5489 = vmatpush1.bf16.msra.mxu0 %v5470
    %5490 = vmatprep.subr.bf16.mxu0 0
    %5491 = vmatpush1.bf16.msra.mxu0 %v5469
    %5492 = vmatprep.subr.bf16.mxu0 0
    %5493 = vmatpush1.bf16.msra.mxu0 %v5468
    %5494 = vmatprep.subr.bf16.mxu0 0
    %5495 = vmatpush1.bf16.msra.mxu0 %v5467
    %5496 = vmatprep.subr.bf16.mxu0 0
    %5497 = vmatpush1.bf16.msra.mxu0 %v5466
    %5498 = vmatprep.subr.bf16.mxu0 0
    %5499 = vmatpush2.bf16.msra.mxu0 0
    %5500 = vmatprep.subr.bf16.mxu0 0
    %5501 = vmatpush2.bf16.msra.mxu0 0
    %5502 = vmatprep.subr.bf16.mxu0 0
    %5503 = vmatpush2.bf16.msra.mxu0 0
    %5504 = vmatprep.subr.bf16.mxu0 0
    %5505 = vmatpush2.bf16.msra.mxu0 0
    %5506 = vmatprep.subr.bf16.mxu0 0
    %5507 = vmatpush2.bf16.msra.mxu0 0
    %5508 = vmatprep.subr.bf16.mxu0 0
    %5509 = vmatpush2.bf16.msra.mxu0 0
    %5510 = vmatprep.subr.bf16.mxu0 0
    %5511 = vmatpush2.bf16.msra.mxu0 0
    %5512 = vmatprep.subr.bf16.mxu0 0
    %5513 = vmatpush2.bf16.msra.mxu0 0
    %5514 = vmatprep.mubr.bf16.mxu0 0
    %5515 = vmatmul.mubr.bf16.gmra.mxu0 %v5405
    %v5516 = vpop.f32.mrf.mxu0
    %v5517 = vadd.f32 %v5432, %v5516
    %v5518 = vpop.f32.mrf.mxu0
    %v5519 = vpop.f32.mrf.mxu0
    %v5520 = vadd.f32 %v5432, %v5519
    %v5521 = vpop.f32.mrf.mxu0
    %5522 = vmatprep.mubr.bf16.mxu0 0
    %5523 = vmatmul.mubr.bf16.gmra.mxu0 %v5406
    %v5524 = vpop.f32.mrf.mxu0
    %v5525 = vadd.f32 %v5432, %v5524
    %v5526 = vpop.f32.mrf.mxu0
    %v5527 = vpop.f32.mrf.mxu0
    %v5528 = vadd.f32 %v5432, %v5527
    %v5529 = vpop.f32.mrf.mxu0
    %5530 = vmatprep.mubr.bf16.mxu0 0
    %5531 = vmatmul.mubr.bf16.gmra.mxu0 %v5407
    %v5532 = vpop.f32.mrf.mxu0
    %v5533 = vadd.f32 %v5432, %v5532
    %v5534 = vpop.f32.mrf.mxu0
    %v5535 = vpop.f32.mrf.mxu0
    %v5536 = vadd.f32 %v5432, %v5535
    %v5537 = vpop.f32.mrf.mxu0
    %5538 = vmatprep.mubr.bf16.mxu0 0
    %5539 = vmatmul.mubr.bf16.gmra.mxu0 %v5408
    %v5540 = vpop.f32.mrf.mxu0
    %v5541 = vadd.f32 %v5432, %v5540
    %v5542 = vpop.f32.mrf.mxu0
    %v5543 = vpop.f32.mrf.mxu0
    %v5544 = vadd.f32 %v5432, %v5543
    %v5545 = vpop.f32.mrf.mxu0
    %5546 = vdwg.mxu0
    %v5547 = vadd.f32 %v2820, %v5517
    %v5548 = vadd.f32 %v2821, %v5520
    %v5549 = vadd.f32 %v2822, %v5525
    %v5550 = vadd.f32 %v2823, %v5528
    %v5551 = vadd.f32 %v2824, %v5533
    %v5552 = vadd.f32 %v2825, %v5536
    %v5553 = vadd.f32 %v2826, %v5541
    %v5554 = vadd.f32 %v2827, %v5544
    %5555 = vst.msk [vmem:[%s12] sm:$0xff] %vm171, %v5547
    %5556 = vst.msk [vmem:[%s12 + $0x8] sm:$0xff] %vm171, %v5548
    %5557 = vst.msk [vmem:[%s12 + $0x10] sm:$0xff] %vm171, %v5549
    %5558 = vst.msk [vmem:[%s12 + $0x18] sm:$0xff] %vm171, %v5550
    %5559 = vst.msk [vmem:[%s13] sm:$0xff] %vm171, %v5551
    %5560 = vst.msk [vmem:[%s13 + $0x8] sm:$0xff] %vm171, %v5552
    %5561 = vst.msk [vmem:[%s13 + $0x10] sm:$0xff] %vm171, %v5553
    %5562 = vst.msk [vmem:[%s13 + $0x18] sm:$0xff] %vm171, %v5554
    // Predicated region
    $region66: #{attentional_gnn.1} parent=1 // pred_check
      _
    $region67: #{attentional_gnn.1} parent=1 // pred_check_branch
      %5564 = sbr.rel (0) target = $region69
    $region68: #{attentional_gnn.1} parent=1 // pred_region
      _
    $region69: #{attentional_gnn.1} parent=1 // pred_fallthru
      _
    // Predicated region
    $region70: #{attentional_gnn.1} parent=1 // pred_check
      _
    $region71: #{attentional_gnn.1} parent=1 // pred_check_branch
      %5566 = sbr.rel (0) target = $region73
    $region72: #{attentional_gnn.1} parent=1 // pred_region
      _
    $region73: #{attentional_gnn.1} parent=1 // pred_fallthru
      _
    // Predicated region
    $region74: #{attentional_gnn.1} parent=1 // pred_check
      _
    $region75: #{attentional_gnn.1} parent=1 // pred_check_branch
      %5568 = sbr.rel (0) target = $region77
    $region76: #{attentional_gnn.1} parent=1 // pred_region
      _
    $region77: #{attentional_gnn.1} parent=1 // pred_fallthru
      _
    // Predicated region
    $region78: #{attentional_gnn.1} parent=1 // pred_check
      _
    $region79: #{attentional_gnn.1} parent=1 // pred_check_branch
      %5570 = sbr.rel (0) target = $region81
    $region80: #{attentional_gnn.1} parent=1 // pred_region
      _
    $region81: #{attentional_gnn.1} parent=1 // pred_fallthru
      _
    %5571 = vsyncpa [#allocation3], 1
    %5572 = vsyncpa [#allocation5], 1
    %5573 = vsyncpa [#allocation8], 1

</llo_original>
